<compile_context>
chip_gen: v5e
topology: v5e:2x2
jax: 0.10.0
libtpu: 0.0.40
codegen_flags: <defaults>
</compile_context>

<pallas_src>
import functools

import jax
import jax.numpy as jnp
from jax.experimental import pallas as pl
from jax.experimental.pallas import tpu as pltpu


def _round_up(x, m):
    return (x + m - 1) // m * m


# ----------------------------------------------------------------------------
# Pallas kernels
# ----------------------------------------------------------------------------
def _matmul_bias_kernel(x_ref, w_ref, b_ref, o_ref, *, relu):
    acc = jnp.dot(x_ref[...], w_ref[...], preferred_element_type=jnp.float32)
    acc = acc + b_ref[...]
    if relu:
        acc = jnp.maximum(acc, 0.0)
    o_ref[...] = acc


def matmul_bias(x, wp, bp, n_out, relu=False):
    """y[:, :n_out] = x @ W + b.

    wp is a pre-padded (Kp, Np) bf16 weight matrix, bp a pre-padded (1, Np) f32 bias
    (both prepared once at init).  x is an unpadded (M, K) activation matrix; only
    the activation gets padded (jnp.pad) and cast to bf16 here.
    """
    M, K = x.shape
    Kp, Np = wp.shape
    # M-tiling: parallel grid for the big patch matmuls (megacore on v7x + pipelining),
    # single full-extent block for the small ones.
    tm = 256 if M >= 512 else _round_up(max(M, 16), 16)
    Mp = _round_up(M, tm)
    xp = jnp.pad(x, ((0, Mp - M), (0, Kp - K))).astype(jnp.bfloat16)
    out = pl.pallas_call(
        functools.partial(_matmul_bias_kernel, relu=relu),
        out_shape=jax.ShapeDtypeStruct((Mp, Np), jnp.float32),
        grid=(Mp // tm,),
        in_specs=[
            pl.BlockSpec((tm, Kp), lambda i: (i, 0)),
            pl.BlockSpec((Kp, Np), lambda i: (0, 0)),
            pl.BlockSpec((1, Np), lambda i: (0, 0)),
        ],
        out_specs=pl.BlockSpec((tm, Np), lambda i: (i, 0)),
        compiler_params=pltpu.CompilerParams(dimension_semantics=("parallel",)),
    )(xp, wp, bp)
    return out[:M, :n_out]


def _maxpool_relu_kernel(x_ref, o_ref):
    m = jnp.maximum(jnp.maximum(x_ref[0], x_ref[1]),
                    jnp.maximum(x_ref[2], x_ref[3]))
    o_ref[...] = jnp.maximum(m, 0.0)


def max_pool2x2_relu(x):
    """relu(maxpool2x2(x)) on NCHW input; lane-dense (rows, 128) single-kernel version."""
    N, C, H, W = x.shape
    Ho, Wo = H // 2, W // 2
    xr = x.reshape(N, C, Ho, 2, Wo, 2)
    corners = jnp.stack(
        [xr[:, :, :, 0, :, 0], xr[:, :, :, 0, :, 1],
         xr[:, :, :, 1, :, 0], xr[:, :, :, 1, :, 1]], axis=0)        # (4, N, C, Ho, Wo)
    L = N * C * Ho * Wo
    Lp = _round_up(max(L, 1024), 1024)                               # multiple of 8*128
    rows = Lp // 128
    inp = jnp.pad(corners.reshape(4, L), ((0, 0), (0, Lp - L))).reshape(4, rows, 128)
    out = pl.pallas_call(
        _maxpool_relu_kernel,
        out_shape=jax.ShapeDtypeStruct((rows, 128), jnp.float32),
        grid=(1,),
        in_specs=[pl.BlockSpec((4, rows, 128), lambda i: (0, 0, 0))],
        out_specs=pl.BlockSpec((rows, 128), lambda i: (0, 0)),
        compiler_params=pltpu.CompilerParams(dimension_semantics=("arbitrary",)),
    )(inp)
    return out.reshape(-1)[:L].reshape(N, C, Ho, Wo)


# ----------------------------------------------------------------------------
# Conv helpers built on the Pallas matmul kernel
# ----------------------------------------------------------------------------
def im2col(x, kh, kw, pad):
    """NCHW -> (N*Ho*Wo, Cin*kh*kw) patch matrix (stride 1), column order c*(kh*kw)+tap."""
    N, C, H, W = x.shape
    xp = jnp.pad(x, ((0, 0), (0, 0), (pad, pad), (pad, pad)))
    Ho = H + 2 * pad - kh + 1
    Wo = W + 2 * pad - kw + 1
    cols = []
    for i in range(kh):
        for j in range(kw):
            cols.append(xp[:, :, i:i + Ho, j:j + Wo])
    patches = jnp.stack(cols, axis=2)                     # (N, C, kh*kw, Ho, Wo)
    patches = patches.reshape(N, C * kh * kw, Ho * Wo)
    patches = patches.transpose(0, 2, 1).reshape(N * Ho * Wo, C * kh * kw)
    return patches, Ho, Wo


def conv2d_pre(x, wp, bp, *, n_out, kh, kw, pad):
    """Conv2d (stride 1) with pre-padded weight matrix wp / bias bp."""
    N = x.shape[0]
    patches, Ho, Wo = im2col(x, kh, kw, pad)
    out = matmul_bias(patches, wp, bp, n_out)
    return out.reshape(N, Ho, Wo, n_out).transpose(0, 3, 1, 2)


# ----------------------------------------------------------------------------
# Parameter init (deterministic, PyTorch-default-like uniform bounds)
# ----------------------------------------------------------------------------
def conv_init(key, cout, cin, kh, kw):
    k1, k2 = jax.random.split(key)
    bound = 1.0 / float((cin * kh * kw) ** 0.5)
    w = jax.random.uniform(k1, (cout, cin, kh, kw), jnp.float32, -bound, bound)
    b = jax.random.uniform(k2, (cout,), jnp.float32, -bound, bound)
    return w, b


def linear_init(key, out_f, in_f):
    k1, k2 = jax.random.split(key)
    bound = 1.0 / float(in_f ** 0.5)
    w = jax.random.uniform(k1, (out_f, in_f), jnp.float32, -bound, bound)
    b = jax.random.uniform(k2, (out_f,), jnp.float32, -bound, bound)
    return w, b


def init_inception(key, cin):
    ks = jax.random.split(key, 7)
    return {
        "pool": conv_init(ks[0], 24, cin, 1, 1),
        "b1x1": conv_init(ks[1], 16, cin, 1, 1),
        "b5x5_1": conv_init(ks[2], 16, cin, 1, 1),
        "b5x5_2": conv_init(ks[3], 24, 16, 5, 5),
        "b3x3_1": conv_init(ks[4], 16, cin, 1, 1),
        "b3x3_2": conv_init(ks[5], 24, 16, 3, 3),
        "b3x3_3": conv_init(ks[6], 24, 24, 3, 3),
    }


def init_net(key):
    ks = jax.random.split(key, 5)
    return {
        "conv1": conv_init(ks[0], 10, 1, 5, 5),
        "conv2": conv_init(ks[1], 20, 88, 5, 5),
        "incep1": init_inception(ks[2], 10),
        "incep2": init_inception(ks[3], 20),
        "fc": linear_init(ks[4], 10, 1408),
    }


# ----------------------------------------------------------------------------
# One-time weight preparation: flatten, transpose, fuse, zero-pad, cast to bf16.
# ----------------------------------------------------------------------------
def _pad_weight(wmat, b):
    K, N = wmat.shape
    Kp = _round_up(max(K, 128), 128)
    Np = _round_up(max(N, 128), 128)
    wp = jnp.pad(wmat, ((0, Kp - K), (0, Np - N))).astype(jnp.bfloat16)
    bp = jnp.pad(b.reshape(1, -1).astype(jnp.float32), ((0, 0), (0, Np - N)))
    return wp, bp


def _conv_mat(wb):
    w, b = wb
    cout, cin, kh, kw = w.shape
    return _pad_weight(w.reshape(cout, cin * kh * kw).T, b)


def _stem_mat(p, cin):
    """Fused weight for one inception block's stem, over a 3x3 pad=1 im2col of x.

    Columns 0:24   = avg_pool3x3(count_include_pad) -> 1x1 pool conv, folded: w_pool/9 on all 9 taps.
    Columns 24:40  = batch1x1      (weights on centre tap only).
    Columns 40:56  = batch5x5_1    (centre tap).
    Columns 56:72  = batch3x3_1    (centre tap).
    """
    w_pool, b_pool = p["pool"]
    w1, b1 = p["b1x1"]
    w5, b5 = p["b5x5_1"]
    w3, b3 = p["b3x3_1"]
    K = cin * 9
    W = jnp.zeros((K, 72), jnp.float32)
    W = W.at[:, 0:24].set(jnp.repeat(w_pool.reshape(24, cin).T, 9, axis=0) / 9.0)
    center = jnp.arange(cin) * 9 + 4                      # centre tap of 3x3 (row-major)
    W = W.at[center, 24:40].set(w1.reshape(16, cin).T)
    W = W.at[center, 40:56].set(w5.reshape(16, cin).T)
    W = W.at[center, 56:72].set(w3.reshape(16, cin).T)
    b = jnp.concatenate([b_pool, b1, b5, b3])
    return _pad_weight(W, b)


def prepare_params(params):
    def incep(p, cin):
        return {
            "stem": _stem_mat(p, cin),
            "b5x5_2": _conv_mat(p["b5x5_2"]),
            "b3x3_2": _conv_mat(p["b3x3_2"]),
            "b3x3_3": _conv_mat(p["b3x3_3"]),
        }

    fc_w, fc_b = params["fc"]
    return {
        "conv1": _conv_mat(params["conv1"]),
        "conv2": _conv_mat(params["conv2"]),
        "incep1": incep(params["incep1"], 10),
        "incep2": incep(params["incep2"], 20),
        "fc": _pad_weight(fc_w.T, fc_b),
    }


# ----------------------------------------------------------------------------
# Forward pass (mirrors the PyTorch module exactly)
# ----------------------------------------------------------------------------
def inception_forward(pp, x):
    N, C, H, W = x.shape
    patches, Ho, Wo = im2col(x, 3, 3, 1)
    # One fused matmul: pool-branch (avgpool+1x1 folded) + the three 1x1 stems.
    stem = matmul_bias(patches, *pp["stem"], n_out=72)    # (N*H*W, 72)
    stem = stem.reshape(N, Ho, Wo, 72).transpose(0, 3, 1, 2)
    bp = stem[:, 0:24]
    b1 = stem[:, 24:40]
    b5 = stem[:, 40:56]
    b3 = stem[:, 56:72]

    b5 = conv2d_pre(b5, *pp["b5x5_2"], n_out=24, kh=5, kw=5, pad=2)
    b3 = conv2d_pre(b3, *pp["b3x3_2"], n_out=24, kh=3, kw=3, pad=1)
    b3 = conv2d_pre(b3, *pp["b3x3_3"], n_out=24, kh=3, kw=3, pad=1)

    # torch.cat([batch_pool, batch1x1, batch3x3, batch5x5], dim=1)
    return jnp.concatenate([bp, b1, b3, b5], axis=1)


def net_forward(pp, x):
    n = x.shape[0]
    x = conv2d_pre(x, *pp["conv1"], n_out=10, kh=5, kw=5, pad=0)   # (N, 10, 24, 24)
    x = max_pool2x2_relu(x)                                        # (N, 10, 12, 12)
    x = inception_forward(pp["incep1"], x)                         # (N, 88, 12, 12)
    x = conv2d_pre(x, *pp["conv2"], n_out=20, kh=5, kw=5, pad=0)   # (N, 20, 8, 8)
    x = max_pool2x2_relu(x)                                        # (N, 20, 4, 4)
    x = inception_forward(pp["incep2"], x)                         # (N, 88, 4, 4)
    x = x.reshape(n, -1)                                           # (N, 1408) NCHW flatten
    return matmul_bias(x, *pp["fc"], n_out=10)                     # (N, 10)


if __name__ == "__main__":
    root = jax.random.PRNGKey(0)
    k_params, k_x = jax.random.split(root)
    params = init_net(k_params)
    prepared = prepare_params(params)                 # one-time weight layout / padding
    # fc expects 1408 = 88*4*4 features -> input spatial must be 28x28 (MNIST-style).
    x = jax.random.normal(k_x, (2, 1, 28, 28), jnp.float32)

    fwd = jax.jit(net_forward)
    out = jax.block_until_ready(fwd(prepared, x))
    assert out.shape == (2, 10) and out.dtype == jnp.float32
    print("KERNEL_OK")
</pallas_src>

<mosaic_0001>
module attributes {stable_mosaic.version = 11 : i64} {
  func.func @_matmul_bias_kernel(%arg0: i32, %arg1: memref<256x128xbf16, #tpu.memory_space<vmem>>, %arg2: memref<128x128xbf16, #tpu.memory_space<vmem>>, %arg3: memref<1x128xf32, #tpu.memory_space<vmem>>, %arg4: memref<256x128xf32, #tpu.memory_space<vmem>>) attributes {dimension_semantics = [#tpu.dimension_semantics<parallel>], iteration_bounds = array<i64: 5>, scalar_prefetch = 0 : i64, scratch_operands = 0 : i64, tpu.core_type = #tpu.core_type<tc>, window_params = [{transform_indices = @transform_0, window_bounds = array<i64: 256, 128>}, {pipeline_mode = #tpu.pipeline_mode<synchronous>, transform_indices = @transform_1, window_bounds = array<i64: 128, 128>}, {pipeline_mode = #tpu.pipeline_mode<synchronous>, transform_indices = @transform_2, window_bounds = array<i64: 1, 128>}, {transform_indices = @transform_3, window_bounds = array<i64: 256, 128>}]} {
    %c0 = arith.constant 0 : index
    %c0_0 = arith.constant 0 : index
    %0 = vector.load %arg1[%c0, %c0_0] : memref<256x128xbf16, #tpu.memory_space<vmem>>, vector<256x128xbf16>
    %c0_1 = arith.constant 0 : index
    %c0_2 = arith.constant 0 : index
    %1 = vector.load %arg2[%c0_1, %c0_2] : memref<128x128xbf16, #tpu.memory_space<vmem>>, vector<128x128xbf16>
    %cst = arith.constant dense<0.000000e+00> : vector<256x128xf32>
    %2 = tpu.matmul %0, %1, %cst {dimension_numbers = #tpu.dot_dimension_numbers<[1], [0], [0], [1], [0, 0, 1, 1], [], []>} : vector<256x128xbf16>, vector<128x128xbf16>, vector<256x128xf32> -> vector<256x128xf32>
    %c0_3 = arith.constant 0 : index
    %c0_4 = arith.constant 0 : index
    %3 = vector.load %arg3[%c0_3, %c0_4] : memref<1x128xf32, #tpu.memory_space<vmem>>, vector<1x128xf32>
    %4 = vector.broadcast %3 : vector<1x128xf32> to vector<256x128xf32>
    %5 = arith.addf %2, %4 : vector<256x128xf32>
    %c0_5 = arith.constant 0 : index
    %c0_6 = arith.constant 0 : index
    %6 = vector.load %arg4[%c0_5, %c0_6] : memref<256x128xf32, #tpu.memory_space<vmem>>, vector<256x128xf32>
    tpu.vector_store %arg4[%c0_5, %c0_6], %5 {strides = array<i32>} : memref<256x128xf32, #tpu.memory_space<vmem>>, vector<256x128xf32>,
    return
  }
  func.func @transform_0(%arg0: i32) -> (i32, i32) {
    %c0_i32 = arith.constant 0 : i32
    %c0_i32_0 = arith.constant 0 : i32
    return %arg0, %c0_i32 : i32, i32
  }
  func.func @transform_1(%arg0: i32) -> (i32, i32) {
    %c0_i32 = arith.constant 0 : i32
    %c0_i32_0 = arith.constant 0 : i32
    %c0_i32_1 = arith.constant 0 : i32
    return %c0_i32, %c0_i32_0 : i32, i32
  }
  func.func @transform_2(%arg0: i32) -> (i32, i32) {
    %c0_i32 = arith.constant 0 : i32
    %c0_i32_0 = arith.constant 0 : i32
    %c0_i32_1 = arith.constant 0 : i32
    return %c0_i32, %c0_i32_0 : i32, i32
  }
  func.func @transform_3(%arg0: i32) -> (i32, i32) {
    %c0_i32 = arith.constant 0 : i32
    %c0_i32_0 = arith.constant 0 : i32
    return %arg0, %c0_i32 : i32, i32
  }
}

module attributes {stable_mosaic.version = 11 : i64} {
  func.func @_maxpool_relu_kernel(%arg0: i32, %arg1: memref<4x24x128xf32, #tpu.memory_space<vmem>>, %arg2: memref<24x128xf32, #tpu.memory_space<vmem>>) attributes {dimension_semantics = [#tpu.dimension_semantics<arbitrary>], iteration_bounds = array<i64: 1>, scalar_prefetch = 0 : i64, scratch_operands = 0 : i64, tpu.core_type = #tpu.core_type<tc>, window_params = [{pipeline_mode = #tpu.pipeline_mode<synchronous>, transform_indices = @transform_0, window_bounds = array<i64: 4, 24, 128>}, {pipeline_mode = #tpu.pipeline_mode<synchronous>, transform_indices = @transform_1, window_bounds = array<i64: 24, 128>}]} {
    %c0 = arith.constant 0 : index
    %c0_0 = arith.constant 0 : index
    %c0_1 = arith.constant 0 : index
    %0 = vector.load %arg1[%c0, %c0_0, %c0_1] : memref<4x24x128xf32, #tpu.memory_space<vmem>>, vector<1x24x128xf32>
    %1 = vector.shape_cast %0 : vector<1x24x128xf32> to vector<24x128xf32>
    %c1 = arith.constant 1 : index
    %c0_2 = arith.constant 0 : index
    %c0_3 = arith.constant 0 : index
    %2 = vector.load %arg1[%c1, %c0_2, %c0_3] : memref<4x24x128xf32, #tpu.memory_space<vmem>>, vector<1x24x128xf32>
    %3 = vector.shape_cast %2 : vector<1x24x128xf32> to vector<24x128xf32>
    %4 = arith.maximumf %1, %3 : vector<24x128xf32>
    %c2 = arith.constant 2 : index
    %c0_4 = arith.constant 0 : index
    %c0_5 = arith.constant 0 : index
    %5 = vector.load %arg1[%c2, %c0_4, %c0_5] : memref<4x24x128xf32, #tpu.memory_space<vmem>>, vector<1x24x128xf32>
    %6 = vector.shape_cast %5 : vector<1x24x128xf32> to vector<24x128xf32>
    %c3 = arith.constant 3 : index
    %c0_6 = arith.constant 0 : index
    %c0_7 = arith.constant 0 : index
    %7 = vector.load %arg1[%c3, %c0_6, %c0_7] : memref<4x24x128xf32, #tpu.memory_space<vmem>>, vector<1x24x128xf32>
    %8 = vector.shape_cast %7 : vector<1x24x128xf32> to vector<24x128xf32>
    %9 = arith.maximumf %6, %8 : vector<24x128xf32>
    %10 = arith.maximumf %4, %9 : vector<24x128xf32>
    %cst = arith.constant 0.000000e+00 : f32
    %11 = vector.broadcast %cst : f32 to vector<24x128xf32>
    %12 = arith.maximumf %10, %11 : vector<24x128xf32>
    %c0_8 = arith.constant 0 : index
    %c0_9 = arith.constant 0 : index
    %13 = vector.load %arg2[%c0_8, %c0_9] : memref<24x128xf32, #tpu.memory_space<vmem>>, vector<24x128xf32>
    tpu.vector_store %arg2[%c0_8, %c0_9], %12 {strides = array<i32>} : memref<24x128xf32, #tpu.memory_space<vmem>>, vector<24x128xf32>,
    return
  }
  func.func @transform_0(%arg0: i32) -> (i32, i32, i32) {
    %c0_i32 = arith.constant 0 : i32
    %c0_i32_0 = arith.constant 0 : i32
    %c0_i32_1 = arith.constant 0 : i32
    %c0_i32_2 = arith.constant 0 : i32
    return %c0_i32, %c0_i32_0, %c0_i32_1 : i32, i32, i32
  }
  func.func @transform_1(%arg0: i32) -> (i32, i32) {
    %c0_i32 = arith.constant 0 : i32
    %c0_i32_0 = arith.constant 0 : i32
    %c0_i32_1 = arith.constant 0 : i32
    return %c0_i32, %c0_i32_0 : i32, i32
  }
}

module attributes {stable_mosaic.version = 11 : i64} {
  func.func @_matmul_bias_kernel(%arg0: i32, %arg1: memref<288x128xbf16, #tpu.memory_space<vmem>>, %arg2: memref<128x128xbf16, #tpu.memory_space<vmem>>, %arg3: memref<1x128xf32, #tpu.memory_space<vmem>>, %arg4: memref<288x128xf32, #tpu.memory_space<vmem>>) attributes {dimension_semantics = [#tpu.dimension_semantics<parallel>], iteration_bounds = array<i64: 1>, scalar_prefetch = 0 : i64, scratch_operands = 0 : i64, tpu.core_type = #tpu.core_type<tc>, window_params = [{transform_indices = @transform_0, window_bounds = array<i64: 288, 128>}, {pipeline_mode = #tpu.pipeline_mode<synchronous>, transform_indices = @transform_1, window_bounds = array<i64: 128, 128>}, {pipeline_mode = #tpu.pipeline_mode<synchronous>, transform_indices = @transform_2, window_bounds = array<i64: 1, 128>}, {transform_indices = @transform_3, window_bounds = array<i64: 288, 128>}]} {
    %c0 = arith.constant 0 : index
    %c0_0 = arith.constant 0 : index
    %0 = vector.load %arg1[%c0, %c0_0] : memref<288x128xbf16, #tpu.memory_space<vmem>>, vector<288x128xbf16>
    %c0_1 = arith.constant 0 : index
    %c0_2 = arith.constant 0 : index
    %1 = vector.load %arg2[%c0_1, %c0_2] : memref<128x128xbf16, #tpu.memory_space<vmem>>, vector<128x128xbf16>
    %cst = arith.constant dense<0.000000e+00> : vector<288x128xf32>
    %2 = tpu.matmul %0, %1, %cst {dimension_numbers = #tpu.dot_dimension_numbers<[1], [0], [0], [1], [0, 0, 1, 1], [], []>} : vector<288x128xbf16>, vector<128x128xbf16>, vector<288x128xf32> -> vector<288x128xf32>
    %c0_3 = arith.constant 0 : index
    %c0_4 = arith.constant 0 : index
    %3 = vector.load %arg3[%c0_3, %c0_4] : memref<1x128xf32, #tpu.memory_space<vmem>>, vector<1x128xf32>
    %4 = vector.broadcast %3 : vector<1x128xf32> to vector<288x128xf32>
    %5 = arith.addf %2, %4 : vector<288x128xf32>
    %c0_5 = arith.constant 0 : index
    %c0_6 = arith.constant 0 : index
    %6 = vector.load %arg4[%c0_5, %c0_6] : memref<288x128xf32, #tpu.memory_space<vmem>>, vector<288x128xf32>
    tpu.vector_store %arg4[%c0_5, %c0_6], %5 {strides = array<i32>} : memref<288x128xf32, #tpu.memory_space<vmem>>, vector<288x128xf32>,
    return
  }
  func.func @transform_0(%arg0: i32) -> (i32, i32) {
    %c0_i32 = arith.constant 0 : i32
    %c0_i32_0 = arith.constant 0 : i32
    return %arg0, %c0_i32 : i32, i32
  }
  func.func @transform_1(%arg0: i32) -> (i32, i32) {
    %c0_i32 = arith.constant 0 : i32
    %c0_i32_0 = arith.constant 0 : i32
    %c0_i32_1 = arith.constant 0 : i32
    return %c0_i32, %c0_i32_0 : i32, i32
  }
  func.func @transform_2(%arg0: i32) -> (i32, i32) {
    %c0_i32 = arith.constant 0 : i32
    %c0_i32_0 = arith.constant 0 : i32
    %c0_i32_1 = arith.constant 0 : i32
    return %c0_i32, %c0_i32_0 : i32, i32
  }
  func.func @transform_3(%arg0: i32) -> (i32, i32) {
    %c0_i32 = arith.constant 0 : i32
    %c0_i32_0 = arith.constant 0 : i32
    return %arg0, %c0_i32 : i32, i32
  }
}

module attributes {stable_mosaic.version = 11 : i64} {
  func.func @_matmul_bias_kernel(%arg0: i32, %arg1: memref<288x256xbf16, #tpu.memory_space<vmem>>, %arg2: memref<256x128xbf16, #tpu.memory_space<vmem>>, %arg3: memref<1x128xf32, #tpu.memory_space<vmem>>, %arg4: memref<288x128xf32, #tpu.memory_space<vmem>>) attributes {dimension_semantics = [#tpu.dimension_semantics<parallel>], iteration_bounds = array<i64: 1>, scalar_prefetch = 0 : i64, scratch_operands = 0 : i64, tpu.core_type = #tpu.core_type<tc>, window_params = [{transform_indices = @transform_0, window_bounds = array<i64: 288, 256>}, {pipeline_mode = #tpu.pipeline_mode<synchronous>, transform_indices = @transform_1, window_bounds = array<i64: 256, 128>}, {pipeline_mode = #tpu.pipeline_mode<synchronous>, transform_indices = @transform_2, window_bounds = array<i64: 1, 128>}, {transform_indices = @transform_3, window_bounds = array<i64: 288, 128>}]} {
    %c0 = arith.constant 0 : index
    %c0_0 = arith.constant 0 : index
    %0 = vector.load %arg1[%c0, %c0_0] : memref<288x256xbf16, #tpu.memory_space<vmem>>, vector<288x256xbf16>
    %c0_1 = arith.constant 0 : index
    %c0_2 = arith.constant 0 : index
    %1 = vector.load %arg2[%c0_1, %c0_2] : memref<256x128xbf16, #tpu.memory_space<vmem>>, vector<256x128xbf16>
    %cst = arith.constant dense<0.000000e+00> : vector<288x128xf32>
    %2 = tpu.matmul %0, %1, %cst {dimension_numbers = #tpu.dot_dimension_numbers<[1], [0], [0], [1], [0, 0, 1, 1], [], []>} : vector<288x256xbf16>, vector<256x128xbf16>, vector<288x128xf32> -> vector<288x128xf32>
    %c0_3 = arith.constant 0 : index
    %c0_4 = arith.constant 0 : index
    %3 = vector.load %arg3[%c0_3, %c0_4] : memref<1x128xf32, #tpu.memory_space<vmem>>, vector<1x128xf32>
    %4 = vector.broadcast %3 : vector<1x128xf32> to vector<288x128xf32>
    %5 = arith.addf %2, %4 : vector<288x128xf32>
    %c0_5 = arith.constant 0 : index
    %c0_6 = arith.constant 0 : index
    %6 = vector.load %arg4[%c0_5, %c0_6] : memref<288x128xf32, #tpu.memory_space<vmem>>, vector<288x128xf32>
    tpu.vector_store %arg4[%c0_5, %c0_6], %5 {strides = array<i32>} : memref<288x128xf32, #tpu.memory_space<vmem>>, vector<288x128xf32>,
    return
  }
  func.func @transform_0(%arg0: i32) -> (i32, i32) {
    %c0_i32 = arith.constant 0 : i32
    %c0_i32_0 = arith.constant 0 : i32
    return %arg0, %c0_i32 : i32, i32
  }
  func.func @transform_1(%arg0: i32) -> (i32, i32) {
    %c0_i32 = arith.constant 0 : i32
    %c0_i32_0 = arith.constant 0 : i32
    %c0_i32_1 = arith.constant 0 : i32
    return %c0_i32, %c0_i32_0 : i32, i32
  }
  func.func @transform_2(%arg0: i32) -> (i32, i32) {
    %c0_i32 = arith.constant 0 : i32
    %c0_i32_0 = arith.constant 0 : i32
    %c0_i32_1 = arith.constant 0 : i32
    return %c0_i32, %c0_i32_0 : i32, i32
  }
  func.func @transform_3(%arg0: i32) -> (i32, i32) {
    %c0_i32 = arith.constant 0 : i32
    %c0_i32_0 = arith.constant 0 : i32
    return %arg0, %c0_i32 : i32, i32
  }
}

module attributes {stable_mosaic.version = 11 : i64} {
  func.func @_matmul_bias_kernel(%arg0: i32, %arg1: memref<288x512xbf16, #tpu.memory_space<vmem>>, %arg2: memref<512x128xbf16, #tpu.memory_space<vmem>>, %arg3: memref<1x128xf32, #tpu.memory_space<vmem>>, %arg4: memref<288x128xf32, #tpu.memory_space<vmem>>) attributes {dimension_semantics = [#tpu.dimension_semantics<parallel>], iteration_bounds = array<i64: 1>, scalar_prefetch = 0 : i64, scratch_operands = 0 : i64, tpu.core_type = #tpu.core_type<tc>, window_params = [{transform_indices = @transform_0, window_bounds = array<i64: 288, 512>}, {pipeline_mode = #tpu.pipeline_mode<synchronous>, transform_indices = @transform_1, window_bounds = array<i64: 512, 128>}, {pipeline_mode = #tpu.pipeline_mode<synchronous>, transform_indices = @transform_2, window_bounds = array<i64: 1, 128>}, {transform_indices = @transform_3, window_bounds = array<i64: 288, 128>}]} {
    %c0 = arith.constant 0 : index
    %c0_0 = arith.constant 0 : index
    %0 = vector.load %arg1[%c0, %c0_0] : memref<288x512xbf16, #tpu.memory_space<vmem>>, vector<288x512xbf16>
    %c0_1 = arith.constant 0 : index
    %c0_2 = arith.constant 0 : index
    %1 = vector.load %arg2[%c0_1, %c0_2] : memref<512x128xbf16, #tpu.memory_space<vmem>>, vector<512x128xbf16>
    %cst = arith.constant dense<0.000000e+00> : vector<288x128xf32>
    %2 = tpu.matmul %0, %1, %cst {dimension_numbers = #tpu.dot_dimension_numbers<[1], [0], [0], [1], [0, 0, 1, 1], [], []>} : vector<288x512xbf16>, vector<512x128xbf16>, vector<288x128xf32> -> vector<288x128xf32>
    %c0_3 = arith.constant 0 : index
    %c0_4 = arith.constant 0 : index
    %3 = vector.load %arg3[%c0_3, %c0_4] : memref<1x128xf32, #tpu.memory_space<vmem>>, vector<1x128xf32>
    %4 = vector.broadcast %3 : vector<1x128xf32> to vector<288x128xf32>
    %5 = arith.addf %2, %4 : vector<288x128xf32>
    %c0_5 = arith.constant 0 : index
    %c0_6 = arith.constant 0 : index
    %6 = vector.load %arg4[%c0_5, %c0_6] : memref<288x128xf32, #tpu.memory_space<vmem>>, vector<288x128xf32>
    tpu.vector_store %arg4[%c0_5, %c0_6], %5 {strides = array<i32>} : memref<288x128xf32, #tpu.memory_space<vmem>>, vector<288x128xf32>,
    return
  }
  func.func @transform_0(%arg0: i32) -> (i32, i32) {
    %c0_i32 = arith.constant 0 : i32
    %c0_i32_0 = arith.constant 0 : i32
    return %arg0, %c0_i32 : i32, i32
  }
  func.func @transform_1(%arg0: i32) -> (i32, i32) {
    %c0_i32 = arith.constant 0 : i32
    %c0_i32_0 = arith.constant 0 : i32
    %c0_i32_1 = arith.constant 0 : i32
    return %c0_i32, %c0_i32_0 : i32, i32
  }
  func.func @transform_2(%arg0: i32) -> (i32, i32) {
    %c0_i32 = arith.constant 0 : i32
    %c0_i32_0 = arith.constant 0 : i32
    %c0_i32_1 = arith.constant 0 : i32
    return %c0_i32, %c0_i32_0 : i32, i32
  }
  func.func @transform_3(%arg0: i32) -> (i32, i32) {
    %c0_i32 = arith.constant 0 : i32
    %c0_i32_0 = arith.constant 0 : i32
    return %arg0, %c0_i32 : i32, i32
  }
}

module attributes {stable_mosaic.version = 11 : i64} {
  func.func @_matmul_bias_kernel(%arg0: i32, %arg1: memref<128x2304xbf16, #tpu.memory_space<vmem>>, %arg2: memref<2304x128xbf16, #tpu.memory_space<vmem>>, %arg3: memref<1x128xf32, #tpu.memory_space<vmem>>, %arg4: memref<128x128xf32, #tpu.memory_space<vmem>>) attributes {dimension_semantics = [#tpu.dimension_semantics<parallel>], iteration_bounds = array<i64: 1>, scalar_prefetch = 0 : i64, scratch_operands = 0 : i64, tpu.core_type = #tpu.core_type<tc>, window_params = [{transform_indices = @transform_0, window_bounds = array<i64: 128, 2304>}, {pipeline_mode = #tpu.pipeline_mode<synchronous>, transform_indices = @transform_1, window_bounds = array<i64: 2304, 128>}, {pipeline_mode = #tpu.pipeline_mode<synchronous>, transform_indices = @transform_2, window_bounds = array<i64: 1, 128>}, {transform_indices = @transform_3, window_bounds = array<i64: 128, 128>}]} {
    %c0 = arith.constant 0 : index
    %c0_0 = arith.constant 0 : index
    %0 = vector.load %arg1[%c0, %c0_0] : memref<128x2304xbf16, #tpu.memory_space<vmem>>, vector<128x2304xbf16>
    %c0_1 = arith.constant 0 : index
    %c0_2 = arith.constant 0 : index
    %1 = vector.load %arg2[%c0_1, %c0_2] : memref<2304x128xbf16, #tpu.memory_space<vmem>>, vector<2304x128xbf16>
    %cst = arith.constant dense<0.000000e+00> : vector<128x128xf32>
    %2 = tpu.matmul %0, %1, %cst {dimension_numbers = #tpu.dot_dimension_numbers<[1], [0], [0], [1], [0, 0, 1, 1], [], []>} : vector<128x2304xbf16>, vector<2304x128xbf16>, vector<128x128xf32> -> vector<128x128xf32>
    %c0_3 = arith.constant 0 : index
    %c0_4 = arith.constant 0 : index
    %3 = vector.load %arg3[%c0_3, %c0_4] : memref<1x128xf32, #tpu.memory_space<vmem>>, vector<1x128xf32>
    %4 = vector.broadcast %3 : vector<1x128xf32> to vector<128x128xf32>
    %5 = arith.addf %2, %4 : vector<128x128xf32>
    %c0_5 = arith.constant 0 : index
    %c0_6 = arith.constant 0 : index
    %6 = vector.load %arg4[%c0_5, %c0_6] : memref<128x128xf32, #tpu.memory_space<vmem>>, vector<128x128xf32>
    tpu.vector_store %arg4[%c0_5, %c0_6], %5 {strides = array<i32>} : memref<128x128xf32, #tpu.memory_space<vmem>>, vector<128x128xf32>,
    return
  }
  func.func @transform_0(%arg0: i32) -> (i32, i32) {
    %c0_i32 = arith.constant 0 : i32
    %c0_i32_0 = arith.constant 0 : i32
    return %arg0, %c0_i32 : i32, i32
  }
  func.func @transform_1(%arg0: i32) -> (i32, i32) {
    %c0_i32 = arith.constant 0 : i32
    %c0_i32_0 = arith.constant 0 : i32
    %c0_i32_1 = arith.constant 0 : i32
    return %c0_i32, %c0_i32_0 : i32, i32
  }
  func.func @transform_2(%arg0: i32) -> (i32, i32) {
    %c0_i32 = arith.constant 0 : i32
    %c0_i32_0 = arith.constant 0 : i32
    %c0_i32_1 = arith.constant 0 : i32
    return %c0_i32, %c0_i32_0 : i32, i32
  }
  func.func @transform_3(%arg0: i32) -> (i32, i32) {
    %c0_i32 = arith.constant 0 : i32
    %c0_i32_0 = arith.constant 0 : i32
    return %arg0, %c0_i32 : i32, i32
  }
}

module attributes {stable_mosaic.version = 11 : i64} {
  func.func @_maxpool_relu_kernel(%arg0: i32, %arg1: memref<4x8x128xf32, #tpu.memory_space<vmem>>, %arg2: memref<8x128xf32, #tpu.memory_space<vmem>>) attributes {dimension_semantics = [#tpu.dimension_semantics<arbitrary>], iteration_bounds = array<i64: 1>, scalar_prefetch = 0 : i64, scratch_operands = 0 : i64, tpu.core_type = #tpu.core_type<tc>, window_params = [{pipeline_mode = #tpu.pipeline_mode<synchronous>, transform_indices = @transform_0, window_bounds = array<i64: 4, 8, 128>}, {pipeline_mode = #tpu.pipeline_mode<synchronous>, transform_indices = @transform_1, window_bounds = array<i64: 8, 128>}]} {
    %c0 = arith.constant 0 : index
    %c0_0 = arith.constant 0 : index
    %c0_1 = arith.constant 0 : index
    %0 = vector.load %arg1[%c0, %c0_0, %c0_1] : memref<4x8x128xf32, #tpu.memory_space<vmem>>, vector<1x8x128xf32>
    %1 = vector.shape_cast %0 : vector<1x8x128xf32> to vector<8x128xf32>
    %c1 = arith.constant 1 : index
    %c0_2 = arith.constant 0 : index
    %c0_3 = arith.constant 0 : index
    %2 = vector.load %arg1[%c1, %c0_2, %c0_3] : memref<4x8x128xf32, #tpu.memory_space<vmem>>, vector<1x8x128xf32>
    %3 = vector.shape_cast %2 : vector<1x8x128xf32> to vector<8x128xf32>
    %4 = arith.maximumf %1, %3 : vector<8x128xf32>
    %c2 = arith.constant 2 : index
    %c0_4 = arith.constant 0 : index
    %c0_5 = arith.constant 0 : index
    %5 = vector.load %arg1[%c2, %c0_4, %c0_5] : memref<4x8x128xf32, #tpu.memory_space<vmem>>, vector<1x8x128xf32>
    %6 = vector.shape_cast %5 : vector<1x8x128xf32> to vector<8x128xf32>
    %c3 = arith.constant 3 : index
    %c0_6 = arith.constant 0 : index
    %c0_7 = arith.constant 0 : index
    %7 = vector.load %arg1[%c3, %c0_6, %c0_7] : memref<4x8x128xf32, #tpu.memory_space<vmem>>, vector<1x8x128xf32>
    %8 = vector.shape_cast %7 : vector<1x8x128xf32> to vector<8x128xf32>
    %9 = arith.maximumf %6, %8 : vector<8x128xf32>
    %10 = arith.maximumf %4, %9 : vector<8x128xf32>
    %cst = arith.constant 0.000000e+00 : f32
    %11 = vector.broadcast %cst : f32 to vector<8x128xf32>
    %12 = arith.maximumf %10, %11 : vector<8x128xf32>
    %c0_8 = arith.constant 0 : index
    %c0_9 = arith.constant 0 : index
    %13 = vector.load %arg2[%c0_8, %c0_9] : memref<8x128xf32, #tpu.memory_space<vmem>>, vector<8x128xf32>
    tpu.vector_store %arg2[%c0_8, %c0_9], %12 {strides = array<i32>} : memref<8x128xf32, #tpu.memory_space<vmem>>, vector<8x128xf32>,
    return
  }
  func.func @transform_0(%arg0: i32) -> (i32, i32, i32) {
    %c0_i32 = arith.constant 0 : i32
    %c0_i32_0 = arith.constant 0 : i32
    %c0_i32_1 = arith.constant 0 : i32
    %c0_i32_2 = arith.constant 0 : i32
    return %c0_i32, %c0_i32_0, %c0_i32_1 : i32, i32, i32
  }
  func.func @transform_1(%arg0: i32) -> (i32, i32) {
    %c0_i32 = arith.constant 0 : i32
    %c0_i32_0 = arith.constant 0 : i32
    %c0_i32_1 = arith.constant 0 : i32
    return %c0_i32, %c0_i32_0 : i32, i32
  }
}

module attributes {stable_mosaic.version = 11 : i64} {
  func.func @_matmul_bias_kernel(%arg0: i32, %arg1: memref<32x256xbf16, #tpu.memory_space<vmem>>, %arg2: memref<256x128xbf16, #tpu.memory_space<vmem>>, %arg3: memref<1x128xf32, #tpu.memory_space<vmem>>, %arg4: memref<32x128xf32, #tpu.memory_space<vmem>>) attributes {dimension_semantics = [#tpu.dimension_semantics<parallel>], iteration_bounds = array<i64: 1>, scalar_prefetch = 0 : i64, scratch_operands = 0 : i64, tpu.core_type = #tpu.core_type<tc>, window_params = [{transform_indices = @transform_0, window_bounds = array<i64: 32, 256>}, {pipeline_mode = #tpu.pipeline_mode<synchronous>, transform_indices = @transform_1, window_bounds = array<i64: 256, 128>}, {pipeline_mode = #tpu.pipeline_mode<synchronous>, transform_indices = @transform_2, window_bounds = array<i64: 1, 128>}, {transform_indices = @transform_3, window_bounds = array<i64: 32, 128>}]} {
    %c0 = arith.constant 0 : index
    %c0_0 = arith.constant 0 : index
    %0 = vector.load %arg1[%c0, %c0_0] : memref<32x256xbf16, #tpu.memory_space<vmem>>, vector<32x256xbf16>
    %c0_1 = arith.constant 0 : index
    %c0_2 = arith.constant 0 : index
    %1 = vector.load %arg2[%c0_1, %c0_2] : memref<256x128xbf16, #tpu.memory_space<vmem>>, vector<256x128xbf16>
    %cst = arith.constant dense<0.000000e+00> : vector<32x128xf32>
    %2 = tpu.matmul %0, %1, %cst {dimension_numbers = #tpu.dot_dimension_numbers<[1], [0], [0], [1], [0, 0, 1, 1], [], []>} : vector<32x256xbf16>, vector<256x128xbf16>, vector<32x128xf32> -> vector<32x128xf32>
    %c0_3 = arith.constant 0 : index
    %c0_4 = arith.constant 0 : index
    %3 = vector.load %arg3[%c0_3, %c0_4] : memref<1x128xf32, #tpu.memory_space<vmem>>, vector<1x128xf32>
    %4 = vector.broadcast %3 : vector<1x128xf32> to vector<32x128xf32>
    %5 = arith.addf %2, %4 : vector<32x128xf32>
    %c0_5 = arith.constant 0 : index
    %c0_6 = arith.constant 0 : index
    %6 = vector.load %arg4[%c0_5, %c0_6] : memref<32x128xf32, #tpu.memory_space<vmem>>, vector<32x128xf32>
    tpu.vector_store %arg4[%c0_5, %c0_6], %5 {strides = array<i32>} : memref<32x128xf32, #tpu.memory_space<vmem>>, vector<32x128xf32>,
    return
  }
  func.func @transform_0(%arg0: i32) -> (i32, i32) {
    %c0_i32 = arith.constant 0 : i32
    %c0_i32_0 = arith.constant 0 : i32
    return %arg0, %c0_i32 : i32, i32
  }
  func.func @transform_1(%arg0: i32) -> (i32, i32) {
    %c0_i32 = arith.constant 0 : i32
    %c0_i32_0 = arith.constant 0 : i32
    %c0_i32_1 = arith.constant 0 : i32
    return %c0_i32, %c0_i32_0 : i32, i32
  }
  func.func @transform_2(%arg0: i32) -> (i32, i32) {
    %c0_i32 = arith.constant 0 : i32
    %c0_i32_0 = arith.constant 0 : i32
    %c0_i32_1 = arith.constant 0 : i32
    return %c0_i32, %c0_i32_0 : i32, i32
  }
  func.func @transform_3(%arg0: i32) -> (i32, i32) {
    %c0_i32 = arith.constant 0 : i32
    %c0_i32_0 = arith.constant 0 : i32
    return %arg0, %c0_i32 : i32, i32
  }
}

module attributes {stable_mosaic.version = 11 : i64} {
  func.func @_matmul_bias_kernel(%arg0: i32, %arg1: memref<32x512xbf16, #tpu.memory_space<vmem>>, %arg2: memref<512x128xbf16, #tpu.memory_space<vmem>>, %arg3: memref<1x128xf32, #tpu.memory_space<vmem>>, %arg4: memref<32x128xf32, #tpu.memory_space<vmem>>) attributes {dimension_semantics = [#tpu.dimension_semantics<parallel>], iteration_bounds = array<i64: 1>, scalar_prefetch = 0 : i64, scratch_operands = 0 : i64, tpu.core_type = #tpu.core_type<tc>, window_params = [{transform_indices = @transform_0, window_bounds = array<i64: 32, 512>}, {pipeline_mode = #tpu.pipeline_mode<synchronous>, transform_indices = @transform_1, window_bounds = array<i64: 512, 128>}, {pipeline_mode = #tpu.pipeline_mode<synchronous>, transform_indices = @transform_2, window_bounds = array<i64: 1, 128>}, {transform_indices = @transform_3, window_bounds = array<i64: 32, 128>}]} {
    %c0 = arith.constant 0 : index
    %c0_0 = arith.constant 0 : index
    %0 = vector.load %arg1[%c0, %c0_0] : memref<32x512xbf16, #tpu.memory_space<vmem>>, vector<32x512xbf16>
    %c0_1 = arith.constant 0 : index
    %c0_2 = arith.constant 0 : index
    %1 = vector.load %arg2[%c0_1, %c0_2] : memref<512x128xbf16, #tpu.memory_space<vmem>>, vector<512x128xbf16>
    %cst = arith.constant dense<0.000000e+00> : vector<32x128xf32>
    %2 = tpu.matmul %0, %1, %cst {dimension_numbers = #tpu.dot_dimension_numbers<[1], [0], [0], [1], [0, 0, 1, 1], [], []>} : vector<32x512xbf16>, vector<512x128xbf16>, vector<32x128xf32> -> vector<32x128xf32>
    %c0_3 = arith.constant 0 : index
    %c0_4 = arith.constant 0 : index
    %3 = vector.load %arg3[%c0_3, %c0_4] : memref<1x128xf32, #tpu.memory_space<vmem>>, vector<1x128xf32>
    %4 = vector.broadcast %3 : vector<1x128xf32> to vector<32x128xf32>
    %5 = arith.addf %2, %4 : vector<32x128xf32>
    %c0_5 = arith.constant 0 : index
    %c0_6 = arith.constant 0 : index
    %6 = vector.load %arg4[%c0_5, %c0_6] : memref<32x128xf32, #tpu.memory_space<vmem>>, vector<32x128xf32>
    tpu.vector_store %arg4[%c0_5, %c0_6], %5 {strides = array<i32>} : memref<32x128xf32, #tpu.memory_space<vmem>>, vector<32x128xf32>,
    return
  }
  func.func @transform_0(%arg0: i32) -> (i32, i32) {
    %c0_i32 = arith.constant 0 : i32
    %c0_i32_0 = arith.constant 0 : i32
    return %arg0, %c0_i32 : i32, i32
  }
  func.func @transform_1(%arg0: i32) -> (i32, i32) {
    %c0_i32 = arith.constant 0 : i32
    %c0_i32_0 = arith.constant 0 : i32
    %c0_i32_1 = arith.constant 0 : i32
    return %c0_i32, %c0_i32_0 : i32, i32
  }
  func.func @transform_2(%arg0: i32) -> (i32, i32) {
    %c0_i32 = arith.constant 0 : i32
    %c0_i32_0 = arith.constant 0 : i32
    %c0_i32_1 = arith.constant 0 : i32
    return %c0_i32, %c0_i32_0 : i32, i32
  }
  func.func @transform_3(%arg0: i32) -> (i32, i32) {
    %c0_i32 = arith.constant 0 : i32
    %c0_i32_0 = arith.constant 0 : i32
    return %arg0, %c0_i32 : i32, i32
  }
}

module attributes {stable_mosaic.version = 11 : i64} {
  func.func @_matmul_bias_kernel(%arg0: i32, %arg1: memref<16x1408xbf16, #tpu.memory_space<vmem>>, %arg2: memref<1408x128xbf16, #tpu.memory_space<vmem>>, %arg3: memref<1x128xf32, #tpu.memory_space<vmem>>, %arg4: memref<16x128xf32, #tpu.memory_space<vmem>>) attributes {dimension_semantics = [#tpu.dimension_semantics<parallel>], iteration_bounds = array<i64: 1>, scalar_prefetch = 0 : i64, scratch_operands = 0 : i64, tpu.core_type = #tpu.core_type<tc>, window_params = [{transform_indices = @transform_0, window_bounds = array<i64: 16, 1408>}, {pipeline_mode = #tpu.pipeline_mode<synchronous>, transform_indices = @transform_1, window_bounds = array<i64: 1408, 128>}, {pipeline_mode = #tpu.pipeline_mode<synchronous>, transform_indices = @transform_2, window_bounds = array<i64: 1, 128>}, {transform_indices = @transform_3, window_bounds = array<i64: 16, 128>}]} {
    %c0 = arith.constant 0 : index
    %c0_0 = arith.constant 0 : index
    %0 = vector.load %arg1[%c0, %c0_0] : memref<16x1408xbf16, #tpu.memory_space<vmem>>, vector<16x1408xbf16>
    %c0_1 = arith.constant 0 : index
    %c0_2 = arith.constant 0 : index
    %1 = vector.load %arg2[%c0_1, %c0_2] : memref<1408x128xbf16, #tpu.memory_space<vmem>>, vector<1408x128xbf16>
    %cst = arith.constant dense<0.000000e+00> : vector<16x128xf32>
    %2 = tpu.matmul %0, %1, %cst {dimension_numbers = #tpu.dot_dimension_numbers<[1], [0], [0], [1], [0, 0, 1, 1], [], []>} : vector<16x1408xbf16>, vector<1408x128xbf16>, vector<16x128xf32> -> vector<16x128xf32>
    %c0_3 = arith.constant 0 : index
    %c0_4 = arith.constant 0 : index
    %3 = vector.load %arg3[%c0_3, %c0_4] : memref<1x128xf32, #tpu.memory_space<vmem>>, vector<1x128xf32>
    %4 = vector.broadcast %3 : vector<1x128xf32> to vector<16x128xf32>
    %5 = arith.addf %2, %4 : vector<16x128xf32>
    %c0_5 = arith.constant 0 : index
    %c0_6 = arith.constant 0 : index
    %6 = vector.load %arg4[%c0_5, %c0_6] : memref<16x128xf32, #tpu.memory_space<vmem>>, vector<16x128xf32>
    tpu.vector_store %arg4[%c0_5, %c0_6], %5 {strides = array<i32>} : memref<16x128xf32, #tpu.memory_space<vmem>>, vector<16x128xf32>,
    return
  }
  func.func @transform_0(%arg0: i32) -> (i32, i32) {
    %c0_i32 = arith.constant 0 : i32
    %c0_i32_0 = arith.constant 0 : i32
    return %arg0, %c0_i32 : i32, i32
  }
  func.func @transform_1(%arg0: i32) -> (i32, i32) {
    %c0_i32 = arith.constant 0 : i32
    %c0_i32_0 = arith.constant 0 : i32
    %c0_i32_1 = arith.constant 0 : i32
    return %c0_i32, %c0_i32_0 : i32, i32
  }
  func.func @transform_2(%arg0: i32) -> (i32, i32) {
    %c0_i32 = arith.constant 0 : i32
    %c0_i32_0 = arith.constant 0 : i32
    %c0_i32_1 = arith.constant 0 : i32
    return %c0_i32, %c0_i32_0 : i32, i32
  }
  func.func @transform_3(%arg0: i32) -> (i32, i32) {
    %c0_i32 = arith.constant 0 : i32
    %c0_i32_0 = arith.constant 0 : i32
    return %arg0, %c0_i32 : i32, i32
  }
}

</mosaic_0001>

<llo_original>
// kernel: net_forward.13
$region0: #{net_forward.13}
  #allocation0 [shape = 'u32[]', space=smem, size = 0x4, offset = 0x4, fixed_abs, tag = 'smem constant byte address 0x4 - core index']
  #allocation1 [shape = 'u32[72,128]{1,0:T(1,128)}', space=vmem, size = 0x9000, scoped, tag = 'internal scratch']
  %s0 = inlined_call_operand.vmem [shape: bf16[1280,128], index: 0, kind: input, shape index: {}]
  %s1 = inlined_call_operand.vmem [shape: bf16[128,128], index: 1, kind: input, shape index: {}]
  %s2 = inlined_call_operand.vmem [shape: f32[1,128], index: 2, kind: input, shape index: {}]
  %s3 = inlined_call_operand.vmem [shape: f32[1280,128], index: 3, kind: output, shape index: {}]
  %s4 = sld [smem:[#allocation0]]
  $region45: #{net_forward.13} parent=0
    _
  %s6 = ssub.s32 1, %s4
  %s7 = scalar_select 0, %s6, %s4
  loop: start=0, step=1, limit=7
  $region2: #{net_forward.13} parent=0 // loop_pre_header
    _
  $region3: #{net_forward.13} parent=0 // loop_header
    %s9 = sphi 0, %s13
    %p10 = scmp.ge.s32.totalorder %s9, 7
    %s19 = sphi 0, %s21
    %s22 = sphi 0, %s19
    %s23 = sphi 0, %s22
    %s39 = sphi 0, %s23
    %s43 = sphi 0, %s43
    %s45 = sphi 0, %s43
    %s46 = sphi 0, %s45
    %s60 = sphi 0, %s46
    %s64 = sphi 0, %s64
    %s66 = sphi 0, %s64
    %s67 = sphi 0, %s66
    %s81 = sphi 0, %s67
    %s87 = sphi 0, %s89
    %s90 = sphi 0, %s87
    %s91 = sphi 0, %s90
    %s107 = sphi 0, %s91
  $region4: #{net_forward.13} parent=0 // loop_header_branch
    %12 = sbr.rel (%p10) target = $region8
  $region5: #{net_forward.13} parent=0 // loop_body
    %s14 = ssub.s32 %s9, 1
    %s15 = ssub.s32 %s9, 2
    %s16 = sadd.s32 %s9, 1
    %s17 = ssub.s32 %s9, %s16
    %p18 = scmp.eq.s32.totalorder %s17, 0
    %s20 = sadd.s32 %s19, 1
    %s21 = scalar_select %p18, %s19, %s20
    %p24 = pneg %p18
    %p25 = scmp.eq.s32.totalorder %s9, 4
    %p26 = por %p24, %p25
    %p27 = scmp.ne.s32.totalorder %s19, %s22
    %p28 = scmp.eq.s32.totalorder %s9, 0
    %p29 = por %p27, %p28
    %p30 = scmp.ne.s32.totalorder %s19, %s22
    %p31 = scmp.eq.s32.totalorder %s14, 4
    %p32 = por %p30, %p31
    %p33 = scmp.ne.s32.totalorder %s22, %s23
    %p34 = scmp.eq.s32.totalorder %s14, 0
    %p35 = por %p33, %p34
    %p36 = scmp.ne.s32.totalorder %s22, %s23
    %p37 = scmp.eq.s32.totalorder %s15, 4
    %p38 = por %p36, %p37
    %p40 = scmp.ne.s32.totalorder %s23, %s39
    %p41 = scmp.eq.s32.totalorder %s15, 0
    %p42 = por %p40, %p41
    %s44 = sadd.s32 %s43, 1
    %p47 = scmp.eq.s32.totalorder %s9, 4
    %p48 = scmp.ne.s32.totalorder %s43, %s45
    %p49 = scmp.eq.s32.totalorder %s9, 0
    %p50 = por %p48, %p49
    %p51 = scmp.ne.s32.totalorder %s43, %s45
    %p52 = scmp.eq.s32.totalorder %s14, 4
    %p53 = por %p51, %p52
    %p54 = scmp.ne.s32.totalorder %s45, %s46
    %p55 = scmp.eq.s32.totalorder %s14, 0
    %p56 = por %p54, %p55
    %p57 = scmp.ne.s32.totalorder %s45, %s46
    %p58 = scmp.eq.s32.totalorder %s15, 4
    %p59 = por %p57, %p58
    %p61 = scmp.ne.s32.totalorder %s46, %s60
    %p62 = scmp.eq.s32.totalorder %s15, 0
    %p63 = por %p61, %p62
    %s65 = sadd.s32 %s64, 1
    %p68 = scmp.eq.s32.totalorder %s9, 4
    %p69 = scmp.ne.s32.totalorder %s64, %s66
    %p70 = scmp.eq.s32.totalorder %s9, 0
    %p71 = por %p69, %p70
    %p72 = scmp.ne.s32.totalorder %s64, %s66
    %p73 = scmp.eq.s32.totalorder %s14, 4
    %p74 = por %p72, %p73
    %p75 = scmp.ne.s32.totalorder %s66, %s67
    %p76 = scmp.eq.s32.totalorder %s14, 0
    %p77 = por %p75, %p76
    %p78 = scmp.ne.s32.totalorder %s66, %s67
    %p79 = scmp.eq.s32.totalorder %s15, 4
    %p80 = por %p78, %p79
    %p82 = scmp.ne.s32.totalorder %s67, %s81
    %p83 = scmp.eq.s32.totalorder %s15, 0
    %p84 = por %p82, %p83
    %s85 = ssub.s32 %s9, %s16
    %p86 = scmp.eq.s32.totalorder %s85, 0
    %s88 = sadd.s32 %s87, 1
    %s89 = scalar_select %p86, %s87, %s88
    %p92 = pneg %p86
    %p93 = scmp.eq.s32.totalorder %s9, 4
    %p94 = por %p92, %p93
    %p95 = scmp.ne.s32.totalorder %s87, %s90
    %p96 = scmp.eq.s32.totalorder %s9, 0
    %p97 = por %p95, %p96
    %p98 = scmp.ne.s32.totalorder %s87, %s90
    %p99 = scmp.eq.s32.totalorder %s14, 4
    %p100 = por %p98, %p99
    %p101 = scmp.ne.s32.totalorder %s90, %s91
    %p102 = scmp.eq.s32.totalorder %s14, 0
    %p103 = por %p101, %p102
    %p104 = scmp.ne.s32.totalorder %s90, %s91
    %p105 = scmp.eq.s32.totalorder %s15, 4
    %p106 = por %p104, %p105
    %p108 = scmp.ne.s32.totalorder %s91, %s107
    %p109 = scmp.eq.s32.totalorder %s15, 0
    %p110 = por %p108, %p109
    %p111 = scmp.le.s32.totalorder 1, %s9
    %p112 = scmp.lt.s32.totalorder %s9, 6
    %p113 = pnand %p111, %p112
    %p114 = pneg %p113
    // Predicated region
    $region9: #{net_forward.13} parent=5 // pred_check
      _
    $region10: #{net_forward.13} parent=5 // pred_check_branch
      %116 = sbr.rel (%p113) target = $region12
    $region11: #{net_forward.13} parent=5 // pred_region
      %s117 = ssub.s32 %s9, 1
      // Predicated region
      $region13: #{net_forward.13} parent=11 // pred_check
        %p118 = pneg %p56
      $region14: #{net_forward.13} parent=11 // pred_check_branch
        %120 = sbr.rel (%p118) target = $region16
      $region15: #{net_forward.13} parent=11 // pred_region
        _
      $region16: #{net_forward.13} parent=11 // pred_fallthru
        _
      // Predicated region
      $region17: #{net_forward.13} parent=11 // pred_check
        %p121 = pneg %p77
      $region18: #{net_forward.13} parent=11 // pred_check_branch
        %123 = sbr.rel (%p121) target = $region20
      $region19: #{net_forward.13} parent=11 // pred_region
        _
      $region20: #{net_forward.13} parent=11 // pred_fallthru
        _
    $region12: #{net_forward.13} parent=5 // pred_fallthru
      _
    %p124 = scmp.lt.s32.totalorder %s9, 5
    // Predicated region
    $region21: #{net_forward.13} parent=5 // pred_check
      %p125 = pneg %p124
    $region22: #{net_forward.13} parent=5 // pred_check_branch
      %127 = sbr.rel (%p125) target = $region24
    $region23: #{net_forward.13} parent=5 // pred_region
      // Predicated region
      $region25: #{net_forward.13} parent=23 // pred_check
        %p128 = pneg %p29
      $region26: #{net_forward.13} parent=23 // pred_check_branch
        %130 = sbr.rel (%p128) target = $region28
      $region27: #{net_forward.13} parent=23 // pred_region
        %s131 = smul.u32 32, %s9
        %p132 = scmp.lt.s32.totalorder %s131, 159
        %s133 = scalar_select %p132, %s131, 159
        %s134 = smul.addr %s133, 4
        %s135 = scalar_lea.vmem %s0, %s134
        %s136 = smul.u32 32, %s9
      $region28: #{net_forward.13} parent=23 // pred_fallthru
        _
    $region24: #{net_forward.13} parent=5 // pred_fallthru
      _
    %p137 = scmp.le.s32.totalorder 1, %s9
    %p138 = scmp.lt.s32.totalorder %s9, 6
    %p139 = pnand %p137, %p138
    %p140 = pneg %p139
    // Predicated region
    $region29: #{net_forward.13} parent=5 // pred_check
      _
    $region30: #{net_forward.13} parent=5 // pred_check_branch
      %142 = sbr.rel (%p139) target = $region32
    $region31: #{net_forward.13} parent=5 // pred_region
      %s143 = ssub.s32 %s9, 1
      %s144 = smul.u32 32, %s14
      %p145 = scmp.lt.s32.totalorder %s144, 159
      %s146 = scalar_select %p145, %s144, 159
      %s147 = smul.addr %s146, 4
      %s148 = scalar_lea.vmem %s0, %s147
      %p149 = pneg %p35
      %p150 = pneg %p32
      %p151 = pneg %p56
      %p152 = pneg %p53
      %p153 = pneg %p77
      %p154 = pneg %p74
      %p155 = pneg %p103
      %p156 = pneg %p100
      %s157 = smul.u32 32, %s14
      %p158 = scmp.lt.s32.totalorder %s157, 159
      %s159 = scalar_select %p158, %s157, 159
      %s160 = smul.addr %s159, 8
      %s161 = scalar_lea.vmem %s3, %s160
      %s162 = smul.u32 32, %s14
      %p163 = scmp.lt.s32.totalorder %s162, 159
      %s164 = scalar_select %p163, %s162, 159
      %s165 = smul.addr %s164, 4
      %s166 = scalar_lea.vmem %s0, %s165
      %s167 = smul.u32 32, %s14
      %s168 = smul.u32 32, %s14
      %p169 = scmp.lt.s32.totalorder %s168, 159
      %s170 = scalar_select %p169, %s168, 159
      %s171 = smul.addr %s170, 8
      %s172 = scalar_lea.vmem %s3, %s171
      %s173 = smul.u32 32, %s14
      %v174 = vld [vmem:[%s166] sm:$0xf]
      %v175 = vld [vmem:[%s166 + $0x4] sm:$0xf]
      %v176 = vld [vmem:[%s166 + $0x8] sm:$0xf]
      %v177 = vld [vmem:[%s166 + $0xc] sm:$0xf]
      %v178 = vld [vmem:[%s166 + $0x10] sm:$0xf]
      %v179 = vld [vmem:[%s166 + $0x14] sm:$0xf]
      %v180 = vld [vmem:[%s166 + $0x18] sm:$0xf]
      %v181 = vld [vmem:[%s166 + $0x1c] sm:$0xf]
      %v182 = vld [vmem:[%s166 + $0x20] sm:$0xf]
      %v183 = vld [vmem:[%s166 + $0x24] sm:$0xf]
      %v184 = vld [vmem:[%s166 + $0x28] sm:$0xf]
      %v185 = vld [vmem:[%s166 + $0x2c] sm:$0xf]
      %v186 = vld [vmem:[%s166 + $0x30] sm:$0xf]
      %v187 = vld [vmem:[%s166 + $0x34] sm:$0xf]
      %v188 = vld [vmem:[%s166 + $0x38] sm:$0xf]
      %v189 = vld [vmem:[%s166 + $0x3c] sm:$0xf]
      %v190 = vld [vmem:[%s166 + $0x40] sm:$0xf]
      %v191 = vld [vmem:[%s166 + $0x44] sm:$0xf]
      %v192 = vld [vmem:[%s166 + $0x48] sm:$0xf]
      %v193 = vld [vmem:[%s166 + $0x4c] sm:$0xf]
      %v194 = vld [vmem:[%s166 + $0x50] sm:$0xf]
      %v195 = vld [vmem:[%s166 + $0x54] sm:$0xf]
      %v196 = vld [vmem:[%s166 + $0x58] sm:$0xf]
      %v197 = vld [vmem:[%s166 + $0x5c] sm:$0xf]
      %v198 = vld [vmem:[%s166 + $0x60] sm:$0xf]
      %v199 = vld [vmem:[%s166 + $0x64] sm:$0xf]
      %v200 = vld [vmem:[%s166 + $0x68] sm:$0xf]
      %v201 = vld [vmem:[%s166 + $0x6c] sm:$0xf]
      %v202 = vld [vmem:[%s166 + $0x70] sm:$0xf]
      %v203 = vld [vmem:[%s166 + $0x74] sm:$0xf]
      %v204 = vld [vmem:[%s166 + $0x78] sm:$0xf]
      %v205 = vld [vmem:[%s166 + $0x7c] sm:$0xf]
      %v206 = vld [vmem:[%s1] sm:$0xf]
      %v207 = vld [vmem:[%s1 + $0x4] sm:$0xf]
      %v208 = vld [vmem:[%s1 + $0x8] sm:$0xf]
      %v209 = vld [vmem:[%s1 + $0xc] sm:$0xf]
      %v210 = vld [vmem:[%s1 + $0x10] sm:$0xf]
      %v211 = vld [vmem:[%s1 + $0x14] sm:$0xf]
      %v212 = vld [vmem:[%s1 + $0x18] sm:$0xf]
      %v213 = vld [vmem:[%s1 + $0x1c] sm:$0xf]
      %v214 = vld [vmem:[%s1 + $0x20] sm:$0xf]
      %v215 = vld [vmem:[%s1 + $0x24] sm:$0xf]
      %v216 = vld [vmem:[%s1 + $0x28] sm:$0xf]
      %v217 = vld [vmem:[%s1 + $0x2c] sm:$0xf]
      %v218 = vld [vmem:[%s1 + $0x30] sm:$0xf]
      %v219 = vld [vmem:[%s1 + $0x34] sm:$0xf]
      %v220 = vld [vmem:[%s1 + $0x38] sm:$0xf]
      %v221 = vld [vmem:[%s1 + $0x3c] sm:$0xf]
      %v222 = vld [vmem:[%s2] sm:$0x1]
      %v224 = vperm.slane %v222, 0
      %v258 = vunpack.c.l.b16 %v174
      %v259 = vunpack.c.l.b16 %v175
      %v260 = vunpack.c.l.b16 %v176
      %v261 = vunpack.c.l.b16 %v177
      %v262 = vunpack.c.l.b16 %v178
      %v263 = vunpack.c.l.b16 %v179
      %v264 = vunpack.c.l.b16 %v180
      %v265 = vunpack.c.l.b16 %v181
      %v266 = vunpack.c.l.b16 %v182
      %v267 = vunpack.c.l.b16 %v183
      %v268 = vunpack.c.l.b16 %v184
      %v269 = vunpack.c.l.b16 %v185
      %v270 = vunpack.c.l.b16 %v186
      %v271 = vunpack.c.l.b16 %v187
      %v272 = vunpack.c.l.b16 %v188
      %v273 = vunpack.c.l.b16 %v189
      %v274 = vunpack.c.l.b16 %v190
      %v275 = vunpack.c.l.b16 %v191
      %v276 = vunpack.c.l.b16 %v192
      %v277 = vunpack.c.l.b16 %v193
      %v278 = vunpack.c.l.b16 %v194
      %v279 = vunpack.c.l.b16 %v195
      %v280 = vunpack.c.l.b16 %v196
      %v281 = vunpack.c.l.b16 %v197
      %v282 = vunpack.c.l.b16 %v198
      %v283 = vunpack.c.l.b16 %v199
      %v284 = vunpack.c.l.b16 %v200
      %v285 = vunpack.c.l.b16 %v201
      %v286 = vunpack.c.l.b16 %v202
      %v287 = vunpack.c.l.b16 %v203
      %v288 = vunpack.c.l.b16 %v204
      %v289 = vunpack.c.l.b16 %v205
      %v290 = vpack.c.b16 %v259, %v258
      %v291 = vpack.c.b16 %v261, %v260
      %v292 = vpack.c.b16 %v263, %v262
      %v293 = vpack.c.b16 %v265, %v264
      %v294 = vpack.c.b16 %v267, %v266
      %v295 = vpack.c.b16 %v269, %v268
      %v296 = vpack.c.b16 %v271, %v270
      %v297 = vpack.c.b16 %v273, %v272
      %v298 = vpack.c.b16 %v275, %v274
      %v299 = vpack.c.b16 %v277, %v276
      %v300 = vpack.c.b16 %v279, %v278
      %v301 = vpack.c.b16 %v281, %v280
      %v302 = vpack.c.b16 %v283, %v282
      %v303 = vpack.c.b16 %v285, %v284
      %v304 = vpack.c.b16 %v287, %v286
      %v305 = vpack.c.b16 %v289, %v288
      %v338 = vunpack.c.l.b16 %v206
      %v339 = vunpack.c.l.b16 %v207
      %v340 = vunpack.c.l.b16 %v208
      %v341 = vunpack.c.l.b16 %v209
      %v342 = vunpack.c.l.b16 %v210
      %v343 = vunpack.c.l.b16 %v211
      %v344 = vunpack.c.l.b16 %v212
      %v345 = vunpack.c.l.b16 %v213
      %v346 = vunpack.c.l.b16 %v214
      %v347 = vunpack.c.l.b16 %v215
      %v348 = vunpack.c.l.b16 %v216
      %v349 = vunpack.c.l.b16 %v217
      %v350 = vunpack.c.l.b16 %v218
      %v351 = vunpack.c.l.b16 %v219
      %v352 = vunpack.c.l.b16 %v220
      %v353 = vunpack.c.l.b16 %v221
      %v354 = vpack.c.b16 %v339, %v338
      %v355 = vpack.c.b16 %v341, %v340
      %v356 = vpack.c.b16 %v343, %v342
      %v357 = vpack.c.b16 %v345, %v344
      %v358 = vpack.c.b16 %v347, %v346
      %v359 = vpack.c.b16 %v349, %v348
      %v360 = vpack.c.b16 %v351, %v350
      %v361 = vpack.c.b16 %v353, %v352
      %370 = vmatpush.bf16.msra.mxu0 %v361
      %371 = vmatpush.bf16.msra.mxu0 %v360
      %372 = vmatpush.bf16.msra.mxu0 %v359
      %373 = vmatpush.bf16.msra.mxu0 %v358
      %374 = vmatpush.bf16.msra.mxu0 %v357
      %375 = vmatpush.bf16.msra.mxu0 %v356
      %376 = vmatpush.bf16.msra.mxu0 %v355
      %377 = vmatpush.bf16.msra.mxu0 %v354
      %378 = vmatmul.bf16.gmra.mxu0 %v290
      %v379 = vpop.f32.mrf.mxu0
      %v380 = vadd.f32 %v224, %v379
      %v381 = vpop.f32.mrf.mxu0
      %v382 = vadd.f32 %v224, %v381
      %383 = vmatmul.bf16.gmra.mxu0 %v291
      %v384 = vpop.f32.mrf.mxu0
      %v385 = vadd.f32 %v224, %v384
      %v386 = vpop.f32.mrf.mxu0
      %v387 = vadd.f32 %v224, %v386
      %388 = vmatmul.bf16.gmra.mxu0 %v292
      %v389 = vpop.f32.mrf.mxu0
      %v390 = vadd.f32 %v224, %v389
      %v391 = vpop.f32.mrf.mxu0
      %v392 = vadd.f32 %v224, %v391
      %393 = vmatmul.bf16.gmra.mxu0 %v293
      %v394 = vpop.f32.mrf.mxu0
      %v395 = vadd.f32 %v224, %v394
      %v396 = vpop.f32.mrf.mxu0
      %v397 = vadd.f32 %v224, %v396
      %398 = vmatmul.bf16.gmra.mxu0 %v294
      %v399 = vpop.f32.mrf.mxu0
      %v400 = vadd.f32 %v224, %v399
      %v401 = vpop.f32.mrf.mxu0
      %v402 = vadd.f32 %v224, %v401
      %403 = vmatmul.bf16.gmra.mxu0 %v295
      %v404 = vpop.f32.mrf.mxu0
      %v405 = vadd.f32 %v224, %v404
      %v406 = vpop.f32.mrf.mxu0
      %v407 = vadd.f32 %v224, %v406
      %408 = vmatmul.bf16.gmra.mxu0 %v296
      %v409 = vpop.f32.mrf.mxu0
      %v410 = vadd.f32 %v224, %v409
      %v411 = vpop.f32.mrf.mxu0
      %v412 = vadd.f32 %v224, %v411
      %413 = vmatmul.bf16.gmra.mxu0 %v297
      %v414 = vpop.f32.mrf.mxu0
      %v415 = vadd.f32 %v224, %v414
      %v416 = vpop.f32.mrf.mxu0
      %v417 = vadd.f32 %v224, %v416
      %418 = vmatmul.bf16.gmra.mxu0 %v298
      %v419 = vpop.f32.mrf.mxu0
      %v420 = vadd.f32 %v224, %v419
      %v421 = vpop.f32.mrf.mxu0
      %v422 = vadd.f32 %v224, %v421
      %423 = vmatmul.bf16.gmra.mxu0 %v299
      %v424 = vpop.f32.mrf.mxu0
      %v425 = vadd.f32 %v224, %v424
      %v426 = vpop.f32.mrf.mxu0
      %v427 = vadd.f32 %v224, %v426
      %428 = vmatmul.bf16.gmra.mxu0 %v300
      %v429 = vpop.f32.mrf.mxu0
      %v430 = vadd.f32 %v224, %v429
      %v431 = vpop.f32.mrf.mxu0
      %v432 = vadd.f32 %v224, %v431
      %433 = vmatmul.bf16.gmra.mxu0 %v301
      %v434 = vpop.f32.mrf.mxu0
      %v435 = vadd.f32 %v224, %v434
      %v436 = vpop.f32.mrf.mxu0
      %v437 = vadd.f32 %v224, %v436
      %438 = vmatmul.bf16.gmra.mxu0 %v302
      %v439 = vpop.f32.mrf.mxu0
      %v440 = vadd.f32 %v224, %v439
      %v441 = vpop.f32.mrf.mxu0
      %v442 = vadd.f32 %v224, %v441
      %443 = vmatmul.bf16.gmra.mxu0 %v303
      %v444 = vpop.f32.mrf.mxu0
      %v445 = vadd.f32 %v224, %v444
      %v446 = vpop.f32.mrf.mxu0
      %v447 = vadd.f32 %v224, %v446
      %448 = vmatmul.bf16.gmra.mxu0 %v304
      %v449 = vpop.f32.mrf.mxu0
      %v450 = vadd.f32 %v224, %v449
      %v451 = vpop.f32.mrf.mxu0
      %v452 = vadd.f32 %v224, %v451
      %453 = vmatmul.bf16.gmra.mxu0 %v305
      %v454 = vpop.f32.mrf.mxu0
      %v455 = vadd.f32 %v224, %v454
      %v456 = vpop.f32.mrf.mxu0
      %v457 = vadd.f32 %v224, %v456
      %458 = vdwg.mxu0
      %459 = vst [vmem:[%s172] sm:$0xff] %v380
      %460 = vst [vmem:[%s172 + $0x8] sm:$0xff] %v382
      %461 = vst [vmem:[%s172 + $0x10] sm:$0xff] %v385
      %462 = vst [vmem:[%s172 + $0x18] sm:$0xff] %v387
      %463 = vst [vmem:[%s172 + $0x20] sm:$0xff] %v390
      %464 = vst [vmem:[%s172 + $0x28] sm:$0xff] %v392
      %465 = vst [vmem:[%s172 + $0x30] sm:$0xff] %v395
      %466 = vst [vmem:[%s172 + $0x38] sm:$0xff] %v397
      %467 = vst [vmem:[%s172 + $0x40] sm:$0xff] %v400
      %468 = vst [vmem:[%s172 + $0x48] sm:$0xff] %v402
      %469 = vst [vmem:[%s172 + $0x50] sm:$0xff] %v405
      %470 = vst [vmem:[%s172 + $0x58] sm:$0xff] %v407
      %471 = vst [vmem:[%s172 + $0x60] sm:$0xff] %v410
      %472 = vst [vmem:[%s172 + $0x68] sm:$0xff] %v412
      %473 = vst [vmem:[%s172 + $0x70] sm:$0xff] %v415
      %474 = vst [vmem:[%s172 + $0x78] sm:$0xff] %v417
      %475 = vst [vmem:[%s172 + $0x80] sm:$0xff] %v420
      %476 = vst [vmem:[%s172 + $0x88] sm:$0xff] %v422
      %477 = vst [vmem:[%s172 + $0x90] sm:$0xff] %v425
      %478 = vst [vmem:[%s172 + $0x98] sm:$0xff] %v427
      %479 = vst [vmem:[%s172 + $0xa0] sm:$0xff] %v430
      %480 = vst [vmem:[%s172 + $0xa8] sm:$0xff] %v432
      %481 = vst [vmem:[%s172 + $0xb0] sm:$0xff] %v435
      %482 = vst [vmem:[%s172 + $0xb8] sm:$0xff] %v437
      %483 = vst [vmem:[%s172 + $0xc0] sm:$0xff] %v440
      %484 = vst [vmem:[%s172 + $0xc8] sm:$0xff] %v442
      %485 = vst [vmem:[%s172 + $0xd0] sm:$0xff] %v445
      %486 = vst [vmem:[%s172 + $0xd8] sm:$0xff] %v447
      %487 = vst [vmem:[%s172 + $0xe0] sm:$0xff] %v450
      %488 = vst [vmem:[%s172 + $0xe8] sm:$0xff] %v452
      %489 = vst [vmem:[%s172 + $0xf0] sm:$0xff] %v455
      %490 = vst [vmem:[%s172 + $0xf8] sm:$0xff] %v457
      %s491 = smul.u32 32, %s14
      %p492 = scmp.lt.s32.totalorder %s491, 159
      %s493 = scalar_select %p492, %s491, 159
      %s494 = smul.addr %s493, 8
      %s495 = scalar_lea.vmem %s3, %s494
      // Predicated region
      $region33: #{net_forward.13} parent=31 // pred_check
        %p496 = pneg %p100
      $region34: #{net_forward.13} parent=31 // pred_check_branch
        %498 = sbr.rel (%p496) target = $region36
      $region35: #{net_forward.13} parent=31 // pred_region
        %s499 = smul.u32 32, %s14
      $region36: #{net_forward.13} parent=31 // pred_fallthru
        _
    $region32: #{net_forward.13} parent=5 // pred_fallthru
      _
    %p500 = scmp.le.s32.totalorder 2, %s9
    // Predicated region
    $region37: #{net_forward.13} parent=5 // pred_check
      %p501 = pneg %p500
    $region38: #{net_forward.13} parent=5 // pred_check_branch
      %503 = sbr.rel (%p501) target = $region40
    $region39: #{net_forward.13} parent=5 // pred_region
      %s504 = ssub.s32 %s9, 2
      // Predicated region
      $region41: #{net_forward.13} parent=39 // pred_check
        %p505 = pneg %p106
      $region42: #{net_forward.13} parent=39 // pred_check_branch
        %507 = sbr.rel (%p505) target = $region44
      $region43: #{net_forward.13} parent=39 // pred_region
        %s508 = smul.u32 32, %s15
        %p509 = scmp.lt.s32.totalorder %s508, 159
        %s510 = scalar_select %p509, %s508, 159
        %s511 = smul.addr %s510, 8
        %s512 = scalar_lea.vmem %s3, %s511
      $region44: #{net_forward.13} parent=39 // pred_fallthru
        _
    $region40: #{net_forward.13} parent=5 // pred_fallthru
      _
  $region6: #{net_forward.13} parent=0 // loop_footer
    %s13 = sadd.s32 1, %s9
  $region7: #{net_forward.13} parent=0 // loop_footer_branch
    %8 = sbr.rel target = $region3
  $region8: #{net_forward.13} parent=0 // loop_exit
    _

// kernel: net_forward.14
$region0: #{net_forward.14}
  #allocation0 [shape = 'u32[]', space=smem, size = 0x4, offset = 0x4, fixed_abs, tag = 'smem constant byte address 0x4 - core index']
  #allocation1 [shape = 'u32[72,128]{1,0:T(1,128)}', space=vmem, size = 0x9000, scoped, tag = 'internal scratch']
  %s0 = inlined_call_operand.vmem [shape: f32[4,24,128], index: 0, kind: input, shape index: {}]
  %s1 = inlined_call_operand.vmem [shape: f32[24,128], index: 1, kind: output, shape index: {}]
  %s2 = sld [smem:[#allocation0]]
  $region14: #{net_forward.14} parent=0
    _
  %s4 = ssub.s32 1, %s2
  %s5 = scalar_select 0, %s4, %s2
  // Predicated region
  $region2: #{net_forward.14} parent=0 // pred_check
    _
  $region3: #{net_forward.14} parent=0 // pred_check_branch
    %7 = sbr.rel (0) target = $region5
  $region4: #{net_forward.14} parent=0 // pred_region
    _
  $region5: #{net_forward.14} parent=0 // pred_fallthru
    _
  %v8 = vld [vmem:[%s0] sm:$0xff]
  %v9 = vld [vmem:[%s0 + $0x8] sm:$0xff]
  %v10 = vld [vmem:[%s0 + $0x10] sm:$0xff]
  %s11 = scalar_lea.vmem %s0, 24
  %v12 = vld [vmem:[%s11] sm:$0xff]
  %v13 = vld [vmem:[%s11 + $0x8] sm:$0xff]
  %v14 = vld [vmem:[%s11 + $0x10] sm:$0xff]
  %v15 = vmax.f32 %v8, %v12
  %v16 = vmax.f32 %v9, %v13
  %v17 = vmax.f32 %v10, %v14
  %s18 = scalar_lea.vmem %s0, 48
  %v19 = vld [vmem:[%s18] sm:$0xff]
  %v20 = vld [vmem:[%s18 + $0x8] sm:$0xff]
  %v21 = vld [vmem:[%s18 + $0x10] sm:$0xff]
  %s22 = scalar_lea.vmem %s0, 72
  %v23 = vld [vmem:[%s22] sm:$0xff]
  %v24 = vld [vmem:[%s22 + $0x8] sm:$0xff]
  %v25 = vld [vmem:[%s22 + $0x10] sm:$0xff]
  %v26 = vmax.f32 %v19, %v23
  %v27 = vmax.f32 %v20, %v24
  %v28 = vmax.f32 %v21, %v25
  %v29 = vmax.f32 %v15, %v26
  %v30 = vmax.f32 %v16, %v27
  %v31 = vmax.f32 %v17, %v28
  %v32 = vmax.f32 %v29, 0.0
  %v33 = vmax.f32 %v30, 0.0
  %v34 = vmax.f32 %v31, 0.0
  %35 = vst [vmem:[%s1] sm:$0xff] %v32
  %36 = vst [vmem:[%s1 + $0x8] sm:$0xff] %v33
  %37 = vst [vmem:[%s1 + $0x10] sm:$0xff] %v34
  // Predicated region
  $region6: #{net_forward.14} parent=0 // pred_check
    _
  $region7: #{net_forward.14} parent=0 // pred_check_branch
    %39 = sbr.rel (0) target = $region9
  $region8: #{net_forward.14} parent=0 // pred_region
    _
  $region9: #{net_forward.14} parent=0 // pred_fallthru
    _
  // Predicated region
  $region10: #{net_forward.14} parent=0 // pred_check
    _
  $region11: #{net_forward.14} parent=0 // pred_check_branch
    %41 = sbr.rel (0) target = $region13
  $region12: #{net_forward.14} parent=0 // pred_region
    _
  $region13: #{net_forward.14} parent=0 // pred_fallthru
    _

// kernel: net_forward.15
$region0: #{net_forward.15}
  #allocation0 [shape = 'u32[]', space=smem, size = 0x4, offset = 0x4, fixed_abs, tag = 'smem constant byte address 0x4 - core index']
  #allocation1 [shape = 'u32[72,128]{1,0:T(1,128)}', space=vmem, size = 0x9000, scoped, tag = 'internal scratch']
  %s0 = inlined_call_operand.vmem [shape: bf16[288,128], index: 0, kind: input, shape index: {}]
  %s1 = inlined_call_operand.vmem [shape: bf16[128,128], index: 1, kind: input, shape index: {}]
  %s2 = inlined_call_operand.vmem [shape: f32[1,128], index: 2, kind: input, shape index: {}]
  %s3 = inlined_call_operand.vmem [shape: f32[288,128], index: 3, kind: output, shape index: {}]
  %s4 = sld [smem:[#allocation0]]
  $region22: #{net_forward.15} parent=0
    _
  %s6 = ssub.s32 1, %s4
  %s7 = scalar_select 0, %s6, %s4
  // Predicated region
  $region2: #{net_forward.15} parent=0 // pred_check
    _
  $region3: #{net_forward.15} parent=0 // pred_check_branch
    %9 = sbr.rel (0) target = $region5
  $region4: #{net_forward.15} parent=0 // pred_region
    _
  $region5: #{net_forward.15} parent=0 // pred_fallthru
    _
  // Predicated region
  $region6: #{net_forward.15} parent=0 // pred_check
    _
  $region7: #{net_forward.15} parent=0 // pred_check_branch
    %11 = sbr.rel (0) target = $region9
  $region8: #{net_forward.15} parent=0 // pred_region
    _
  $region9: #{net_forward.15} parent=0 // pred_fallthru
    _
  // Predicated region
  $region10: #{net_forward.15} parent=0 // pred_check
    _
  $region11: #{net_forward.15} parent=0 // pred_check_branch
    %13 = sbr.rel (0) target = $region13
  $region12: #{net_forward.15} parent=0 // pred_region
    _
  $region13: #{net_forward.15} parent=0 // pred_fallthru
    _
  %v14 = vld [vmem:[%s0] sm:$0xf]
  %v15 = vld [vmem:[%s0 + $0x4] sm:$0xf]
  %v16 = vld [vmem:[%s0 + $0x8] sm:$0xf]
  %v17 = vld [vmem:[%s0 + $0xc] sm:$0xf]
  %v18 = vld [vmem:[%s0 + $0x10] sm:$0xf]
  %v19 = vld [vmem:[%s0 + $0x14] sm:$0xf]
  %v20 = vld [vmem:[%s0 + $0x18] sm:$0xf]
  %v21 = vld [vmem:[%s0 + $0x1c] sm:$0xf]
  %v22 = vld [vmem:[%s0 + $0x20] sm:$0xf]
  %v23 = vld [vmem:[%s0 + $0x24] sm:$0xf]
  %v24 = vld [vmem:[%s0 + $0x28] sm:$0xf]
  %v25 = vld [vmem:[%s0 + $0x2c] sm:$0xf]
  %v26 = vld [vmem:[%s0 + $0x30] sm:$0xf]
  %v27 = vld [vmem:[%s0 + $0x34] sm:$0xf]
  %v28 = vld [vmem:[%s0 + $0x38] sm:$0xf]
  %v29 = vld [vmem:[%s0 + $0x3c] sm:$0xf]
  %v30 = vld [vmem:[%s0 + $0x40] sm:$0xf]
  %v31 = vld [vmem:[%s0 + $0x44] sm:$0xf]
  %v32 = vld [vmem:[%s0 + $0x48] sm:$0xf]
  %v33 = vld [vmem:[%s0 + $0x4c] sm:$0xf]
  %v34 = vld [vmem:[%s0 + $0x50] sm:$0xf]
  %v35 = vld [vmem:[%s0 + $0x54] sm:$0xf]
  %v36 = vld [vmem:[%s0 + $0x58] sm:$0xf]
  %v37 = vld [vmem:[%s0 + $0x5c] sm:$0xf]
  %v38 = vld [vmem:[%s0 + $0x60] sm:$0xf]
  %v39 = vld [vmem:[%s0 + $0x64] sm:$0xf]
  %v40 = vld [vmem:[%s0 + $0x68] sm:$0xf]
  %v41 = vld [vmem:[%s0 + $0x6c] sm:$0xf]
  %v42 = vld [vmem:[%s0 + $0x70] sm:$0xf]
  %v43 = vld [vmem:[%s0 + $0x74] sm:$0xf]
  %v44 = vld [vmem:[%s0 + $0x78] sm:$0xf]
  %v45 = vld [vmem:[%s0 + $0x7c] sm:$0xf]
  %v46 = vld [vmem:[%s0 + $0x80] sm:$0xf]
  %v47 = vld [vmem:[%s0 + $0x84] sm:$0xf]
  %v48 = vld [vmem:[%s0 + $0x88] sm:$0xf]
  %v49 = vld [vmem:[%s0 + $0x8c] sm:$0xf]
  %v50 = vld [vmem:[%s1] sm:$0xf]
  %v51 = vld [vmem:[%s1 + $0x4] sm:$0xf]
  %v52 = vld [vmem:[%s1 + $0x8] sm:$0xf]
  %v53 = vld [vmem:[%s1 + $0xc] sm:$0xf]
  %v54 = vld [vmem:[%s1 + $0x10] sm:$0xf]
  %v55 = vld [vmem:[%s1 + $0x14] sm:$0xf]
  %v56 = vld [vmem:[%s1 + $0x18] sm:$0xf]
  %v57 = vld [vmem:[%s1 + $0x1c] sm:$0xf]
  %v58 = vld [vmem:[%s1 + $0x20] sm:$0xf]
  %v59 = vld [vmem:[%s1 + $0x24] sm:$0xf]
  %v60 = vld [vmem:[%s1 + $0x28] sm:$0xf]
  %v61 = vld [vmem:[%s1 + $0x2c] sm:$0xf]
  %v62 = vld [vmem:[%s1 + $0x30] sm:$0xf]
  %v63 = vld [vmem:[%s1 + $0x34] sm:$0xf]
  %v64 = vld [vmem:[%s1 + $0x38] sm:$0xf]
  %v65 = vld [vmem:[%s1 + $0x3c] sm:$0xf]
  %v66 = vld [vmem:[%s2] sm:$0x1]
  %v68 = vperm.slane %v66, 0
  %v106 = vunpack.c.l.b16 %v14
  %v107 = vunpack.c.l.b16 %v15
  %v108 = vunpack.c.l.b16 %v16
  %v109 = vunpack.c.l.b16 %v17
  %v110 = vunpack.c.l.b16 %v18
  %v111 = vunpack.c.l.b16 %v19
  %v112 = vunpack.c.l.b16 %v20
  %v113 = vunpack.c.l.b16 %v21
  %v114 = vunpack.c.l.b16 %v22
  %v115 = vunpack.c.l.b16 %v23
  %v116 = vunpack.c.l.b16 %v24
  %v117 = vunpack.c.l.b16 %v25
  %v118 = vunpack.c.l.b16 %v26
  %v119 = vunpack.c.l.b16 %v27
  %v120 = vunpack.c.l.b16 %v28
  %v121 = vunpack.c.l.b16 %v29
  %v122 = vunpack.c.l.b16 %v30
  %v123 = vunpack.c.l.b16 %v31
  %v124 = vunpack.c.l.b16 %v32
  %v125 = vunpack.c.l.b16 %v33
  %v126 = vunpack.c.l.b16 %v34
  %v127 = vunpack.c.l.b16 %v35
  %v128 = vunpack.c.l.b16 %v36
  %v129 = vunpack.c.l.b16 %v37
  %v130 = vunpack.c.l.b16 %v38
  %v131 = vunpack.c.l.b16 %v39
  %v132 = vunpack.c.l.b16 %v40
  %v133 = vunpack.c.l.b16 %v41
  %v134 = vunpack.c.l.b16 %v42
  %v135 = vunpack.c.l.b16 %v43
  %v136 = vunpack.c.l.b16 %v44
  %v137 = vunpack.c.l.b16 %v45
  %v138 = vunpack.c.l.b16 %v46
  %v139 = vunpack.c.l.b16 %v47
  %v140 = vunpack.c.l.b16 %v48
  %v141 = vunpack.c.l.b16 %v49
  %v142 = vpack.c.b16 %v107, %v106
  %v143 = vpack.c.b16 %v109, %v108
  %v144 = vpack.c.b16 %v111, %v110
  %v145 = vpack.c.b16 %v113, %v112
  %v146 = vpack.c.b16 %v115, %v114
  %v147 = vpack.c.b16 %v117, %v116
  %v148 = vpack.c.b16 %v119, %v118
  %v149 = vpack.c.b16 %v121, %v120
  %v150 = vpack.c.b16 %v123, %v122
  %v151 = vpack.c.b16 %v125, %v124
  %v152 = vpack.c.b16 %v127, %v126
  %v153 = vpack.c.b16 %v129, %v128
  %v154 = vpack.c.b16 %v131, %v130
  %v155 = vpack.c.b16 %v133, %v132
  %v156 = vpack.c.b16 %v135, %v134
  %v157 = vpack.c.b16 %v137, %v136
  %v158 = vpack.c.b16 %v139, %v138
  %v159 = vpack.c.b16 %v141, %v140
  %v194 = vunpack.c.l.b16 %v50
  %v195 = vunpack.c.l.b16 %v51
  %v196 = vunpack.c.l.b16 %v52
  %v197 = vunpack.c.l.b16 %v53
  %v198 = vunpack.c.l.b16 %v54
  %v199 = vunpack.c.l.b16 %v55
  %v200 = vunpack.c.l.b16 %v56
  %v201 = vunpack.c.l.b16 %v57
  %v202 = vunpack.c.l.b16 %v58
  %v203 = vunpack.c.l.b16 %v59
  %v204 = vunpack.c.l.b16 %v60
  %v205 = vunpack.c.l.b16 %v61
  %v206 = vunpack.c.l.b16 %v62
  %v207 = vunpack.c.l.b16 %v63
  %v208 = vunpack.c.l.b16 %v64
  %v209 = vunpack.c.l.b16 %v65
  %v210 = vpack.c.b16 %v195, %v194
  %v211 = vpack.c.b16 %v197, %v196
  %v212 = vpack.c.b16 %v199, %v198
  %v213 = vpack.c.b16 %v201, %v200
  %v214 = vpack.c.b16 %v203, %v202
  %v215 = vpack.c.b16 %v205, %v204
  %v216 = vpack.c.b16 %v207, %v206
  %v217 = vpack.c.b16 %v209, %v208
  %226 = vmatpush.bf16.msra.mxu0 %v217
  %227 = vmatpush.bf16.msra.mxu0 %v216
  %228 = vmatpush.bf16.msra.mxu0 %v215
  %229 = vmatpush.bf16.msra.mxu0 %v214
  %230 = vmatpush.bf16.msra.mxu0 %v213
  %231 = vmatpush.bf16.msra.mxu0 %v212
  %232 = vmatpush.bf16.msra.mxu0 %v211
  %233 = vmatpush.bf16.msra.mxu0 %v210
  %234 = vmatmul.bf16.gmra.mxu0 %v142
  %v235 = vpop.f32.mrf.mxu0
  %v236 = vadd.f32 %v68, %v235
  %v237 = vpop.f32.mrf.mxu0
  %v238 = vadd.f32 %v68, %v237
  %239 = vmatmul.bf16.gmra.mxu0 %v143
  %v240 = vpop.f32.mrf.mxu0
  %v241 = vadd.f32 %v68, %v240
  %v242 = vpop.f32.mrf.mxu0
  %v243 = vadd.f32 %v68, %v242
  %244 = vmatmul.bf16.gmra.mxu0 %v144
  %v245 = vpop.f32.mrf.mxu0
  %v246 = vadd.f32 %v68, %v245
  %v247 = vpop.f32.mrf.mxu0
  %v248 = vadd.f32 %v68, %v247
  %249 = vmatmul.bf16.gmra.mxu0 %v145
  %v250 = vpop.f32.mrf.mxu0
  %v251 = vadd.f32 %v68, %v250
  %v252 = vpop.f32.mrf.mxu0
  %v253 = vadd.f32 %v68, %v252
  %254 = vmatmul.bf16.gmra.mxu0 %v146
  %v255 = vpop.f32.mrf.mxu0
  %v256 = vadd.f32 %v68, %v255
  %v257 = vpop.f32.mrf.mxu0
  %v258 = vadd.f32 %v68, %v257
  %259 = vmatmul.bf16.gmra.mxu0 %v147
  %v260 = vpop.f32.mrf.mxu0
  %v261 = vadd.f32 %v68, %v260
  %v262 = vpop.f32.mrf.mxu0
  %v263 = vadd.f32 %v68, %v262
  %264 = vmatmul.bf16.gmra.mxu0 %v148
  %v265 = vpop.f32.mrf.mxu0
  %v266 = vadd.f32 %v68, %v265
  %v267 = vpop.f32.mrf.mxu0
  %v268 = vadd.f32 %v68, %v267
  %269 = vmatmul.bf16.gmra.mxu0 %v149
  %v270 = vpop.f32.mrf.mxu0
  %v271 = vadd.f32 %v68, %v270
  %v272 = vpop.f32.mrf.mxu0
  %v273 = vadd.f32 %v68, %v272
  %274 = vmatmul.bf16.gmra.mxu0 %v150
  %v275 = vpop.f32.mrf.mxu0
  %v276 = vadd.f32 %v68, %v275
  %v277 = vpop.f32.mrf.mxu0
  %v278 = vadd.f32 %v68, %v277
  %279 = vmatmul.bf16.gmra.mxu0 %v151
  %v280 = vpop.f32.mrf.mxu0
  %v281 = vadd.f32 %v68, %v280
  %v282 = vpop.f32.mrf.mxu0
  %v283 = vadd.f32 %v68, %v282
  %284 = vmatmul.bf16.gmra.mxu0 %v152
  %v285 = vpop.f32.mrf.mxu0
  %v286 = vadd.f32 %v68, %v285
  %v287 = vpop.f32.mrf.mxu0
  %v288 = vadd.f32 %v68, %v287
  %289 = vmatmul.bf16.gmra.mxu0 %v153
  %v290 = vpop.f32.mrf.mxu0
  %v291 = vadd.f32 %v68, %v290
  %v292 = vpop.f32.mrf.mxu0
  %v293 = vadd.f32 %v68, %v292
  %294 = vmatmul.bf16.gmra.mxu0 %v154
  %v295 = vpop.f32.mrf.mxu0
  %v296 = vadd.f32 %v68, %v295
  %v297 = vpop.f32.mrf.mxu0
  %v298 = vadd.f32 %v68, %v297
  %299 = vmatmul.bf16.gmra.mxu0 %v155
  %v300 = vpop.f32.mrf.mxu0
  %v301 = vadd.f32 %v68, %v300
  %v302 = vpop.f32.mrf.mxu0
  %v303 = vadd.f32 %v68, %v302
  %304 = vmatmul.bf16.gmra.mxu0 %v156
  %v305 = vpop.f32.mrf.mxu0
  %v306 = vadd.f32 %v68, %v305
  %v307 = vpop.f32.mrf.mxu0
  %v308 = vadd.f32 %v68, %v307
  %309 = vmatmul.bf16.gmra.mxu0 %v157
  %v310 = vpop.f32.mrf.mxu0
  %v311 = vadd.f32 %v68, %v310
  %v312 = vpop.f32.mrf.mxu0
  %v313 = vadd.f32 %v68, %v312
  %314 = vmatmul.bf16.gmra.mxu0 %v158
  %v315 = vpop.f32.mrf.mxu0
  %v316 = vadd.f32 %v68, %v315
  %v317 = vpop.f32.mrf.mxu0
  %v318 = vadd.f32 %v68, %v317
  %319 = vmatmul.bf16.gmra.mxu0 %v159
  %v320 = vpop.f32.mrf.mxu0
  %v321 = vadd.f32 %v68, %v320
  %v322 = vpop.f32.mrf.mxu0
  %v323 = vadd.f32 %v68, %v322
  %324 = vdwg.mxu0
  %325 = vst [vmem:[%s3] sm:$0xff] %v236
  %326 = vst [vmem:[%s3 + $0x8] sm:$0xff] %v238
  %327 = vst [vmem:[%s3 + $0x10] sm:$0xff] %v241
  %328 = vst [vmem:[%s3 + $0x18] sm:$0xff] %v243
  %329 = vst [vmem:[%s3 + $0x20] sm:$0xff] %v246
  %330 = vst [vmem:[%s3 + $0x28] sm:$0xff] %v248
  %331 = vst [vmem:[%s3 + $0x30] sm:$0xff] %v251
  %332 = vst [vmem:[%s3 + $0x38] sm:$0xff] %v253
  %333 = vst [vmem:[%s3 + $0x40] sm:$0xff] %v256
  %334 = vst [vmem:[%s3 + $0x48] sm:$0xff] %v258
  %335 = vst [vmem:[%s3 + $0x50] sm:$0xff] %v261
  %336 = vst [vmem:[%s3 + $0x58] sm:$0xff] %v263
  %337 = vst [vmem:[%s3 + $0x60] sm:$0xff] %v266
  %338 = vst [vmem:[%s3 + $0x68] sm:$0xff] %v268
  %339 = vst [vmem:[%s3 + $0x70] sm:$0xff] %v271
  %340 = vst [vmem:[%s3 + $0x78] sm:$0xff] %v273
  %341 = vst [vmem:[%s3 + $0x80] sm:$0xff] %v276
  %342 = vst [vmem:[%s3 + $0x88] sm:$0xff] %v278
  %343 = vst [vmem:[%s3 + $0x90] sm:$0xff] %v281
  %344 = vst [vmem:[%s3 + $0x98] sm:$0xff] %v283
  %345 = vst [vmem:[%s3 + $0xa0] sm:$0xff] %v286
  %346 = vst [vmem:[%s3 + $0xa8] sm:$0xff] %v288
  %347 = vst [vmem:[%s3 + $0xb0] sm:$0xff] %v291
  %348 = vst [vmem:[%s3 + $0xb8] sm:$0xff] %v293
  %349 = vst [vmem:[%s3 + $0xc0] sm:$0xff] %v296
  %350 = vst [vmem:[%s3 + $0xc8] sm:$0xff] %v298
  %351 = vst [vmem:[%s3 + $0xd0] sm:$0xff] %v301
  %352 = vst [vmem:[%s3 + $0xd8] sm:$0xff] %v303
  %353 = vst [vmem:[%s3 + $0xe0] sm:$0xff] %v306
  %354 = vst [vmem:[%s3 + $0xe8] sm:$0xff] %v308
  %355 = vst [vmem:[%s3 + $0xf0] sm:$0xff] %v311
  %356 = vst [vmem:[%s3 + $0xf8] sm:$0xff] %v313
  %357 = vst [vmem:[%s3 + $0x100] sm:$0xff] %v316
  %358 = vst [vmem:[%s3 + $0x108] sm:$0xff] %v318
  %359 = vst [vmem:[%s3 + $0x110] sm:$0xff] %v321
  %360 = vst [vmem:[%s3 + $0x118] sm:$0xff] %v323
  // Predicated region
  $region14: #{net_forward.15} parent=0 // pred_check
    _
  $region15: #{net_forward.15} parent=0 // pred_check_branch
    %362 = sbr.rel (0) target = $region17
  $region16: #{net_forward.15} parent=0 // pred_region
    _
  $region17: #{net_forward.15} parent=0 // pred_fallthru
    _
  // Predicated region
  $region18: #{net_forward.15} parent=0 // pred_check
    _
  $region19: #{net_forward.15} parent=0 // pred_check_branch
    %364 = sbr.rel (0) target = $region21
  $region20: #{net_forward.15} parent=0 // pred_region
    _
  $region21: #{net_forward.15} parent=0 // pred_fallthru
    _

// kernel: net_forward.17
$region0: #{net_forward.17}
  #allocation0 [shape = 'u32[]', space=smem, size = 0x4, offset = 0x4, fixed_abs, tag = 'smem constant byte address 0x4 - core index']
  #allocation1 [shape = 'u32[72,128]{1,0:T(1,128)}', space=vmem, size = 0x9000, scoped, tag = 'internal scratch']
  %s0 = inlined_call_operand.vmem [shape: bf16[288,256], index: 0, kind: input, shape index: {}]
  %s1 = inlined_call_operand.vmem [shape: bf16[256,128], index: 1, kind: input, shape index: {}]
  %s2 = inlined_call_operand.vmem [shape: f32[1,128], index: 2, kind: input, shape index: {}]
  %s3 = inlined_call_operand.vmem [shape: f32[288,128], index: 3, kind: output, shape index: {}]
  %s4 = sld [smem:[#allocation0]]
  $region22: #{net_forward.17} parent=0
    _
  %s6 = ssub.s32 1, %s4
  %s7 = scalar_select 0, %s6, %s4
  // Predicated region
  $region2: #{net_forward.17} parent=0 // pred_check
    _
  $region3: #{net_forward.17} parent=0 // pred_check_branch
    %9 = sbr.rel (0) target = $region5
  $region4: #{net_forward.17} parent=0 // pred_region
    _
  $region5: #{net_forward.17} parent=0 // pred_fallthru
    _
  // Predicated region
  $region6: #{net_forward.17} parent=0 // pred_check
    _
  $region7: #{net_forward.17} parent=0 // pred_check_branch
    %11 = sbr.rel (0) target = $region9
  $region8: #{net_forward.17} parent=0 // pred_region
    _
  $region9: #{net_forward.17} parent=0 // pred_fallthru
    _
  // Predicated region
  $region10: #{net_forward.17} parent=0 // pred_check
    _
  $region11: #{net_forward.17} parent=0 // pred_check_branch
    %13 = sbr.rel (0) target = $region13
  $region12: #{net_forward.17} parent=0 // pred_region
    _
  $region13: #{net_forward.17} parent=0 // pred_fallthru
    _
  %v14 = vld [vmem:[%s0] sm:$0xff]
  %v15 = vld [vmem:[%s0 + $0x8] sm:$0xff]
  %v16 = vld [vmem:[%s0 + $0x10] sm:$0xff]
  %v17 = vld [vmem:[%s0 + $0x18] sm:$0xff]
  %v18 = vld [vmem:[%s0 + $0x20] sm:$0xff]
  %v19 = vld [vmem:[%s0 + $0x28] sm:$0xff]
  %v20 = vld [vmem:[%s0 + $0x30] sm:$0xff]
  %v21 = vld [vmem:[%s0 + $0x38] sm:$0xff]
  %v22 = vld [vmem:[%s0 + $0x40] sm:$0xff]
  %v23 = vld [vmem:[%s0 + $0x48] sm:$0xff]
  %v24 = vld [vmem:[%s0 + $0x50] sm:$0xff]
  %v25 = vld [vmem:[%s0 + $0x58] sm:$0xff]
  %v26 = vld [vmem:[%s0 + $0x60] sm:$0xff]
  %v27 = vld [vmem:[%s0 + $0x68] sm:$0xff]
  %v28 = vld [vmem:[%s0 + $0x70] sm:$0xff]
  %v29 = vld [vmem:[%s0 + $0x78] sm:$0xff]
  %v30 = vld [vmem:[%s0 + $0x80] sm:$0xff]
  %v31 = vld [vmem:[%s0 + $0x88] sm:$0xff]
  %v32 = vld [vmem:[%s0 + $0x90] sm:$0xff]
  %v33 = vld [vmem:[%s0 + $0x98] sm:$0xff]
  %v34 = vld [vmem:[%s0 + $0xa0] sm:$0xff]
  %v35 = vld [vmem:[%s0 + $0xa8] sm:$0xff]
  %v36 = vld [vmem:[%s0 + $0xb0] sm:$0xff]
  %v37 = vld [vmem:[%s0 + $0xb8] sm:$0xff]
  %v38 = vld [vmem:[%s0 + $0xc0] sm:$0xff]
  %v39 = vld [vmem:[%s0 + $0xc8] sm:$0xff]
  %v40 = vld [vmem:[%s0 + $0xd0] sm:$0xff]
  %v41 = vld [vmem:[%s0 + $0xd8] sm:$0xff]
  %v42 = vld [vmem:[%s0 + $0xe0] sm:$0xff]
  %v43 = vld [vmem:[%s0 + $0xe8] sm:$0xff]
  %v44 = vld [vmem:[%s0 + $0xf0] sm:$0xff]
  %v45 = vld [vmem:[%s0 + $0xf8] sm:$0xff]
  %v46 = vld [vmem:[%s0 + $0x100] sm:$0xff]
  %v47 = vld [vmem:[%s0 + $0x108] sm:$0xff]
  %v48 = vld [vmem:[%s0 + $0x110] sm:$0xff]
  %v49 = vld [vmem:[%s0 + $0x118] sm:$0xff]
  %v50 = vld [vmem:[%s1] sm:$0xf]
  %v51 = vld [vmem:[%s1 + $0x4] sm:$0xf]
  %v52 = vld [vmem:[%s1 + $0x8] sm:$0xf]
  %v53 = vld [vmem:[%s1 + $0xc] sm:$0xf]
  %v54 = vld [vmem:[%s1 + $0x10] sm:$0xf]
  %v55 = vld [vmem:[%s1 + $0x14] sm:$0xf]
  %v56 = vld [vmem:[%s1 + $0x18] sm:$0xf]
  %v57 = vld [vmem:[%s1 + $0x1c] sm:$0xf]
  %v58 = vld [vmem:[%s1 + $0x20] sm:$0xf]
  %v59 = vld [vmem:[%s1 + $0x24] sm:$0xf]
  %v60 = vld [vmem:[%s1 + $0x28] sm:$0xf]
  %v61 = vld [vmem:[%s1 + $0x2c] sm:$0xf]
  %v62 = vld [vmem:[%s1 + $0x30] sm:$0xf]
  %v63 = vld [vmem:[%s1 + $0x34] sm:$0xf]
  %v64 = vld [vmem:[%s1 + $0x38] sm:$0xf]
  %v65 = vld [vmem:[%s1 + $0x3c] sm:$0xf]
  %v66 = vld [vmem:[%s1 + $0x40] sm:$0xf]
  %v67 = vld [vmem:[%s1 + $0x44] sm:$0xf]
  %v68 = vld [vmem:[%s1 + $0x48] sm:$0xf]
  %v69 = vld [vmem:[%s1 + $0x4c] sm:$0xf]
  %v70 = vld [vmem:[%s1 + $0x50] sm:$0xf]
  %v71 = vld [vmem:[%s1 + $0x54] sm:$0xf]
  %v72 = vld [vmem:[%s1 + $0x58] sm:$0xf]
  %v73 = vld [vmem:[%s1 + $0x5c] sm:$0xf]
  %v74 = vld [vmem:[%s1 + $0x60] sm:$0xf]
  %v75 = vld [vmem:[%s1 + $0x64] sm:$0xf]
  %v76 = vld [vmem:[%s1 + $0x68] sm:$0xf]
  %v77 = vld [vmem:[%s1 + $0x6c] sm:$0xf]
  %v78 = vld [vmem:[%s1 + $0x70] sm:$0xf]
  %v79 = vld [vmem:[%s1 + $0x74] sm:$0xf]
  %v80 = vld [vmem:[%s1 + $0x78] sm:$0xf]
  %v81 = vld [vmem:[%s1 + $0x7c] sm:$0xf]
  %v82 = vld [vmem:[%s2] sm:$0x1]
  %v84 = vperm.slane %v82, 0
  %v122 = vunpack.c.l.b16 %v14
  %v123 = vunpack.c.h.b16 %v14
  %v124 = vunpack.c.l.b16 %v15
  %v125 = vunpack.c.h.b16 %v15
  %v126 = vunpack.c.l.b16 %v16
  %v127 = vunpack.c.h.b16 %v16
  %v128 = vunpack.c.l.b16 %v17
  %v129 = vunpack.c.h.b16 %v17
  %v130 = vunpack.c.l.b16 %v18
  %v131 = vunpack.c.h.b16 %v18
  %v132 = vunpack.c.l.b16 %v19
  %v133 = vunpack.c.h.b16 %v19
  %v134 = vunpack.c.l.b16 %v20
  %v135 = vunpack.c.h.b16 %v20
  %v136 = vunpack.c.l.b16 %v21
  %v137 = vunpack.c.h.b16 %v21
  %v138 = vunpack.c.l.b16 %v22
  %v139 = vunpack.c.h.b16 %v22
  %v140 = vunpack.c.l.b16 %v23
  %v141 = vunpack.c.h.b16 %v23
  %v142 = vunpack.c.l.b16 %v24
  %v143 = vunpack.c.h.b16 %v24
  %v144 = vunpack.c.l.b16 %v25
  %v145 = vunpack.c.h.b16 %v25
  %v146 = vunpack.c.l.b16 %v26
  %v147 = vunpack.c.h.b16 %v26
  %v148 = vunpack.c.l.b16 %v27
  %v149 = vunpack.c.h.b16 %v27
  %v150 = vunpack.c.l.b16 %v28
  %v151 = vunpack.c.h.b16 %v28
  %v152 = vunpack.c.l.b16 %v29
  %v153 = vunpack.c.h.b16 %v29
  %v154 = vunpack.c.l.b16 %v30
  %v155 = vunpack.c.h.b16 %v30
  %v156 = vunpack.c.l.b16 %v31
  %v157 = vunpack.c.h.b16 %v31
  %v158 = vunpack.c.l.b16 %v32
  %v159 = vunpack.c.h.b16 %v32
  %v160 = vunpack.c.l.b16 %v33
  %v161 = vunpack.c.h.b16 %v33
  %v162 = vunpack.c.l.b16 %v34
  %v163 = vunpack.c.h.b16 %v34
  %v164 = vunpack.c.l.b16 %v35
  %v165 = vunpack.c.h.b16 %v35
  %v166 = vunpack.c.l.b16 %v36
  %v167 = vunpack.c.h.b16 %v36
  %v168 = vunpack.c.l.b16 %v37
  %v169 = vunpack.c.h.b16 %v37
  %v170 = vunpack.c.l.b16 %v38
  %v171 = vunpack.c.h.b16 %v38
  %v172 = vunpack.c.l.b16 %v39
  %v173 = vunpack.c.h.b16 %v39
  %v174 = vunpack.c.l.b16 %v40
  %v175 = vunpack.c.h.b16 %v40
  %v176 = vunpack.c.l.b16 %v41
  %v177 = vunpack.c.h.b16 %v41
  %v178 = vunpack.c.l.b16 %v42
  %v179 = vunpack.c.h.b16 %v42
  %v180 = vunpack.c.l.b16 %v43
  %v181 = vunpack.c.h.b16 %v43
  %v182 = vunpack.c.l.b16 %v44
  %v183 = vunpack.c.h.b16 %v44
  %v184 = vunpack.c.l.b16 %v45
  %v185 = vunpack.c.h.b16 %v45
  %v186 = vunpack.c.l.b16 %v46
  %v187 = vunpack.c.h.b16 %v46
  %v188 = vunpack.c.l.b16 %v47
  %v189 = vunpack.c.h.b16 %v47
  %v190 = vunpack.c.l.b16 %v48
  %v191 = vunpack.c.h.b16 %v48
  %v192 = vunpack.c.l.b16 %v49
  %v193 = vunpack.c.h.b16 %v49
  %v194 = vpack.c.b16 %v124, %v122
  %v195 = vpack.c.b16 %v125, %v123
  %v196 = vpack.c.b16 %v128, %v126
  %v197 = vpack.c.b16 %v129, %v127
  %v198 = vpack.c.b16 %v132, %v130
  %v199 = vpack.c.b16 %v133, %v131
  %v200 = vpack.c.b16 %v136, %v134
  %v201 = vpack.c.b16 %v137, %v135
  %v202 = vpack.c.b16 %v140, %v138
  %v203 = vpack.c.b16 %v141, %v139
  %v204 = vpack.c.b16 %v144, %v142
  %v205 = vpack.c.b16 %v145, %v143
  %v206 = vpack.c.b16 %v148, %v146
  %v207 = vpack.c.b16 %v149, %v147
  %v208 = vpack.c.b16 %v152, %v150
  %v209 = vpack.c.b16 %v153, %v151
  %v210 = vpack.c.b16 %v156, %v154
  %v211 = vpack.c.b16 %v157, %v155
  %v212 = vpack.c.b16 %v160, %v158
  %v213 = vpack.c.b16 %v161, %v159
  %v214 = vpack.c.b16 %v164, %v162
  %v215 = vpack.c.b16 %v165, %v163
  %v216 = vpack.c.b16 %v168, %v166
  %v217 = vpack.c.b16 %v169, %v167
  %v218 = vpack.c.b16 %v172, %v170
  %v219 = vpack.c.b16 %v173, %v171
  %v220 = vpack.c.b16 %v176, %v174
  %v221 = vpack.c.b16 %v177, %v175
  %v222 = vpack.c.b16 %v180, %v178
  %v223 = vpack.c.b16 %v181, %v179
  %v224 = vpack.c.b16 %v184, %v182
  %v225 = vpack.c.b16 %v185, %v183
  %v226 = vpack.c.b16 %v188, %v186
  %v227 = vpack.c.b16 %v189, %v187
  %v228 = vpack.c.b16 %v192, %v190
  %v229 = vpack.c.b16 %v193, %v191
  %v298 = vunpack.c.l.b16 %v50
  %v299 = vunpack.c.l.b16 %v51
  %v300 = vunpack.c.l.b16 %v52
  %v301 = vunpack.c.l.b16 %v53
  %v302 = vunpack.c.l.b16 %v54
  %v303 = vunpack.c.l.b16 %v55
  %v304 = vunpack.c.l.b16 %v56
  %v305 = vunpack.c.l.b16 %v57
  %v306 = vunpack.c.l.b16 %v58
  %v307 = vunpack.c.l.b16 %v59
  %v308 = vunpack.c.l.b16 %v60
  %v309 = vunpack.c.l.b16 %v61
  %v310 = vunpack.c.l.b16 %v62
  %v311 = vunpack.c.l.b16 %v63
  %v312 = vunpack.c.l.b16 %v64
  %v313 = vunpack.c.l.b16 %v65
  %v314 = vunpack.c.l.b16 %v66
  %v315 = vunpack.c.l.b16 %v67
  %v316 = vunpack.c.l.b16 %v68
  %v317 = vunpack.c.l.b16 %v69
  %v318 = vunpack.c.l.b16 %v70
  %v319 = vunpack.c.l.b16 %v71
  %v320 = vunpack.c.l.b16 %v72
  %v321 = vunpack.c.l.b16 %v73
  %v322 = vunpack.c.l.b16 %v74
  %v323 = vunpack.c.l.b16 %v75
  %v324 = vunpack.c.l.b16 %v76
  %v325 = vunpack.c.l.b16 %v77
  %v326 = vunpack.c.l.b16 %v78
  %v327 = vunpack.c.l.b16 %v79
  %v328 = vunpack.c.l.b16 %v80
  %v329 = vunpack.c.l.b16 %v81
  %v330 = vpack.c.b16 %v299, %v298
  %v331 = vpack.c.b16 %v301, %v300
  %v332 = vpack.c.b16 %v303, %v302
  %v333 = vpack.c.b16 %v305, %v304
  %v334 = vpack.c.b16 %v307, %v306
  %v335 = vpack.c.b16 %v309, %v308
  %v336 = vpack.c.b16 %v311, %v310
  %v337 = vpack.c.b16 %v313, %v312
  %v338 = vpack.c.b16 %v315, %v314
  %v339 = vpack.c.b16 %v317, %v316
  %v340 = vpack.c.b16 %v319, %v318
  %v341 = vpack.c.b16 %v321, %v320
  %v342 = vpack.c.b16 %v323, %v322
  %v343 = vpack.c.b16 %v325, %v324
  %v344 = vpack.c.b16 %v327, %v326
  %v345 = vpack.c.b16 %v329, %v328
  %362 = vmatpush.bf16.msra.mxu0 %v337
  %363 = vmatpush.bf16.msra.mxu0 %v336
  %364 = vmatpush.bf16.msra.mxu0 %v335
  %365 = vmatpush.bf16.msra.mxu0 %v334
  %366 = vmatpush.bf16.msra.mxu0 %v333
  %367 = vmatpush.bf16.msra.mxu0 %v332
  %368 = vmatpush.bf16.msra.mxu0 %v331
  %369 = vmatpush.bf16.msra.mxu0 %v330
  %370 = vmatmul.bf16.gmra.mxu0 %v194
  %v371 = vpop.f32.mrf.mxu0
  %v372 = vadd.f32 %v84, %v371
  %v373 = vpop.f32.mrf.mxu0
  %v374 = vadd.f32 %v84, %v373
  %375 = vmatmul.bf16.gmra.mxu0 %v196
  %v376 = vpop.f32.mrf.mxu0
  %v377 = vadd.f32 %v84, %v376
  %v378 = vpop.f32.mrf.mxu0
  %v379 = vadd.f32 %v84, %v378
  %380 = vmatmul.bf16.gmra.mxu0 %v198
  %v381 = vpop.f32.mrf.mxu0
  %v382 = vadd.f32 %v84, %v381
  %v383 = vpop.f32.mrf.mxu0
  %v384 = vadd.f32 %v84, %v383
  %385 = vmatmul.bf16.gmra.mxu0 %v200
  %v386 = vpop.f32.mrf.mxu0
  %v387 = vadd.f32 %v84, %v386
  %v388 = vpop.f32.mrf.mxu0
  %v389 = vadd.f32 %v84, %v388
  %390 = vmatmul.bf16.gmra.mxu0 %v202
  %v391 = vpop.f32.mrf.mxu0
  %v392 = vadd.f32 %v84, %v391
  %v393 = vpop.f32.mrf.mxu0
  %v394 = vadd.f32 %v84, %v393
  %395 = vmatmul.bf16.gmra.mxu0 %v204
  %v396 = vpop.f32.mrf.mxu0
  %v397 = vadd.f32 %v84, %v396
  %v398 = vpop.f32.mrf.mxu0
  %v399 = vadd.f32 %v84, %v398
  %400 = vmatmul.bf16.gmra.mxu0 %v206
  %v401 = vpop.f32.mrf.mxu0
  %v402 = vadd.f32 %v84, %v401
  %v403 = vpop.f32.mrf.mxu0
  %v404 = vadd.f32 %v84, %v403
  %405 = vmatmul.bf16.gmra.mxu0 %v208
  %v406 = vpop.f32.mrf.mxu0
  %v407 = vadd.f32 %v84, %v406
  %v408 = vpop.f32.mrf.mxu0
  %v409 = vadd.f32 %v84, %v408
  %410 = vmatmul.bf16.gmra.mxu0 %v210
  %v411 = vpop.f32.mrf.mxu0
  %v412 = vadd.f32 %v84, %v411
  %v413 = vpop.f32.mrf.mxu0
  %v414 = vadd.f32 %v84, %v413
  %415 = vmatmul.bf16.gmra.mxu0 %v212
  %v416 = vpop.f32.mrf.mxu0
  %v417 = vadd.f32 %v84, %v416
  %v418 = vpop.f32.mrf.mxu0
  %v419 = vadd.f32 %v84, %v418
  %420 = vmatmul.bf16.gmra.mxu0 %v214
  %v421 = vpop.f32.mrf.mxu0
  %v422 = vadd.f32 %v84, %v421
  %v423 = vpop.f32.mrf.mxu0
  %v424 = vadd.f32 %v84, %v423
  %425 = vmatmul.bf16.gmra.mxu0 %v216
  %v426 = vpop.f32.mrf.mxu0
  %v427 = vadd.f32 %v84, %v426
  %v428 = vpop.f32.mrf.mxu0
  %v429 = vadd.f32 %v84, %v428
  %430 = vmatmul.bf16.gmra.mxu0 %v218
  %v431 = vpop.f32.mrf.mxu0
  %v432 = vadd.f32 %v84, %v431
  %v433 = vpop.f32.mrf.mxu0
  %v434 = vadd.f32 %v84, %v433
  %435 = vmatmul.bf16.gmra.mxu0 %v220
  %v436 = vpop.f32.mrf.mxu0
  %v437 = vadd.f32 %v84, %v436
  %v438 = vpop.f32.mrf.mxu0
  %v439 = vadd.f32 %v84, %v438
  %440 = vmatmul.bf16.gmra.mxu0 %v222
  %v441 = vpop.f32.mrf.mxu0
  %v442 = vadd.f32 %v84, %v441
  %v443 = vpop.f32.mrf.mxu0
  %v444 = vadd.f32 %v84, %v443
  %445 = vmatmul.bf16.gmra.mxu0 %v224
  %v446 = vpop.f32.mrf.mxu0
  %v447 = vadd.f32 %v84, %v446
  %v448 = vpop.f32.mrf.mxu0
  %v449 = vadd.f32 %v84, %v448
  %450 = vmatmul.bf16.gmra.mxu0 %v226
  %v451 = vpop.f32.mrf.mxu0
  %v452 = vadd.f32 %v84, %v451
  %v453 = vpop.f32.mrf.mxu0
  %v454 = vadd.f32 %v84, %v453
  %455 = vmatmul.bf16.gmra.mxu0 %v228
  %v456 = vpop.f32.mrf.mxu0
  %v457 = vadd.f32 %v84, %v456
  %v458 = vpop.f32.mrf.mxu0
  %v459 = vadd.f32 %v84, %v458
  %460 = vdwg.mxu0
  %461 = vmatpush.bf16.msra.mxu0 %v345
  %462 = vmatpush.bf16.msra.mxu0 %v344
  %463 = vmatpush.bf16.msra.mxu0 %v343
  %464 = vmatpush.bf16.msra.mxu0 %v342
  %465 = vmatpush.bf16.msra.mxu0 %v341
  %466 = vmatpush.bf16.msra.mxu0 %v340
  %467 = vmatpush.bf16.msra.mxu0 %v339
  %468 = vmatpush.bf16.msra.mxu0 %v338
  %469 = vmatmul.bf16.gmra.mxu0 %v195
  %v470 = vpop.f32.mrf.mxu0
  %v471 = vadd.f32 %v372, %v470
  %v472 = vpop.f32.mrf.mxu0
  %v473 = vadd.f32 %v374, %v472
  %474 = vmatmul.bf16.gmra.mxu0 %v197
  %v475 = vpop.f32.mrf.mxu0
  %v476 = vadd.f32 %v377, %v475
  %v477 = vpop.f32.mrf.mxu0
  %v478 = vadd.f32 %v379, %v477
  %479 = vmatmul.bf16.gmra.mxu0 %v199
  %v480 = vpop.f32.mrf.mxu0
  %v481 = vadd.f32 %v382, %v480
  %v482 = vpop.f32.mrf.mxu0
  %v483 = vadd.f32 %v384, %v482
  %484 = vmatmul.bf16.gmra.mxu0 %v201
  %v485 = vpop.f32.mrf.mxu0
  %v486 = vadd.f32 %v387, %v485
  %v487 = vpop.f32.mrf.mxu0
  %v488 = vadd.f32 %v389, %v487
  %489 = vmatmul.bf16.gmra.mxu0 %v203
  %v490 = vpop.f32.mrf.mxu0
  %v491 = vadd.f32 %v392, %v490
  %v492 = vpop.f32.mrf.mxu0
  %v493 = vadd.f32 %v394, %v492
  %494 = vmatmul.bf16.gmra.mxu0 %v205
  %v495 = vpop.f32.mrf.mxu0
  %v496 = vadd.f32 %v397, %v495
  %v497 = vpop.f32.mrf.mxu0
  %v498 = vadd.f32 %v399, %v497
  %499 = vmatmul.bf16.gmra.mxu0 %v207
  %v500 = vpop.f32.mrf.mxu0
  %v501 = vadd.f32 %v402, %v500
  %v502 = vpop.f32.mrf.mxu0
  %v503 = vadd.f32 %v404, %v502
  %504 = vmatmul.bf16.gmra.mxu0 %v209
  %v505 = vpop.f32.mrf.mxu0
  %v506 = vadd.f32 %v407, %v505
  %v507 = vpop.f32.mrf.mxu0
  %v508 = vadd.f32 %v409, %v507
  %509 = vmatmul.bf16.gmra.mxu0 %v211
  %v510 = vpop.f32.mrf.mxu0
  %v511 = vadd.f32 %v412, %v510
  %v512 = vpop.f32.mrf.mxu0
  %v513 = vadd.f32 %v414, %v512
  %514 = vmatmul.bf16.gmra.mxu0 %v213
  %v515 = vpop.f32.mrf.mxu0
  %v516 = vadd.f32 %v417, %v515
  %v517 = vpop.f32.mrf.mxu0
  %v518 = vadd.f32 %v419, %v517
  %519 = vmatmul.bf16.gmra.mxu0 %v215
  %v520 = vpop.f32.mrf.mxu0
  %v521 = vadd.f32 %v422, %v520
  %v522 = vpop.f32.mrf.mxu0
  %v523 = vadd.f32 %v424, %v522
  %524 = vmatmul.bf16.gmra.mxu0 %v217
  %v525 = vpop.f32.mrf.mxu0
  %v526 = vadd.f32 %v427, %v525
  %v527 = vpop.f32.mrf.mxu0
  %v528 = vadd.f32 %v429, %v527
  %529 = vmatmul.bf16.gmra.mxu0 %v219
  %v530 = vpop.f32.mrf.mxu0
  %v531 = vadd.f32 %v432, %v530
  %v532 = vpop.f32.mrf.mxu0
  %v533 = vadd.f32 %v434, %v532
  %534 = vmatmul.bf16.gmra.mxu0 %v221
  %v535 = vpop.f32.mrf.mxu0
  %v536 = vadd.f32 %v437, %v535
  %v537 = vpop.f32.mrf.mxu0
  %v538 = vadd.f32 %v439, %v537
  %539 = vmatmul.bf16.gmra.mxu0 %v223
  %v540 = vpop.f32.mrf.mxu0
  %v541 = vadd.f32 %v442, %v540
  %v542 = vpop.f32.mrf.mxu0
  %v543 = vadd.f32 %v444, %v542
  %544 = vmatmul.bf16.gmra.mxu0 %v225
  %v545 = vpop.f32.mrf.mxu0
  %v546 = vadd.f32 %v447, %v545
  %v547 = vpop.f32.mrf.mxu0
  %v548 = vadd.f32 %v449, %v547
  %549 = vmatmul.bf16.gmra.mxu0 %v227
  %v550 = vpop.f32.mrf.mxu0
  %v551 = vadd.f32 %v452, %v550
  %v552 = vpop.f32.mrf.mxu0
  %v553 = vadd.f32 %v454, %v552
  %554 = vmatmul.bf16.gmra.mxu0 %v229
  %v555 = vpop.f32.mrf.mxu0
  %v556 = vadd.f32 %v457, %v555
  %v557 = vpop.f32.mrf.mxu0
  %v558 = vadd.f32 %v459, %v557
  %559 = vdwg.mxu0
  %560 = vst [vmem:[%s3] sm:$0xff] %v471
  %561 = vst [vmem:[%s3 + $0x8] sm:$0xff] %v473
  %562 = vst [vmem:[%s3 + $0x10] sm:$0xff] %v476
  %563 = vst [vmem:[%s3 + $0x18] sm:$0xff] %v478
  %564 = vst [vmem:[%s3 + $0x20] sm:$0xff] %v481
  %565 = vst [vmem:[%s3 + $0x28] sm:$0xff] %v483
  %566 = vst [vmem:[%s3 + $0x30] sm:$0xff] %v486
  %567 = vst [vmem:[%s3 + $0x38] sm:$0xff] %v488
  %568 = vst [vmem:[%s3 + $0x40] sm:$0xff] %v491
  %569 = vst [vmem:[%s3 + $0x48] sm:$0xff] %v493
  %570 = vst [vmem:[%s3 + $0x50] sm:$0xff] %v496
  %571 = vst [vmem:[%s3 + $0x58] sm:$0xff] %v498
  %572 = vst [vmem:[%s3 + $0x60] sm:$0xff] %v501
  %573 = vst [vmem:[%s3 + $0x68] sm:$0xff] %v503
  %574 = vst [vmem:[%s3 + $0x70] sm:$0xff] %v506
  %575 = vst [vmem:[%s3 + $0x78] sm:$0xff] %v508
  %576 = vst [vmem:[%s3 + $0x80] sm:$0xff] %v511
  %577 = vst [vmem:[%s3 + $0x88] sm:$0xff] %v513
  %578 = vst [vmem:[%s3 + $0x90] sm:$0xff] %v516
  %579 = vst [vmem:[%s3 + $0x98] sm:$0xff] %v518
  %580 = vst [vmem:[%s3 + $0xa0] sm:$0xff] %v521
  %581 = vst [vmem:[%s3 + $0xa8] sm:$0xff] %v523
  %582 = vst [vmem:[%s3 + $0xb0] sm:$0xff] %v526
  %583 = vst [vmem:[%s3 + $0xb8] sm:$0xff] %v528
  %584 = vst [vmem:[%s3 + $0xc0] sm:$0xff] %v531
  %585 = vst [vmem:[%s3 + $0xc8] sm:$0xff] %v533
  %586 = vst [vmem:[%s3 + $0xd0] sm:$0xff] %v536
  %587 = vst [vmem:[%s3 + $0xd8] sm:$0xff] %v538
  %588 = vst [vmem:[%s3 + $0xe0] sm:$0xff] %v541
  %589 = vst [vmem:[%s3 + $0xe8] sm:$0xff] %v543
  %590 = vst [vmem:[%s3 + $0xf0] sm:$0xff] %v546
  %591 = vst [vmem:[%s3 + $0xf8] sm:$0xff] %v548
  %592 = vst [vmem:[%s3 + $0x100] sm:$0xff] %v551
  %593 = vst [vmem:[%s3 + $0x108] sm:$0xff] %v553
  %594 = vst [vmem:[%s3 + $0x110] sm:$0xff] %v556
  %595 = vst [vmem:[%s3 + $0x118] sm:$0xff] %v558
  // Predicated region
  $region14: #{net_forward.17} parent=0 // pred_check
    _
  $region15: #{net_forward.17} parent=0 // pred_check_branch
    %597 = sbr.rel (0) target = $region17
  $region16: #{net_forward.17} parent=0 // pred_region
    _
  $region17: #{net_forward.17} parent=0 // pred_fallthru
    _
  // Predicated region
  $region18: #{net_forward.17} parent=0 // pred_check
    _
  $region19: #{net_forward.17} parent=0 // pred_check_branch
    %599 = sbr.rel (0) target = $region21
  $region20: #{net_forward.17} parent=0 // pred_region
    _
  $region21: #{net_forward.17} parent=0 // pred_fallthru
    _

// kernel: net_forward.16
$region0: #{net_forward.16}
  #allocation0 [shape = 'u32[]', space=smem, size = 0x4, offset = 0x4, fixed_abs, tag = 'smem constant byte address 0x4 - core index']
  #allocation1 [shape = 'u32[72,128]{1,0:T(1,128)}', space=vmem, size = 0x9000, scoped, tag = 'internal scratch']
  %s0 = inlined_call_operand.vmem [shape: bf16[288,512], index: 0, kind: input, shape index: {}]
  %s1 = inlined_call_operand.vmem [shape: bf16[512,128], index: 1, kind: input, shape index: {}]
  %s2 = inlined_call_operand.vmem [shape: f32[1,128], index: 2, kind: input, shape index: {}]
  %s3 = inlined_call_operand.vmem [shape: f32[288,128], index: 3, kind: output, shape index: {}]
  %s4 = sld [smem:[#allocation0]]
  $region22: #{net_forward.16} parent=0
    _
  %s6 = ssub.s32 1, %s4
  %s7 = scalar_select 0, %s6, %s4
  // Predicated region
  $region2: #{net_forward.16} parent=0 // pred_check
    _
  $region3: #{net_forward.16} parent=0 // pred_check_branch
    %9 = sbr.rel (0) target = $region5
  $region4: #{net_forward.16} parent=0 // pred_region
    _
  $region5: #{net_forward.16} parent=0 // pred_fallthru
    _
  // Predicated region
  $region6: #{net_forward.16} parent=0 // pred_check
    _
  $region7: #{net_forward.16} parent=0 // pred_check_branch
    %11 = sbr.rel (0) target = $region9
  $region8: #{net_forward.16} parent=0 // pred_region
    _
  $region9: #{net_forward.16} parent=0 // pred_fallthru
    _
  // Predicated region
  $region10: #{net_forward.16} parent=0 // pred_check
    _
  $region11: #{net_forward.16} parent=0 // pred_check_branch
    %13 = sbr.rel (0) target = $region13
  $region12: #{net_forward.16} parent=0 // pred_region
    _
  $region13: #{net_forward.16} parent=0 // pred_fallthru
    _
  %v14 = vld [vmem:[%s0] sm:$0xff]
  %v15 = vld [vmem:[%s0 + $0x8] sm:$0xff]
  %v16 = vld [vmem:[%s0 + $0x10] sm:$0xff]
  %v17 = vld [vmem:[%s0 + $0x18] sm:$0xff]
  %v18 = vld [vmem:[%s0 + $0x20] sm:$0xff]
  %v19 = vld [vmem:[%s0 + $0x28] sm:$0xff]
  %v20 = vld [vmem:[%s0 + $0x30] sm:$0xff]
  %v21 = vld [vmem:[%s0 + $0x38] sm:$0xff]
  %v22 = vld [vmem:[%s0 + $0x40] sm:$0xff]
  %v23 = vld [vmem:[%s0 + $0x48] sm:$0xff]
  %v24 = vld [vmem:[%s0 + $0x50] sm:$0xff]
  %v25 = vld [vmem:[%s0 + $0x58] sm:$0xff]
  %v26 = vld [vmem:[%s0 + $0x60] sm:$0xff]
  %v27 = vld [vmem:[%s0 + $0x68] sm:$0xff]
  %v28 = vld [vmem:[%s0 + $0x70] sm:$0xff]
  %v29 = vld [vmem:[%s0 + $0x78] sm:$0xff]
  %v30 = vld [vmem:[%s0 + $0x80] sm:$0xff]
  %v31 = vld [vmem:[%s0 + $0x88] sm:$0xff]
  %v32 = vld [vmem:[%s0 + $0x90] sm:$0xff]
  %v33 = vld [vmem:[%s0 + $0x98] sm:$0xff]
  %v34 = vld [vmem:[%s0 + $0xa0] sm:$0xff]
  %v35 = vld [vmem:[%s0 + $0xa8] sm:$0xff]
  %v36 = vld [vmem:[%s0 + $0xb0] sm:$0xff]
  %v37 = vld [vmem:[%s0 + $0xb8] sm:$0xff]
  %v38 = vld [vmem:[%s0 + $0xc0] sm:$0xff]
  %v39 = vld [vmem:[%s0 + $0xc8] sm:$0xff]
  %v40 = vld [vmem:[%s0 + $0xd0] sm:$0xff]
  %v41 = vld [vmem:[%s0 + $0xd8] sm:$0xff]
  %v42 = vld [vmem:[%s0 + $0xe0] sm:$0xff]
  %v43 = vld [vmem:[%s0 + $0xe8] sm:$0xff]
  %v44 = vld [vmem:[%s0 + $0xf0] sm:$0xff]
  %v45 = vld [vmem:[%s0 + $0xf8] sm:$0xff]
  %v46 = vld [vmem:[%s0 + $0x100] sm:$0xff]
  %v47 = vld [vmem:[%s0 + $0x108] sm:$0xff]
  %v48 = vld [vmem:[%s0 + $0x110] sm:$0xff]
  %v49 = vld [vmem:[%s0 + $0x118] sm:$0xff]
  %v50 = vld [vmem:[%s0 + $0x120] sm:$0xff]
  %v51 = vld [vmem:[%s0 + $0x128] sm:$0xff]
  %v52 = vld [vmem:[%s0 + $0x130] sm:$0xff]
  %v53 = vld [vmem:[%s0 + $0x138] sm:$0xff]
  %v54 = vld [vmem:[%s0 + $0x140] sm:$0xff]
  %v55 = vld [vmem:[%s0 + $0x148] sm:$0xff]
  %v56 = vld [vmem:[%s0 + $0x150] sm:$0xff]
  %v57 = vld [vmem:[%s0 + $0x158] sm:$0xff]
  %v58 = vld [vmem:[%s0 + $0x160] sm:$0xff]
  %v59 = vld [vmem:[%s0 + $0x168] sm:$0xff]
  %v60 = vld [vmem:[%s0 + $0x170] sm:$0xff]
  %v61 = vld [vmem:[%s0 + $0x178] sm:$0xff]
  %v62 = vld [vmem:[%s0 + $0x180] sm:$0xff]
  %v63 = vld [vmem:[%s0 + $0x188] sm:$0xff]
  %v64 = vld [vmem:[%s0 + $0x190] sm:$0xff]
  %v65 = vld [vmem:[%s0 + $0x198] sm:$0xff]
  %v66 = vld [vmem:[%s0 + $0x1a0] sm:$0xff]
  %v67 = vld [vmem:[%s0 + $0x1a8] sm:$0xff]
  %v68 = vld [vmem:[%s0 + $0x1b0] sm:$0xff]
  %v69 = vld [vmem:[%s0 + $0x1b8] sm:$0xff]
  %v70 = vld [vmem:[%s0 + $0x1c0] sm:$0xff]
  %v71 = vld [vmem:[%s0 + $0x1c8] sm:$0xff]
  %v72 = vld [vmem:[%s0 + $0x1d0] sm:$0xff]
  %v73 = vld [vmem:[%s0 + $0x1d8] sm:$0xff]
  %v74 = vld [vmem:[%s0 + $0x1e0] sm:$0xff]
  %v75 = vld [vmem:[%s0 + $0x1e8] sm:$0xff]
  %v76 = vld [vmem:[%s0 + $0x1f0] sm:$0xff]
  %v77 = vld [vmem:[%s0 + $0x1f8] sm:$0xff]
  %v78 = vld [vmem:[%s0 + $0x200] sm:$0xff]
  %v79 = vld [vmem:[%s0 + $0x208] sm:$0xff]
  %v80 = vld [vmem:[%s0 + $0x210] sm:$0xff]
  %v81 = vld [vmem:[%s0 + $0x218] sm:$0xff]
  %v82 = vld [vmem:[%s0 + $0x220] sm:$0xff]
  %v83 = vld [vmem:[%s0 + $0x228] sm:$0xff]
  %v84 = vld [vmem:[%s0 + $0x230] sm:$0xff]
  %v85 = vld [vmem:[%s0 + $0x238] sm:$0xff]
  %v86 = vld [vmem:[%s1] sm:$0xf]
  %v87 = vld [vmem:[%s1 + $0x4] sm:$0xf]
  %v88 = vld [vmem:[%s1 + $0x8] sm:$0xf]
  %v89 = vld [vmem:[%s1 + $0xc] sm:$0xf]
  %v90 = vld [vmem:[%s1 + $0x10] sm:$0xf]
  %v91 = vld [vmem:[%s1 + $0x14] sm:$0xf]
  %v92 = vld [vmem:[%s1 + $0x18] sm:$0xf]
  %v93 = vld [vmem:[%s1 + $0x1c] sm:$0xf]
  %v94 = vld [vmem:[%s1 + $0x20] sm:$0xf]
  %v95 = vld [vmem:[%s1 + $0x24] sm:$0xf]
  %v96 = vld [vmem:[%s1 + $0x28] sm:$0xf]
  %v97 = vld [vmem:[%s1 + $0x2c] sm:$0xf]
  %v98 = vld [vmem:[%s1 + $0x30] sm:$0xf]
  %v99 = vld [vmem:[%s1 + $0x34] sm:$0xf]
  %v100 = vld [vmem:[%s1 + $0x38] sm:$0xf]
  %v101 = vld [vmem:[%s1 + $0x3c] sm:$0xf]
  %v102 = vld [vmem:[%s1 + $0x40] sm:$0xf]
  %v103 = vld [vmem:[%s1 + $0x44] sm:$0xf]
  %v104 = vld [vmem:[%s1 + $0x48] sm:$0xf]
  %v105 = vld [vmem:[%s1 + $0x4c] sm:$0xf]
  %v106 = vld [vmem:[%s1 + $0x50] sm:$0xf]
  %v107 = vld [vmem:[%s1 + $0x54] sm:$0xf]
  %v108 = vld [vmem:[%s1 + $0x58] sm:$0xf]
  %v109 = vld [vmem:[%s1 + $0x5c] sm:$0xf]
  %v110 = vld [vmem:[%s1 + $0x60] sm:$0xf]
  %v111 = vld [vmem:[%s1 + $0x64] sm:$0xf]
  %v112 = vld [vmem:[%s1 + $0x68] sm:$0xf]
  %v113 = vld [vmem:[%s1 + $0x6c] sm:$0xf]
  %v114 = vld [vmem:[%s1 + $0x70] sm:$0xf]
  %v115 = vld [vmem:[%s1 + $0x74] sm:$0xf]
  %v116 = vld [vmem:[%s1 + $0x78] sm:$0xf]
  %v117 = vld [vmem:[%s1 + $0x7c] sm:$0xf]
  %v118 = vld [vmem:[%s1 + $0x80] sm:$0xf]
  %v119 = vld [vmem:[%s1 + $0x84] sm:$0xf]
  %v120 = vld [vmem:[%s1 + $0x88] sm:$0xf]
  %v121 = vld [vmem:[%s1 + $0x8c] sm:$0xf]
  %v122 = vld [vmem:[%s1 + $0x90] sm:$0xf]
  %v123 = vld [vmem:[%s1 + $0x94] sm:$0xf]
  %v124 = vld [vmem:[%s1 + $0x98] sm:$0xf]
  %v125 = vld [vmem:[%s1 + $0x9c] sm:$0xf]
  %v126 = vld [vmem:[%s1 + $0xa0] sm:$0xf]
  %v127 = vld [vmem:[%s1 + $0xa4] sm:$0xf]
  %v128 = vld [vmem:[%s1 + $0xa8] sm:$0xf]
  %v129 = vld [vmem:[%s1 + $0xac] sm:$0xf]
  %v130 = vld [vmem:[%s1 + $0xb0] sm:$0xf]
  %v131 = vld [vmem:[%s1 + $0xb4] sm:$0xf]
  %v132 = vld [vmem:[%s1 + $0xb8] sm:$0xf]
  %v133 = vld [vmem:[%s1 + $0xbc] sm:$0xf]
  %v134 = vld [vmem:[%s1 + $0xc0] sm:$0xf]
  %v135 = vld [vmem:[%s1 + $0xc4] sm:$0xf]
  %v136 = vld [vmem:[%s1 + $0xc8] sm:$0xf]
  %v137 = vld [vmem:[%s1 + $0xcc] sm:$0xf]
  %v138 = vld [vmem:[%s1 + $0xd0] sm:$0xf]
  %v139 = vld [vmem:[%s1 + $0xd4] sm:$0xf]
  %v140 = vld [vmem:[%s1 + $0xd8] sm:$0xf]
  %v141 = vld [vmem:[%s1 + $0xdc] sm:$0xf]
  %v142 = vld [vmem:[%s1 + $0xe0] sm:$0xf]
  %v143 = vld [vmem:[%s1 + $0xe4] sm:$0xf]
  %v144 = vld [vmem:[%s1 + $0xe8] sm:$0xf]
  %v145 = vld [vmem:[%s1 + $0xec] sm:$0xf]
  %v146 = vld [vmem:[%s1 + $0xf0] sm:$0xf]
  %v147 = vld [vmem:[%s1 + $0xf4] sm:$0xf]
  %v148 = vld [vmem:[%s1 + $0xf8] sm:$0xf]
  %v149 = vld [vmem:[%s1 + $0xfc] sm:$0xf]
  %v150 = vld [vmem:[%s2] sm:$0x1]
  %v152 = vperm.slane %v150, 0
  %v226 = vunpack.c.l.b16 %v14
  %v227 = vunpack.c.h.b16 %v14
  %v228 = vunpack.c.l.b16 %v15
  %v229 = vunpack.c.h.b16 %v15
  %v230 = vunpack.c.l.b16 %v16
  %v231 = vunpack.c.h.b16 %v16
  %v232 = vunpack.c.l.b16 %v17
  %v233 = vunpack.c.h.b16 %v17
  %v234 = vunpack.c.l.b16 %v18
  %v235 = vunpack.c.h.b16 %v18
  %v236 = vunpack.c.l.b16 %v19
  %v237 = vunpack.c.h.b16 %v19
  %v238 = vunpack.c.l.b16 %v20
  %v239 = vunpack.c.h.b16 %v20
  %v240 = vunpack.c.l.b16 %v21
  %v241 = vunpack.c.h.b16 %v21
  %v242 = vunpack.c.l.b16 %v22
  %v243 = vunpack.c.h.b16 %v22
  %v244 = vunpack.c.l.b16 %v23
  %v245 = vunpack.c.h.b16 %v23
  %v246 = vunpack.c.l.b16 %v24
  %v247 = vunpack.c.h.b16 %v24
  %v248 = vunpack.c.l.b16 %v25
  %v249 = vunpack.c.h.b16 %v25
  %v250 = vunpack.c.l.b16 %v26
  %v251 = vunpack.c.h.b16 %v26
  %v252 = vunpack.c.l.b16 %v27
  %v253 = vunpack.c.h.b16 %v27
  %v254 = vunpack.c.l.b16 %v28
  %v255 = vunpack.c.h.b16 %v28
  %v256 = vunpack.c.l.b16 %v29
  %v257 = vunpack.c.h.b16 %v29
  %v258 = vunpack.c.l.b16 %v30
  %v259 = vunpack.c.h.b16 %v30
  %v260 = vunpack.c.l.b16 %v31
  %v261 = vunpack.c.h.b16 %v31
  %v262 = vunpack.c.l.b16 %v32
  %v263 = vunpack.c.h.b16 %v32
  %v264 = vunpack.c.l.b16 %v33
  %v265 = vunpack.c.h.b16 %v33
  %v266 = vunpack.c.l.b16 %v34
  %v267 = vunpack.c.h.b16 %v34
  %v268 = vunpack.c.l.b16 %v35
  %v269 = vunpack.c.h.b16 %v35
  %v270 = vunpack.c.l.b16 %v36
  %v271 = vunpack.c.h.b16 %v36
  %v272 = vunpack.c.l.b16 %v37
  %v273 = vunpack.c.h.b16 %v37
  %v274 = vunpack.c.l.b16 %v38
  %v275 = vunpack.c.h.b16 %v38
  %v276 = vunpack.c.l.b16 %v39
  %v277 = vunpack.c.h.b16 %v39
  %v278 = vunpack.c.l.b16 %v40
  %v279 = vunpack.c.h.b16 %v40
  %v280 = vunpack.c.l.b16 %v41
  %v281 = vunpack.c.h.b16 %v41
  %v282 = vunpack.c.l.b16 %v42
  %v283 = vunpack.c.h.b16 %v42
  %v284 = vunpack.c.l.b16 %v43
  %v285 = vunpack.c.h.b16 %v43
  %v286 = vunpack.c.l.b16 %v44
  %v287 = vunpack.c.h.b16 %v44
  %v288 = vunpack.c.l.b16 %v45
  %v289 = vunpack.c.h.b16 %v45
  %v290 = vunpack.c.l.b16 %v46
  %v291 = vunpack.c.h.b16 %v46
  %v292 = vunpack.c.l.b16 %v47
  %v293 = vunpack.c.h.b16 %v47
  %v294 = vunpack.c.l.b16 %v48
  %v295 = vunpack.c.h.b16 %v48
  %v296 = vunpack.c.l.b16 %v49
  %v297 = vunpack.c.h.b16 %v49
  %v298 = vunpack.c.l.b16 %v50
  %v299 = vunpack.c.h.b16 %v50
  %v300 = vunpack.c.l.b16 %v51
  %v301 = vunpack.c.h.b16 %v51
  %v302 = vunpack.c.l.b16 %v52
  %v303 = vunpack.c.h.b16 %v52
  %v304 = vunpack.c.l.b16 %v53
  %v305 = vunpack.c.h.b16 %v53
  %v306 = vunpack.c.l.b16 %v54
  %v307 = vunpack.c.h.b16 %v54
  %v308 = vunpack.c.l.b16 %v55
  %v309 = vunpack.c.h.b16 %v55
  %v310 = vunpack.c.l.b16 %v56
  %v311 = vunpack.c.h.b16 %v56
  %v312 = vunpack.c.l.b16 %v57
  %v313 = vunpack.c.h.b16 %v57
  %v314 = vunpack.c.l.b16 %v58
  %v315 = vunpack.c.h.b16 %v58
  %v316 = vunpack.c.l.b16 %v59
  %v317 = vunpack.c.h.b16 %v59
  %v318 = vunpack.c.l.b16 %v60
  %v319 = vunpack.c.h.b16 %v60
  %v320 = vunpack.c.l.b16 %v61
  %v321 = vunpack.c.h.b16 %v61
  %v322 = vunpack.c.l.b16 %v62
  %v323 = vunpack.c.h.b16 %v62
  %v324 = vunpack.c.l.b16 %v63
  %v325 = vunpack.c.h.b16 %v63
  %v326 = vunpack.c.l.b16 %v64
  %v327 = vunpack.c.h.b16 %v64
  %v328 = vunpack.c.l.b16 %v65
  %v329 = vunpack.c.h.b16 %v65
  %v330 = vunpack.c.l.b16 %v66
  %v331 = vunpack.c.h.b16 %v66
  %v332 = vunpack.c.l.b16 %v67
  %v333 = vunpack.c.h.b16 %v67
  %v334 = vunpack.c.l.b16 %v68
  %v335 = vunpack.c.h.b16 %v68
  %v336 = vunpack.c.l.b16 %v69
  %v337 = vunpack.c.h.b16 %v69
  %v338 = vunpack.c.l.b16 %v70
  %v339 = vunpack.c.h.b16 %v70
  %v340 = vunpack.c.l.b16 %v71
  %v341 = vunpack.c.h.b16 %v71
  %v342 = vunpack.c.l.b16 %v72
  %v343 = vunpack.c.h.b16 %v72
  %v344 = vunpack.c.l.b16 %v73
  %v345 = vunpack.c.h.b16 %v73
  %v346 = vunpack.c.l.b16 %v74
  %v347 = vunpack.c.h.b16 %v74
  %v348 = vunpack.c.l.b16 %v75
  %v349 = vunpack.c.h.b16 %v75
  %v350 = vunpack.c.l.b16 %v76
  %v351 = vunpack.c.h.b16 %v76
  %v352 = vunpack.c.l.b16 %v77
  %v353 = vunpack.c.h.b16 %v77
  %v354 = vunpack.c.l.b16 %v78
  %v355 = vunpack.c.h.b16 %v78
  %v356 = vunpack.c.l.b16 %v79
  %v357 = vunpack.c.h.b16 %v79
  %v358 = vunpack.c.l.b16 %v80
  %v359 = vunpack.c.h.b16 %v80
  %v360 = vunpack.c.l.b16 %v81
  %v361 = vunpack.c.h.b16 %v81
  %v362 = vunpack.c.l.b16 %v82
  %v363 = vunpack.c.h.b16 %v82
  %v364 = vunpack.c.l.b16 %v83
  %v365 = vunpack.c.h.b16 %v83
  %v366 = vunpack.c.l.b16 %v84
  %v367 = vunpack.c.h.b16 %v84
  %v368 = vunpack.c.l.b16 %v85
  %v369 = vunpack.c.h.b16 %v85
  %v370 = vpack.c.b16 %v230, %v226
  %v371 = vpack.c.b16 %v231, %v227
  %v372 = vpack.c.b16 %v232, %v228
  %v373 = vpack.c.b16 %v233, %v229
  %v374 = vpack.c.b16 %v238, %v234
  %v375 = vpack.c.b16 %v239, %v235
  %v376 = vpack.c.b16 %v240, %v236
  %v377 = vpack.c.b16 %v241, %v237
  %v378 = vpack.c.b16 %v246, %v242
  %v379 = vpack.c.b16 %v247, %v243
  %v380 = vpack.c.b16 %v248, %v244
  %v381 = vpack.c.b16 %v249, %v245
  %v382 = vpack.c.b16 %v254, %v250
  %v383 = vpack.c.b16 %v255, %v251
  %v384 = vpack.c.b16 %v256, %v252
  %v385 = vpack.c.b16 %v257, %v253
  %v386 = vpack.c.b16 %v262, %v258
  %v387 = vpack.c.b16 %v263, %v259
  %v388 = vpack.c.b16 %v264, %v260
  %v389 = vpack.c.b16 %v265, %v261
  %v390 = vpack.c.b16 %v270, %v266
  %v391 = vpack.c.b16 %v271, %v267
  %v392 = vpack.c.b16 %v272, %v268
  %v393 = vpack.c.b16 %v273, %v269
  %v394 = vpack.c.b16 %v278, %v274
  %v395 = vpack.c.b16 %v279, %v275
  %v396 = vpack.c.b16 %v280, %v276
  %v397 = vpack.c.b16 %v281, %v277
  %v398 = vpack.c.b16 %v286, %v282
  %v399 = vpack.c.b16 %v287, %v283
  %v400 = vpack.c.b16 %v288, %v284
  %v401 = vpack.c.b16 %v289, %v285
  %v402 = vpack.c.b16 %v294, %v290
  %v403 = vpack.c.b16 %v295, %v291
  %v404 = vpack.c.b16 %v296, %v292
  %v405 = vpack.c.b16 %v297, %v293
  %v406 = vpack.c.b16 %v302, %v298
  %v407 = vpack.c.b16 %v303, %v299
  %v408 = vpack.c.b16 %v304, %v300
  %v409 = vpack.c.b16 %v305, %v301
  %v410 = vpack.c.b16 %v310, %v306
  %v411 = vpack.c.b16 %v311, %v307
  %v412 = vpack.c.b16 %v312, %v308
  %v413 = vpack.c.b16 %v313, %v309
  %v414 = vpack.c.b16 %v318, %v314
  %v415 = vpack.c.b16 %v319, %v315
  %v416 = vpack.c.b16 %v320, %v316
  %v417 = vpack.c.b16 %v321, %v317
  %v418 = vpack.c.b16 %v326, %v322
  %v419 = vpack.c.b16 %v327, %v323
  %v420 = vpack.c.b16 %v328, %v324
  %v421 = vpack.c.b16 %v329, %v325
  %v422 = vpack.c.b16 %v334, %v330
  %v423 = vpack.c.b16 %v335, %v331
  %v424 = vpack.c.b16 %v336, %v332
  %v425 = vpack.c.b16 %v337, %v333
  %v426 = vpack.c.b16 %v342, %v338
  %v427 = vpack.c.b16 %v343, %v339
  %v428 = vpack.c.b16 %v344, %v340
  %v429 = vpack.c.b16 %v345, %v341
  %v430 = vpack.c.b16 %v350, %v346
  %v431 = vpack.c.b16 %v351, %v347
  %v432 = vpack.c.b16 %v352, %v348
  %v433 = vpack.c.b16 %v353, %v349
  %v434 = vpack.c.b16 %v358, %v354
  %v435 = vpack.c.b16 %v359, %v355
  %v436 = vpack.c.b16 %v360, %v356
  %v437 = vpack.c.b16 %v361, %v357
  %v438 = vpack.c.b16 %v366, %v362
  %v439 = vpack.c.b16 %v367, %v363
  %v440 = vpack.c.b16 %v368, %v364
  %v441 = vpack.c.b16 %v369, %v365
  %v578 = vunpack.c.l.b16 %v86
  %v579 = vunpack.c.l.b16 %v87
  %v580 = vunpack.c.l.b16 %v88
  %v581 = vunpack.c.l.b16 %v89
  %v582 = vunpack.c.l.b16 %v90
  %v583 = vunpack.c.l.b16 %v91
  %v584 = vunpack.c.l.b16 %v92
  %v585 = vunpack.c.l.b16 %v93
  %v586 = vunpack.c.l.b16 %v94
  %v587 = vunpack.c.l.b16 %v95
  %v588 = vunpack.c.l.b16 %v96
  %v589 = vunpack.c.l.b16 %v97
  %v590 = vunpack.c.l.b16 %v98
  %v591 = vunpack.c.l.b16 %v99
  %v592 = vunpack.c.l.b16 %v100
  %v593 = vunpack.c.l.b16 %v101
  %v594 = vunpack.c.l.b16 %v102
  %v595 = vunpack.c.l.b16 %v103
  %v596 = vunpack.c.l.b16 %v104
  %v597 = vunpack.c.l.b16 %v105
  %v598 = vunpack.c.l.b16 %v106
  %v599 = vunpack.c.l.b16 %v107
  %v600 = vunpack.c.l.b16 %v108
  %v601 = vunpack.c.l.b16 %v109
  %v602 = vunpack.c.l.b16 %v110
  %v603 = vunpack.c.l.b16 %v111
  %v604 = vunpack.c.l.b16 %v112
  %v605 = vunpack.c.l.b16 %v113
  %v606 = vunpack.c.l.b16 %v114
  %v607 = vunpack.c.l.b16 %v115
  %v608 = vunpack.c.l.b16 %v116
  %v609 = vunpack.c.l.b16 %v117
  %v610 = vunpack.c.l.b16 %v118
  %v611 = vunpack.c.l.b16 %v119
  %v612 = vunpack.c.l.b16 %v120
  %v613 = vunpack.c.l.b16 %v121
  %v614 = vunpack.c.l.b16 %v122
  %v615 = vunpack.c.l.b16 %v123
  %v616 = vunpack.c.l.b16 %v124
  %v617 = vunpack.c.l.b16 %v125
  %v618 = vunpack.c.l.b16 %v126
  %v619 = vunpack.c.l.b16 %v127
  %v620 = vunpack.c.l.b16 %v128
  %v621 = vunpack.c.l.b16 %v129
  %v622 = vunpack.c.l.b16 %v130
  %v623 = vunpack.c.l.b16 %v131
  %v624 = vunpack.c.l.b16 %v132
  %v625 = vunpack.c.l.b16 %v133
  %v626 = vunpack.c.l.b16 %v134
  %v627 = vunpack.c.l.b16 %v135
  %v628 = vunpack.c.l.b16 %v136
  %v629 = vunpack.c.l.b16 %v137
  %v630 = vunpack.c.l.b16 %v138
  %v631 = vunpack.c.l.b16 %v139
  %v632 = vunpack.c.l.b16 %v140
  %v633 = vunpack.c.l.b16 %v141
  %v634 = vunpack.c.l.b16 %v142
  %v635 = vunpack.c.l.b16 %v143
  %v636 = vunpack.c.l.b16 %v144
  %v637 = vunpack.c.l.b16 %v145
  %v638 = vunpack.c.l.b16 %v146
  %v639 = vunpack.c.l.b16 %v147
  %v640 = vunpack.c.l.b16 %v148
  %v641 = vunpack.c.l.b16 %v149
  %v642 = vpack.c.b16 %v579, %v578
  %v643 = vpack.c.b16 %v581, %v580
  %v644 = vpack.c.b16 %v583, %v582
  %v645 = vpack.c.b16 %v585, %v584
  %v646 = vpack.c.b16 %v587, %v586
  %v647 = vpack.c.b16 %v589, %v588
  %v648 = vpack.c.b16 %v591, %v590
  %v649 = vpack.c.b16 %v593, %v592
  %v650 = vpack.c.b16 %v595, %v594
  %v651 = vpack.c.b16 %v597, %v596
  %v652 = vpack.c.b16 %v599, %v598
  %v653 = vpack.c.b16 %v601, %v600
  %v654 = vpack.c.b16 %v603, %v602
  %v655 = vpack.c.b16 %v605, %v604
  %v656 = vpack.c.b16 %v607, %v606
  %v657 = vpack.c.b16 %v609, %v608
  %v658 = vpack.c.b16 %v611, %v610
  %v659 = vpack.c.b16 %v613, %v612
  %v660 = vpack.c.b16 %v615, %v614
  %v661 = vpack.c.b16 %v617, %v616
  %v662 = vpack.c.b16 %v619, %v618
  %v663 = vpack.c.b16 %v621, %v620
  %v664 = vpack.c.b16 %v623, %v622
  %v665 = vpack.c.b16 %v625, %v624
  %v666 = vpack.c.b16 %v627, %v626
  %v667 = vpack.c.b16 %v629, %v628
  %v668 = vpack.c.b16 %v631, %v630
  %v669 = vpack.c.b16 %v633, %v632
  %v670 = vpack.c.b16 %v635, %v634
  %v671 = vpack.c.b16 %v637, %v636
  %v672 = vpack.c.b16 %v639, %v638
  %v673 = vpack.c.b16 %v641, %v640
  %706 = vmatpush.bf16.msra.mxu0 %v649
  %707 = vmatpush.bf16.msra.mxu0 %v648
  %708 = vmatpush.bf16.msra.mxu0 %v647
  %709 = vmatpush.bf16.msra.mxu0 %v646
  %710 = vmatpush.bf16.msra.mxu0 %v645
  %711 = vmatpush.bf16.msra.mxu0 %v644
  %712 = vmatpush.bf16.msra.mxu0 %v643
  %713 = vmatpush.bf16.msra.mxu0 %v642
  %714 = vmatmul.bf16.gmra.mxu0 %v370
  %v715 = vpop.f32.mrf.mxu0
  %v716 = vadd.f32 %v152, %v715
  %v717 = vpop.f32.mrf.mxu0
  %v718 = vadd.f32 %v152, %v717
  %719 = vmatmul.bf16.gmra.mxu0 %v374
  %v720 = vpop.f32.mrf.mxu0
  %v721 = vadd.f32 %v152, %v720
  %v722 = vpop.f32.mrf.mxu0
  %v723 = vadd.f32 %v152, %v722
  %724 = vmatmul.bf16.gmra.mxu0 %v378
  %v725 = vpop.f32.mrf.mxu0
  %v726 = vadd.f32 %v152, %v725
  %v727 = vpop.f32.mrf.mxu0
  %v728 = vadd.f32 %v152, %v727
  %729 = vmatmul.bf16.gmra.mxu0 %v382
  %v730 = vpop.f32.mrf.mxu0
  %v731 = vadd.f32 %v152, %v730
  %v732 = vpop.f32.mrf.mxu0
  %v733 = vadd.f32 %v152, %v732
  %734 = vmatmul.bf16.gmra.mxu0 %v386
  %v735 = vpop.f32.mrf.mxu0
  %v736 = vadd.f32 %v152, %v735
  %v737 = vpop.f32.mrf.mxu0
  %v738 = vadd.f32 %v152, %v737
  %739 = vmatmul.bf16.gmra.mxu0 %v390
  %v740 = vpop.f32.mrf.mxu0
  %v741 = vadd.f32 %v152, %v740
  %v742 = vpop.f32.mrf.mxu0
  %v743 = vadd.f32 %v152, %v742
  %744 = vmatmul.bf16.gmra.mxu0 %v394
  %v745 = vpop.f32.mrf.mxu0
  %v746 = vadd.f32 %v152, %v745
  %v747 = vpop.f32.mrf.mxu0
  %v748 = vadd.f32 %v152, %v747
  %749 = vmatmul.bf16.gmra.mxu0 %v398
  %v750 = vpop.f32.mrf.mxu0
  %v751 = vadd.f32 %v152, %v750
  %v752 = vpop.f32.mrf.mxu0
  %v753 = vadd.f32 %v152, %v752
  %754 = vmatmul.bf16.gmra.mxu0 %v402
  %v755 = vpop.f32.mrf.mxu0
  %v756 = vadd.f32 %v152, %v755
  %v757 = vpop.f32.mrf.mxu0
  %v758 = vadd.f32 %v152, %v757
  %759 = vmatmul.bf16.gmra.mxu0 %v406
  %v760 = vpop.f32.mrf.mxu0
  %v761 = vadd.f32 %v152, %v760
  %v762 = vpop.f32.mrf.mxu0
  %v763 = vadd.f32 %v152, %v762
  %764 = vmatmul.bf16.gmra.mxu0 %v410
  %v765 = vpop.f32.mrf.mxu0
  %v766 = vadd.f32 %v152, %v765
  %v767 = vpop.f32.mrf.mxu0
  %v768 = vadd.f32 %v152, %v767
  %769 = vmatmul.bf16.gmra.mxu0 %v414
  %v770 = vpop.f32.mrf.mxu0
  %v771 = vadd.f32 %v152, %v770
  %v772 = vpop.f32.mrf.mxu0
  %v773 = vadd.f32 %v152, %v772
  %774 = vmatmul.bf16.gmra.mxu0 %v418
  %v775 = vpop.f32.mrf.mxu0
  %v776 = vadd.f32 %v152, %v775
  %v777 = vpop.f32.mrf.mxu0
  %v778 = vadd.f32 %v152, %v777
  %779 = vmatmul.bf16.gmra.mxu0 %v422
  %v780 = vpop.f32.mrf.mxu0
  %v781 = vadd.f32 %v152, %v780
  %v782 = vpop.f32.mrf.mxu0
  %v783 = vadd.f32 %v152, %v782
  %784 = vmatmul.bf16.gmra.mxu0 %v426
  %v785 = vpop.f32.mrf.mxu0
  %v786 = vadd.f32 %v152, %v785
  %v787 = vpop.f32.mrf.mxu0
  %v788 = vadd.f32 %v152, %v787
  %789 = vmatmul.bf16.gmra.mxu0 %v430
  %v790 = vpop.f32.mrf.mxu0
  %v791 = vadd.f32 %v152, %v790
  %v792 = vpop.f32.mrf.mxu0
  %v793 = vadd.f32 %v152, %v792
  %794 = vmatmul.bf16.gmra.mxu0 %v434
  %v795 = vpop.f32.mrf.mxu0
  %v796 = vadd.f32 %v152, %v795
  %v797 = vpop.f32.mrf.mxu0
  %v798 = vadd.f32 %v152, %v797
  %799 = vmatmul.bf16.gmra.mxu0 %v438
  %v800 = vpop.f32.mrf.mxu0
  %v801 = vadd.f32 %v152, %v800
  %v802 = vpop.f32.mrf.mxu0
  %v803 = vadd.f32 %v152, %v802
  %804 = vdwg.mxu0
  %805 = vmatpush.bf16.msra.mxu0 %v657
  %806 = vmatpush.bf16.msra.mxu0 %v656
  %807 = vmatpush.bf16.msra.mxu0 %v655
  %808 = vmatpush.bf16.msra.mxu0 %v654
  %809 = vmatpush.bf16.msra.mxu0 %v653
  %810 = vmatpush.bf16.msra.mxu0 %v652
  %811 = vmatpush.bf16.msra.mxu0 %v651
  %812 = vmatpush.bf16.msra.mxu0 %v650
  %813 = vmatmul.bf16.gmra.mxu0 %v371
  %v814 = vpop.f32.mrf.mxu0
  %v815 = vadd.f32 %v716, %v814
  %v816 = vpop.f32.mrf.mxu0
  %v817 = vadd.f32 %v718, %v816
  %818 = vmatmul.bf16.gmra.mxu0 %v375
  %v819 = vpop.f32.mrf.mxu0
  %v820 = vadd.f32 %v721, %v819
  %v821 = vpop.f32.mrf.mxu0
  %v822 = vadd.f32 %v723, %v821
  %823 = vmatmul.bf16.gmra.mxu0 %v379
  %v824 = vpop.f32.mrf.mxu0
  %v825 = vadd.f32 %v726, %v824
  %v826 = vpop.f32.mrf.mxu0
  %v827 = vadd.f32 %v728, %v826
  %828 = vmatmul.bf16.gmra.mxu0 %v383
  %v829 = vpop.f32.mrf.mxu0
  %v830 = vadd.f32 %v731, %v829
  %v831 = vpop.f32.mrf.mxu0
  %v832 = vadd.f32 %v733, %v831
  %833 = vmatmul.bf16.gmra.mxu0 %v387
  %v834 = vpop.f32.mrf.mxu0
  %v835 = vadd.f32 %v736, %v834
  %v836 = vpop.f32.mrf.mxu0
  %v837 = vadd.f32 %v738, %v836
  %838 = vmatmul.bf16.gmra.mxu0 %v391
  %v839 = vpop.f32.mrf.mxu0
  %v840 = vadd.f32 %v741, %v839
  %v841 = vpop.f32.mrf.mxu0
  %v842 = vadd.f32 %v743, %v841
  %843 = vmatmul.bf16.gmra.mxu0 %v395
  %v844 = vpop.f32.mrf.mxu0
  %v845 = vadd.f32 %v746, %v844
  %v846 = vpop.f32.mrf.mxu0
  %v847 = vadd.f32 %v748, %v846
  %848 = vmatmul.bf16.gmra.mxu0 %v399
  %v849 = vpop.f32.mrf.mxu0
  %v850 = vadd.f32 %v751, %v849
  %v851 = vpop.f32.mrf.mxu0
  %v852 = vadd.f32 %v753, %v851
  %853 = vmatmul.bf16.gmra.mxu0 %v403
  %v854 = vpop.f32.mrf.mxu0
  %v855 = vadd.f32 %v756, %v854
  %v856 = vpop.f32.mrf.mxu0
  %v857 = vadd.f32 %v758, %v856
  %858 = vmatmul.bf16.gmra.mxu0 %v407
  %v859 = vpop.f32.mrf.mxu0
  %v860 = vadd.f32 %v761, %v859
  %v861 = vpop.f32.mrf.mxu0
  %v862 = vadd.f32 %v763, %v861
  %863 = vmatmul.bf16.gmra.mxu0 %v411
  %v864 = vpop.f32.mrf.mxu0
  %v865 = vadd.f32 %v766, %v864
  %v866 = vpop.f32.mrf.mxu0
  %v867 = vadd.f32 %v768, %v866
  %868 = vmatmul.bf16.gmra.mxu0 %v415
  %v869 = vpop.f32.mrf.mxu0
  %v870 = vadd.f32 %v771, %v869
  %v871 = vpop.f32.mrf.mxu0
  %v872 = vadd.f32 %v773, %v871
  %873 = vmatmul.bf16.gmra.mxu0 %v419
  %v874 = vpop.f32.mrf.mxu0
  %v875 = vadd.f32 %v776, %v874
  %v876 = vpop.f32.mrf.mxu0
  %v877 = vadd.f32 %v778, %v876
  %878 = vmatmul.bf16.gmra.mxu0 %v423
  %v879 = vpop.f32.mrf.mxu0
  %v880 = vadd.f32 %v781, %v879
  %v881 = vpop.f32.mrf.mxu0
  %v882 = vadd.f32 %v783, %v881
  %883 = vmatmul.bf16.gmra.mxu0 %v427
  %v884 = vpop.f32.mrf.mxu0
  %v885 = vadd.f32 %v786, %v884
  %v886 = vpop.f32.mrf.mxu0
  %v887 = vadd.f32 %v788, %v886
  %888 = vmatmul.bf16.gmra.mxu0 %v431
  %v889 = vpop.f32.mrf.mxu0
  %v890 = vadd.f32 %v791, %v889
  %v891 = vpop.f32.mrf.mxu0
  %v892 = vadd.f32 %v793, %v891
  %893 = vmatmul.bf16.gmra.mxu0 %v435
  %v894 = vpop.f32.mrf.mxu0
  %v895 = vadd.f32 %v796, %v894
  %v896 = vpop.f32.mrf.mxu0
  %v897 = vadd.f32 %v798, %v896
  %898 = vmatmul.bf16.gmra.mxu0 %v439
  %v899 = vpop.f32.mrf.mxu0
  %v900 = vadd.f32 %v801, %v899
  %v901 = vpop.f32.mrf.mxu0
  %v902 = vadd.f32 %v803, %v901
  %903 = vdwg.mxu0
  %904 = vmatpush.bf16.msra.mxu0 %v665
  %905 = vmatpush.bf16.msra.mxu0 %v664
  %906 = vmatpush.bf16.msra.mxu0 %v663
  %907 = vmatpush.bf16.msra.mxu0 %v662
  %908 = vmatpush.bf16.msra.mxu0 %v661
  %909 = vmatpush.bf16.msra.mxu0 %v660
  %910 = vmatpush.bf16.msra.mxu0 %v659
  %911 = vmatpush.bf16.msra.mxu0 %v658
  %912 = vmatmul.bf16.gmra.mxu0 %v372
  %v913 = vpop.f32.mrf.mxu0
  %v914 = vadd.f32 %v815, %v913
  %v915 = vpop.f32.mrf.mxu0
  %v916 = vadd.f32 %v817, %v915
  %917 = vmatmul.bf16.gmra.mxu0 %v376
  %v918 = vpop.f32.mrf.mxu0
  %v919 = vadd.f32 %v820, %v918
  %v920 = vpop.f32.mrf.mxu0
  %v921 = vadd.f32 %v822, %v920
  %922 = vmatmul.bf16.gmra.mxu0 %v380
  %v923 = vpop.f32.mrf.mxu0
  %v924 = vadd.f32 %v825, %v923
  %v925 = vpop.f32.mrf.mxu0
  %v926 = vadd.f32 %v827, %v925
  %927 = vmatmul.bf16.gmra.mxu0 %v384
  %v928 = vpop.f32.mrf.mxu0
  %v929 = vadd.f32 %v830, %v928
  %v930 = vpop.f32.mrf.mxu0
  %v931 = vadd.f32 %v832, %v930
  %932 = vmatmul.bf16.gmra.mxu0 %v388
  %v933 = vpop.f32.mrf.mxu0
  %v934 = vadd.f32 %v835, %v933
  %v935 = vpop.f32.mrf.mxu0
  %v936 = vadd.f32 %v837, %v935
  %937 = vmatmul.bf16.gmra.mxu0 %v392
  %v938 = vpop.f32.mrf.mxu0
  %v939 = vadd.f32 %v840, %v938
  %v940 = vpop.f32.mrf.mxu0
  %v941 = vadd.f32 %v842, %v940
  %942 = vmatmul.bf16.gmra.mxu0 %v396
  %v943 = vpop.f32.mrf.mxu0
  %v944 = vadd.f32 %v845, %v943
  %v945 = vpop.f32.mrf.mxu0
  %v946 = vadd.f32 %v847, %v945
  %947 = vmatmul.bf16.gmra.mxu0 %v400
  %v948 = vpop.f32.mrf.mxu0
  %v949 = vadd.f32 %v850, %v948
  %v950 = vpop.f32.mrf.mxu0
  %v951 = vadd.f32 %v852, %v950
  %952 = vmatmul.bf16.gmra.mxu0 %v404
  %v953 = vpop.f32.mrf.mxu0
  %v954 = vadd.f32 %v855, %v953
  %v955 = vpop.f32.mrf.mxu0
  %v956 = vadd.f32 %v857, %v955
  %957 = vmatmul.bf16.gmra.mxu0 %v408
  %v958 = vpop.f32.mrf.mxu0
  %v959 = vadd.f32 %v860, %v958
  %v960 = vpop.f32.mrf.mxu0
  %v961 = vadd.f32 %v862, %v960
  %962 = vmatmul.bf16.gmra.mxu0 %v412
  %v963 = vpop.f32.mrf.mxu0
  %v964 = vadd.f32 %v865, %v963
  %v965 = vpop.f32.mrf.mxu0
  %v966 = vadd.f32 %v867, %v965
  %967 = vmatmul.bf16.gmra.mxu0 %v416
  %v968 = vpop.f32.mrf.mxu0
  %v969 = vadd.f32 %v870, %v968
  %v970 = vpop.f32.mrf.mxu0
  %v971 = vadd.f32 %v872, %v970
  %972 = vmatmul.bf16.gmra.mxu0 %v420
  %v973 = vpop.f32.mrf.mxu0
  %v974 = vadd.f32 %v875, %v973
  %v975 = vpop.f32.mrf.mxu0
  %v976 = vadd.f32 %v877, %v975
  %977 = vmatmul.bf16.gmra.mxu0 %v424
  %v978 = vpop.f32.mrf.mxu0
  %v979 = vadd.f32 %v880, %v978
  %v980 = vpop.f32.mrf.mxu0
  %v981 = vadd.f32 %v882, %v980
  %982 = vmatmul.bf16.gmra.mxu0 %v428
  %v983 = vpop.f32.mrf.mxu0
  %v984 = vadd.f32 %v885, %v983
  %v985 = vpop.f32.mrf.mxu0
  %v986 = vadd.f32 %v887, %v985
  %987 = vmatmul.bf16.gmra.mxu0 %v432
  %v988 = vpop.f32.mrf.mxu0
  %v989 = vadd.f32 %v890, %v988
  %v990 = vpop.f32.mrf.mxu0
  %v991 = vadd.f32 %v892, %v990
  %992 = vmatmul.bf16.gmra.mxu0 %v436
  %v993 = vpop.f32.mrf.mxu0
  %v994 = vadd.f32 %v895, %v993
  %v995 = vpop.f32.mrf.mxu0
  %v996 = vadd.f32 %v897, %v995
  %997 = vmatmul.bf16.gmra.mxu0 %v440
  %v998 = vpop.f32.mrf.mxu0
  %v999 = vadd.f32 %v900, %v998
  %v1000 = vpop.f32.mrf.mxu0
  %v1001 = vadd.f32 %v902, %v1000
  %1002 = vdwg.mxu0
  %1003 = vmatpush.bf16.msra.mxu0 %v673
  %1004 = vmatpush.bf16.msra.mxu0 %v672
  %1005 = vmatpush.bf16.msra.mxu0 %v671
  %1006 = vmatpush.bf16.msra.mxu0 %v670
  %1007 = vmatpush.bf16.msra.mxu0 %v669
  %1008 = vmatpush.bf16.msra.mxu0 %v668
  %1009 = vmatpush.bf16.msra.mxu0 %v667
  %1010 = vmatpush.bf16.msra.mxu0 %v666
  %1011 = vmatmul.bf16.gmra.mxu0 %v373
  %v1012 = vpop.f32.mrf.mxu0
  %v1013 = vadd.f32 %v914, %v1012
  %v1014 = vpop.f32.mrf.mxu0
  %v1015 = vadd.f32 %v916, %v1014
  %1016 = vmatmul.bf16.gmra.mxu0 %v377
  %v1017 = vpop.f32.mrf.mxu0
  %v1018 = vadd.f32 %v919, %v1017
  %v1019 = vpop.f32.mrf.mxu0
  %v1020 = vadd.f32 %v921, %v1019
  %1021 = vmatmul.bf16.gmra.mxu0 %v381
  %v1022 = vpop.f32.mrf.mxu0
  %v1023 = vadd.f32 %v924, %v1022
  %v1024 = vpop.f32.mrf.mxu0
  %v1025 = vadd.f32 %v926, %v1024
  %1026 = vmatmul.bf16.gmra.mxu0 %v385
  %v1027 = vpop.f32.mrf.mxu0
  %v1028 = vadd.f32 %v929, %v1027
  %v1029 = vpop.f32.mrf.mxu0
  %v1030 = vadd.f32 %v931, %v1029
  %1031 = vmatmul.bf16.gmra.mxu0 %v389
  %v1032 = vpop.f32.mrf.mxu0
  %v1033 = vadd.f32 %v934, %v1032
  %v1034 = vpop.f32.mrf.mxu0
  %v1035 = vadd.f32 %v936, %v1034
  %1036 = vmatmul.bf16.gmra.mxu0 %v393
  %v1037 = vpop.f32.mrf.mxu0
  %v1038 = vadd.f32 %v939, %v1037
  %v1039 = vpop.f32.mrf.mxu0
  %v1040 = vadd.f32 %v941, %v1039
  %1041 = vmatmul.bf16.gmra.mxu0 %v397
  %v1042 = vpop.f32.mrf.mxu0
  %v1043 = vadd.f32 %v944, %v1042
  %v1044 = vpop.f32.mrf.mxu0
  %v1045 = vadd.f32 %v946, %v1044
  %1046 = vmatmul.bf16.gmra.mxu0 %v401
  %v1047 = vpop.f32.mrf.mxu0
  %v1048 = vadd.f32 %v949, %v1047
  %v1049 = vpop.f32.mrf.mxu0
  %v1050 = vadd.f32 %v951, %v1049
  %1051 = vmatmul.bf16.gmra.mxu0 %v405
  %v1052 = vpop.f32.mrf.mxu0
  %v1053 = vadd.f32 %v954, %v1052
  %v1054 = vpop.f32.mrf.mxu0
  %v1055 = vadd.f32 %v956, %v1054
  %1056 = vmatmul.bf16.gmra.mxu0 %v409
  %v1057 = vpop.f32.mrf.mxu0
  %v1058 = vadd.f32 %v959, %v1057
  %v1059 = vpop.f32.mrf.mxu0
  %v1060 = vadd.f32 %v961, %v1059
  %1061 = vmatmul.bf16.gmra.mxu0 %v413
  %v1062 = vpop.f32.mrf.mxu0
  %v1063 = vadd.f32 %v964, %v1062
  %v1064 = vpop.f32.mrf.mxu0
  %v1065 = vadd.f32 %v966, %v1064
  %1066 = vmatmul.bf16.gmra.mxu0 %v417
  %v1067 = vpop.f32.mrf.mxu0
  %v1068 = vadd.f32 %v969, %v1067
  %v1069 = vpop.f32.mrf.mxu0
  %v1070 = vadd.f32 %v971, %v1069
  %1071 = vmatmul.bf16.gmra.mxu0 %v421
  %v1072 = vpop.f32.mrf.mxu0
  %v1073 = vadd.f32 %v974, %v1072
  %v1074 = vpop.f32.mrf.mxu0
  %v1075 = vadd.f32 %v976, %v1074
  %1076 = vmatmul.bf16.gmra.mxu0 %v425
  %v1077 = vpop.f32.mrf.mxu0
  %v1078 = vadd.f32 %v979, %v1077
  %v1079 = vpop.f32.mrf.mxu0
  %v1080 = vadd.f32 %v981, %v1079
  %1081 = vmatmul.bf16.gmra.mxu0 %v429
  %v1082 = vpop.f32.mrf.mxu0
  %v1083 = vadd.f32 %v984, %v1082
  %v1084 = vpop.f32.mrf.mxu0
  %v1085 = vadd.f32 %v986, %v1084
  %1086 = vmatmul.bf16.gmra.mxu0 %v433
  %v1087 = vpop.f32.mrf.mxu0
  %v1088 = vadd.f32 %v989, %v1087
  %v1089 = vpop.f32.mrf.mxu0
  %v1090 = vadd.f32 %v991, %v1089
  %1091 = vmatmul.bf16.gmra.mxu0 %v437
  %v1092 = vpop.f32.mrf.mxu0
  %v1093 = vadd.f32 %v994, %v1092
  %v1094 = vpop.f32.mrf.mxu0
  %v1095 = vadd.f32 %v996, %v1094
  %1096 = vmatmul.bf16.gmra.mxu0 %v441
  %v1097 = vpop.f32.mrf.mxu0
  %v1098 = vadd.f32 %v999, %v1097
  %v1099 = vpop.f32.mrf.mxu0
  %v1100 = vadd.f32 %v1001, %v1099
  %1101 = vdwg.mxu0
  %1102 = vst [vmem:[%s3] sm:$0xff] %v1013
  %1103 = vst [vmem:[%s3 + $0x8] sm:$0xff] %v1015
  %1104 = vst [vmem:[%s3 + $0x10] sm:$0xff] %v1018
  %1105 = vst [vmem:[%s3 + $0x18] sm:$0xff] %v1020
  %1106 = vst [vmem:[%s3 + $0x20] sm:$0xff] %v1023
  %1107 = vst [vmem:[%s3 + $0x28] sm:$0xff] %v1025
  %1108 = vst [vmem:[%s3 + $0x30] sm:$0xff] %v1028
  %1109 = vst [vmem:[%s3 + $0x38] sm:$0xff] %v1030
  %1110 = vst [vmem:[%s3 + $0x40] sm:$0xff] %v1033
  %1111 = vst [vmem:[%s3 + $0x48] sm:$0xff] %v1035
  %1112 = vst [vmem:[%s3 + $0x50] sm:$0xff] %v1038
  %1113 = vst [vmem:[%s3 + $0x58] sm:$0xff] %v1040
  %1114 = vst [vmem:[%s3 + $0x60] sm:$0xff] %v1043
  %1115 = vst [vmem:[%s3 + $0x68] sm:$0xff] %v1045
  %1116 = vst [vmem:[%s3 + $0x70] sm:$0xff] %v1048
  %1117 = vst [vmem:[%s3 + $0x78] sm:$0xff] %v1050
  %1118 = vst [vmem:[%s3 + $0x80] sm:$0xff] %v1053
  %1119 = vst [vmem:[%s3 + $0x88] sm:$0xff] %v1055
  %1120 = vst [vmem:[%s3 + $0x90] sm:$0xff] %v1058
  %1121 = vst [vmem:[%s3 + $0x98] sm:$0xff] %v1060
  %1122 = vst [vmem:[%s3 + $0xa0] sm:$0xff] %v1063
  %1123 = vst [vmem:[%s3 + $0xa8] sm:$0xff] %v1065
  %1124 = vst [vmem:[%s3 + $0xb0] sm:$0xff] %v1068
  %1125 = vst [vmem:[%s3 + $0xb8] sm:$0xff] %v1070
  %1126 = vst [vmem:[%s3 + $0xc0] sm:$0xff] %v1073
  %1127 = vst [vmem:[%s3 + $0xc8] sm:$0xff] %v1075
  %1128 = vst [vmem:[%s3 + $0xd0] sm:$0xff] %v1078
  %1129 = vst [vmem:[%s3 + $0xd8] sm:$0xff] %v1080
  %1130 = vst [vmem:[%s3 + $0xe0] sm:$0xff] %v1083
  %1131 = vst [vmem:[%s3 + $0xe8] sm:$0xff] %v1085
  %1132 = vst [vmem:[%s3 + $0xf0] sm:$0xff] %v1088
  %1133 = vst [vmem:[%s3 + $0xf8] sm:$0xff] %v1090
  %1134 = vst [vmem:[%s3 + $0x100] sm:$0xff] %v1093
  %1135 = vst [vmem:[%s3 + $0x108] sm:$0xff] %v1095
  %1136 = vst [vmem:[%s3 + $0x110] sm:$0xff] %v1098
  %1137 = vst [vmem:[%s3 + $0x118] sm:$0xff] %v1100
  // Predicated region
  $region14: #{net_forward.16} parent=0 // pred_check
    _
  $region15: #{net_forward.16} parent=0 // pred_check_branch
    %1139 = sbr.rel (0) target = $region17
  $region16: #{net_forward.16} parent=0 // pred_region
    _
  $region17: #{net_forward.16} parent=0 // pred_fallthru
    _
  // Predicated region
  $region18: #{net_forward.16} parent=0 // pred_check
    _
  $region19: #{net_forward.16} parent=0 // pred_check_branch
    %1141 = sbr.rel (0) target = $region21
  $region20: #{net_forward.16} parent=0 // pred_region
    _
  $region21: #{net_forward.16} parent=0 // pred_fallthru
    _

// kernel: net_forward.19
$region0: #{net_forward.19}
  #allocation0 [shape = 'u32[]', space=smem, size = 0x4, offset = 0x4, fixed_abs, tag = 'smem constant byte address 0x4 - core index']
  #allocation1 [shape = 'u32[72,128]{1,0:T(1,128)}', space=vmem, size = 0x9000, scoped, tag = 'internal scratch']
  %s0 = inlined_call_operand.vmem [shape: bf16[128,2304], index: 0, kind: input, shape index: {}]
  %s1 = inlined_call_operand.vmem [shape: bf16[2304,128], index: 1, kind: input, shape index: {}]
  %s2 = inlined_call_operand.vmem [shape: f32[1,128], index: 2, kind: input, shape index: {}]
  %s3 = inlined_call_operand.vmem [shape: f32[128,128], index: 3, kind: output, shape index: {}]
  %s4 = sld [smem:[#allocation0]]
  $region22: #{net_forward.19} parent=0
    _
  %s6 = ssub.s32 1, %s4
  %s7 = scalar_select 0, %s6, %s4
  // Predicated region
  $region2: #{net_forward.19} parent=0 // pred_check
    _
  $region3: #{net_forward.19} parent=0 // pred_check_branch
    %9 = sbr.rel (0) target = $region5
  $region4: #{net_forward.19} parent=0 // pred_region
    _
  $region5: #{net_forward.19} parent=0 // pred_fallthru
    _
  // Predicated region
  $region6: #{net_forward.19} parent=0 // pred_check
    _
  $region7: #{net_forward.19} parent=0 // pred_check_branch
    %11 = sbr.rel (0) target = $region9
  $region8: #{net_forward.19} parent=0 // pred_region
    _
  $region9: #{net_forward.19} parent=0 // pred_fallthru
    _
  // Predicated region
  $region10: #{net_forward.19} parent=0 // pred_check
    _
  $region11: #{net_forward.19} parent=0 // pred_check_branch
    %13 = sbr.rel (0) target = $region13
  $region12: #{net_forward.19} parent=0 // pred_region
    _
  $region13: #{net_forward.19} parent=0 // pred_fallthru
    _
  %v14 = vld [vmem:[%s0] sm:$0xff]
  %v15 = vld [vmem:[%s0 + $0x8] sm:$0xff]
  %v16 = vld [vmem:[%s0 + $0x10] sm:$0xff]
  %v17 = vld [vmem:[%s0 + $0x18] sm:$0xff]
  %v18 = vld [vmem:[%s0 + $0x20] sm:$0xff]
  %v19 = vld [vmem:[%s0 + $0x28] sm:$0xff]
  %v20 = vld [vmem:[%s0 + $0x30] sm:$0xff]
  %v21 = vld [vmem:[%s0 + $0x38] sm:$0xff]
  %v22 = vld [vmem:[%s0 + $0x40] sm:$0xff]
  %v23 = vld [vmem:[%s0 + $0x48] sm:$0xff]
  %v24 = vld [vmem:[%s0 + $0x50] sm:$0xff]
  %v25 = vld [vmem:[%s0 + $0x58] sm:$0xff]
  %v26 = vld [vmem:[%s0 + $0x60] sm:$0xff]
  %v27 = vld [vmem:[%s0 + $0x68] sm:$0xff]
  %v28 = vld [vmem:[%s0 + $0x70] sm:$0xff]
  %v29 = vld [vmem:[%s0 + $0x78] sm:$0xff]
  %v30 = vld [vmem:[%s0 + $0x80] sm:$0xff]
  %v31 = vld [vmem:[%s0 + $0x88] sm:$0xff]
  %v32 = vld [vmem:[%s0 + $0x90] sm:$0xff]
  %v33 = vld [vmem:[%s0 + $0x98] sm:$0xff]
  %v34 = vld [vmem:[%s0 + $0xa0] sm:$0xff]
  %v35 = vld [vmem:[%s0 + $0xa8] sm:$0xff]
  %v36 = vld [vmem:[%s0 + $0xb0] sm:$0xff]
  %v37 = vld [vmem:[%s0 + $0xb8] sm:$0xff]
  %v38 = vld [vmem:[%s0 + $0xc0] sm:$0xff]
  %v39 = vld [vmem:[%s0 + $0xc8] sm:$0xff]
  %v40 = vld [vmem:[%s0 + $0xd0] sm:$0xff]
  %v41 = vld [vmem:[%s0 + $0xd8] sm:$0xff]
  %v42 = vld [vmem:[%s0 + $0xe0] sm:$0xff]
  %v43 = vld [vmem:[%s0 + $0xe8] sm:$0xff]
  %v44 = vld [vmem:[%s0 + $0xf0] sm:$0xff]
  %v45 = vld [vmem:[%s0 + $0xf8] sm:$0xff]
  %v46 = vld [vmem:[%s0 + $0x100] sm:$0xff]
  %v47 = vld [vmem:[%s0 + $0x108] sm:$0xff]
  %v48 = vld [vmem:[%s0 + $0x110] sm:$0xff]
  %v49 = vld [vmem:[%s0 + $0x118] sm:$0xff]
  %v50 = vld [vmem:[%s0 + $0x120] sm:$0xff]
  %v51 = vld [vmem:[%s0 + $0x128] sm:$0xff]
  %v52 = vld [vmem:[%s0 + $0x130] sm:$0xff]
  %v53 = vld [vmem:[%s0 + $0x138] sm:$0xff]
  %v54 = vld [vmem:[%s0 + $0x140] sm:$0xff]
  %v55 = vld [vmem:[%s0 + $0x148] sm:$0xff]
  %v56 = vld [vmem:[%s0 + $0x150] sm:$0xff]
  %v57 = vld [vmem:[%s0 + $0x158] sm:$0xff]
  %v58 = vld [vmem:[%s0 + $0x160] sm:$0xff]
  %v59 = vld [vmem:[%s0 + $0x168] sm:$0xff]
  %v60 = vld [vmem:[%s0 + $0x170] sm:$0xff]
  %v61 = vld [vmem:[%s0 + $0x178] sm:$0xff]
  %v62 = vld [vmem:[%s0 + $0x180] sm:$0xff]
  %v63 = vld [vmem:[%s0 + $0x188] sm:$0xff]
  %v64 = vld [vmem:[%s0 + $0x190] sm:$0xff]
  %v65 = vld [vmem:[%s0 + $0x198] sm:$0xff]
  %v66 = vld [vmem:[%s0 + $0x1a0] sm:$0xff]
  %v67 = vld [vmem:[%s0 + $0x1a8] sm:$0xff]
  %v68 = vld [vmem:[%s0 + $0x1b0] sm:$0xff]
  %v69 = vld [vmem:[%s0 + $0x1b8] sm:$0xff]
  %v70 = vld [vmem:[%s0 + $0x1c0] sm:$0xff]
  %v71 = vld [vmem:[%s0 + $0x1c8] sm:$0xff]
  %v72 = vld [vmem:[%s0 + $0x1d0] sm:$0xff]
  %v73 = vld [vmem:[%s0 + $0x1d8] sm:$0xff]
  %v74 = vld [vmem:[%s0 + $0x1e0] sm:$0xff]
  %v75 = vld [vmem:[%s0 + $0x1e8] sm:$0xff]
  %v76 = vld [vmem:[%s0 + $0x1f0] sm:$0xff]
  %v77 = vld [vmem:[%s0 + $0x1f8] sm:$0xff]
  %v78 = vld [vmem:[%s0 + $0x200] sm:$0xff]
  %v79 = vld [vmem:[%s0 + $0x208] sm:$0xff]
  %v80 = vld [vmem:[%s0 + $0x210] sm:$0xff]
  %v81 = vld [vmem:[%s0 + $0x218] sm:$0xff]
  %v82 = vld [vmem:[%s0 + $0x220] sm:$0xff]
  %v83 = vld [vmem:[%s0 + $0x228] sm:$0xff]
  %v84 = vld [vmem:[%s0 + $0x230] sm:$0xff]
  %v85 = vld [vmem:[%s0 + $0x238] sm:$0xff]
  %v86 = vld [vmem:[%s0 + $0x240] sm:$0xff]
  %v87 = vld [vmem:[%s0 + $0x248] sm:$0xff]
  %v88 = vld [vmem:[%s0 + $0x250] sm:$0xff]
  %v89 = vld [vmem:[%s0 + $0x258] sm:$0xff]
  %v90 = vld [vmem:[%s0 + $0x260] sm:$0xff]
  %v91 = vld [vmem:[%s0 + $0x268] sm:$0xff]
  %v92 = vld [vmem:[%s0 + $0x270] sm:$0xff]
  %v93 = vld [vmem:[%s0 + $0x278] sm:$0xff]
  %v94 = vld [vmem:[%s0 + $0x280] sm:$0xff]
  %v95 = vld [vmem:[%s0 + $0x288] sm:$0xff]
  %v96 = vld [vmem:[%s0 + $0x290] sm:$0xff]
  %v97 = vld [vmem:[%s0 + $0x298] sm:$0xff]
  %v98 = vld [vmem:[%s0 + $0x2a0] sm:$0xff]
  %v99 = vld [vmem:[%s0 + $0x2a8] sm:$0xff]
  %v100 = vld [vmem:[%s0 + $0x2b0] sm:$0xff]
  %v101 = vld [vmem:[%s0 + $0x2b8] sm:$0xff]
  %v102 = vld [vmem:[%s0 + $0x2c0] sm:$0xff]
  %v103 = vld [vmem:[%s0 + $0x2c8] sm:$0xff]
  %v104 = vld [vmem:[%s0 + $0x2d0] sm:$0xff]
  %v105 = vld [vmem:[%s0 + $0x2d8] sm:$0xff]
  %v106 = vld [vmem:[%s0 + $0x2e0] sm:$0xff]
  %v107 = vld [vmem:[%s0 + $0x2e8] sm:$0xff]
  %v108 = vld [vmem:[%s0 + $0x2f0] sm:$0xff]
  %v109 = vld [vmem:[%s0 + $0x2f8] sm:$0xff]
  %v110 = vld [vmem:[%s0 + $0x300] sm:$0xff]
  %v111 = vld [vmem:[%s0 + $0x308] sm:$0xff]
  %v112 = vld [vmem:[%s0 + $0x310] sm:$0xff]
  %v113 = vld [vmem:[%s0 + $0x318] sm:$0xff]
  %v114 = vld [vmem:[%s0 + $0x320] sm:$0xff]
  %v115 = vld [vmem:[%s0 + $0x328] sm:$0xff]
  %v116 = vld [vmem:[%s0 + $0x330] sm:$0xff]
  %v117 = vld [vmem:[%s0 + $0x338] sm:$0xff]
  %v118 = vld [vmem:[%s0 + $0x340] sm:$0xff]
  %v119 = vld [vmem:[%s0 + $0x348] sm:$0xff]
  %v120 = vld [vmem:[%s0 + $0x350] sm:$0xff]
  %v121 = vld [vmem:[%s0 + $0x358] sm:$0xff]
  %v122 = vld [vmem:[%s0 + $0x360] sm:$0xff]
  %v123 = vld [vmem:[%s0 + $0x368] sm:$0xff]
  %v124 = vld [vmem:[%s0 + $0x370] sm:$0xff]
  %v125 = vld [vmem:[%s0 + $0x378] sm:$0xff]
  %v126 = vld [vmem:[%s0 + $0x380] sm:$0xff]
  %v127 = vld [vmem:[%s0 + $0x388] sm:$0xff]
  %v128 = vld [vmem:[%s0 + $0x390] sm:$0xff]
  %v129 = vld [vmem:[%s0 + $0x398] sm:$0xff]
  %v130 = vld [vmem:[%s0 + $0x3a0] sm:$0xff]
  %v131 = vld [vmem:[%s0 + $0x3a8] sm:$0xff]
  %v132 = vld [vmem:[%s0 + $0x3b0] sm:$0xff]
  %v133 = vld [vmem:[%s0 + $0x3b8] sm:$0xff]
  %v134 = vld [vmem:[%s0 + $0x3c0] sm:$0xff]
  %v135 = vld [vmem:[%s0 + $0x3c8] sm:$0xff]
  %v136 = vld [vmem:[%s0 + $0x3d0] sm:$0xff]
  %v137 = vld [vmem:[%s0 + $0x3d8] sm:$0xff]
  %v138 = vld [vmem:[%s0 + $0x3e0] sm:$0xff]
  %v139 = vld [vmem:[%s0 + $0x3e8] sm:$0xff]
  %v140 = vld [vmem:[%s0 + $0x3f0] sm:$0xff]
  %v141 = vld [vmem:[%s0 + $0x3f8] sm:$0xff]
  %v142 = vld [vmem:[%s0 + $0x400] sm:$0xff]
  %v143 = vld [vmem:[%s0 + $0x408] sm:$0xff]
  %v144 = vld [vmem:[%s0 + $0x410] sm:$0xff]
  %v145 = vld [vmem:[%s0 + $0x418] sm:$0xff]
  %v146 = vld [vmem:[%s0 + $0x420] sm:$0xff]
  %v147 = vld [vmem:[%s0 + $0x428] sm:$0xff]
  %v148 = vld [vmem:[%s0 + $0x430] sm:$0xff]
  %v149 = vld [vmem:[%s0 + $0x438] sm:$0xff]
  %v150 = vld [vmem:[%s0 + $0x440] sm:$0xff]
  %v151 = vld [vmem:[%s0 + $0x448] sm:$0xff]
  %v152 = vld [vmem:[%s0 + $0x450] sm:$0xff]
  %v153 = vld [vmem:[%s0 + $0x458] sm:$0xff]
  %v154 = vld [vmem:[%s0 + $0x460] sm:$0xff]
  %v155 = vld [vmem:[%s0 + $0x468] sm:$0xff]
  %v156 = vld [vmem:[%s0 + $0x470] sm:$0xff]
  %v157 = vld [vmem:[%s0 + $0x478] sm:$0xff]
  %v158 = vld [vmem:[%s1] sm:$0xf]
  %v159 = vld [vmem:[%s1 + $0x4] sm:$0xf]
  %v160 = vld [vmem:[%s1 + $0x8] sm:$0xf]
  %v161 = vld [vmem:[%s1 + $0xc] sm:$0xf]
  %v162 = vld [vmem:[%s1 + $0x10] sm:$0xf]
  %v163 = vld [vmem:[%s1 + $0x14] sm:$0xf]
  %v164 = vld [vmem:[%s1 + $0x18] sm:$0xf]
  %v165 = vld [vmem:[%s1 + $0x1c] sm:$0xf]
  %v166 = vld [vmem:[%s1 + $0x20] sm:$0xf]
  %v167 = vld [vmem:[%s1 + $0x24] sm:$0xf]
  %v168 = vld [vmem:[%s1 + $0x28] sm:$0xf]
  %v169 = vld [vmem:[%s1 + $0x2c] sm:$0xf]
  %v170 = vld [vmem:[%s1 + $0x30] sm:$0xf]
  %v171 = vld [vmem:[%s1 + $0x34] sm:$0xf]
  %v172 = vld [vmem:[%s1 + $0x38] sm:$0xf]
  %v173 = vld [vmem:[%s1 + $0x3c] sm:$0xf]
  %v174 = vld [vmem:[%s1 + $0x40] sm:$0xf]
  %v175 = vld [vmem:[%s1 + $0x44] sm:$0xf]
  %v176 = vld [vmem:[%s1 + $0x48] sm:$0xf]
  %v177 = vld [vmem:[%s1 + $0x4c] sm:$0xf]
  %v178 = vld [vmem:[%s1 + $0x50] sm:$0xf]
  %v179 = vld [vmem:[%s1 + $0x54] sm:$0xf]
  %v180 = vld [vmem:[%s1 + $0x58] sm:$0xf]
  %v181 = vld [vmem:[%s1 + $0x5c] sm:$0xf]
  %v182 = vld [vmem:[%s1 + $0x60] sm:$0xf]
  %v183 = vld [vmem:[%s1 + $0x64] sm:$0xf]
  %v184 = vld [vmem:[%s1 + $0x68] sm:$0xf]
  %v185 = vld [vmem:[%s1 + $0x6c] sm:$0xf]
  %v186 = vld [vmem:[%s1 + $0x70] sm:$0xf]
  %v187 = vld [vmem:[%s1 + $0x74] sm:$0xf]
  %v188 = vld [vmem:[%s1 + $0x78] sm:$0xf]
  %v189 = vld [vmem:[%s1 + $0x7c] sm:$0xf]
  %v190 = vld [vmem:[%s1 + $0x80] sm:$0xf]
  %v191 = vld [vmem:[%s1 + $0x84] sm:$0xf]
  %v192 = vld [vmem:[%s1 + $0x88] sm:$0xf]
  %v193 = vld [vmem:[%s1 + $0x8c] sm:$0xf]
  %v194 = vld [vmem:[%s1 + $0x90] sm:$0xf]
  %v195 = vld [vmem:[%s1 + $0x94] sm:$0xf]
  %v196 = vld [vmem:[%s1 + $0x98] sm:$0xf]
  %v197 = vld [vmem:[%s1 + $0x9c] sm:$0xf]
  %v198 = vld [vmem:[%s1 + $0xa0] sm:$0xf]
  %v199 = vld [vmem:[%s1 + $0xa4] sm:$0xf]
  %v200 = vld [vmem:[%s1 + $0xa8] sm:$0xf]
  %v201 = vld [vmem:[%s1 + $0xac] sm:$0xf]
  %v202 = vld [vmem:[%s1 + $0xb0] sm:$0xf]
  %v203 = vld [vmem:[%s1 + $0xb4] sm:$0xf]
  %v204 = vld [vmem:[%s1 + $0xb8] sm:$0xf]
  %v205 = vld [vmem:[%s1 + $0xbc] sm:$0xf]
  %v206 = vld [vmem:[%s1 + $0xc0] sm:$0xf]
  %v207 = vld [vmem:[%s1 + $0xc4] sm:$0xf]
  %v208 = vld [vmem:[%s1 + $0xc8] sm:$0xf]
  %v209 = vld [vmem:[%s1 + $0xcc] sm:$0xf]
  %v210 = vld [vmem:[%s1 + $0xd0] sm:$0xf]
  %v211 = vld [vmem:[%s1 + $0xd4] sm:$0xf]
  %v212 = vld [vmem:[%s1 + $0xd8] sm:$0xf]
  %v213 = vld [vmem:[%s1 + $0xdc] sm:$0xf]
  %v214 = vld [vmem:[%s1 + $0xe0] sm:$0xf]
  %v215 = vld [vmem:[%s1 + $0xe4] sm:$0xf]
  %v216 = vld [vmem:[%s1 + $0xe8] sm:$0xf]
  %v217 = vld [vmem:[%s1 + $0xec] sm:$0xf]
  %v218 = vld [vmem:[%s1 + $0xf0] sm:$0xf]
  %v219 = vld [vmem:[%s1 + $0xf4] sm:$0xf]
  %v220 = vld [vmem:[%s1 + $0xf8] sm:$0xf]
  %v221 = vld [vmem:[%s1 + $0xfc] sm:$0xf]
  %v222 = vld [vmem:[%s1 + $0x100] sm:$0xf]
  %v223 = vld [vmem:[%s1 + $0x104] sm:$0xf]
  %v224 = vld [vmem:[%s1 + $0x108] sm:$0xf]
  %v225 = vld [vmem:[%s1 + $0x10c] sm:$0xf]
  %v226 = vld [vmem:[%s1 + $0x110] sm:$0xf]
  %v227 = vld [vmem:[%s1 + $0x114] sm:$0xf]
  %v228 = vld [vmem:[%s1 + $0x118] sm:$0xf]
  %v229 = vld [vmem:[%s1 + $0x11c] sm:$0xf]
  %v230 = vld [vmem:[%s1 + $0x120] sm:$0xf]
  %v231 = vld [vmem:[%s1 + $0x124] sm:$0xf]
  %v232 = vld [vmem:[%s1 + $0x128] sm:$0xf]
  %v233 = vld [vmem:[%s1 + $0x12c] sm:$0xf]
  %v234 = vld [vmem:[%s1 + $0x130] sm:$0xf]
  %v235 = vld [vmem:[%s1 + $0x134] sm:$0xf]
  %v236 = vld [vmem:[%s1 + $0x138] sm:$0xf]
  %v237 = vld [vmem:[%s1 + $0x13c] sm:$0xf]
  %v238 = vld [vmem:[%s1 + $0x140] sm:$0xf]
  %v239 = vld [vmem:[%s1 + $0x144] sm:$0xf]
  %v240 = vld [vmem:[%s1 + $0x148] sm:$0xf]
  %v241 = vld [vmem:[%s1 + $0x14c] sm:$0xf]
  %v242 = vld [vmem:[%s1 + $0x150] sm:$0xf]
  %v243 = vld [vmem:[%s1 + $0x154] sm:$0xf]
  %v244 = vld [vmem:[%s1 + $0x158] sm:$0xf]
  %v245 = vld [vmem:[%s1 + $0x15c] sm:$0xf]
  %v246 = vld [vmem:[%s1 + $0x160] sm:$0xf]
  %v247 = vld [vmem:[%s1 + $0x164] sm:$0xf]
  %v248 = vld [vmem:[%s1 + $0x168] sm:$0xf]
  %v249 = vld [vmem:[%s1 + $0x16c] sm:$0xf]
  %v250 = vld [vmem:[%s1 + $0x170] sm:$0xf]
  %v251 = vld [vmem:[%s1 + $0x174] sm:$0xf]
  %v252 = vld [vmem:[%s1 + $0x178] sm:$0xf]
  %v253 = vld [vmem:[%s1 + $0x17c] sm:$0xf]
  %v254 = vld [vmem:[%s1 + $0x180] sm:$0xf]
  %v255 = vld [vmem:[%s1 + $0x184] sm:$0xf]
  %v256 = vld [vmem:[%s1 + $0x188] sm:$0xf]
  %v257 = vld [vmem:[%s1 + $0x18c] sm:$0xf]
  %v258 = vld [vmem:[%s1 + $0x190] sm:$0xf]
  %v259 = vld [vmem:[%s1 + $0x194] sm:$0xf]
  %v260 = vld [vmem:[%s1 + $0x198] sm:$0xf]
  %v261 = vld [vmem:[%s1 + $0x19c] sm:$0xf]
  %v262 = vld [vmem:[%s1 + $0x1a0] sm:$0xf]
  %v263 = vld [vmem:[%s1 + $0x1a4] sm:$0xf]
  %v264 = vld [vmem:[%s1 + $0x1a8] sm:$0xf]
  %v265 = vld [vmem:[%s1 + $0x1ac] sm:$0xf]
  %v266 = vld [vmem:[%s1 + $0x1b0] sm:$0xf]
  %v267 = vld [vmem:[%s1 + $0x1b4] sm:$0xf]
  %v268 = vld [vmem:[%s1 + $0x1b8] sm:$0xf]
  %v269 = vld [vmem:[%s1 + $0x1bc] sm:$0xf]
  %v270 = vld [vmem:[%s1 + $0x1c0] sm:$0xf]
  %v271 = vld [vmem:[%s1 + $0x1c4] sm:$0xf]
  %v272 = vld [vmem:[%s1 + $0x1c8] sm:$0xf]
  %v273 = vld [vmem:[%s1 + $0x1cc] sm:$0xf]
  %v274 = vld [vmem:[%s1 + $0x1d0] sm:$0xf]
  %v275 = vld [vmem:[%s1 + $0x1d4] sm:$0xf]
  %v276 = vld [vmem:[%s1 + $0x1d8] sm:$0xf]
  %v277 = vld [vmem:[%s1 + $0x1dc] sm:$0xf]
  %v278 = vld [vmem:[%s1 + $0x1e0] sm:$0xf]
  %v279 = vld [vmem:[%s1 + $0x1e4] sm:$0xf]
  %v280 = vld [vmem:[%s1 + $0x1e8] sm:$0xf]
  %v281 = vld [vmem:[%s1 + $0x1ec] sm:$0xf]
  %v282 = vld [vmem:[%s1 + $0x1f0] sm:$0xf]
  %v283 = vld [vmem:[%s1 + $0x1f4] sm:$0xf]
  %v284 = vld [vmem:[%s1 + $0x1f8] sm:$0xf]
  %v285 = vld [vmem:[%s1 + $0x1fc] sm:$0xf]
  %v286 = vld [vmem:[%s1 + $0x200] sm:$0xf]
  %v287 = vld [vmem:[%s1 + $0x204] sm:$0xf]
  %v288 = vld [vmem:[%s1 + $0x208] sm:$0xf]
  %v289 = vld [vmem:[%s1 + $0x20c] sm:$0xf]
  %v290 = vld [vmem:[%s1 + $0x210] sm:$0xf]
  %v291 = vld [vmem:[%s1 + $0x214] sm:$0xf]
  %v292 = vld [vmem:[%s1 + $0x218] sm:$0xf]
  %v293 = vld [vmem:[%s1 + $0x21c] sm:$0xf]
  %v294 = vld [vmem:[%s1 + $0x220] sm:$0xf]
  %v295 = vld [vmem:[%s1 + $0x224] sm:$0xf]
  %v296 = vld [vmem:[%s1 + $0x228] sm:$0xf]
  %v297 = vld [vmem:[%s1 + $0x22c] sm:$0xf]
  %v298 = vld [vmem:[%s1 + $0x230] sm:$0xf]
  %v299 = vld [vmem:[%s1 + $0x234] sm:$0xf]
  %v300 = vld [vmem:[%s1 + $0x238] sm:$0xf]
  %v301 = vld [vmem:[%s1 + $0x23c] sm:$0xf]
  %v302 = vld [vmem:[%s1 + $0x240] sm:$0xf]
  %v303 = vld [vmem:[%s1 + $0x244] sm:$0xf]
  %v304 = vld [vmem:[%s1 + $0x248] sm:$0xf]
  %v305 = vld [vmem:[%s1 + $0x24c] sm:$0xf]
  %v306 = vld [vmem:[%s1 + $0x250] sm:$0xf]
  %v307 = vld [vmem:[%s1 + $0x254] sm:$0xf]
  %v308 = vld [vmem:[%s1 + $0x258] sm:$0xf]
  %v309 = vld [vmem:[%s1 + $0x25c] sm:$0xf]
  %v310 = vld [vmem:[%s1 + $0x260] sm:$0xf]
  %v311 = vld [vmem:[%s1 + $0x264] sm:$0xf]
  %v312 = vld [vmem:[%s1 + $0x268] sm:$0xf]
  %v313 = vld [vmem:[%s1 + $0x26c] sm:$0xf]
  %v314 = vld [vmem:[%s1 + $0x270] sm:$0xf]
  %v315 = vld [vmem:[%s1 + $0x274] sm:$0xf]
  %v316 = vld [vmem:[%s1 + $0x278] sm:$0xf]
  %v317 = vld [vmem:[%s1 + $0x27c] sm:$0xf]
  %v318 = vld [vmem:[%s1 + $0x280] sm:$0xf]
  %v319 = vld [vmem:[%s1 + $0x284] sm:$0xf]
  %v320 = vld [vmem:[%s1 + $0x288] sm:$0xf]
  %v321 = vld [vmem:[%s1 + $0x28c] sm:$0xf]
  %v322 = vld [vmem:[%s1 + $0x290] sm:$0xf]
  %v323 = vld [vmem:[%s1 + $0x294] sm:$0xf]
  %v324 = vld [vmem:[%s1 + $0x298] sm:$0xf]
  %v325 = vld [vmem:[%s1 + $0x29c] sm:$0xf]
  %v326 = vld [vmem:[%s1 + $0x2a0] sm:$0xf]
  %v327 = vld [vmem:[%s1 + $0x2a4] sm:$0xf]
  %v328 = vld [vmem:[%s1 + $0x2a8] sm:$0xf]
  %v329 = vld [vmem:[%s1 + $0x2ac] sm:$0xf]
  %v330 = vld [vmem:[%s1 + $0x2b0] sm:$0xf]
  %v331 = vld [vmem:[%s1 + $0x2b4] sm:$0xf]
  %v332 = vld [vmem:[%s1 + $0x2b8] sm:$0xf]
  %v333 = vld [vmem:[%s1 + $0x2bc] sm:$0xf]
  %v334 = vld [vmem:[%s1 + $0x2c0] sm:$0xf]
  %v335 = vld [vmem:[%s1 + $0x2c4] sm:$0xf]
  %v336 = vld [vmem:[%s1 + $0x2c8] sm:$0xf]
  %v337 = vld [vmem:[%s1 + $0x2cc] sm:$0xf]
  %v338 = vld [vmem:[%s1 + $0x2d0] sm:$0xf]
  %v339 = vld [vmem:[%s1 + $0x2d4] sm:$0xf]
  %v340 = vld [vmem:[%s1 + $0x2d8] sm:$0xf]
  %v341 = vld [vmem:[%s1 + $0x2dc] sm:$0xf]
  %v342 = vld [vmem:[%s1 + $0x2e0] sm:$0xf]
  %v343 = vld [vmem:[%s1 + $0x2e4] sm:$0xf]
  %v344 = vld [vmem:[%s1 + $0x2e8] sm:$0xf]
  %v345 = vld [vmem:[%s1 + $0x2ec] sm:$0xf]
  %v346 = vld [vmem:[%s1 + $0x2f0] sm:$0xf]
  %v347 = vld [vmem:[%s1 + $0x2f4] sm:$0xf]
  %v348 = vld [vmem:[%s1 + $0x2f8] sm:$0xf]
  %v349 = vld [vmem:[%s1 + $0x2fc] sm:$0xf]
  %v350 = vld [vmem:[%s1 + $0x300] sm:$0xf]
  %v351 = vld [vmem:[%s1 + $0x304] sm:$0xf]
  %v352 = vld [vmem:[%s1 + $0x308] sm:$0xf]
  %v353 = vld [vmem:[%s1 + $0x30c] sm:$0xf]
  %v354 = vld [vmem:[%s1 + $0x310] sm:$0xf]
  %v355 = vld [vmem:[%s1 + $0x314] sm:$0xf]
  %v356 = vld [vmem:[%s1 + $0x318] sm:$0xf]
  %v357 = vld [vmem:[%s1 + $0x31c] sm:$0xf]
  %v358 = vld [vmem:[%s1 + $0x320] sm:$0xf]
  %v359 = vld [vmem:[%s1 + $0x324] sm:$0xf]
  %v360 = vld [vmem:[%s1 + $0x328] sm:$0xf]
  %v361 = vld [vmem:[%s1 + $0x32c] sm:$0xf]
  %v362 = vld [vmem:[%s1 + $0x330] sm:$0xf]
  %v363 = vld [vmem:[%s1 + $0x334] sm:$0xf]
  %v364 = vld [vmem:[%s1 + $0x338] sm:$0xf]
  %v365 = vld [vmem:[%s1 + $0x33c] sm:$0xf]
  %v366 = vld [vmem:[%s1 + $0x340] sm:$0xf]
  %v367 = vld [vmem:[%s1 + $0x344] sm:$0xf]
  %v368 = vld [vmem:[%s1 + $0x348] sm:$0xf]
  %v369 = vld [vmem:[%s1 + $0x34c] sm:$0xf]
  %v370 = vld [vmem:[%s1 + $0x350] sm:$0xf]
  %v371 = vld [vmem:[%s1 + $0x354] sm:$0xf]
  %v372 = vld [vmem:[%s1 + $0x358] sm:$0xf]
  %v373 = vld [vmem:[%s1 + $0x35c] sm:$0xf]
  %v374 = vld [vmem:[%s1 + $0x360] sm:$0xf]
  %v375 = vld [vmem:[%s1 + $0x364] sm:$0xf]
  %v376 = vld [vmem:[%s1 + $0x368] sm:$0xf]
  %v377 = vld [vmem:[%s1 + $0x36c] sm:$0xf]
  %v378 = vld [vmem:[%s1 + $0x370] sm:$0xf]
  %v379 = vld [vmem:[%s1 + $0x374] sm:$0xf]
  %v380 = vld [vmem:[%s1 + $0x378] sm:$0xf]
  %v381 = vld [vmem:[%s1 + $0x37c] sm:$0xf]
  %v382 = vld [vmem:[%s1 + $0x380] sm:$0xf]
  %v383 = vld [vmem:[%s1 + $0x384] sm:$0xf]
  %v384 = vld [vmem:[%s1 + $0x388] sm:$0xf]
  %v385 = vld [vmem:[%s1 + $0x38c] sm:$0xf]
  %v386 = vld [vmem:[%s1 + $0x390] sm:$0xf]
  %v387 = vld [vmem:[%s1 + $0x394] sm:$0xf]
  %v388 = vld [vmem:[%s1 + $0x398] sm:$0xf]
  %v389 = vld [vmem:[%s1 + $0x39c] sm:$0xf]
  %v390 = vld [vmem:[%s1 + $0x3a0] sm:$0xf]
  %v391 = vld [vmem:[%s1 + $0x3a4] sm:$0xf]
  %v392 = vld [vmem:[%s1 + $0x3a8] sm:$0xf]
  %v393 = vld [vmem:[%s1 + $0x3ac] sm:$0xf]
  %v394 = vld [vmem:[%s1 + $0x3b0] sm:$0xf]
  %v395 = vld [vmem:[%s1 + $0x3b4] sm:$0xf]
  %v396 = vld [vmem:[%s1 + $0x3b8] sm:$0xf]
  %v397 = vld [vmem:[%s1 + $0x3bc] sm:$0xf]
  %v398 = vld [vmem:[%s1 + $0x3c0] sm:$0xf]
  %v399 = vld [vmem:[%s1 + $0x3c4] sm:$0xf]
  %v400 = vld [vmem:[%s1 + $0x3c8] sm:$0xf]
  %v401 = vld [vmem:[%s1 + $0x3cc] sm:$0xf]
  %v402 = vld [vmem:[%s1 + $0x3d0] sm:$0xf]
  %v403 = vld [vmem:[%s1 + $0x3d4] sm:$0xf]
  %v404 = vld [vmem:[%s1 + $0x3d8] sm:$0xf]
  %v405 = vld [vmem:[%s1 + $0x3dc] sm:$0xf]
  %v406 = vld [vmem:[%s1 + $0x3e0] sm:$0xf]
  %v407 = vld [vmem:[%s1 + $0x3e4] sm:$0xf]
  %v408 = vld [vmem:[%s1 + $0x3e8] sm:$0xf]
  %v409 = vld [vmem:[%s1 + $0x3ec] sm:$0xf]
  %v410 = vld [vmem:[%s1 + $0x3f0] sm:$0xf]
  %v411 = vld [vmem:[%s1 + $0x3f4] sm:$0xf]
  %v412 = vld [vmem:[%s1 + $0x3f8] sm:$0xf]
  %v413 = vld [vmem:[%s1 + $0x3fc] sm:$0xf]
  %v414 = vld [vmem:[%s1 + $0x400] sm:$0xf]
  %v415 = vld [vmem:[%s1 + $0x404] sm:$0xf]
  %v416 = vld [vmem:[%s1 + $0x408] sm:$0xf]
  %v417 = vld [vmem:[%s1 + $0x40c] sm:$0xf]
  %v418 = vld [vmem:[%s1 + $0x410] sm:$0xf]
  %v419 = vld [vmem:[%s1 + $0x414] sm:$0xf]
  %v420 = vld [vmem:[%s1 + $0x418] sm:$0xf]
  %v421 = vld [vmem:[%s1 + $0x41c] sm:$0xf]
  %v422 = vld [vmem:[%s1 + $0x420] sm:$0xf]
  %v423 = vld [vmem:[%s1 + $0x424] sm:$0xf]
  %v424 = vld [vmem:[%s1 + $0x428] sm:$0xf]
  %v425 = vld [vmem:[%s1 + $0x42c] sm:$0xf]
  %v426 = vld [vmem:[%s1 + $0x430] sm:$0xf]
  %v427 = vld [vmem:[%s1 + $0x434] sm:$0xf]
  %v428 = vld [vmem:[%s1 + $0x438] sm:$0xf]
  %v429 = vld [vmem:[%s1 + $0x43c] sm:$0xf]
  %v430 = vld [vmem:[%s1 + $0x440] sm:$0xf]
  %v431 = vld [vmem:[%s1 + $0x444] sm:$0xf]
  %v432 = vld [vmem:[%s1 + $0x448] sm:$0xf]
  %v433 = vld [vmem:[%s1 + $0x44c] sm:$0xf]
  %v434 = vld [vmem:[%s1 + $0x450] sm:$0xf]
  %v435 = vld [vmem:[%s1 + $0x454] sm:$0xf]
  %v436 = vld [vmem:[%s1 + $0x458] sm:$0xf]
  %v437 = vld [vmem:[%s1 + $0x45c] sm:$0xf]
  %v438 = vld [vmem:[%s1 + $0x460] sm:$0xf]
  %v439 = vld [vmem:[%s1 + $0x464] sm:$0xf]
  %v440 = vld [vmem:[%s1 + $0x468] sm:$0xf]
  %v441 = vld [vmem:[%s1 + $0x46c] sm:$0xf]
  %v442 = vld [vmem:[%s1 + $0x470] sm:$0xf]
  %v443 = vld [vmem:[%s1 + $0x474] sm:$0xf]
  %v444 = vld [vmem:[%s1 + $0x478] sm:$0xf]
  %v445 = vld [vmem:[%s1 + $0x47c] sm:$0xf]
  %v446 = vld [vmem:[%s2] sm:$0x1]
  %v448 = vperm.slane %v446, 0
  %v594 = vunpack.c.l.b16 %v14
  %v595 = vunpack.c.h.b16 %v14
  %v596 = vunpack.c.l.b16 %v15
  %v597 = vunpack.c.h.b16 %v15
  %v598 = vunpack.c.l.b16 %v16
  %v599 = vunpack.c.h.b16 %v16
  %v600 = vunpack.c.l.b16 %v17
  %v601 = vunpack.c.h.b16 %v17
  %v602 = vunpack.c.l.b16 %v18
  %v603 = vunpack.c.h.b16 %v18
  %v604 = vunpack.c.l.b16 %v19
  %v605 = vunpack.c.h.b16 %v19
  %v606 = vunpack.c.l.b16 %v20
  %v607 = vunpack.c.h.b16 %v20
  %v608 = vunpack.c.l.b16 %v21
  %v609 = vunpack.c.h.b16 %v21
  %v610 = vunpack.c.l.b16 %v22
  %v611 = vunpack.c.h.b16 %v22
  %v612 = vunpack.c.l.b16 %v23
  %v613 = vunpack.c.h.b16 %v23
  %v614 = vunpack.c.l.b16 %v24
  %v615 = vunpack.c.h.b16 %v24
  %v616 = vunpack.c.l.b16 %v25
  %v617 = vunpack.c.h.b16 %v25
  %v618 = vunpack.c.l.b16 %v26
  %v619 = vunpack.c.h.b16 %v26
  %v620 = vunpack.c.l.b16 %v27
  %v621 = vunpack.c.h.b16 %v27
  %v622 = vunpack.c.l.b16 %v28
  %v623 = vunpack.c.h.b16 %v28
  %v624 = vunpack.c.l.b16 %v29
  %v625 = vunpack.c.h.b16 %v29
  %v626 = vunpack.c.l.b16 %v30
  %v627 = vunpack.c.h.b16 %v30
  %v628 = vunpack.c.l.b16 %v31
  %v629 = vunpack.c.h.b16 %v31
  %v630 = vunpack.c.l.b16 %v32
  %v631 = vunpack.c.h.b16 %v32
  %v632 = vunpack.c.l.b16 %v33
  %v633 = vunpack.c.h.b16 %v33
  %v634 = vunpack.c.l.b16 %v34
  %v635 = vunpack.c.h.b16 %v34
  %v636 = vunpack.c.l.b16 %v35
  %v637 = vunpack.c.h.b16 %v35
  %v638 = vunpack.c.l.b16 %v36
  %v639 = vunpack.c.h.b16 %v36
  %v640 = vunpack.c.l.b16 %v37
  %v641 = vunpack.c.h.b16 %v37
  %v642 = vunpack.c.l.b16 %v38
  %v643 = vunpack.c.h.b16 %v38
  %v644 = vunpack.c.l.b16 %v39
  %v645 = vunpack.c.h.b16 %v39
  %v646 = vunpack.c.l.b16 %v40
  %v647 = vunpack.c.h.b16 %v40
  %v648 = vunpack.c.l.b16 %v41
  %v649 = vunpack.c.h.b16 %v41
  %v650 = vunpack.c.l.b16 %v42
  %v651 = vunpack.c.h.b16 %v42
  %v652 = vunpack.c.l.b16 %v43
  %v653 = vunpack.c.h.b16 %v43
  %v654 = vunpack.c.l.b16 %v44
  %v655 = vunpack.c.h.b16 %v44
  %v656 = vunpack.c.l.b16 %v45
  %v657 = vunpack.c.h.b16 %v45
  %v658 = vunpack.c.l.b16 %v46
  %v659 = vunpack.c.h.b16 %v46
  %v660 = vunpack.c.l.b16 %v47
  %v661 = vunpack.c.h.b16 %v47
  %v662 = vunpack.c.l.b16 %v48
  %v663 = vunpack.c.h.b16 %v48
  %v664 = vunpack.c.l.b16 %v49
  %v665 = vunpack.c.h.b16 %v49
  %v666 = vunpack.c.l.b16 %v50
  %v667 = vunpack.c.h.b16 %v50
  %v668 = vunpack.c.l.b16 %v51
  %v669 = vunpack.c.h.b16 %v51
  %v670 = vunpack.c.l.b16 %v52
  %v671 = vunpack.c.h.b16 %v52
  %v672 = vunpack.c.l.b16 %v53
  %v673 = vunpack.c.h.b16 %v53
  %v674 = vunpack.c.l.b16 %v54
  %v675 = vunpack.c.h.b16 %v54
  %v676 = vunpack.c.l.b16 %v55
  %v677 = vunpack.c.h.b16 %v55
  %v678 = vunpack.c.l.b16 %v56
  %v679 = vunpack.c.h.b16 %v56
  %v680 = vunpack.c.l.b16 %v57
  %v681 = vunpack.c.h.b16 %v57
  %v682 = vunpack.c.l.b16 %v58
  %v683 = vunpack.c.h.b16 %v58
  %v684 = vunpack.c.l.b16 %v59
  %v685 = vunpack.c.h.b16 %v59
  %v686 = vunpack.c.l.b16 %v60
  %v687 = vunpack.c.h.b16 %v60
  %v688 = vunpack.c.l.b16 %v61
  %v689 = vunpack.c.h.b16 %v61
  %v690 = vunpack.c.l.b16 %v62
  %v691 = vunpack.c.h.b16 %v62
  %v692 = vunpack.c.l.b16 %v63
  %v693 = vunpack.c.h.b16 %v63
  %v694 = vunpack.c.l.b16 %v64
  %v695 = vunpack.c.h.b16 %v64
  %v696 = vunpack.c.l.b16 %v65
  %v697 = vunpack.c.h.b16 %v65
  %v698 = vunpack.c.l.b16 %v66
  %v699 = vunpack.c.h.b16 %v66
  %v700 = vunpack.c.l.b16 %v67
  %v701 = vunpack.c.h.b16 %v67
  %v702 = vunpack.c.l.b16 %v68
  %v703 = vunpack.c.h.b16 %v68
  %v704 = vunpack.c.l.b16 %v69
  %v705 = vunpack.c.h.b16 %v69
  %v706 = vunpack.c.l.b16 %v70
  %v707 = vunpack.c.h.b16 %v70
  %v708 = vunpack.c.l.b16 %v71
  %v709 = vunpack.c.h.b16 %v71
  %v710 = vunpack.c.l.b16 %v72
  %v711 = vunpack.c.h.b16 %v72
  %v712 = vunpack.c.l.b16 %v73
  %v713 = vunpack.c.h.b16 %v73
  %v714 = vunpack.c.l.b16 %v74
  %v715 = vunpack.c.h.b16 %v74
  %v716 = vunpack.c.l.b16 %v75
  %v717 = vunpack.c.h.b16 %v75
  %v718 = vunpack.c.l.b16 %v76
  %v719 = vunpack.c.h.b16 %v76
  %v720 = vunpack.c.l.b16 %v77
  %v721 = vunpack.c.h.b16 %v77
  %v722 = vunpack.c.l.b16 %v78
  %v723 = vunpack.c.h.b16 %v78
  %v724 = vunpack.c.l.b16 %v79
  %v725 = vunpack.c.h.b16 %v79
  %v726 = vunpack.c.l.b16 %v80
  %v727 = vunpack.c.h.b16 %v80
  %v728 = vunpack.c.l.b16 %v81
  %v729 = vunpack.c.h.b16 %v81
  %v730 = vunpack.c.l.b16 %v82
  %v731 = vunpack.c.h.b16 %v82
  %v732 = vunpack.c.l.b16 %v83
  %v733 = vunpack.c.h.b16 %v83
  %v734 = vunpack.c.l.b16 %v84
  %v735 = vunpack.c.h.b16 %v84
  %v736 = vunpack.c.l.b16 %v85
  %v737 = vunpack.c.h.b16 %v85
  %v738 = vunpack.c.l.b16 %v86
  %v739 = vunpack.c.h.b16 %v86
  %v740 = vunpack.c.l.b16 %v87
  %v741 = vunpack.c.h.b16 %v87
  %v742 = vunpack.c.l.b16 %v88
  %v743 = vunpack.c.h.b16 %v88
  %v744 = vunpack.c.l.b16 %v89
  %v745 = vunpack.c.h.b16 %v89
  %v746 = vunpack.c.l.b16 %v90
  %v747 = vunpack.c.h.b16 %v90
  %v748 = vunpack.c.l.b16 %v91
  %v749 = vunpack.c.h.b16 %v91
  %v750 = vunpack.c.l.b16 %v92
  %v751 = vunpack.c.h.b16 %v92
  %v752 = vunpack.c.l.b16 %v93
  %v753 = vunpack.c.h.b16 %v93
  %v754 = vunpack.c.l.b16 %v94
  %v755 = vunpack.c.h.b16 %v94
  %v756 = vunpack.c.l.b16 %v95
  %v757 = vunpack.c.h.b16 %v95
  %v758 = vunpack.c.l.b16 %v96
  %v759 = vunpack.c.h.b16 %v96
  %v760 = vunpack.c.l.b16 %v97
  %v761 = vunpack.c.h.b16 %v97
  %v762 = vunpack.c.l.b16 %v98
  %v763 = vunpack.c.h.b16 %v98
  %v764 = vunpack.c.l.b16 %v99
  %v765 = vunpack.c.h.b16 %v99
  %v766 = vunpack.c.l.b16 %v100
  %v767 = vunpack.c.h.b16 %v100
  %v768 = vunpack.c.l.b16 %v101
  %v769 = vunpack.c.h.b16 %v101
  %v770 = vunpack.c.l.b16 %v102
  %v771 = vunpack.c.h.b16 %v102
  %v772 = vunpack.c.l.b16 %v103
  %v773 = vunpack.c.h.b16 %v103
  %v774 = vunpack.c.l.b16 %v104
  %v775 = vunpack.c.h.b16 %v104
  %v776 = vunpack.c.l.b16 %v105
  %v777 = vunpack.c.h.b16 %v105
  %v778 = vunpack.c.l.b16 %v106
  %v779 = vunpack.c.h.b16 %v106
  %v780 = vunpack.c.l.b16 %v107
  %v781 = vunpack.c.h.b16 %v107
  %v782 = vunpack.c.l.b16 %v108
  %v783 = vunpack.c.h.b16 %v108
  %v784 = vunpack.c.l.b16 %v109
  %v785 = vunpack.c.h.b16 %v109
  %v786 = vunpack.c.l.b16 %v110
  %v787 = vunpack.c.h.b16 %v110
  %v788 = vunpack.c.l.b16 %v111
  %v789 = vunpack.c.h.b16 %v111
  %v790 = vunpack.c.l.b16 %v112
  %v791 = vunpack.c.h.b16 %v112
  %v792 = vunpack.c.l.b16 %v113
  %v793 = vunpack.c.h.b16 %v113
  %v794 = vunpack.c.l.b16 %v114
  %v795 = vunpack.c.h.b16 %v114
  %v796 = vunpack.c.l.b16 %v115
  %v797 = vunpack.c.h.b16 %v115
  %v798 = vunpack.c.l.b16 %v116
  %v799 = vunpack.c.h.b16 %v116
  %v800 = vunpack.c.l.b16 %v117
  %v801 = vunpack.c.h.b16 %v117
  %v802 = vunpack.c.l.b16 %v118
  %v803 = vunpack.c.h.b16 %v118
  %v804 = vunpack.c.l.b16 %v119
  %v805 = vunpack.c.h.b16 %v119
  %v806 = vunpack.c.l.b16 %v120
  %v807 = vunpack.c.h.b16 %v120
  %v808 = vunpack.c.l.b16 %v121
  %v809 = vunpack.c.h.b16 %v121
  %v810 = vunpack.c.l.b16 %v122
  %v811 = vunpack.c.h.b16 %v122
  %v812 = vunpack.c.l.b16 %v123
  %v813 = vunpack.c.h.b16 %v123
  %v814 = vunpack.c.l.b16 %v124
  %v815 = vunpack.c.h.b16 %v124
  %v816 = vunpack.c.l.b16 %v125
  %v817 = vunpack.c.h.b16 %v125
  %v818 = vunpack.c.l.b16 %v126
  %v819 = vunpack.c.h.b16 %v126
  %v820 = vunpack.c.l.b16 %v127
  %v821 = vunpack.c.h.b16 %v127
  %v822 = vunpack.c.l.b16 %v128
  %v823 = vunpack.c.h.b16 %v128
  %v824 = vunpack.c.l.b16 %v129
  %v825 = vunpack.c.h.b16 %v129
  %v826 = vunpack.c.l.b16 %v130
  %v827 = vunpack.c.h.b16 %v130
  %v828 = vunpack.c.l.b16 %v131
  %v829 = vunpack.c.h.b16 %v131
  %v830 = vunpack.c.l.b16 %v132
  %v831 = vunpack.c.h.b16 %v132
  %v832 = vunpack.c.l.b16 %v133
  %v833 = vunpack.c.h.b16 %v133
  %v834 = vunpack.c.l.b16 %v134
  %v835 = vunpack.c.h.b16 %v134
  %v836 = vunpack.c.l.b16 %v135
  %v837 = vunpack.c.h.b16 %v135
  %v838 = vunpack.c.l.b16 %v136
  %v839 = vunpack.c.h.b16 %v136
  %v840 = vunpack.c.l.b16 %v137
  %v841 = vunpack.c.h.b16 %v137
  %v842 = vunpack.c.l.b16 %v138
  %v843 = vunpack.c.h.b16 %v138
  %v844 = vunpack.c.l.b16 %v139
  %v845 = vunpack.c.h.b16 %v139
  %v846 = vunpack.c.l.b16 %v140
  %v847 = vunpack.c.h.b16 %v140
  %v848 = vunpack.c.l.b16 %v141
  %v849 = vunpack.c.h.b16 %v141
  %v850 = vunpack.c.l.b16 %v142
  %v851 = vunpack.c.h.b16 %v142
  %v852 = vunpack.c.l.b16 %v143
  %v853 = vunpack.c.h.b16 %v143
  %v854 = vunpack.c.l.b16 %v144
  %v855 = vunpack.c.h.b16 %v144
  %v856 = vunpack.c.l.b16 %v145
  %v857 = vunpack.c.h.b16 %v145
  %v858 = vunpack.c.l.b16 %v146
  %v859 = vunpack.c.h.b16 %v146
  %v860 = vunpack.c.l.b16 %v147
  %v861 = vunpack.c.h.b16 %v147
  %v862 = vunpack.c.l.b16 %v148
  %v863 = vunpack.c.h.b16 %v148
  %v864 = vunpack.c.l.b16 %v149
  %v865 = vunpack.c.h.b16 %v149
  %v866 = vunpack.c.l.b16 %v150
  %v867 = vunpack.c.h.b16 %v150
  %v868 = vunpack.c.l.b16 %v151
  %v869 = vunpack.c.h.b16 %v151
  %v870 = vunpack.c.l.b16 %v152
  %v871 = vunpack.c.h.b16 %v152
  %v872 = vunpack.c.l.b16 %v153
  %v873 = vunpack.c.h.b16 %v153
  %v874 = vunpack.c.l.b16 %v154
  %v875 = vunpack.c.h.b16 %v154
  %v876 = vunpack.c.l.b16 %v155
  %v877 = vunpack.c.h.b16 %v155
  %v878 = vunpack.c.l.b16 %v156
  %v879 = vunpack.c.h.b16 %v156
  %v880 = vunpack.c.l.b16 %v157
  %v881 = vunpack.c.h.b16 %v157
  %v882 = vpack.c.b16 %v612, %v594
  %v883 = vpack.c.b16 %v613, %v595
  %v884 = vpack.c.b16 %v614, %v596
  %v885 = vpack.c.b16 %v615, %v597
  %v886 = vpack.c.b16 %v616, %v598
  %v887 = vpack.c.b16 %v617, %v599
  %v888 = vpack.c.b16 %v618, %v600
  %v889 = vpack.c.b16 %v619, %v601
  %v890 = vpack.c.b16 %v620, %v602
  %v891 = vpack.c.b16 %v621, %v603
  %v892 = vpack.c.b16 %v622, %v604
  %v893 = vpack.c.b16 %v623, %v605
  %v894 = vpack.c.b16 %v624, %v606
  %v895 = vpack.c.b16 %v625, %v607
  %v896 = vpack.c.b16 %v626, %v608
  %v897 = vpack.c.b16 %v627, %v609
  %v898 = vpack.c.b16 %v628, %v610
  %v899 = vpack.c.b16 %v629, %v611
  %v900 = vpack.c.b16 %v648, %v630
  %v901 = vpack.c.b16 %v649, %v631
  %v902 = vpack.c.b16 %v650, %v632
  %v903 = vpack.c.b16 %v651, %v633
  %v904 = vpack.c.b16 %v652, %v634
  %v905 = vpack.c.b16 %v653, %v635
  %v906 = vpack.c.b16 %v654, %v636
  %v907 = vpack.c.b16 %v655, %v637
  %v908 = vpack.c.b16 %v656, %v638
  %v909 = vpack.c.b16 %v657, %v639
  %v910 = vpack.c.b16 %v658, %v640
  %v911 = vpack.c.b16 %v659, %v641
  %v912 = vpack.c.b16 %v660, %v642
  %v913 = vpack.c.b16 %v661, %v643
  %v914 = vpack.c.b16 %v662, %v644
  %v915 = vpack.c.b16 %v663, %v645
  %v916 = vpack.c.b16 %v664, %v646
  %v917 = vpack.c.b16 %v665, %v647
  %v918 = vpack.c.b16 %v684, %v666
  %v919 = vpack.c.b16 %v685, %v667
  %v920 = vpack.c.b16 %v686, %v668
  %v921 = vpack.c.b16 %v687, %v669
  %v922 = vpack.c.b16 %v688, %v670
  %v923 = vpack.c.b16 %v689, %v671
  %v924 = vpack.c.b16 %v690, %v672
  %v925 = vpack.c.b16 %v691, %v673
  %v926 = vpack.c.b16 %v692, %v674
  %v927 = vpack.c.b16 %v693, %v675
  %v928 = vpack.c.b16 %v694, %v676
  %v929 = vpack.c.b16 %v695, %v677
  %v930 = vpack.c.b16 %v696, %v678
  %v931 = vpack.c.b16 %v697, %v679
  %v932 = vpack.c.b16 %v698, %v680
  %v933 = vpack.c.b16 %v699, %v681
  %v934 = vpack.c.b16 %v700, %v682
  %v935 = vpack.c.b16 %v701, %v683
  %v936 = vpack.c.b16 %v720, %v702
  %v937 = vpack.c.b16 %v721, %v703
  %v938 = vpack.c.b16 %v722, %v704
  %v939 = vpack.c.b16 %v723, %v705
  %v940 = vpack.c.b16 %v724, %v706
  %v941 = vpack.c.b16 %v725, %v707
  %v942 = vpack.c.b16 %v726, %v708
  %v943 = vpack.c.b16 %v727, %v709
  %v944 = vpack.c.b16 %v728, %v710
  %v945 = vpack.c.b16 %v729, %v711
  %v946 = vpack.c.b16 %v730, %v712
  %v947 = vpack.c.b16 %v731, %v713
  %v948 = vpack.c.b16 %v732, %v714
  %v949 = vpack.c.b16 %v733, %v715
  %v950 = vpack.c.b16 %v734, %v716
  %v951 = vpack.c.b16 %v735, %v717
  %v952 = vpack.c.b16 %v736, %v718
  %v953 = vpack.c.b16 %v737, %v719
  %v954 = vpack.c.b16 %v756, %v738
  %v955 = vpack.c.b16 %v757, %v739
  %v956 = vpack.c.b16 %v758, %v740
  %v957 = vpack.c.b16 %v759, %v741
  %v958 = vpack.c.b16 %v760, %v742
  %v959 = vpack.c.b16 %v761, %v743
  %v960 = vpack.c.b16 %v762, %v744
  %v961 = vpack.c.b16 %v763, %v745
  %v962 = vpack.c.b16 %v764, %v746
  %v963 = vpack.c.b16 %v765, %v747
  %v964 = vpack.c.b16 %v766, %v748
  %v965 = vpack.c.b16 %v767, %v749
  %v966 = vpack.c.b16 %v768, %v750
  %v967 = vpack.c.b16 %v769, %v751
  %v968 = vpack.c.b16 %v770, %v752
  %v969 = vpack.c.b16 %v771, %v753
  %v970 = vpack.c.b16 %v772, %v754
  %v971 = vpack.c.b16 %v773, %v755
  %v972 = vpack.c.b16 %v792, %v774
  %v973 = vpack.c.b16 %v793, %v775
  %v974 = vpack.c.b16 %v794, %v776
  %v975 = vpack.c.b16 %v795, %v777
  %v976 = vpack.c.b16 %v796, %v778
  %v977 = vpack.c.b16 %v797, %v779
  %v978 = vpack.c.b16 %v798, %v780
  %v979 = vpack.c.b16 %v799, %v781
  %v980 = vpack.c.b16 %v800, %v782
  %v981 = vpack.c.b16 %v801, %v783
  %v982 = vpack.c.b16 %v802, %v784
  %v983 = vpack.c.b16 %v803, %v785
  %v984 = vpack.c.b16 %v804, %v786
  %v985 = vpack.c.b16 %v805, %v787
  %v986 = vpack.c.b16 %v806, %v788
  %v987 = vpack.c.b16 %v807, %v789
  %v988 = vpack.c.b16 %v808, %v790
  %v989 = vpack.c.b16 %v809, %v791
  %v990 = vpack.c.b16 %v828, %v810
  %v991 = vpack.c.b16 %v829, %v811
  %v992 = vpack.c.b16 %v830, %v812
  %v993 = vpack.c.b16 %v831, %v813
  %v994 = vpack.c.b16 %v832, %v814
  %v995 = vpack.c.b16 %v833, %v815
  %v996 = vpack.c.b16 %v834, %v816
  %v997 = vpack.c.b16 %v835, %v817
  %v998 = vpack.c.b16 %v836, %v818
  %v999 = vpack.c.b16 %v837, %v819
  %v1000 = vpack.c.b16 %v838, %v820
  %v1001 = vpack.c.b16 %v839, %v821
  %v1002 = vpack.c.b16 %v840, %v822
  %v1003 = vpack.c.b16 %v841, %v823
  %v1004 = vpack.c.b16 %v842, %v824
  %v1005 = vpack.c.b16 %v843, %v825
  %v1006 = vpack.c.b16 %v844, %v826
  %v1007 = vpack.c.b16 %v845, %v827
  %v1008 = vpack.c.b16 %v864, %v846
  %v1009 = vpack.c.b16 %v865, %v847
  %v1010 = vpack.c.b16 %v866, %v848
  %v1011 = vpack.c.b16 %v867, %v849
  %v1012 = vpack.c.b16 %v868, %v850
  %v1013 = vpack.c.b16 %v869, %v851
  %v1014 = vpack.c.b16 %v870, %v852
  %v1015 = vpack.c.b16 %v871, %v853
  %v1016 = vpack.c.b16 %v872, %v854
  %v1017 = vpack.c.b16 %v873, %v855
  %v1018 = vpack.c.b16 %v874, %v856
  %v1019 = vpack.c.b16 %v875, %v857
  %v1020 = vpack.c.b16 %v876, %v858
  %v1021 = vpack.c.b16 %v877, %v859
  %v1022 = vpack.c.b16 %v878, %v860
  %v1023 = vpack.c.b16 %v879, %v861
  %v1024 = vpack.c.b16 %v880, %v862
  %v1025 = vpack.c.b16 %v881, %v863
  %v1458 = vunpack.c.l.b16 %v158
  %v1459 = vunpack.c.l.b16 %v159
  %v1460 = vunpack.c.l.b16 %v160
  %v1461 = vunpack.c.l.b16 %v161
  %v1462 = vunpack.c.l.b16 %v162
  %v1463 = vunpack.c.l.b16 %v163
  %v1464 = vunpack.c.l.b16 %v164
  %v1465 = vunpack.c.l.b16 %v165
  %v1466 = vunpack.c.l.b16 %v166
  %v1467 = vunpack.c.l.b16 %v167
  %v1468 = vunpack.c.l.b16 %v168
  %v1469 = vunpack.c.l.b16 %v169
  %v1470 = vunpack.c.l.b16 %v170
  %v1471 = vunpack.c.l.b16 %v171
  %v1472 = vunpack.c.l.b16 %v172
  %v1473 = vunpack.c.l.b16 %v173
  %v1474 = vunpack.c.l.b16 %v174
  %v1475 = vunpack.c.l.b16 %v175
  %v1476 = vunpack.c.l.b16 %v176
  %v1477 = vunpack.c.l.b16 %v177
  %v1478 = vunpack.c.l.b16 %v178
  %v1479 = vunpack.c.l.b16 %v179
  %v1480 = vunpack.c.l.b16 %v180
  %v1481 = vunpack.c.l.b16 %v181
  %v1482 = vunpack.c.l.b16 %v182
  %v1483 = vunpack.c.l.b16 %v183
  %v1484 = vunpack.c.l.b16 %v184
  %v1485 = vunpack.c.l.b16 %v185
  %v1486 = vunpack.c.l.b16 %v186
  %v1487 = vunpack.c.l.b16 %v187
  %v1488 = vunpack.c.l.b16 %v188
  %v1489 = vunpack.c.l.b16 %v189
  %v1490 = vunpack.c.l.b16 %v190
  %v1491 = vunpack.c.l.b16 %v191
  %v1492 = vunpack.c.l.b16 %v192
  %v1493 = vunpack.c.l.b16 %v193
  %v1494 = vunpack.c.l.b16 %v194
  %v1495 = vunpack.c.l.b16 %v195
  %v1496 = vunpack.c.l.b16 %v196
  %v1497 = vunpack.c.l.b16 %v197
  %v1498 = vunpack.c.l.b16 %v198
  %v1499 = vunpack.c.l.b16 %v199
  %v1500 = vunpack.c.l.b16 %v200
  %v1501 = vunpack.c.l.b16 %v201
  %v1502 = vunpack.c.l.b16 %v202
  %v1503 = vunpack.c.l.b16 %v203
  %v1504 = vunpack.c.l.b16 %v204
  %v1505 = vunpack.c.l.b16 %v205
  %v1506 = vunpack.c.l.b16 %v206
  %v1507 = vunpack.c.l.b16 %v207
  %v1508 = vunpack.c.l.b16 %v208
  %v1509 = vunpack.c.l.b16 %v209
  %v1510 = vunpack.c.l.b16 %v210
  %v1511 = vunpack.c.l.b16 %v211
  %v1512 = vunpack.c.l.b16 %v212
  %v1513 = vunpack.c.l.b16 %v213
  %v1514 = vunpack.c.l.b16 %v214
  %v1515 = vunpack.c.l.b16 %v215
  %v1516 = vunpack.c.l.b16 %v216
  %v1517 = vunpack.c.l.b16 %v217
  %v1518 = vunpack.c.l.b16 %v218
  %v1519 = vunpack.c.l.b16 %v219
  %v1520 = vunpack.c.l.b16 %v220
  %v1521 = vunpack.c.l.b16 %v221
  %v1522 = vunpack.c.l.b16 %v222
  %v1523 = vunpack.c.l.b16 %v223
  %v1524 = vunpack.c.l.b16 %v224
  %v1525 = vunpack.c.l.b16 %v225
  %v1526 = vunpack.c.l.b16 %v226
  %v1527 = vunpack.c.l.b16 %v227
  %v1528 = vunpack.c.l.b16 %v228
  %v1529 = vunpack.c.l.b16 %v229
  %v1530 = vunpack.c.l.b16 %v230
  %v1531 = vunpack.c.l.b16 %v231
  %v1532 = vunpack.c.l.b16 %v232
  %v1533 = vunpack.c.l.b16 %v233
  %v1534 = vunpack.c.l.b16 %v234
  %v1535 = vunpack.c.l.b16 %v235
  %v1536 = vunpack.c.l.b16 %v236
  %v1537 = vunpack.c.l.b16 %v237
  %v1538 = vunpack.c.l.b16 %v238
  %v1539 = vunpack.c.l.b16 %v239
  %v1540 = vunpack.c.l.b16 %v240
  %v1541 = vunpack.c.l.b16 %v241
  %v1542 = vunpack.c.l.b16 %v242
  %v1543 = vunpack.c.l.b16 %v243
  %v1544 = vunpack.c.l.b16 %v244
  %v1545 = vunpack.c.l.b16 %v245
  %v1546 = vunpack.c.l.b16 %v246
  %v1547 = vunpack.c.l.b16 %v247
  %v1548 = vunpack.c.l.b16 %v248
  %v1549 = vunpack.c.l.b16 %v249
  %v1550 = vunpack.c.l.b16 %v250
  %v1551 = vunpack.c.l.b16 %v251
  %v1552 = vunpack.c.l.b16 %v252
  %v1553 = vunpack.c.l.b16 %v253
  %v1554 = vunpack.c.l.b16 %v254
  %v1555 = vunpack.c.l.b16 %v255
  %v1556 = vunpack.c.l.b16 %v256
  %v1557 = vunpack.c.l.b16 %v257
  %v1558 = vunpack.c.l.b16 %v258
  %v1559 = vunpack.c.l.b16 %v259
  %v1560 = vunpack.c.l.b16 %v260
  %v1561 = vunpack.c.l.b16 %v261
  %v1562 = vunpack.c.l.b16 %v262
  %v1563 = vunpack.c.l.b16 %v263
  %v1564 = vunpack.c.l.b16 %v264
  %v1565 = vunpack.c.l.b16 %v265
  %v1566 = vunpack.c.l.b16 %v266
  %v1567 = vunpack.c.l.b16 %v267
  %v1568 = vunpack.c.l.b16 %v268
  %v1569 = vunpack.c.l.b16 %v269
  %v1570 = vunpack.c.l.b16 %v270
  %v1571 = vunpack.c.l.b16 %v271
  %v1572 = vunpack.c.l.b16 %v272
  %v1573 = vunpack.c.l.b16 %v273
  %v1574 = vunpack.c.l.b16 %v274
  %v1575 = vunpack.c.l.b16 %v275
  %v1576 = vunpack.c.l.b16 %v276
  %v1577 = vunpack.c.l.b16 %v277
  %v1578 = vunpack.c.l.b16 %v278
  %v1579 = vunpack.c.l.b16 %v279
  %v1580 = vunpack.c.l.b16 %v280
  %v1581 = vunpack.c.l.b16 %v281
  %v1582 = vunpack.c.l.b16 %v282
  %v1583 = vunpack.c.l.b16 %v283
  %v1584 = vunpack.c.l.b16 %v284
  %v1585 = vunpack.c.l.b16 %v285
  %v1586 = vunpack.c.l.b16 %v286
  %v1587 = vunpack.c.l.b16 %v287
  %v1588 = vunpack.c.l.b16 %v288
  %v1589 = vunpack.c.l.b16 %v289
  %v1590 = vunpack.c.l.b16 %v290
  %v1591 = vunpack.c.l.b16 %v291
  %v1592 = vunpack.c.l.b16 %v292
  %v1593 = vunpack.c.l.b16 %v293
  %v1594 = vunpack.c.l.b16 %v294
  %v1595 = vunpack.c.l.b16 %v295
  %v1596 = vunpack.c.l.b16 %v296
  %v1597 = vunpack.c.l.b16 %v297
  %v1598 = vunpack.c.l.b16 %v298
  %v1599 = vunpack.c.l.b16 %v299
  %v1600 = vunpack.c.l.b16 %v300
  %v1601 = vunpack.c.l.b16 %v301
  %v1602 = vunpack.c.l.b16 %v302
  %v1603 = vunpack.c.l.b16 %v303
  %v1604 = vunpack.c.l.b16 %v304
  %v1605 = vunpack.c.l.b16 %v305
  %v1606 = vunpack.c.l.b16 %v306
  %v1607 = vunpack.c.l.b16 %v307
  %v1608 = vunpack.c.l.b16 %v308
  %v1609 = vunpack.c.l.b16 %v309
  %v1610 = vunpack.c.l.b16 %v310
  %v1611 = vunpack.c.l.b16 %v311
  %v1612 = vunpack.c.l.b16 %v312
  %v1613 = vunpack.c.l.b16 %v313
  %v1614 = vunpack.c.l.b16 %v314
  %v1615 = vunpack.c.l.b16 %v315
  %v1616 = vunpack.c.l.b16 %v316
  %v1617 = vunpack.c.l.b16 %v317
  %v1618 = vunpack.c.l.b16 %v318
  %v1619 = vunpack.c.l.b16 %v319
  %v1620 = vunpack.c.l.b16 %v320
  %v1621 = vunpack.c.l.b16 %v321
  %v1622 = vunpack.c.l.b16 %v322
  %v1623 = vunpack.c.l.b16 %v323
  %v1624 = vunpack.c.l.b16 %v324
  %v1625 = vunpack.c.l.b16 %v325
  %v1626 = vunpack.c.l.b16 %v326
  %v1627 = vunpack.c.l.b16 %v327
  %v1628 = vunpack.c.l.b16 %v328
  %v1629 = vunpack.c.l.b16 %v329
  %v1630 = vunpack.c.l.b16 %v330
  %v1631 = vunpack.c.l.b16 %v331
  %v1632 = vunpack.c.l.b16 %v332
  %v1633 = vunpack.c.l.b16 %v333
  %v1634 = vunpack.c.l.b16 %v334
  %v1635 = vunpack.c.l.b16 %v335
  %v1636 = vunpack.c.l.b16 %v336
  %v1637 = vunpack.c.l.b16 %v337
  %v1638 = vunpack.c.l.b16 %v338
  %v1639 = vunpack.c.l.b16 %v339
  %v1640 = vunpack.c.l.b16 %v340
  %v1641 = vunpack.c.l.b16 %v341
  %v1642 = vunpack.c.l.b16 %v342
  %v1643 = vunpack.c.l.b16 %v343
  %v1644 = vunpack.c.l.b16 %v344
  %v1645 = vunpack.c.l.b16 %v345
  %v1646 = vunpack.c.l.b16 %v346
  %v1647 = vunpack.c.l.b16 %v347
  %v1648 = vunpack.c.l.b16 %v348
  %v1649 = vunpack.c.l.b16 %v349
  %v1650 = vunpack.c.l.b16 %v350
  %v1651 = vunpack.c.l.b16 %v351
  %v1652 = vunpack.c.l.b16 %v352
  %v1653 = vunpack.c.l.b16 %v353
  %v1654 = vunpack.c.l.b16 %v354
  %v1655 = vunpack.c.l.b16 %v355
  %v1656 = vunpack.c.l.b16 %v356
  %v1657 = vunpack.c.l.b16 %v357
  %v1658 = vunpack.c.l.b16 %v358
  %v1659 = vunpack.c.l.b16 %v359
  %v1660 = vunpack.c.l.b16 %v360
  %v1661 = vunpack.c.l.b16 %v361
  %v1662 = vunpack.c.l.b16 %v362
  %v1663 = vunpack.c.l.b16 %v363
  %v1664 = vunpack.c.l.b16 %v364
  %v1665 = vunpack.c.l.b16 %v365
  %v1666 = vunpack.c.l.b16 %v366
  %v1667 = vunpack.c.l.b16 %v367
  %v1668 = vunpack.c.l.b16 %v368
  %v1669 = vunpack.c.l.b16 %v369
  %v1670 = vunpack.c.l.b16 %v370
  %v1671 = vunpack.c.l.b16 %v371
  %v1672 = vunpack.c.l.b16 %v372
  %v1673 = vunpack.c.l.b16 %v373
  %v1674 = vunpack.c.l.b16 %v374
  %v1675 = vunpack.c.l.b16 %v375
  %v1676 = vunpack.c.l.b16 %v376
  %v1677 = vunpack.c.l.b16 %v377
  %v1678 = vunpack.c.l.b16 %v378
  %v1679 = vunpack.c.l.b16 %v379
  %v1680 = vunpack.c.l.b16 %v380
  %v1681 = vunpack.c.l.b16 %v381
  %v1682 = vunpack.c.l.b16 %v382
  %v1683 = vunpack.c.l.b16 %v383
  %v1684 = vunpack.c.l.b16 %v384
  %v1685 = vunpack.c.l.b16 %v385
  %v1686 = vunpack.c.l.b16 %v386
  %v1687 = vunpack.c.l.b16 %v387
  %v1688 = vunpack.c.l.b16 %v388
  %v1689 = vunpack.c.l.b16 %v389
  %v1690 = vunpack.c.l.b16 %v390
  %v1691 = vunpack.c.l.b16 %v391
  %v1692 = vunpack.c.l.b16 %v392
  %v1693 = vunpack.c.l.b16 %v393
  %v1694 = vunpack.c.l.b16 %v394
  %v1695 = vunpack.c.l.b16 %v395
  %v1696 = vunpack.c.l.b16 %v396
  %v1697 = vunpack.c.l.b16 %v397
  %v1698 = vunpack.c.l.b16 %v398
  %v1699 = vunpack.c.l.b16 %v399
  %v1700 = vunpack.c.l.b16 %v400
  %v1701 = vunpack.c.l.b16 %v401
  %v1702 = vunpack.c.l.b16 %v402
  %v1703 = vunpack.c.l.b16 %v403
  %v1704 = vunpack.c.l.b16 %v404
  %v1705 = vunpack.c.l.b16 %v405
  %v1706 = vunpack.c.l.b16 %v406
  %v1707 = vunpack.c.l.b16 %v407
  %v1708 = vunpack.c.l.b16 %v408
  %v1709 = vunpack.c.l.b16 %v409
  %v1710 = vunpack.c.l.b16 %v410
  %v1711 = vunpack.c.l.b16 %v411
  %v1712 = vunpack.c.l.b16 %v412
  %v1713 = vunpack.c.l.b16 %v413
  %v1714 = vunpack.c.l.b16 %v414
  %v1715 = vunpack.c.l.b16 %v415
  %v1716 = vunpack.c.l.b16 %v416
  %v1717 = vunpack.c.l.b16 %v417
  %v1718 = vunpack.c.l.b16 %v418
  %v1719 = vunpack.c.l.b16 %v419
  %v1720 = vunpack.c.l.b16 %v420
  %v1721 = vunpack.c.l.b16 %v421
  %v1722 = vunpack.c.l.b16 %v422
  %v1723 = vunpack.c.l.b16 %v423
  %v1724 = vunpack.c.l.b16 %v424
  %v1725 = vunpack.c.l.b16 %v425
  %v1726 = vunpack.c.l.b16 %v426
  %v1727 = vunpack.c.l.b16 %v427
  %v1728 = vunpack.c.l.b16 %v428
  %v1729 = vunpack.c.l.b16 %v429
  %v1730 = vunpack.c.l.b16 %v430
  %v1731 = vunpack.c.l.b16 %v431
  %v1732 = vunpack.c.l.b16 %v432
  %v1733 = vunpack.c.l.b16 %v433
  %v1734 = vunpack.c.l.b16 %v434
  %v1735 = vunpack.c.l.b16 %v435
  %v1736 = vunpack.c.l.b16 %v436
  %v1737 = vunpack.c.l.b16 %v437
  %v1738 = vunpack.c.l.b16 %v438
  %v1739 = vunpack.c.l.b16 %v439
  %v1740 = vunpack.c.l.b16 %v440
  %v1741 = vunpack.c.l.b16 %v441
  %v1742 = vunpack.c.l.b16 %v442
  %v1743 = vunpack.c.l.b16 %v443
  %v1744 = vunpack.c.l.b16 %v444
  %v1745 = vunpack.c.l.b16 %v445
  %v1746 = vpack.c.b16 %v1459, %v1458
  %v1747 = vpack.c.b16 %v1461, %v1460
  %v1748 = vpack.c.b16 %v1463, %v1462
  %v1749 = vpack.c.b16 %v1465, %v1464
  %v1750 = vpack.c.b16 %v1467, %v1466
  %v1751 = vpack.c.b16 %v1469, %v1468
  %v1752 = vpack.c.b16 %v1471, %v1470
  %v1753 = vpack.c.b16 %v1473, %v1472
  %v1754 = vpack.c.b16 %v1475, %v1474
  %v1755 = vpack.c.b16 %v1477, %v1476
  %v1756 = vpack.c.b16 %v1479, %v1478
  %v1757 = vpack.c.b16 %v1481, %v1480
  %v1758 = vpack.c.b16 %v1483, %v1482
  %v1759 = vpack.c.b16 %v1485, %v1484
  %v1760 = vpack.c.b16 %v1487, %v1486
  %v1761 = vpack.c.b16 %v1489, %v1488
  %v1762 = vpack.c.b16 %v1491, %v1490
  %v1763 = vpack.c.b16 %v1493, %v1492
  %v1764 = vpack.c.b16 %v1495, %v1494
  %v1765 = vpack.c.b16 %v1497, %v1496
  %v1766 = vpack.c.b16 %v1499, %v1498
  %v1767 = vpack.c.b16 %v1501, %v1500
  %v1768 = vpack.c.b16 %v1503, %v1502
  %v1769 = vpack.c.b16 %v1505, %v1504
  %v1770 = vpack.c.b16 %v1507, %v1506
  %v1771 = vpack.c.b16 %v1509, %v1508
  %v1772 = vpack.c.b16 %v1511, %v1510
  %v1773 = vpack.c.b16 %v1513, %v1512
  %v1774 = vpack.c.b16 %v1515, %v1514
  %v1775 = vpack.c.b16 %v1517, %v1516
  %v1776 = vpack.c.b16 %v1519, %v1518
  %v1777 = vpack.c.b16 %v1521, %v1520
  %v1778 = vpack.c.b16 %v1523, %v1522
  %v1779 = vpack.c.b16 %v1525, %v1524
  %v1780 = vpack.c.b16 %v1527, %v1526
  %v1781 = vpack.c.b16 %v1529, %v1528
  %v1782 = vpack.c.b16 %v1531, %v1530
  %v1783 = vpack.c.b16 %v1533, %v1532
  %v1784 = vpack.c.b16 %v1535, %v1534
  %v1785 = vpack.c.b16 %v1537, %v1536
  %v1786 = vpack.c.b16 %v1539, %v1538
  %v1787 = vpack.c.b16 %v1541, %v1540
  %v1788 = vpack.c.b16 %v1543, %v1542
  %v1789 = vpack.c.b16 %v1545, %v1544
  %v1790 = vpack.c.b16 %v1547, %v1546
  %v1791 = vpack.c.b16 %v1549, %v1548
  %v1792 = vpack.c.b16 %v1551, %v1550
  %v1793 = vpack.c.b16 %v1553, %v1552
  %v1794 = vpack.c.b16 %v1555, %v1554
  %v1795 = vpack.c.b16 %v1557, %v1556
  %v1796 = vpack.c.b16 %v1559, %v1558
  %v1797 = vpack.c.b16 %v1561, %v1560
  %v1798 = vpack.c.b16 %v1563, %v1562
  %v1799 = vpack.c.b16 %v1565, %v1564
  %v1800 = vpack.c.b16 %v1567, %v1566
  %v1801 = vpack.c.b16 %v1569, %v1568
  %v1802 = vpack.c.b16 %v1571, %v1570
  %v1803 = vpack.c.b16 %v1573, %v1572
  %v1804 = vpack.c.b16 %v1575, %v1574
  %v1805 = vpack.c.b16 %v1577, %v1576
  %v1806 = vpack.c.b16 %v1579, %v1578
  %v1807 = vpack.c.b16 %v1581, %v1580
  %v1808 = vpack.c.b16 %v1583, %v1582
  %v1809 = vpack.c.b16 %v1585, %v1584
  %v1810 = vpack.c.b16 %v1587, %v1586
  %v1811 = vpack.c.b16 %v1589, %v1588
  %v1812 = vpack.c.b16 %v1591, %v1590
  %v1813 = vpack.c.b16 %v1593, %v1592
  %v1814 = vpack.c.b16 %v1595, %v1594
  %v1815 = vpack.c.b16 %v1597, %v1596
  %v1816 = vpack.c.b16 %v1599, %v1598
  %v1817 = vpack.c.b16 %v1601, %v1600
  %v1818 = vpack.c.b16 %v1603, %v1602
  %v1819 = vpack.c.b16 %v1605, %v1604
  %v1820 = vpack.c.b16 %v1607, %v1606
  %v1821 = vpack.c.b16 %v1609, %v1608
  %v1822 = vpack.c.b16 %v1611, %v1610
  %v1823 = vpack.c.b16 %v1613, %v1612
  %v1824 = vpack.c.b16 %v1615, %v1614
  %v1825 = vpack.c.b16 %v1617, %v1616
  %v1826 = vpack.c.b16 %v1619, %v1618
  %v1827 = vpack.c.b16 %v1621, %v1620
  %v1828 = vpack.c.b16 %v1623, %v1622
  %v1829 = vpack.c.b16 %v1625, %v1624
  %v1830 = vpack.c.b16 %v1627, %v1626
  %v1831 = vpack.c.b16 %v1629, %v1628
  %v1832 = vpack.c.b16 %v1631, %v1630
  %v1833 = vpack.c.b16 %v1633, %v1632
  %v1834 = vpack.c.b16 %v1635, %v1634
  %v1835 = vpack.c.b16 %v1637, %v1636
  %v1836 = vpack.c.b16 %v1639, %v1638
  %v1837 = vpack.c.b16 %v1641, %v1640
  %v1838 = vpack.c.b16 %v1643, %v1642
  %v1839 = vpack.c.b16 %v1645, %v1644
  %v1840 = vpack.c.b16 %v1647, %v1646
  %v1841 = vpack.c.b16 %v1649, %v1648
  %v1842 = vpack.c.b16 %v1651, %v1650
  %v1843 = vpack.c.b16 %v1653, %v1652
  %v1844 = vpack.c.b16 %v1655, %v1654
  %v1845 = vpack.c.b16 %v1657, %v1656
  %v1846 = vpack.c.b16 %v1659, %v1658
  %v1847 = vpack.c.b16 %v1661, %v1660
  %v1848 = vpack.c.b16 %v1663, %v1662
  %v1849 = vpack.c.b16 %v1665, %v1664
  %v1850 = vpack.c.b16 %v1667, %v1666
  %v1851 = vpack.c.b16 %v1669, %v1668
  %v1852 = vpack.c.b16 %v1671, %v1670
  %v1853 = vpack.c.b16 %v1673, %v1672
  %v1854 = vpack.c.b16 %v1675, %v1674
  %v1855 = vpack.c.b16 %v1677, %v1676
  %v1856 = vpack.c.b16 %v1679, %v1678
  %v1857 = vpack.c.b16 %v1681, %v1680
  %v1858 = vpack.c.b16 %v1683, %v1682
  %v1859 = vpack.c.b16 %v1685, %v1684
  %v1860 = vpack.c.b16 %v1687, %v1686
  %v1861 = vpack.c.b16 %v1689, %v1688
  %v1862 = vpack.c.b16 %v1691, %v1690
  %v1863 = vpack.c.b16 %v1693, %v1692
  %v1864 = vpack.c.b16 %v1695, %v1694
  %v1865 = vpack.c.b16 %v1697, %v1696
  %v1866 = vpack.c.b16 %v1699, %v1698
  %v1867 = vpack.c.b16 %v1701, %v1700
  %v1868 = vpack.c.b16 %v1703, %v1702
  %v1869 = vpack.c.b16 %v1705, %v1704
  %v1870 = vpack.c.b16 %v1707, %v1706
  %v1871 = vpack.c.b16 %v1709, %v1708
  %v1872 = vpack.c.b16 %v1711, %v1710
  %v1873 = vpack.c.b16 %v1713, %v1712
  %v1874 = vpack.c.b16 %v1715, %v1714
  %v1875 = vpack.c.b16 %v1717, %v1716
  %v1876 = vpack.c.b16 %v1719, %v1718
  %v1877 = vpack.c.b16 %v1721, %v1720
  %v1878 = vpack.c.b16 %v1723, %v1722
  %v1879 = vpack.c.b16 %v1725, %v1724
  %v1880 = vpack.c.b16 %v1727, %v1726
  %v1881 = vpack.c.b16 %v1729, %v1728
  %v1882 = vpack.c.b16 %v1731, %v1730
  %v1883 = vpack.c.b16 %v1733, %v1732
  %v1884 = vpack.c.b16 %v1735, %v1734
  %v1885 = vpack.c.b16 %v1737, %v1736
  %v1886 = vpack.c.b16 %v1739, %v1738
  %v1887 = vpack.c.b16 %v1741, %v1740
  %v1888 = vpack.c.b16 %v1743, %v1742
  %v1889 = vpack.c.b16 %v1745, %v1744
  %2034 = vmatpush.bf16.msra.mxu0 %v1753
  %2035 = vmatpush.bf16.msra.mxu0 %v1752
  %2036 = vmatpush.bf16.msra.mxu0 %v1751
  %2037 = vmatpush.bf16.msra.mxu0 %v1750
  %2038 = vmatpush.bf16.msra.mxu0 %v1749
  %2039 = vmatpush.bf16.msra.mxu0 %v1748
  %2040 = vmatpush.bf16.msra.mxu0 %v1747
  %2041 = vmatpush.bf16.msra.mxu0 %v1746
  %2042 = vmatmul.bf16.gmra.mxu0 %v882
  %v2043 = vpop.f32.mrf.mxu0
  %v2044 = vadd.f32 %v448, %v2043
  %v2045 = vpop.f32.mrf.mxu0
  %v2046 = vadd.f32 %v448, %v2045
  %2047 = vmatmul.bf16.gmra.mxu0 %v900
  %v2048 = vpop.f32.mrf.mxu0
  %v2049 = vadd.f32 %v448, %v2048
  %v2050 = vpop.f32.mrf.mxu0
  %v2051 = vadd.f32 %v448, %v2050
  %2052 = vmatmul.bf16.gmra.mxu0 %v918
  %v2053 = vpop.f32.mrf.mxu0
  %v2054 = vadd.f32 %v448, %v2053
  %v2055 = vpop.f32.mrf.mxu0
  %v2056 = vadd.f32 %v448, %v2055
  %2057 = vmatmul.bf16.gmra.mxu0 %v936
  %v2058 = vpop.f32.mrf.mxu0
  %v2059 = vadd.f32 %v448, %v2058
  %v2060 = vpop.f32.mrf.mxu0
  %v2061 = vadd.f32 %v448, %v2060
  %2062 = vmatmul.bf16.gmra.mxu0 %v954
  %v2063 = vpop.f32.mrf.mxu0
  %v2064 = vadd.f32 %v448, %v2063
  %v2065 = vpop.f32.mrf.mxu0
  %v2066 = vadd.f32 %v448, %v2065
  %2067 = vmatmul.bf16.gmra.mxu0 %v972
  %v2068 = vpop.f32.mrf.mxu0
  %v2069 = vadd.f32 %v448, %v2068
  %v2070 = vpop.f32.mrf.mxu0
  %v2071 = vadd.f32 %v448, %v2070
  %2072 = vmatmul.bf16.gmra.mxu0 %v990
  %v2073 = vpop.f32.mrf.mxu0
  %v2074 = vadd.f32 %v448, %v2073
  %v2075 = vpop.f32.mrf.mxu0
  %v2076 = vadd.f32 %v448, %v2075
  %2077 = vmatmul.bf16.gmra.mxu0 %v1008
  %v2078 = vpop.f32.mrf.mxu0
  %v2079 = vadd.f32 %v448, %v2078
  %v2080 = vpop.f32.mrf.mxu0
  %v2081 = vadd.f32 %v448, %v2080
  %2082 = vdwg.mxu0
  %2083 = vmatpush.bf16.msra.mxu0 %v1761
  %2084 = vmatpush.bf16.msra.mxu0 %v1760
  %2085 = vmatpush.bf16.msra.mxu0 %v1759
  %2086 = vmatpush.bf16.msra.mxu0 %v1758
  %2087 = vmatpush.bf16.msra.mxu0 %v1757
  %2088 = vmatpush.bf16.msra.mxu0 %v1756
  %2089 = vmatpush.bf16.msra.mxu0 %v1755
  %2090 = vmatpush.bf16.msra.mxu0 %v1754
  %2091 = vmatmul.bf16.gmra.mxu0 %v883
  %v2092 = vpop.f32.mrf.mxu0
  %v2093 = vadd.f32 %v2044, %v2092
  %v2094 = vpop.f32.mrf.mxu0
  %v2095 = vadd.f32 %v2046, %v2094
  %2096 = vmatmul.bf16.gmra.mxu0 %v901
  %v2097 = vpop.f32.mrf.mxu0
  %v2098 = vadd.f32 %v2049, %v2097
  %v2099 = vpop.f32.mrf.mxu0
  %v2100 = vadd.f32 %v2051, %v2099
  %2101 = vmatmul.bf16.gmra.mxu0 %v919
  %v2102 = vpop.f32.mrf.mxu0
  %v2103 = vadd.f32 %v2054, %v2102
  %v2104 = vpop.f32.mrf.mxu0
  %v2105 = vadd.f32 %v2056, %v2104
  %2106 = vmatmul.bf16.gmra.mxu0 %v937
  %v2107 = vpop.f32.mrf.mxu0
  %v2108 = vadd.f32 %v2059, %v2107
  %v2109 = vpop.f32.mrf.mxu0
  %v2110 = vadd.f32 %v2061, %v2109
  %2111 = vmatmul.bf16.gmra.mxu0 %v955
  %v2112 = vpop.f32.mrf.mxu0
  %v2113 = vadd.f32 %v2064, %v2112
  %v2114 = vpop.f32.mrf.mxu0
  %v2115 = vadd.f32 %v2066, %v2114
  %2116 = vmatmul.bf16.gmra.mxu0 %v973
  %v2117 = vpop.f32.mrf.mxu0
  %v2118 = vadd.f32 %v2069, %v2117
  %v2119 = vpop.f32.mrf.mxu0
  %v2120 = vadd.f32 %v2071, %v2119
  %2121 = vmatmul.bf16.gmra.mxu0 %v991
  %v2122 = vpop.f32.mrf.mxu0
  %v2123 = vadd.f32 %v2074, %v2122
  %v2124 = vpop.f32.mrf.mxu0
  %v2125 = vadd.f32 %v2076, %v2124
  %2126 = vmatmul.bf16.gmra.mxu0 %v1009
  %v2127 = vpop.f32.mrf.mxu0
  %v2128 = vadd.f32 %v2079, %v2127
  %v2129 = vpop.f32.mrf.mxu0
  %v2130 = vadd.f32 %v2081, %v2129
  %2131 = vdwg.mxu0
  %2132 = vmatpush.bf16.msra.mxu0 %v1769
  %2133 = vmatpush.bf16.msra.mxu0 %v1768
  %2134 = vmatpush.bf16.msra.mxu0 %v1767
  %2135 = vmatpush.bf16.msra.mxu0 %v1766
  %2136 = vmatpush.bf16.msra.mxu0 %v1765
  %2137 = vmatpush.bf16.msra.mxu0 %v1764
  %2138 = vmatpush.bf16.msra.mxu0 %v1763
  %2139 = vmatpush.bf16.msra.mxu0 %v1762
  %2140 = vmatmul.bf16.gmra.mxu0 %v884
  %v2141 = vpop.f32.mrf.mxu0
  %v2142 = vadd.f32 %v2093, %v2141
  %v2143 = vpop.f32.mrf.mxu0
  %v2144 = vadd.f32 %v2095, %v2143
  %2145 = vmatmul.bf16.gmra.mxu0 %v902
  %v2146 = vpop.f32.mrf.mxu0
  %v2147 = vadd.f32 %v2098, %v2146
  %v2148 = vpop.f32.mrf.mxu0
  %v2149 = vadd.f32 %v2100, %v2148
  %2150 = vmatmul.bf16.gmra.mxu0 %v920
  %v2151 = vpop.f32.mrf.mxu0
  %v2152 = vadd.f32 %v2103, %v2151
  %v2153 = vpop.f32.mrf.mxu0
  %v2154 = vadd.f32 %v2105, %v2153
  %2155 = vmatmul.bf16.gmra.mxu0 %v938
  %v2156 = vpop.f32.mrf.mxu0
  %v2157 = vadd.f32 %v2108, %v2156
  %v2158 = vpop.f32.mrf.mxu0
  %v2159 = vadd.f32 %v2110, %v2158
  %2160 = vmatmul.bf16.gmra.mxu0 %v956
  %v2161 = vpop.f32.mrf.mxu0
  %v2162 = vadd.f32 %v2113, %v2161
  %v2163 = vpop.f32.mrf.mxu0
  %v2164 = vadd.f32 %v2115, %v2163
  %2165 = vmatmul.bf16.gmra.mxu0 %v974
  %v2166 = vpop.f32.mrf.mxu0
  %v2167 = vadd.f32 %v2118, %v2166
  %v2168 = vpop.f32.mrf.mxu0
  %v2169 = vadd.f32 %v2120, %v2168
  %2170 = vmatmul.bf16.gmra.mxu0 %v992
  %v2171 = vpop.f32.mrf.mxu0
  %v2172 = vadd.f32 %v2123, %v2171
  %v2173 = vpop.f32.mrf.mxu0
  %v2174 = vadd.f32 %v2125, %v2173
  %2175 = vmatmul.bf16.gmra.mxu0 %v1010
  %v2176 = vpop.f32.mrf.mxu0
  %v2177 = vadd.f32 %v2128, %v2176
  %v2178 = vpop.f32.mrf.mxu0
  %v2179 = vadd.f32 %v2130, %v2178
  %2180 = vdwg.mxu0
  %2181 = vmatpush.bf16.msra.mxu0 %v1777
  %2182 = vmatpush.bf16.msra.mxu0 %v1776
  %2183 = vmatpush.bf16.msra.mxu0 %v1775
  %2184 = vmatpush.bf16.msra.mxu0 %v1774
  %2185 = vmatpush.bf16.msra.mxu0 %v1773
  %2186 = vmatpush.bf16.msra.mxu0 %v1772
  %2187 = vmatpush.bf16.msra.mxu0 %v1771
  %2188 = vmatpush.bf16.msra.mxu0 %v1770
  %2189 = vmatmul.bf16.gmra.mxu0 %v885
  %v2190 = vpop.f32.mrf.mxu0
  %v2191 = vadd.f32 %v2142, %v2190
  %v2192 = vpop.f32.mrf.mxu0
  %v2193 = vadd.f32 %v2144, %v2192
  %2194 = vmatmul.bf16.gmra.mxu0 %v903
  %v2195 = vpop.f32.mrf.mxu0
  %v2196 = vadd.f32 %v2147, %v2195
  %v2197 = vpop.f32.mrf.mxu0
  %v2198 = vadd.f32 %v2149, %v2197
  %2199 = vmatmul.bf16.gmra.mxu0 %v921
  %v2200 = vpop.f32.mrf.mxu0
  %v2201 = vadd.f32 %v2152, %v2200
  %v2202 = vpop.f32.mrf.mxu0
  %v2203 = vadd.f32 %v2154, %v2202
  %2204 = vmatmul.bf16.gmra.mxu0 %v939
  %v2205 = vpop.f32.mrf.mxu0
  %v2206 = vadd.f32 %v2157, %v2205
  %v2207 = vpop.f32.mrf.mxu0
  %v2208 = vadd.f32 %v2159, %v2207
  %2209 = vmatmul.bf16.gmra.mxu0 %v957
  %v2210 = vpop.f32.mrf.mxu0
  %v2211 = vadd.f32 %v2162, %v2210
  %v2212 = vpop.f32.mrf.mxu0
  %v2213 = vadd.f32 %v2164, %v2212
  %2214 = vmatmul.bf16.gmra.mxu0 %v975
  %v2215 = vpop.f32.mrf.mxu0
  %v2216 = vadd.f32 %v2167, %v2215
  %v2217 = vpop.f32.mrf.mxu0
  %v2218 = vadd.f32 %v2169, %v2217
  %2219 = vmatmul.bf16.gmra.mxu0 %v993
  %v2220 = vpop.f32.mrf.mxu0
  %v2221 = vadd.f32 %v2172, %v2220
  %v2222 = vpop.f32.mrf.mxu0
  %v2223 = vadd.f32 %v2174, %v2222
  %2224 = vmatmul.bf16.gmra.mxu0 %v1011
  %v2225 = vpop.f32.mrf.mxu0
  %v2226 = vadd.f32 %v2177, %v2225
  %v2227 = vpop.f32.mrf.mxu0
  %v2228 = vadd.f32 %v2179, %v2227
  %2229 = vdwg.mxu0
  %2230 = vmatpush.bf16.msra.mxu0 %v1785
  %2231 = vmatpush.bf16.msra.mxu0 %v1784
  %2232 = vmatpush.bf16.msra.mxu0 %v1783
  %2233 = vmatpush.bf16.msra.mxu0 %v1782
  %2234 = vmatpush.bf16.msra.mxu0 %v1781
  %2235 = vmatpush.bf16.msra.mxu0 %v1780
  %2236 = vmatpush.bf16.msra.mxu0 %v1779
  %2237 = vmatpush.bf16.msra.mxu0 %v1778
  %2238 = vmatmul.bf16.gmra.mxu0 %v886
  %v2239 = vpop.f32.mrf.mxu0
  %v2240 = vadd.f32 %v2191, %v2239
  %v2241 = vpop.f32.mrf.mxu0
  %v2242 = vadd.f32 %v2193, %v2241
  %2243 = vmatmul.bf16.gmra.mxu0 %v904
  %v2244 = vpop.f32.mrf.mxu0
  %v2245 = vadd.f32 %v2196, %v2244
  %v2246 = vpop.f32.mrf.mxu0
  %v2247 = vadd.f32 %v2198, %v2246
  %2248 = vmatmul.bf16.gmra.mxu0 %v922
  %v2249 = vpop.f32.mrf.mxu0
  %v2250 = vadd.f32 %v2201, %v2249
  %v2251 = vpop.f32.mrf.mxu0
  %v2252 = vadd.f32 %v2203, %v2251
  %2253 = vmatmul.bf16.gmra.mxu0 %v940
  %v2254 = vpop.f32.mrf.mxu0
  %v2255 = vadd.f32 %v2206, %v2254
  %v2256 = vpop.f32.mrf.mxu0
  %v2257 = vadd.f32 %v2208, %v2256
  %2258 = vmatmul.bf16.gmra.mxu0 %v958
  %v2259 = vpop.f32.mrf.mxu0
  %v2260 = vadd.f32 %v2211, %v2259
  %v2261 = vpop.f32.mrf.mxu0
  %v2262 = vadd.f32 %v2213, %v2261
  %2263 = vmatmul.bf16.gmra.mxu0 %v976
  %v2264 = vpop.f32.mrf.mxu0
  %v2265 = vadd.f32 %v2216, %v2264
  %v2266 = vpop.f32.mrf.mxu0
  %v2267 = vadd.f32 %v2218, %v2266
  %2268 = vmatmul.bf16.gmra.mxu0 %v994
  %v2269 = vpop.f32.mrf.mxu0
  %v2270 = vadd.f32 %v2221, %v2269
  %v2271 = vpop.f32.mrf.mxu0
  %v2272 = vadd.f32 %v2223, %v2271
  %2273 = vmatmul.bf16.gmra.mxu0 %v1012
  %v2274 = vpop.f32.mrf.mxu0
  %v2275 = vadd.f32 %v2226, %v2274
  %v2276 = vpop.f32.mrf.mxu0
  %v2277 = vadd.f32 %v2228, %v2276
  %2278 = vdwg.mxu0
  %2279 = vmatpush.bf16.msra.mxu0 %v1793
  %2280 = vmatpush.bf16.msra.mxu0 %v1792
  %2281 = vmatpush.bf16.msra.mxu0 %v1791
  %2282 = vmatpush.bf16.msra.mxu0 %v1790
  %2283 = vmatpush.bf16.msra.mxu0 %v1789
  %2284 = vmatpush.bf16.msra.mxu0 %v1788
  %2285 = vmatpush.bf16.msra.mxu0 %v1787
  %2286 = vmatpush.bf16.msra.mxu0 %v1786
  %2287 = vmatmul.bf16.gmra.mxu0 %v887
  %v2288 = vpop.f32.mrf.mxu0
  %v2289 = vadd.f32 %v2240, %v2288
  %v2290 = vpop.f32.mrf.mxu0
  %v2291 = vadd.f32 %v2242, %v2290
  %2292 = vmatmul.bf16.gmra.mxu0 %v905
  %v2293 = vpop.f32.mrf.mxu0
  %v2294 = vadd.f32 %v2245, %v2293
  %v2295 = vpop.f32.mrf.mxu0
  %v2296 = vadd.f32 %v2247, %v2295
  %2297 = vmatmul.bf16.gmra.mxu0 %v923
  %v2298 = vpop.f32.mrf.mxu0
  %v2299 = vadd.f32 %v2250, %v2298
  %v2300 = vpop.f32.mrf.mxu0
  %v2301 = vadd.f32 %v2252, %v2300
  %2302 = vmatmul.bf16.gmra.mxu0 %v941
  %v2303 = vpop.f32.mrf.mxu0
  %v2304 = vadd.f32 %v2255, %v2303
  %v2305 = vpop.f32.mrf.mxu0
  %v2306 = vadd.f32 %v2257, %v2305
  %2307 = vmatmul.bf16.gmra.mxu0 %v959
  %v2308 = vpop.f32.mrf.mxu0
  %v2309 = vadd.f32 %v2260, %v2308
  %v2310 = vpop.f32.mrf.mxu0
  %v2311 = vadd.f32 %v2262, %v2310
  %2312 = vmatmul.bf16.gmra.mxu0 %v977
  %v2313 = vpop.f32.mrf.mxu0
  %v2314 = vadd.f32 %v2265, %v2313
  %v2315 = vpop.f32.mrf.mxu0
  %v2316 = vadd.f32 %v2267, %v2315
  %2317 = vmatmul.bf16.gmra.mxu0 %v995
  %v2318 = vpop.f32.mrf.mxu0
  %v2319 = vadd.f32 %v2270, %v2318
  %v2320 = vpop.f32.mrf.mxu0
  %v2321 = vadd.f32 %v2272, %v2320
  %2322 = vmatmul.bf16.gmra.mxu0 %v1013
  %v2323 = vpop.f32.mrf.mxu0
  %v2324 = vadd.f32 %v2275, %v2323
  %v2325 = vpop.f32.mrf.mxu0
  %v2326 = vadd.f32 %v2277, %v2325
  %2327 = vdwg.mxu0
  %2328 = vmatpush.bf16.msra.mxu0 %v1801
  %2329 = vmatpush.bf16.msra.mxu0 %v1800
  %2330 = vmatpush.bf16.msra.mxu0 %v1799
  %2331 = vmatpush.bf16.msra.mxu0 %v1798
  %2332 = vmatpush.bf16.msra.mxu0 %v1797
  %2333 = vmatpush.bf16.msra.mxu0 %v1796
  %2334 = vmatpush.bf16.msra.mxu0 %v1795
  %2335 = vmatpush.bf16.msra.mxu0 %v1794
  %2336 = vmatmul.bf16.gmra.mxu0 %v888
  %v2337 = vpop.f32.mrf.mxu0
  %v2338 = vadd.f32 %v2289, %v2337
  %v2339 = vpop.f32.mrf.mxu0
  %v2340 = vadd.f32 %v2291, %v2339
  %2341 = vmatmul.bf16.gmra.mxu0 %v906
  %v2342 = vpop.f32.mrf.mxu0
  %v2343 = vadd.f32 %v2294, %v2342
  %v2344 = vpop.f32.mrf.mxu0
  %v2345 = vadd.f32 %v2296, %v2344
  %2346 = vmatmul.bf16.gmra.mxu0 %v924
  %v2347 = vpop.f32.mrf.mxu0
  %v2348 = vadd.f32 %v2299, %v2347
  %v2349 = vpop.f32.mrf.mxu0
  %v2350 = vadd.f32 %v2301, %v2349
  %2351 = vmatmul.bf16.gmra.mxu0 %v942
  %v2352 = vpop.f32.mrf.mxu0
  %v2353 = vadd.f32 %v2304, %v2352
  %v2354 = vpop.f32.mrf.mxu0
  %v2355 = vadd.f32 %v2306, %v2354
  %2356 = vmatmul.bf16.gmra.mxu0 %v960
  %v2357 = vpop.f32.mrf.mxu0
  %v2358 = vadd.f32 %v2309, %v2357
  %v2359 = vpop.f32.mrf.mxu0
  %v2360 = vadd.f32 %v2311, %v2359
  %2361 = vmatmul.bf16.gmra.mxu0 %v978
  %v2362 = vpop.f32.mrf.mxu0
  %v2363 = vadd.f32 %v2314, %v2362
  %v2364 = vpop.f32.mrf.mxu0
  %v2365 = vadd.f32 %v2316, %v2364
  %2366 = vmatmul.bf16.gmra.mxu0 %v996
  %v2367 = vpop.f32.mrf.mxu0
  %v2368 = vadd.f32 %v2319, %v2367
  %v2369 = vpop.f32.mrf.mxu0
  %v2370 = vadd.f32 %v2321, %v2369
  %2371 = vmatmul.bf16.gmra.mxu0 %v1014
  %v2372 = vpop.f32.mrf.mxu0
  %v2373 = vadd.f32 %v2324, %v2372
  %v2374 = vpop.f32.mrf.mxu0
  %v2375 = vadd.f32 %v2326, %v2374
  %2376 = vdwg.mxu0
  %2377 = vmatpush.bf16.msra.mxu0 %v1809
  %2378 = vmatpush.bf16.msra.mxu0 %v1808
  %2379 = vmatpush.bf16.msra.mxu0 %v1807
  %2380 = vmatpush.bf16.msra.mxu0 %v1806
  %2381 = vmatpush.bf16.msra.mxu0 %v1805
  %2382 = vmatpush.bf16.msra.mxu0 %v1804
  %2383 = vmatpush.bf16.msra.mxu0 %v1803
  %2384 = vmatpush.bf16.msra.mxu0 %v1802
  %2385 = vmatmul.bf16.gmra.mxu0 %v889
  %v2386 = vpop.f32.mrf.mxu0
  %v2387 = vadd.f32 %v2338, %v2386
  %v2388 = vpop.f32.mrf.mxu0
  %v2389 = vadd.f32 %v2340, %v2388
  %2390 = vmatmul.bf16.gmra.mxu0 %v907
  %v2391 = vpop.f32.mrf.mxu0
  %v2392 = vadd.f32 %v2343, %v2391
  %v2393 = vpop.f32.mrf.mxu0
  %v2394 = vadd.f32 %v2345, %v2393
  %2395 = vmatmul.bf16.gmra.mxu0 %v925
  %v2396 = vpop.f32.mrf.mxu0
  %v2397 = vadd.f32 %v2348, %v2396
  %v2398 = vpop.f32.mrf.mxu0
  %v2399 = vadd.f32 %v2350, %v2398
  %2400 = vmatmul.bf16.gmra.mxu0 %v943
  %v2401 = vpop.f32.mrf.mxu0
  %v2402 = vadd.f32 %v2353, %v2401
  %v2403 = vpop.f32.mrf.mxu0
  %v2404 = vadd.f32 %v2355, %v2403
  %2405 = vmatmul.bf16.gmra.mxu0 %v961
  %v2406 = vpop.f32.mrf.mxu0
  %v2407 = vadd.f32 %v2358, %v2406
  %v2408 = vpop.f32.mrf.mxu0
  %v2409 = vadd.f32 %v2360, %v2408
  %2410 = vmatmul.bf16.gmra.mxu0 %v979
  %v2411 = vpop.f32.mrf.mxu0
  %v2412 = vadd.f32 %v2363, %v2411
  %v2413 = vpop.f32.mrf.mxu0
  %v2414 = vadd.f32 %v2365, %v2413
  %2415 = vmatmul.bf16.gmra.mxu0 %v997
  %v2416 = vpop.f32.mrf.mxu0
  %v2417 = vadd.f32 %v2368, %v2416
  %v2418 = vpop.f32.mrf.mxu0
  %v2419 = vadd.f32 %v2370, %v2418
  %2420 = vmatmul.bf16.gmra.mxu0 %v1015
  %v2421 = vpop.f32.mrf.mxu0
  %v2422 = vadd.f32 %v2373, %v2421
  %v2423 = vpop.f32.mrf.mxu0
  %v2424 = vadd.f32 %v2375, %v2423
  %2425 = vdwg.mxu0
  %2426 = vmatpush.bf16.msra.mxu0 %v1817
  %2427 = vmatpush.bf16.msra.mxu0 %v1816
  %2428 = vmatpush.bf16.msra.mxu0 %v1815
  %2429 = vmatpush.bf16.msra.mxu0 %v1814
  %2430 = vmatpush.bf16.msra.mxu0 %v1813
  %2431 = vmatpush.bf16.msra.mxu0 %v1812
  %2432 = vmatpush.bf16.msra.mxu0 %v1811
  %2433 = vmatpush.bf16.msra.mxu0 %v1810
  %2434 = vmatmul.bf16.gmra.mxu0 %v890
  %v2435 = vpop.f32.mrf.mxu0
  %v2436 = vadd.f32 %v2387, %v2435
  %v2437 = vpop.f32.mrf.mxu0
  %v2438 = vadd.f32 %v2389, %v2437
  %2439 = vmatmul.bf16.gmra.mxu0 %v908
  %v2440 = vpop.f32.mrf.mxu0
  %v2441 = vadd.f32 %v2392, %v2440
  %v2442 = vpop.f32.mrf.mxu0
  %v2443 = vadd.f32 %v2394, %v2442
  %2444 = vmatmul.bf16.gmra.mxu0 %v926
  %v2445 = vpop.f32.mrf.mxu0
  %v2446 = vadd.f32 %v2397, %v2445
  %v2447 = vpop.f32.mrf.mxu0
  %v2448 = vadd.f32 %v2399, %v2447
  %2449 = vmatmul.bf16.gmra.mxu0 %v944
  %v2450 = vpop.f32.mrf.mxu0
  %v2451 = vadd.f32 %v2402, %v2450
  %v2452 = vpop.f32.mrf.mxu0
  %v2453 = vadd.f32 %v2404, %v2452
  %2454 = vmatmul.bf16.gmra.mxu0 %v962
  %v2455 = vpop.f32.mrf.mxu0
  %v2456 = vadd.f32 %v2407, %v2455
  %v2457 = vpop.f32.mrf.mxu0
  %v2458 = vadd.f32 %v2409, %v2457
  %2459 = vmatmul.bf16.gmra.mxu0 %v980
  %v2460 = vpop.f32.mrf.mxu0
  %v2461 = vadd.f32 %v2412, %v2460
  %v2462 = vpop.f32.mrf.mxu0
  %v2463 = vadd.f32 %v2414, %v2462
  %2464 = vmatmul.bf16.gmra.mxu0 %v998
  %v2465 = vpop.f32.mrf.mxu0
  %v2466 = vadd.f32 %v2417, %v2465
  %v2467 = vpop.f32.mrf.mxu0
  %v2468 = vadd.f32 %v2419, %v2467
  %2469 = vmatmul.bf16.gmra.mxu0 %v1016
  %v2470 = vpop.f32.mrf.mxu0
  %v2471 = vadd.f32 %v2422, %v2470
  %v2472 = vpop.f32.mrf.mxu0
  %v2473 = vadd.f32 %v2424, %v2472
  %2474 = vdwg.mxu0
  %2475 = vmatpush.bf16.msra.mxu0 %v1825
  %2476 = vmatpush.bf16.msra.mxu0 %v1824
  %2477 = vmatpush.bf16.msra.mxu0 %v1823
  %2478 = vmatpush.bf16.msra.mxu0 %v1822
  %2479 = vmatpush.bf16.msra.mxu0 %v1821
  %2480 = vmatpush.bf16.msra.mxu0 %v1820
  %2481 = vmatpush.bf16.msra.mxu0 %v1819
  %2482 = vmatpush.bf16.msra.mxu0 %v1818
  %2483 = vmatmul.bf16.gmra.mxu0 %v891
  %v2484 = vpop.f32.mrf.mxu0
  %v2485 = vadd.f32 %v2436, %v2484
  %v2486 = vpop.f32.mrf.mxu0
  %v2487 = vadd.f32 %v2438, %v2486
  %2488 = vmatmul.bf16.gmra.mxu0 %v909
  %v2489 = vpop.f32.mrf.mxu0
  %v2490 = vadd.f32 %v2441, %v2489
  %v2491 = vpop.f32.mrf.mxu0
  %v2492 = vadd.f32 %v2443, %v2491
  %2493 = vmatmul.bf16.gmra.mxu0 %v927
  %v2494 = vpop.f32.mrf.mxu0
  %v2495 = vadd.f32 %v2446, %v2494
  %v2496 = vpop.f32.mrf.mxu0
  %v2497 = vadd.f32 %v2448, %v2496
  %2498 = vmatmul.bf16.gmra.mxu0 %v945
  %v2499 = vpop.f32.mrf.mxu0
  %v2500 = vadd.f32 %v2451, %v2499
  %v2501 = vpop.f32.mrf.mxu0
  %v2502 = vadd.f32 %v2453, %v2501
  %2503 = vmatmul.bf16.gmra.mxu0 %v963
  %v2504 = vpop.f32.mrf.mxu0
  %v2505 = vadd.f32 %v2456, %v2504
  %v2506 = vpop.f32.mrf.mxu0
  %v2507 = vadd.f32 %v2458, %v2506
  %2508 = vmatmul.bf16.gmra.mxu0 %v981
  %v2509 = vpop.f32.mrf.mxu0
  %v2510 = vadd.f32 %v2461, %v2509
  %v2511 = vpop.f32.mrf.mxu0
  %v2512 = vadd.f32 %v2463, %v2511
  %2513 = vmatmul.bf16.gmra.mxu0 %v999
  %v2514 = vpop.f32.mrf.mxu0
  %v2515 = vadd.f32 %v2466, %v2514
  %v2516 = vpop.f32.mrf.mxu0
  %v2517 = vadd.f32 %v2468, %v2516
  %2518 = vmatmul.bf16.gmra.mxu0 %v1017
  %v2519 = vpop.f32.mrf.mxu0
  %v2520 = vadd.f32 %v2471, %v2519
  %v2521 = vpop.f32.mrf.mxu0
  %v2522 = vadd.f32 %v2473, %v2521
  %2523 = vdwg.mxu0
  %2524 = vmatpush.bf16.msra.mxu0 %v1833
  %2525 = vmatpush.bf16.msra.mxu0 %v1832
  %2526 = vmatpush.bf16.msra.mxu0 %v1831
  %2527 = vmatpush.bf16.msra.mxu0 %v1830
  %2528 = vmatpush.bf16.msra.mxu0 %v1829
  %2529 = vmatpush.bf16.msra.mxu0 %v1828
  %2530 = vmatpush.bf16.msra.mxu0 %v1827
  %2531 = vmatpush.bf16.msra.mxu0 %v1826
  %2532 = vmatmul.bf16.gmra.mxu0 %v892
  %v2533 = vpop.f32.mrf.mxu0
  %v2534 = vadd.f32 %v2485, %v2533
  %v2535 = vpop.f32.mrf.mxu0
  %v2536 = vadd.f32 %v2487, %v2535
  %2537 = vmatmul.bf16.gmra.mxu0 %v910
  %v2538 = vpop.f32.mrf.mxu0
  %v2539 = vadd.f32 %v2490, %v2538
  %v2540 = vpop.f32.mrf.mxu0
  %v2541 = vadd.f32 %v2492, %v2540
  %2542 = vmatmul.bf16.gmra.mxu0 %v928
  %v2543 = vpop.f32.mrf.mxu0
  %v2544 = vadd.f32 %v2495, %v2543
  %v2545 = vpop.f32.mrf.mxu0
  %v2546 = vadd.f32 %v2497, %v2545
  %2547 = vmatmul.bf16.gmra.mxu0 %v946
  %v2548 = vpop.f32.mrf.mxu0
  %v2549 = vadd.f32 %v2500, %v2548
  %v2550 = vpop.f32.mrf.mxu0
  %v2551 = vadd.f32 %v2502, %v2550
  %2552 = vmatmul.bf16.gmra.mxu0 %v964
  %v2553 = vpop.f32.mrf.mxu0
  %v2554 = vadd.f32 %v2505, %v2553
  %v2555 = vpop.f32.mrf.mxu0
  %v2556 = vadd.f32 %v2507, %v2555
  %2557 = vmatmul.bf16.gmra.mxu0 %v982
  %v2558 = vpop.f32.mrf.mxu0
  %v2559 = vadd.f32 %v2510, %v2558
  %v2560 = vpop.f32.mrf.mxu0
  %v2561 = vadd.f32 %v2512, %v2560
  %2562 = vmatmul.bf16.gmra.mxu0 %v1000
  %v2563 = vpop.f32.mrf.mxu0
  %v2564 = vadd.f32 %v2515, %v2563
  %v2565 = vpop.f32.mrf.mxu0
  %v2566 = vadd.f32 %v2517, %v2565
  %2567 = vmatmul.bf16.gmra.mxu0 %v1018
  %v2568 = vpop.f32.mrf.mxu0
  %v2569 = vadd.f32 %v2520, %v2568
  %v2570 = vpop.f32.mrf.mxu0
  %v2571 = vadd.f32 %v2522, %v2570
  %2572 = vdwg.mxu0
  %2573 = vmatpush.bf16.msra.mxu0 %v1841
  %2574 = vmatpush.bf16.msra.mxu0 %v1840
  %2575 = vmatpush.bf16.msra.mxu0 %v1839
  %2576 = vmatpush.bf16.msra.mxu0 %v1838
  %2577 = vmatpush.bf16.msra.mxu0 %v1837
  %2578 = vmatpush.bf16.msra.mxu0 %v1836
  %2579 = vmatpush.bf16.msra.mxu0 %v1835
  %2580 = vmatpush.bf16.msra.mxu0 %v1834
  %2581 = vmatmul.bf16.gmra.mxu0 %v893
  %v2582 = vpop.f32.mrf.mxu0
  %v2583 = vadd.f32 %v2534, %v2582
  %v2584 = vpop.f32.mrf.mxu0
  %v2585 = vadd.f32 %v2536, %v2584
  %2586 = vmatmul.bf16.gmra.mxu0 %v911
  %v2587 = vpop.f32.mrf.mxu0
  %v2588 = vadd.f32 %v2539, %v2587
  %v2589 = vpop.f32.mrf.mxu0
  %v2590 = vadd.f32 %v2541, %v2589
  %2591 = vmatmul.bf16.gmra.mxu0 %v929
  %v2592 = vpop.f32.mrf.mxu0
  %v2593 = vadd.f32 %v2544, %v2592
  %v2594 = vpop.f32.mrf.mxu0
  %v2595 = vadd.f32 %v2546, %v2594
  %2596 = vmatmul.bf16.gmra.mxu0 %v947
  %v2597 = vpop.f32.mrf.mxu0
  %v2598 = vadd.f32 %v2549, %v2597
  %v2599 = vpop.f32.mrf.mxu0
  %v2600 = vadd.f32 %v2551, %v2599
  %2601 = vmatmul.bf16.gmra.mxu0 %v965
  %v2602 = vpop.f32.mrf.mxu0
  %v2603 = vadd.f32 %v2554, %v2602
  %v2604 = vpop.f32.mrf.mxu0
  %v2605 = vadd.f32 %v2556, %v2604
  %2606 = vmatmul.bf16.gmra.mxu0 %v983
  %v2607 = vpop.f32.mrf.mxu0
  %v2608 = vadd.f32 %v2559, %v2607
  %v2609 = vpop.f32.mrf.mxu0
  %v2610 = vadd.f32 %v2561, %v2609
  %2611 = vmatmul.bf16.gmra.mxu0 %v1001
  %v2612 = vpop.f32.mrf.mxu0
  %v2613 = vadd.f32 %v2564, %v2612
  %v2614 = vpop.f32.mrf.mxu0
  %v2615 = vadd.f32 %v2566, %v2614
  %2616 = vmatmul.bf16.gmra.mxu0 %v1019
  %v2617 = vpop.f32.mrf.mxu0
  %v2618 = vadd.f32 %v2569, %v2617
  %v2619 = vpop.f32.mrf.mxu0
  %v2620 = vadd.f32 %v2571, %v2619
  %2621 = vdwg.mxu0
  %2622 = vmatpush.bf16.msra.mxu0 %v1849
  %2623 = vmatpush.bf16.msra.mxu0 %v1848
  %2624 = vmatpush.bf16.msra.mxu0 %v1847
  %2625 = vmatpush.bf16.msra.mxu0 %v1846
  %2626 = vmatpush.bf16.msra.mxu0 %v1845
  %2627 = vmatpush.bf16.msra.mxu0 %v1844
  %2628 = vmatpush.bf16.msra.mxu0 %v1843
  %2629 = vmatpush.bf16.msra.mxu0 %v1842
  %2630 = vmatmul.bf16.gmra.mxu0 %v894
  %v2631 = vpop.f32.mrf.mxu0
  %v2632 = vadd.f32 %v2583, %v2631
  %v2633 = vpop.f32.mrf.mxu0
  %v2634 = vadd.f32 %v2585, %v2633
  %2635 = vmatmul.bf16.gmra.mxu0 %v912
  %v2636 = vpop.f32.mrf.mxu0
  %v2637 = vadd.f32 %v2588, %v2636
  %v2638 = vpop.f32.mrf.mxu0
  %v2639 = vadd.f32 %v2590, %v2638
  %2640 = vmatmul.bf16.gmra.mxu0 %v930
  %v2641 = vpop.f32.mrf.mxu0
  %v2642 = vadd.f32 %v2593, %v2641
  %v2643 = vpop.f32.mrf.mxu0
  %v2644 = vadd.f32 %v2595, %v2643
  %2645 = vmatmul.bf16.gmra.mxu0 %v948
  %v2646 = vpop.f32.mrf.mxu0
  %v2647 = vadd.f32 %v2598, %v2646
  %v2648 = vpop.f32.mrf.mxu0
  %v2649 = vadd.f32 %v2600, %v2648
  %2650 = vmatmul.bf16.gmra.mxu0 %v966
  %v2651 = vpop.f32.mrf.mxu0
  %v2652 = vadd.f32 %v2603, %v2651
  %v2653 = vpop.f32.mrf.mxu0
  %v2654 = vadd.f32 %v2605, %v2653
  %2655 = vmatmul.bf16.gmra.mxu0 %v984
  %v2656 = vpop.f32.mrf.mxu0
  %v2657 = vadd.f32 %v2608, %v2656
  %v2658 = vpop.f32.mrf.mxu0
  %v2659 = vadd.f32 %v2610, %v2658
  %2660 = vmatmul.bf16.gmra.mxu0 %v1002
  %v2661 = vpop.f32.mrf.mxu0
  %v2662 = vadd.f32 %v2613, %v2661
  %v2663 = vpop.f32.mrf.mxu0
  %v2664 = vadd.f32 %v2615, %v2663
  %2665 = vmatmul.bf16.gmra.mxu0 %v1020
  %v2666 = vpop.f32.mrf.mxu0
  %v2667 = vadd.f32 %v2618, %v2666
  %v2668 = vpop.f32.mrf.mxu0
  %v2669 = vadd.f32 %v2620, %v2668
  %2670 = vdwg.mxu0
  %2671 = vmatpush.bf16.msra.mxu0 %v1857
  %2672 = vmatpush.bf16.msra.mxu0 %v1856
  %2673 = vmatpush.bf16.msra.mxu0 %v1855
  %2674 = vmatpush.bf16.msra.mxu0 %v1854
  %2675 = vmatpush.bf16.msra.mxu0 %v1853
  %2676 = vmatpush.bf16.msra.mxu0 %v1852
  %2677 = vmatpush.bf16.msra.mxu0 %v1851
  %2678 = vmatpush.bf16.msra.mxu0 %v1850
  %2679 = vmatmul.bf16.gmra.mxu0 %v895
  %v2680 = vpop.f32.mrf.mxu0
  %v2681 = vadd.f32 %v2632, %v2680
  %v2682 = vpop.f32.mrf.mxu0
  %v2683 = vadd.f32 %v2634, %v2682
  %2684 = vmatmul.bf16.gmra.mxu0 %v913
  %v2685 = vpop.f32.mrf.mxu0
  %v2686 = vadd.f32 %v2637, %v2685
  %v2687 = vpop.f32.mrf.mxu0
  %v2688 = vadd.f32 %v2639, %v2687
  %2689 = vmatmul.bf16.gmra.mxu0 %v931
  %v2690 = vpop.f32.mrf.mxu0
  %v2691 = vadd.f32 %v2642, %v2690
  %v2692 = vpop.f32.mrf.mxu0
  %v2693 = vadd.f32 %v2644, %v2692
  %2694 = vmatmul.bf16.gmra.mxu0 %v949
  %v2695 = vpop.f32.mrf.mxu0
  %v2696 = vadd.f32 %v2647, %v2695
  %v2697 = vpop.f32.mrf.mxu0
  %v2698 = vadd.f32 %v2649, %v2697
  %2699 = vmatmul.bf16.gmra.mxu0 %v967
  %v2700 = vpop.f32.mrf.mxu0
  %v2701 = vadd.f32 %v2652, %v2700
  %v2702 = vpop.f32.mrf.mxu0
  %v2703 = vadd.f32 %v2654, %v2702
  %2704 = vmatmul.bf16.gmra.mxu0 %v985
  %v2705 = vpop.f32.mrf.mxu0
  %v2706 = vadd.f32 %v2657, %v2705
  %v2707 = vpop.f32.mrf.mxu0
  %v2708 = vadd.f32 %v2659, %v2707
  %2709 = vmatmul.bf16.gmra.mxu0 %v1003
  %v2710 = vpop.f32.mrf.mxu0
  %v2711 = vadd.f32 %v2662, %v2710
  %v2712 = vpop.f32.mrf.mxu0
  %v2713 = vadd.f32 %v2664, %v2712
  %2714 = vmatmul.bf16.gmra.mxu0 %v1021
  %v2715 = vpop.f32.mrf.mxu0
  %v2716 = vadd.f32 %v2667, %v2715
  %v2717 = vpop.f32.mrf.mxu0
  %v2718 = vadd.f32 %v2669, %v2717
  %2719 = vdwg.mxu0
  %2720 = vmatpush.bf16.msra.mxu0 %v1865
  %2721 = vmatpush.bf16.msra.mxu0 %v1864
  %2722 = vmatpush.bf16.msra.mxu0 %v1863
  %2723 = vmatpush.bf16.msra.mxu0 %v1862
  %2724 = vmatpush.bf16.msra.mxu0 %v1861
  %2725 = vmatpush.bf16.msra.mxu0 %v1860
  %2726 = vmatpush.bf16.msra.mxu0 %v1859
  %2727 = vmatpush.bf16.msra.mxu0 %v1858
  %2728 = vmatmul.bf16.gmra.mxu0 %v896
  %v2729 = vpop.f32.mrf.mxu0
  %v2730 = vadd.f32 %v2681, %v2729
  %v2731 = vpop.f32.mrf.mxu0
  %v2732 = vadd.f32 %v2683, %v2731
  %2733 = vmatmul.bf16.gmra.mxu0 %v914
  %v2734 = vpop.f32.mrf.mxu0
  %v2735 = vadd.f32 %v2686, %v2734
  %v2736 = vpop.f32.mrf.mxu0
  %v2737 = vadd.f32 %v2688, %v2736
  %2738 = vmatmul.bf16.gmra.mxu0 %v932
  %v2739 = vpop.f32.mrf.mxu0
  %v2740 = vadd.f32 %v2691, %v2739
  %v2741 = vpop.f32.mrf.mxu0
  %v2742 = vadd.f32 %v2693, %v2741
  %2743 = vmatmul.bf16.gmra.mxu0 %v950
  %v2744 = vpop.f32.mrf.mxu0
  %v2745 = vadd.f32 %v2696, %v2744
  %v2746 = vpop.f32.mrf.mxu0
  %v2747 = vadd.f32 %v2698, %v2746
  %2748 = vmatmul.bf16.gmra.mxu0 %v968
  %v2749 = vpop.f32.mrf.mxu0
  %v2750 = vadd.f32 %v2701, %v2749
  %v2751 = vpop.f32.mrf.mxu0
  %v2752 = vadd.f32 %v2703, %v2751
  %2753 = vmatmul.bf16.gmra.mxu0 %v986
  %v2754 = vpop.f32.mrf.mxu0
  %v2755 = vadd.f32 %v2706, %v2754
  %v2756 = vpop.f32.mrf.mxu0
  %v2757 = vadd.f32 %v2708, %v2756
  %2758 = vmatmul.bf16.gmra.mxu0 %v1004
  %v2759 = vpop.f32.mrf.mxu0
  %v2760 = vadd.f32 %v2711, %v2759
  %v2761 = vpop.f32.mrf.mxu0
  %v2762 = vadd.f32 %v2713, %v2761
  %2763 = vmatmul.bf16.gmra.mxu0 %v1022
  %v2764 = vpop.f32.mrf.mxu0
  %v2765 = vadd.f32 %v2716, %v2764
  %v2766 = vpop.f32.mrf.mxu0
  %v2767 = vadd.f32 %v2718, %v2766
  %2768 = vdwg.mxu0
  %2769 = vmatpush.bf16.msra.mxu0 %v1873
  %2770 = vmatpush.bf16.msra.mxu0 %v1872
  %2771 = vmatpush.bf16.msra.mxu0 %v1871
  %2772 = vmatpush.bf16.msra.mxu0 %v1870
  %2773 = vmatpush.bf16.msra.mxu0 %v1869
  %2774 = vmatpush.bf16.msra.mxu0 %v1868
  %2775 = vmatpush.bf16.msra.mxu0 %v1867
  %2776 = vmatpush.bf16.msra.mxu0 %v1866
  %2777 = vmatmul.bf16.gmra.mxu0 %v897
  %v2778 = vpop.f32.mrf.mxu0
  %v2779 = vadd.f32 %v2730, %v2778
  %v2780 = vpop.f32.mrf.mxu0
  %v2781 = vadd.f32 %v2732, %v2780
  %2782 = vmatmul.bf16.gmra.mxu0 %v915
  %v2783 = vpop.f32.mrf.mxu0
  %v2784 = vadd.f32 %v2735, %v2783
  %v2785 = vpop.f32.mrf.mxu0
  %v2786 = vadd.f32 %v2737, %v2785
  %2787 = vmatmul.bf16.gmra.mxu0 %v933
  %v2788 = vpop.f32.mrf.mxu0
  %v2789 = vadd.f32 %v2740, %v2788
  %v2790 = vpop.f32.mrf.mxu0
  %v2791 = vadd.f32 %v2742, %v2790
  %2792 = vmatmul.bf16.gmra.mxu0 %v951
  %v2793 = vpop.f32.mrf.mxu0
  %v2794 = vadd.f32 %v2745, %v2793
  %v2795 = vpop.f32.mrf.mxu0
  %v2796 = vadd.f32 %v2747, %v2795
  %2797 = vmatmul.bf16.gmra.mxu0 %v969
  %v2798 = vpop.f32.mrf.mxu0
  %v2799 = vadd.f32 %v2750, %v2798
  %v2800 = vpop.f32.mrf.mxu0
  %v2801 = vadd.f32 %v2752, %v2800
  %2802 = vmatmul.bf16.gmra.mxu0 %v987
  %v2803 = vpop.f32.mrf.mxu0
  %v2804 = vadd.f32 %v2755, %v2803
  %v2805 = vpop.f32.mrf.mxu0
  %v2806 = vadd.f32 %v2757, %v2805
  %2807 = vmatmul.bf16.gmra.mxu0 %v1005
  %v2808 = vpop.f32.mrf.mxu0
  %v2809 = vadd.f32 %v2760, %v2808
  %v2810 = vpop.f32.mrf.mxu0
  %v2811 = vadd.f32 %v2762, %v2810
  %2812 = vmatmul.bf16.gmra.mxu0 %v1023
  %v2813 = vpop.f32.mrf.mxu0
  %v2814 = vadd.f32 %v2765, %v2813
  %v2815 = vpop.f32.mrf.mxu0
  %v2816 = vadd.f32 %v2767, %v2815
  %2817 = vdwg.mxu0
  %2818 = vmatpush.bf16.msra.mxu0 %v1881
  %2819 = vmatpush.bf16.msra.mxu0 %v1880
  %2820 = vmatpush.bf16.msra.mxu0 %v1879
  %2821 = vmatpush.bf16.msra.mxu0 %v1878
  %2822 = vmatpush.bf16.msra.mxu0 %v1877
  %2823 = vmatpush.bf16.msra.mxu0 %v1876
  %2824 = vmatpush.bf16.msra.mxu0 %v1875
  %2825 = vmatpush.bf16.msra.mxu0 %v1874
  %2826 = vmatmul.bf16.gmra.mxu0 %v898
  %v2827 = vpop.f32.mrf.mxu0
  %v2828 = vadd.f32 %v2779, %v2827
  %v2829 = vpop.f32.mrf.mxu0
  %v2830 = vadd.f32 %v2781, %v2829
  %2831 = vmatmul.bf16.gmra.mxu0 %v916
  %v2832 = vpop.f32.mrf.mxu0
  %v2833 = vadd.f32 %v2784, %v2832
  %v2834 = vpop.f32.mrf.mxu0
  %v2835 = vadd.f32 %v2786, %v2834
  %2836 = vmatmul.bf16.gmra.mxu0 %v934
  %v2837 = vpop.f32.mrf.mxu0
  %v2838 = vadd.f32 %v2789, %v2837
  %v2839 = vpop.f32.mrf.mxu0
  %v2840 = vadd.f32 %v2791, %v2839
  %2841 = vmatmul.bf16.gmra.mxu0 %v952
  %v2842 = vpop.f32.mrf.mxu0
  %v2843 = vadd.f32 %v2794, %v2842
  %v2844 = vpop.f32.mrf.mxu0
  %v2845 = vadd.f32 %v2796, %v2844
  %2846 = vmatmul.bf16.gmra.mxu0 %v970
  %v2847 = vpop.f32.mrf.mxu0
  %v2848 = vadd.f32 %v2799, %v2847
  %v2849 = vpop.f32.mrf.mxu0
  %v2850 = vadd.f32 %v2801, %v2849
  %2851 = vmatmul.bf16.gmra.mxu0 %v988
  %v2852 = vpop.f32.mrf.mxu0
  %v2853 = vadd.f32 %v2804, %v2852
  %v2854 = vpop.f32.mrf.mxu0
  %v2855 = vadd.f32 %v2806, %v2854
  %2856 = vmatmul.bf16.gmra.mxu0 %v1006
  %v2857 = vpop.f32.mrf.mxu0
  %v2858 = vadd.f32 %v2809, %v2857
  %v2859 = vpop.f32.mrf.mxu0
  %v2860 = vadd.f32 %v2811, %v2859
  %2861 = vmatmul.bf16.gmra.mxu0 %v1024
  %v2862 = vpop.f32.mrf.mxu0
  %v2863 = vadd.f32 %v2814, %v2862
  %v2864 = vpop.f32.mrf.mxu0
  %v2865 = vadd.f32 %v2816, %v2864
  %2866 = vdwg.mxu0
  %2867 = vmatpush.bf16.msra.mxu0 %v1889
  %2868 = vmatpush.bf16.msra.mxu0 %v1888
  %2869 = vmatpush.bf16.msra.mxu0 %v1887
  %2870 = vmatpush.bf16.msra.mxu0 %v1886
  %2871 = vmatpush.bf16.msra.mxu0 %v1885
  %2872 = vmatpush.bf16.msra.mxu0 %v1884
  %2873 = vmatpush.bf16.msra.mxu0 %v1883
  %2874 = vmatpush.bf16.msra.mxu0 %v1882
  %2875 = vmatmul.bf16.gmra.mxu0 %v899
  %v2876 = vpop.f32.mrf.mxu0
  %v2877 = vadd.f32 %v2828, %v2876
  %v2878 = vpop.f32.mrf.mxu0
  %v2879 = vadd.f32 %v2830, %v2878
  %2880 = vmatmul.bf16.gmra.mxu0 %v917
  %v2881 = vpop.f32.mrf.mxu0
  %v2882 = vadd.f32 %v2833, %v2881
  %v2883 = vpop.f32.mrf.mxu0
  %v2884 = vadd.f32 %v2835, %v2883
  %2885 = vmatmul.bf16.gmra.mxu0 %v935
  %v2886 = vpop.f32.mrf.mxu0
  %v2887 = vadd.f32 %v2838, %v2886
  %v2888 = vpop.f32.mrf.mxu0
  %v2889 = vadd.f32 %v2840, %v2888
  %2890 = vmatmul.bf16.gmra.mxu0 %v953
  %v2891 = vpop.f32.mrf.mxu0
  %v2892 = vadd.f32 %v2843, %v2891
  %v2893 = vpop.f32.mrf.mxu0
  %v2894 = vadd.f32 %v2845, %v2893
  %2895 = vmatmul.bf16.gmra.mxu0 %v971
  %v2896 = vpop.f32.mrf.mxu0
  %v2897 = vadd.f32 %v2848, %v2896
  %v2898 = vpop.f32.mrf.mxu0
  %v2899 = vadd.f32 %v2850, %v2898
  %2900 = vmatmul.bf16.gmra.mxu0 %v989
  %v2901 = vpop.f32.mrf.mxu0
  %v2902 = vadd.f32 %v2853, %v2901
  %v2903 = vpop.f32.mrf.mxu0
  %v2904 = vadd.f32 %v2855, %v2903
  %2905 = vmatmul.bf16.gmra.mxu0 %v1007
  %v2906 = vpop.f32.mrf.mxu0
  %v2907 = vadd.f32 %v2858, %v2906
  %v2908 = vpop.f32.mrf.mxu0
  %v2909 = vadd.f32 %v2860, %v2908
  %2910 = vmatmul.bf16.gmra.mxu0 %v1025
  %v2911 = vpop.f32.mrf.mxu0
  %v2912 = vadd.f32 %v2863, %v2911
  %v2913 = vpop.f32.mrf.mxu0
  %v2914 = vadd.f32 %v2865, %v2913
  %2915 = vdwg.mxu0
  %2916 = vst [vmem:[%s3] sm:$0xff] %v2877
  %2917 = vst [vmem:[%s3 + $0x8] sm:$0xff] %v2879
  %2918 = vst [vmem:[%s3 + $0x10] sm:$0xff] %v2882
  %2919 = vst [vmem:[%s3 + $0x18] sm:$0xff] %v2884
  %2920 = vst [vmem:[%s3 + $0x20] sm:$0xff] %v2887
  %2921 = vst [vmem:[%s3 + $0x28] sm:$0xff] %v2889
  %2922 = vst [vmem:[%s3 + $0x30] sm:$0xff] %v2892
  %2923 = vst [vmem:[%s3 + $0x38] sm:$0xff] %v2894
  %2924 = vst [vmem:[%s3 + $0x40] sm:$0xff] %v2897
  %2925 = vst [vmem:[%s3 + $0x48] sm:$0xff] %v2899
  %2926 = vst [vmem:[%s3 + $0x50] sm:$0xff] %v2902
  %2927 = vst [vmem:[%s3 + $0x58] sm:$0xff] %v2904
  %2928 = vst [vmem:[%s3 + $0x60] sm:$0xff] %v2907
  %2929 = vst [vmem:[%s3 + $0x68] sm:$0xff] %v2909
  %2930 = vst [vmem:[%s3 + $0x70] sm:$0xff] %v2912
  %2931 = vst [vmem:[%s3 + $0x78] sm:$0xff] %v2914
  // Predicated region
  $region14: #{net_forward.19} parent=0 // pred_check
    _
  $region15: #{net_forward.19} parent=0 // pred_check_branch
    %2933 = sbr.rel (0) target = $region17
  $region16: #{net_forward.19} parent=0 // pred_region
    _
  $region17: #{net_forward.19} parent=0 // pred_fallthru
    _
  // Predicated region
  $region18: #{net_forward.19} parent=0 // pred_check
    _
  $region19: #{net_forward.19} parent=0 // pred_check_branch
    %2935 = sbr.rel (0) target = $region21
  $region20: #{net_forward.19} parent=0 // pred_region
    _
  $region21: #{net_forward.19} parent=0 // pred_fallthru
    _

// kernel: net_forward.20
$region0: #{net_forward.20}
  #allocation0 [shape = 'u32[]', space=smem, size = 0x4, offset = 0x4, fixed_abs, tag = 'smem constant byte address 0x4 - core index']
  #allocation1 [shape = 'u32[72,128]{1,0:T(1,128)}', space=vmem, size = 0x9000, scoped, tag = 'internal scratch']
  %s0 = inlined_call_operand.vmem [shape: f32[4,8,128], index: 0, kind: input, shape index: {}]
  %s1 = inlined_call_operand.vmem [shape: f32[8,128], index: 1, kind: output, shape index: {}]
  %s2 = sld [smem:[#allocation0]]
  $region14: #{net_forward.20} parent=0
    _
  %s4 = ssub.s32 1, %s2
  %s5 = scalar_select 0, %s4, %s2
  // Predicated region
  $region2: #{net_forward.20} parent=0 // pred_check
    _
  $region3: #{net_forward.20} parent=0 // pred_check_branch
    %7 = sbr.rel (0) target = $region5
  $region4: #{net_forward.20} parent=0 // pred_region
    _
  $region5: #{net_forward.20} parent=0 // pred_fallthru
    _
  %v8 = vld [vmem:[%s0] sm:$0xff]
  %s9 = scalar_lea.vmem %s0, 8
  %v10 = vld [vmem:[%s9] sm:$0xff]
  %v11 = vmax.f32 %v8, %v10
  %s12 = scalar_lea.vmem %s0, 16
  %v13 = vld [vmem:[%s12] sm:$0xff]
  %s14 = scalar_lea.vmem %s0, 24
  %v15 = vld [vmem:[%s14] sm:$0xff]
  %v16 = vmax.f32 %v13, %v15
  %v17 = vmax.f32 %v11, %v16
  %v18 = vmax.f32 %v17, 0.0
  %19 = vst [vmem:[%s1] sm:$0xff] %v18
  // Predicated region
  $region6: #{net_forward.20} parent=0 // pred_check
    _
  $region7: #{net_forward.20} parent=0 // pred_check_branch
    %21 = sbr.rel (0) target = $region9
  $region8: #{net_forward.20} parent=0 // pred_region
    _
  $region9: #{net_forward.20} parent=0 // pred_fallthru
    _
  // Predicated region
  $region10: #{net_forward.20} parent=0 // pred_check
    _
  $region11: #{net_forward.20} parent=0 // pred_check_branch
    %23 = sbr.rel (0) target = $region13
  $region12: #{net_forward.20} parent=0 // pred_region
    _
  $region13: #{net_forward.20} parent=0 // pred_fallthru
    _

// kernel: net_forward.21
$region0: #{net_forward.21}
  #allocation0 [shape = 'u32[]', space=smem, size = 0x4, offset = 0x4, fixed_abs, tag = 'smem constant byte address 0x4 - core index']
  #allocation1 [shape = 'u32[72,128]{1,0:T(1,128)}', space=vmem, size = 0x9000, scoped, tag = 'internal scratch']
  %s0 = inlined_call_operand.vmem [shape: bf16[32,256], index: 0, kind: input, shape index: {}]
  %s1 = inlined_call_operand.vmem [shape: bf16[256,128], index: 1, kind: input, shape index: {}]
  %s2 = inlined_call_operand.vmem [shape: f32[1,128], index: 2, kind: input, shape index: {}]
  %s3 = inlined_call_operand.vmem [shape: f32[32,128], index: 3, kind: output, shape index: {}]
  %s4 = sld [smem:[#allocation0]]
  $region22: #{net_forward.21} parent=0
    _
  %s6 = ssub.s32 1, %s4
  %s7 = scalar_select 0, %s6, %s4
  // Predicated region
  $region2: #{net_forward.21} parent=0 // pred_check
    _
  $region3: #{net_forward.21} parent=0 // pred_check_branch
    %9 = sbr.rel (0) target = $region5
  $region4: #{net_forward.21} parent=0 // pred_region
    _
  $region5: #{net_forward.21} parent=0 // pred_fallthru
    _
  // Predicated region
  $region6: #{net_forward.21} parent=0 // pred_check
    _
  $region7: #{net_forward.21} parent=0 // pred_check_branch
    %11 = sbr.rel (0) target = $region9
  $region8: #{net_forward.21} parent=0 // pred_region
    _
  $region9: #{net_forward.21} parent=0 // pred_fallthru
    _
  // Predicated region
  $region10: #{net_forward.21} parent=0 // pred_check
    _
  $region11: #{net_forward.21} parent=0 // pred_check_branch
    %13 = sbr.rel (0) target = $region13
  $region12: #{net_forward.21} parent=0 // pred_region
    _
  $region13: #{net_forward.21} parent=0 // pred_fallthru
    _
  %v14 = vld [vmem:[%s0] sm:$0xff]
  %v15 = vld [vmem:[%s0 + $0x8] sm:$0xff]
  %v16 = vld [vmem:[%s0 + $0x10] sm:$0xff]
  %v17 = vld [vmem:[%s0 + $0x18] sm:$0xff]
  %v18 = vld [vmem:[%s1] sm:$0xf]
  %v19 = vld [vmem:[%s1 + $0x4] sm:$0xf]
  %v20 = vld [vmem:[%s1 + $0x8] sm:$0xf]
  %v21 = vld [vmem:[%s1 + $0xc] sm:$0xf]
  %v22 = vld [vmem:[%s1 + $0x10] sm:$0xf]
  %v23 = vld [vmem:[%s1 + $0x14] sm:$0xf]
  %v24 = vld [vmem:[%s1 + $0x18] sm:$0xf]
  %v25 = vld [vmem:[%s1 + $0x1c] sm:$0xf]
  %v26 = vld [vmem:[%s1 + $0x20] sm:$0xf]
  %v27 = vld [vmem:[%s1 + $0x24] sm:$0xf]
  %v28 = vld [vmem:[%s1 + $0x28] sm:$0xf]
  %v29 = vld [vmem:[%s1 + $0x2c] sm:$0xf]
  %v30 = vld [vmem:[%s1 + $0x30] sm:$0xf]
  %v31 = vld [vmem:[%s1 + $0x34] sm:$0xf]
  %v32 = vld [vmem:[%s1 + $0x38] sm:$0xf]
  %v33 = vld [vmem:[%s1 + $0x3c] sm:$0xf]
  %v34 = vld [vmem:[%s1 + $0x40] sm:$0xf]
  %v35 = vld [vmem:[%s1 + $0x44] sm:$0xf]
  %v36 = vld [vmem:[%s1 + $0x48] sm:$0xf]
  %v37 = vld [vmem:[%s1 + $0x4c] sm:$0xf]
  %v38 = vld [vmem:[%s1 + $0x50] sm:$0xf]
  %v39 = vld [vmem:[%s1 + $0x54] sm:$0xf]
  %v40 = vld [vmem:[%s1 + $0x58] sm:$0xf]
  %v41 = vld [vmem:[%s1 + $0x5c] sm:$0xf]
  %v42 = vld [vmem:[%s1 + $0x60] sm:$0xf]
  %v43 = vld [vmem:[%s1 + $0x64] sm:$0xf]
  %v44 = vld [vmem:[%s1 + $0x68] sm:$0xf]
  %v45 = vld [vmem:[%s1 + $0x6c] sm:$0xf]
  %v46 = vld [vmem:[%s1 + $0x70] sm:$0xf]
  %v47 = vld [vmem:[%s1 + $0x74] sm:$0xf]
  %v48 = vld [vmem:[%s1 + $0x78] sm:$0xf]
  %v49 = vld [vmem:[%s1 + $0x7c] sm:$0xf]
  %v50 = vld [vmem:[%s2] sm:$0x1]
  %v52 = vperm.slane %v50, 0
  %v58 = vunpack.c.l.b16 %v14
  %v59 = vunpack.c.h.b16 %v14
  %v60 = vunpack.c.l.b16 %v15
  %v61 = vunpack.c.h.b16 %v15
  %v62 = vunpack.c.l.b16 %v16
  %v63 = vunpack.c.h.b16 %v16
  %v64 = vunpack.c.l.b16 %v17
  %v65 = vunpack.c.h.b16 %v17
  %v66 = vpack.c.b16 %v60, %v58
  %v67 = vpack.c.b16 %v61, %v59
  %v68 = vpack.c.b16 %v64, %v62
  %v69 = vpack.c.b16 %v65, %v63
  %v106 = vunpack.c.l.b16 %v18
  %v107 = vunpack.c.l.b16 %v19
  %v108 = vunpack.c.l.b16 %v20
  %v109 = vunpack.c.l.b16 %v21
  %v110 = vunpack.c.l.b16 %v22
  %v111 = vunpack.c.l.b16 %v23
  %v112 = vunpack.c.l.b16 %v24
  %v113 = vunpack.c.l.b16 %v25
  %v114 = vunpack.c.l.b16 %v26
  %v115 = vunpack.c.l.b16 %v27
  %v116 = vunpack.c.l.b16 %v28
  %v117 = vunpack.c.l.b16 %v29
  %v118 = vunpack.c.l.b16 %v30
  %v119 = vunpack.c.l.b16 %v31
  %v120 = vunpack.c.l.b16 %v32
  %v121 = vunpack.c.l.b16 %v33
  %v122 = vunpack.c.l.b16 %v34
  %v123 = vunpack.c.l.b16 %v35
  %v124 = vunpack.c.l.b16 %v36
  %v125 = vunpack.c.l.b16 %v37
  %v126 = vunpack.c.l.b16 %v38
  %v127 = vunpack.c.l.b16 %v39
  %v128 = vunpack.c.l.b16 %v40
  %v129 = vunpack.c.l.b16 %v41
  %v130 = vunpack.c.l.b16 %v42
  %v131 = vunpack.c.l.b16 %v43
  %v132 = vunpack.c.l.b16 %v44
  %v133 = vunpack.c.l.b16 %v45
  %v134 = vunpack.c.l.b16 %v46
  %v135 = vunpack.c.l.b16 %v47
  %v136 = vunpack.c.l.b16 %v48
  %v137 = vunpack.c.l.b16 %v49
  %v138 = vpack.c.b16 %v107, %v106
  %v139 = vpack.c.b16 %v109, %v108
  %v140 = vpack.c.b16 %v111, %v110
  %v141 = vpack.c.b16 %v113, %v112
  %v142 = vpack.c.b16 %v115, %v114
  %v143 = vpack.c.b16 %v117, %v116
  %v144 = vpack.c.b16 %v119, %v118
  %v145 = vpack.c.b16 %v121, %v120
  %v146 = vpack.c.b16 %v123, %v122
  %v147 = vpack.c.b16 %v125, %v124
  %v148 = vpack.c.b16 %v127, %v126
  %v149 = vpack.c.b16 %v129, %v128
  %v150 = vpack.c.b16 %v131, %v130
  %v151 = vpack.c.b16 %v133, %v132
  %v152 = vpack.c.b16 %v135, %v134
  %v153 = vpack.c.b16 %v137, %v136
  %170 = vmatpush.bf16.msra.mxu0 %v145
  %171 = vmatpush.bf16.msra.mxu0 %v144
  %172 = vmatpush.bf16.msra.mxu0 %v143
  %173 = vmatpush.bf16.msra.mxu0 %v142
  %174 = vmatpush.bf16.msra.mxu0 %v141
  %175 = vmatpush.bf16.msra.mxu0 %v140
  %176 = vmatpush.bf16.msra.mxu0 %v139
  %177 = vmatpush.bf16.msra.mxu0 %v138
  %178 = vmatmul.bf16.gmra.mxu0 %v66
  %v179 = vpop.f32.mrf.mxu0
  %v180 = vadd.f32 %v52, %v179
  %v181 = vpop.f32.mrf.mxu0
  %v182 = vadd.f32 %v52, %v181
  %183 = vmatmul.bf16.gmra.mxu0 %v68
  %v184 = vpop.f32.mrf.mxu0
  %v185 = vadd.f32 %v52, %v184
  %v186 = vpop.f32.mrf.mxu0
  %v187 = vadd.f32 %v52, %v186
  %188 = vdwg.mxu0
  %189 = vmatpush.bf16.msra.mxu0 %v153
  %190 = vmatpush.bf16.msra.mxu0 %v152
  %191 = vmatpush.bf16.msra.mxu0 %v151
  %192 = vmatpush.bf16.msra.mxu0 %v150
  %193 = vmatpush.bf16.msra.mxu0 %v149
  %194 = vmatpush.bf16.msra.mxu0 %v148
  %195 = vmatpush.bf16.msra.mxu0 %v147
  %196 = vmatpush.bf16.msra.mxu0 %v146
  %197 = vmatmul.bf16.gmra.mxu0 %v67
  %v198 = vpop.f32.mrf.mxu0
  %v199 = vadd.f32 %v180, %v198
  %v200 = vpop.f32.mrf.mxu0
  %v201 = vadd.f32 %v182, %v200
  %202 = vmatmul.bf16.gmra.mxu0 %v69
  %v203 = vpop.f32.mrf.mxu0
  %v204 = vadd.f32 %v185, %v203
  %v205 = vpop.f32.mrf.mxu0
  %v206 = vadd.f32 %v187, %v205
  %207 = vdwg.mxu0
  %208 = vst [vmem:[%s3] sm:$0xff] %v199
  %209 = vst [vmem:[%s3 + $0x8] sm:$0xff] %v201
  %210 = vst [vmem:[%s3 + $0x10] sm:$0xff] %v204
  %211 = vst [vmem:[%s3 + $0x18] sm:$0xff] %v206
  // Predicated region
  $region14: #{net_forward.21} parent=0 // pred_check
    _
  $region15: #{net_forward.21} parent=0 // pred_check_branch
    %213 = sbr.rel (0) target = $region17
  $region16: #{net_forward.21} parent=0 // pred_region
    _
  $region17: #{net_forward.21} parent=0 // pred_fallthru
    _
  // Predicated region
  $region18: #{net_forward.21} parent=0 // pred_check
    _
  $region19: #{net_forward.21} parent=0 // pred_check_branch
    %215 = sbr.rel (0) target = $region21
  $region20: #{net_forward.21} parent=0 // pred_region
    _
  $region21: #{net_forward.21} parent=0 // pred_fallthru
    _

// kernel: net_forward.22
$region0: #{net_forward.22}
  #allocation0 [shape = 'u32[]', space=smem, size = 0x4, offset = 0x4, fixed_abs, tag = 'smem constant byte address 0x4 - core index']
  #allocation1 [shape = 'u32[72,128]{1,0:T(1,128)}', space=vmem, size = 0x9000, scoped, tag = 'internal scratch']
  %s0 = inlined_call_operand.vmem [shape: bf16[32,512], index: 0, kind: input, shape index: {}]
  %s1 = inlined_call_operand.vmem [shape: bf16[512,128], index: 1, kind: input, shape index: {}]
  %s2 = inlined_call_operand.vmem [shape: f32[1,128], index: 2, kind: input, shape index: {}]
  %s3 = inlined_call_operand.vmem [shape: f32[32,128], index: 3, kind: output, shape index: {}]
  %s4 = sld [smem:[#allocation0]]
  $region22: #{net_forward.22} parent=0
    _
  %s6 = ssub.s32 1, %s4
  %s7 = scalar_select 0, %s6, %s4
  // Predicated region
  $region2: #{net_forward.22} parent=0 // pred_check
    _
  $region3: #{net_forward.22} parent=0 // pred_check_branch
    %9 = sbr.rel (0) target = $region5
  $region4: #{net_forward.22} parent=0 // pred_region
    _
  $region5: #{net_forward.22} parent=0 // pred_fallthru
    _
  // Predicated region
  $region6: #{net_forward.22} parent=0 // pred_check
    _
  $region7: #{net_forward.22} parent=0 // pred_check_branch
    %11 = sbr.rel (0) target = $region9
  $region8: #{net_forward.22} parent=0 // pred_region
    _
  $region9: #{net_forward.22} parent=0 // pred_fallthru
    _
  // Predicated region
  $region10: #{net_forward.22} parent=0 // pred_check
    _
  $region11: #{net_forward.22} parent=0 // pred_check_branch
    %13 = sbr.rel (0) target = $region13
  $region12: #{net_forward.22} parent=0 // pred_region
    _
  $region13: #{net_forward.22} parent=0 // pred_fallthru
    _
  %v14 = vld [vmem:[%s0] sm:$0xff]
  %v15 = vld [vmem:[%s0 + $0x8] sm:$0xff]
  %v16 = vld [vmem:[%s0 + $0x10] sm:$0xff]
  %v17 = vld [vmem:[%s0 + $0x18] sm:$0xff]
  %v18 = vld [vmem:[%s0 + $0x20] sm:$0xff]
  %v19 = vld [vmem:[%s0 + $0x28] sm:$0xff]
  %v20 = vld [vmem:[%s0 + $0x30] sm:$0xff]
  %v21 = vld [vmem:[%s0 + $0x38] sm:$0xff]
  %v22 = vld [vmem:[%s1] sm:$0xf]
  %v23 = vld [vmem:[%s1 + $0x4] sm:$0xf]
  %v24 = vld [vmem:[%s1 + $0x8] sm:$0xf]
  %v25 = vld [vmem:[%s1 + $0xc] sm:$0xf]
  %v26 = vld [vmem:[%s1 + $0x10] sm:$0xf]
  %v27 = vld [vmem:[%s1 + $0x14] sm:$0xf]
  %v28 = vld [vmem:[%s1 + $0x18] sm:$0xf]
  %v29 = vld [vmem:[%s1 + $0x1c] sm:$0xf]
  %v30 = vld [vmem:[%s1 + $0x20] sm:$0xf]
  %v31 = vld [vmem:[%s1 + $0x24] sm:$0xf]
  %v32 = vld [vmem:[%s1 + $0x28] sm:$0xf]
  %v33 = vld [vmem:[%s1 + $0x2c] sm:$0xf]
  %v34 = vld [vmem:[%s1 + $0x30] sm:$0xf]
  %v35 = vld [vmem:[%s1 + $0x34] sm:$0xf]
  %v36 = vld [vmem:[%s1 + $0x38] sm:$0xf]
  %v37 = vld [vmem:[%s1 + $0x3c] sm:$0xf]
  %v38 = vld [vmem:[%s1 + $0x40] sm:$0xf]
  %v39 = vld [vmem:[%s1 + $0x44] sm:$0xf]
  %v40 = vld [vmem:[%s1 + $0x48] sm:$0xf]
  %v41 = vld [vmem:[%s1 + $0x4c] sm:$0xf]
  %v42 = vld [vmem:[%s1 + $0x50] sm:$0xf]
  %v43 = vld [vmem:[%s1 + $0x54] sm:$0xf]
  %v44 = vld [vmem:[%s1 + $0x58] sm:$0xf]
  %v45 = vld [vmem:[%s1 + $0x5c] sm:$0xf]
  %v46 = vld [vmem:[%s1 + $0x60] sm:$0xf]
  %v47 = vld [vmem:[%s1 + $0x64] sm:$0xf]
  %v48 = vld [vmem:[%s1 + $0x68] sm:$0xf]
  %v49 = vld [vmem:[%s1 + $0x6c] sm:$0xf]
  %v50 = vld [vmem:[%s1 + $0x70] sm:$0xf]
  %v51 = vld [vmem:[%s1 + $0x74] sm:$0xf]
  %v52 = vld [vmem:[%s1 + $0x78] sm:$0xf]
  %v53 = vld [vmem:[%s1 + $0x7c] sm:$0xf]
  %v54 = vld [vmem:[%s1 + $0x80] sm:$0xf]
  %v55 = vld [vmem:[%s1 + $0x84] sm:$0xf]
  %v56 = vld [vmem:[%s1 + $0x88] sm:$0xf]
  %v57 = vld [vmem:[%s1 + $0x8c] sm:$0xf]
  %v58 = vld [vmem:[%s1 + $0x90] sm:$0xf]
  %v59 = vld [vmem:[%s1 + $0x94] sm:$0xf]
  %v60 = vld [vmem:[%s1 + $0x98] sm:$0xf]
  %v61 = vld [vmem:[%s1 + $0x9c] sm:$0xf]
  %v62 = vld [vmem:[%s1 + $0xa0] sm:$0xf]
  %v63 = vld [vmem:[%s1 + $0xa4] sm:$0xf]
  %v64 = vld [vmem:[%s1 + $0xa8] sm:$0xf]
  %v65 = vld [vmem:[%s1 + $0xac] sm:$0xf]
  %v66 = vld [vmem:[%s1 + $0xb0] sm:$0xf]
  %v67 = vld [vmem:[%s1 + $0xb4] sm:$0xf]
  %v68 = vld [vmem:[%s1 + $0xb8] sm:$0xf]
  %v69 = vld [vmem:[%s1 + $0xbc] sm:$0xf]
  %v70 = vld [vmem:[%s1 + $0xc0] sm:$0xf]
  %v71 = vld [vmem:[%s1 + $0xc4] sm:$0xf]
  %v72 = vld [vmem:[%s1 + $0xc8] sm:$0xf]
  %v73 = vld [vmem:[%s1 + $0xcc] sm:$0xf]
  %v74 = vld [vmem:[%s1 + $0xd0] sm:$0xf]
  %v75 = vld [vmem:[%s1 + $0xd4] sm:$0xf]
  %v76 = vld [vmem:[%s1 + $0xd8] sm:$0xf]
  %v77 = vld [vmem:[%s1 + $0xdc] sm:$0xf]
  %v78 = vld [vmem:[%s1 + $0xe0] sm:$0xf]
  %v79 = vld [vmem:[%s1 + $0xe4] sm:$0xf]
  %v80 = vld [vmem:[%s1 + $0xe8] sm:$0xf]
  %v81 = vld [vmem:[%s1 + $0xec] sm:$0xf]
  %v82 = vld [vmem:[%s1 + $0xf0] sm:$0xf]
  %v83 = vld [vmem:[%s1 + $0xf4] sm:$0xf]
  %v84 = vld [vmem:[%s1 + $0xf8] sm:$0xf]
  %v85 = vld [vmem:[%s1 + $0xfc] sm:$0xf]
  %v86 = vld [vmem:[%s2] sm:$0x1]
  %v88 = vperm.slane %v86, 0
  %v98 = vunpack.c.l.b16 %v14
  %v99 = vunpack.c.h.b16 %v14
  %v100 = vunpack.c.l.b16 %v15
  %v101 = vunpack.c.h.b16 %v15
  %v102 = vunpack.c.l.b16 %v16
  %v103 = vunpack.c.h.b16 %v16
  %v104 = vunpack.c.l.b16 %v17
  %v105 = vunpack.c.h.b16 %v17
  %v106 = vunpack.c.l.b16 %v18
  %v107 = vunpack.c.h.b16 %v18
  %v108 = vunpack.c.l.b16 %v19
  %v109 = vunpack.c.h.b16 %v19
  %v110 = vunpack.c.l.b16 %v20
  %v111 = vunpack.c.h.b16 %v20
  %v112 = vunpack.c.l.b16 %v21
  %v113 = vunpack.c.h.b16 %v21
  %v114 = vpack.c.b16 %v102, %v98
  %v115 = vpack.c.b16 %v103, %v99
  %v116 = vpack.c.b16 %v104, %v100
  %v117 = vpack.c.b16 %v105, %v101
  %v118 = vpack.c.b16 %v110, %v106
  %v119 = vpack.c.b16 %v111, %v107
  %v120 = vpack.c.b16 %v112, %v108
  %v121 = vpack.c.b16 %v113, %v109
  %v194 = vunpack.c.l.b16 %v22
  %v195 = vunpack.c.l.b16 %v23
  %v196 = vunpack.c.l.b16 %v24
  %v197 = vunpack.c.l.b16 %v25
  %v198 = vunpack.c.l.b16 %v26
  %v199 = vunpack.c.l.b16 %v27
  %v200 = vunpack.c.l.b16 %v28
  %v201 = vunpack.c.l.b16 %v29
  %v202 = vunpack.c.l.b16 %v30
  %v203 = vunpack.c.l.b16 %v31
  %v204 = vunpack.c.l.b16 %v32
  %v205 = vunpack.c.l.b16 %v33
  %v206 = vunpack.c.l.b16 %v34
  %v207 = vunpack.c.l.b16 %v35
  %v208 = vunpack.c.l.b16 %v36
  %v209 = vunpack.c.l.b16 %v37
  %v210 = vunpack.c.l.b16 %v38
  %v211 = vunpack.c.l.b16 %v39
  %v212 = vunpack.c.l.b16 %v40
  %v213 = vunpack.c.l.b16 %v41
  %v214 = vunpack.c.l.b16 %v42
  %v215 = vunpack.c.l.b16 %v43
  %v216 = vunpack.c.l.b16 %v44
  %v217 = vunpack.c.l.b16 %v45
  %v218 = vunpack.c.l.b16 %v46
  %v219 = vunpack.c.l.b16 %v47
  %v220 = vunpack.c.l.b16 %v48
  %v221 = vunpack.c.l.b16 %v49
  %v222 = vunpack.c.l.b16 %v50
  %v223 = vunpack.c.l.b16 %v51
  %v224 = vunpack.c.l.b16 %v52
  %v225 = vunpack.c.l.b16 %v53
  %v226 = vunpack.c.l.b16 %v54
  %v227 = vunpack.c.l.b16 %v55
  %v228 = vunpack.c.l.b16 %v56
  %v229 = vunpack.c.l.b16 %v57
  %v230 = vunpack.c.l.b16 %v58
  %v231 = vunpack.c.l.b16 %v59
  %v232 = vunpack.c.l.b16 %v60
  %v233 = vunpack.c.l.b16 %v61
  %v234 = vunpack.c.l.b16 %v62
  %v235 = vunpack.c.l.b16 %v63
  %v236 = vunpack.c.l.b16 %v64
  %v237 = vunpack.c.l.b16 %v65
  %v238 = vunpack.c.l.b16 %v66
  %v239 = vunpack.c.l.b16 %v67
  %v240 = vunpack.c.l.b16 %v68
  %v241 = vunpack.c.l.b16 %v69
  %v242 = vunpack.c.l.b16 %v70
  %v243 = vunpack.c.l.b16 %v71
  %v244 = vunpack.c.l.b16 %v72
  %v245 = vunpack.c.l.b16 %v73
  %v246 = vunpack.c.l.b16 %v74
  %v247 = vunpack.c.l.b16 %v75
  %v248 = vunpack.c.l.b16 %v76
  %v249 = vunpack.c.l.b16 %v77
  %v250 = vunpack.c.l.b16 %v78
  %v251 = vunpack.c.l.b16 %v79
  %v252 = vunpack.c.l.b16 %v80
  %v253 = vunpack.c.l.b16 %v81
  %v254 = vunpack.c.l.b16 %v82
  %v255 = vunpack.c.l.b16 %v83
  %v256 = vunpack.c.l.b16 %v84
  %v257 = vunpack.c.l.b16 %v85
  %v258 = vpack.c.b16 %v195, %v194
  %v259 = vpack.c.b16 %v197, %v196
  %v260 = vpack.c.b16 %v199, %v198
  %v261 = vpack.c.b16 %v201, %v200
  %v262 = vpack.c.b16 %v203, %v202
  %v263 = vpack.c.b16 %v205, %v204
  %v264 = vpack.c.b16 %v207, %v206
  %v265 = vpack.c.b16 %v209, %v208
  %v266 = vpack.c.b16 %v211, %v210
  %v267 = vpack.c.b16 %v213, %v212
  %v268 = vpack.c.b16 %v215, %v214
  %v269 = vpack.c.b16 %v217, %v216
  %v270 = vpack.c.b16 %v219, %v218
  %v271 = vpack.c.b16 %v221, %v220
  %v272 = vpack.c.b16 %v223, %v222
  %v273 = vpack.c.b16 %v225, %v224
  %v274 = vpack.c.b16 %v227, %v226
  %v275 = vpack.c.b16 %v229, %v228
  %v276 = vpack.c.b16 %v231, %v230
  %v277 = vpack.c.b16 %v233, %v232
  %v278 = vpack.c.b16 %v235, %v234
  %v279 = vpack.c.b16 %v237, %v236
  %v280 = vpack.c.b16 %v239, %v238
  %v281 = vpack.c.b16 %v241, %v240
  %v282 = vpack.c.b16 %v243, %v242
  %v283 = vpack.c.b16 %v245, %v244
  %v284 = vpack.c.b16 %v247, %v246
  %v285 = vpack.c.b16 %v249, %v248
  %v286 = vpack.c.b16 %v251, %v250
  %v287 = vpack.c.b16 %v253, %v252
  %v288 = vpack.c.b16 %v255, %v254
  %v289 = vpack.c.b16 %v257, %v256
  %322 = vmatpush.bf16.msra.mxu0 %v265
  %323 = vmatpush.bf16.msra.mxu0 %v264
  %324 = vmatpush.bf16.msra.mxu0 %v263
  %325 = vmatpush.bf16.msra.mxu0 %v262
  %326 = vmatpush.bf16.msra.mxu0 %v261
  %327 = vmatpush.bf16.msra.mxu0 %v260
  %328 = vmatpush.bf16.msra.mxu0 %v259
  %329 = vmatpush.bf16.msra.mxu0 %v258
  %330 = vmatmul.bf16.gmra.mxu0 %v114
  %v331 = vpop.f32.mrf.mxu0
  %v332 = vadd.f32 %v88, %v331
  %v333 = vpop.f32.mrf.mxu0
  %v334 = vadd.f32 %v88, %v333
  %335 = vmatmul.bf16.gmra.mxu0 %v118
  %v336 = vpop.f32.mrf.mxu0
  %v337 = vadd.f32 %v88, %v336
  %v338 = vpop.f32.mrf.mxu0
  %v339 = vadd.f32 %v88, %v338
  %340 = vdwg.mxu0
  %341 = vmatpush.bf16.msra.mxu0 %v273
  %342 = vmatpush.bf16.msra.mxu0 %v272
  %343 = vmatpush.bf16.msra.mxu0 %v271
  %344 = vmatpush.bf16.msra.mxu0 %v270
  %345 = vmatpush.bf16.msra.mxu0 %v269
  %346 = vmatpush.bf16.msra.mxu0 %v268
  %347 = vmatpush.bf16.msra.mxu0 %v267
  %348 = vmatpush.bf16.msra.mxu0 %v266
  %349 = vmatmul.bf16.gmra.mxu0 %v115
  %v350 = vpop.f32.mrf.mxu0
  %v351 = vadd.f32 %v332, %v350
  %v352 = vpop.f32.mrf.mxu0
  %v353 = vadd.f32 %v334, %v352
  %354 = vmatmul.bf16.gmra.mxu0 %v119
  %v355 = vpop.f32.mrf.mxu0
  %v356 = vadd.f32 %v337, %v355
  %v357 = vpop.f32.mrf.mxu0
  %v358 = vadd.f32 %v339, %v357
  %359 = vdwg.mxu0
  %360 = vmatpush.bf16.msra.mxu0 %v281
  %361 = vmatpush.bf16.msra.mxu0 %v280
  %362 = vmatpush.bf16.msra.mxu0 %v279
  %363 = vmatpush.bf16.msra.mxu0 %v278
  %364 = vmatpush.bf16.msra.mxu0 %v277
  %365 = vmatpush.bf16.msra.mxu0 %v276
  %366 = vmatpush.bf16.msra.mxu0 %v275
  %367 = vmatpush.bf16.msra.mxu0 %v274
  %368 = vmatmul.bf16.gmra.mxu0 %v116
  %v369 = vpop.f32.mrf.mxu0
  %v370 = vadd.f32 %v351, %v369
  %v371 = vpop.f32.mrf.mxu0
  %v372 = vadd.f32 %v353, %v371
  %373 = vmatmul.bf16.gmra.mxu0 %v120
  %v374 = vpop.f32.mrf.mxu0
  %v375 = vadd.f32 %v356, %v374
  %v376 = vpop.f32.mrf.mxu0
  %v377 = vadd.f32 %v358, %v376
  %378 = vdwg.mxu0
  %379 = vmatpush.bf16.msra.mxu0 %v289
  %380 = vmatpush.bf16.msra.mxu0 %v288
  %381 = vmatpush.bf16.msra.mxu0 %v287
  %382 = vmatpush.bf16.msra.mxu0 %v286
  %383 = vmatpush.bf16.msra.mxu0 %v285
  %384 = vmatpush.bf16.msra.mxu0 %v284
  %385 = vmatpush.bf16.msra.mxu0 %v283
  %386 = vmatpush.bf16.msra.mxu0 %v282
  %387 = vmatmul.bf16.gmra.mxu0 %v117
  %v388 = vpop.f32.mrf.mxu0
  %v389 = vadd.f32 %v370, %v388
  %v390 = vpop.f32.mrf.mxu0
  %v391 = vadd.f32 %v372, %v390
  %392 = vmatmul.bf16.gmra.mxu0 %v121
  %v393 = vpop.f32.mrf.mxu0
  %v394 = vadd.f32 %v375, %v393
  %v395 = vpop.f32.mrf.mxu0
  %v396 = vadd.f32 %v377, %v395
  %397 = vdwg.mxu0
  %398 = vst [vmem:[%s3] sm:$0xff] %v389
  %399 = vst [vmem:[%s3 + $0x8] sm:$0xff] %v391
  %400 = vst [vmem:[%s3 + $0x10] sm:$0xff] %v394
  %401 = vst [vmem:[%s3 + $0x18] sm:$0xff] %v396
  // Predicated region
  $region14: #{net_forward.22} parent=0 // pred_check
    _
  $region15: #{net_forward.22} parent=0 // pred_check_branch
    %403 = sbr.rel (0) target = $region17
  $region16: #{net_forward.22} parent=0 // pred_region
    _
  $region17: #{net_forward.22} parent=0 // pred_fallthru
    _
  // Predicated region
  $region18: #{net_forward.22} parent=0 // pred_check
    _
  $region19: #{net_forward.22} parent=0 // pred_check_branch
    %405 = sbr.rel (0) target = $region21
  $region20: #{net_forward.22} parent=0 // pred_region
    _
  $region21: #{net_forward.22} parent=0 // pred_fallthru
    _

// kernel: net_forward.25
$region0: #{net_forward.25}
  #allocation0 [shape = 'u32[]', space=smem, size = 0x4, offset = 0x4, fixed_abs, tag = 'smem constant byte address 0x4 - core index']
  #allocation1 [shape = 'u32[72,128]{1,0:T(1,128)}', space=vmem, size = 0x9000, scoped, tag = 'internal scratch']
  %s0 = inlined_call_operand.vmem [shape: bf16[16,1408], index: 0, kind: input, shape index: {}]
  %s1 = inlined_call_operand.vmem [shape: bf16[1408,128], index: 1, kind: input, shape index: {}]
  %s2 = inlined_call_operand.vmem [shape: f32[1,128], index: 2, kind: input, shape index: {}]
  %s3 = inlined_call_operand.vmem [shape: f32[16,128], index: 3, kind: output, shape index: {}]
  %s4 = sld [smem:[#allocation0]]
  $region22: #{net_forward.25} parent=0
    _
  %s6 = ssub.s32 1, %s4
  %s7 = scalar_select 0, %s6, %s4
  // Predicated region
  $region2: #{net_forward.25} parent=0 // pred_check
    _
  $region3: #{net_forward.25} parent=0 // pred_check_branch
    %9 = sbr.rel (0) target = $region5
  $region4: #{net_forward.25} parent=0 // pred_region
    _
  $region5: #{net_forward.25} parent=0 // pred_fallthru
    _
  // Predicated region
  $region6: #{net_forward.25} parent=0 // pred_check
    _
  $region7: #{net_forward.25} parent=0 // pred_check_branch
    %11 = sbr.rel (0) target = $region9
  $region8: #{net_forward.25} parent=0 // pred_region
    _
  $region9: #{net_forward.25} parent=0 // pred_fallthru
    _
  // Predicated region
  $region10: #{net_forward.25} parent=0 // pred_check
    _
  $region11: #{net_forward.25} parent=0 // pred_check_branch
    %13 = sbr.rel (0) target = $region13
  $region12: #{net_forward.25} parent=0 // pred_region
    _
  $region13: #{net_forward.25} parent=0 // pred_fallthru
    _
  %v14 = vld [vmem:[%s0] sm:$0xff]
  %v15 = vld [vmem:[%s0 + $0x8] sm:$0xff]
  %v16 = vld [vmem:[%s0 + $0x10] sm:$0xff]
  %v17 = vld [vmem:[%s0 + $0x18] sm:$0xff]
  %v18 = vld [vmem:[%s0 + $0x20] sm:$0xff]
  %v19 = vld [vmem:[%s0 + $0x28] sm:$0xf]
  %v20 = vld [vmem:[%s0 + $0x2c] sm:$0xff]
  %v21 = vld [vmem:[%s0 + $0x34] sm:$0xff]
  %v22 = vld [vmem:[%s0 + $0x3c] sm:$0xff]
  %v23 = vld [vmem:[%s0 + $0x44] sm:$0xff]
  %v24 = vld [vmem:[%s0 + $0x4c] sm:$0xff]
  %v25 = vld [vmem:[%s0 + $0x54] sm:$0xf]
  %v26 = vld [vmem:[%s1] sm:$0xf]
  %v27 = vld [vmem:[%s1 + $0x4] sm:$0xf]
  %v28 = vld [vmem:[%s1 + $0x8] sm:$0xf]
  %v29 = vld [vmem:[%s1 + $0xc] sm:$0xf]
  %v30 = vld [vmem:[%s1 + $0x10] sm:$0xf]
  %v31 = vld [vmem:[%s1 + $0x14] sm:$0xf]
  %v32 = vld [vmem:[%s1 + $0x18] sm:$0xf]
  %v33 = vld [vmem:[%s1 + $0x1c] sm:$0xf]
  %v34 = vld [vmem:[%s1 + $0x20] sm:$0xf]
  %v35 = vld [vmem:[%s1 + $0x24] sm:$0xf]
  %v36 = vld [vmem:[%s1 + $0x28] sm:$0xf]
  %v37 = vld [vmem:[%s1 + $0x2c] sm:$0xf]
  %v38 = vld [vmem:[%s1 + $0x30] sm:$0xf]
  %v39 = vld [vmem:[%s1 + $0x34] sm:$0xf]
  %v40 = vld [vmem:[%s1 + $0x38] sm:$0xf]
  %v41 = vld [vmem:[%s1 + $0x3c] sm:$0xf]
  %v42 = vld [vmem:[%s1 + $0x40] sm:$0xf]
  %v43 = vld [vmem:[%s1 + $0x44] sm:$0xf]
  %v44 = vld [vmem:[%s1 + $0x48] sm:$0xf]
  %v45 = vld [vmem:[%s1 + $0x4c] sm:$0xf]
  %v46 = vld [vmem:[%s1 + $0x50] sm:$0xf]
  %v47 = vld [vmem:[%s1 + $0x54] sm:$0xf]
  %v48 = vld [vmem:[%s1 + $0x58] sm:$0xf]
  %v49 = vld [vmem:[%s1 + $0x5c] sm:$0xf]
  %v50 = vld [vmem:[%s1 + $0x60] sm:$0xf]
  %v51 = vld [vmem:[%s1 + $0x64] sm:$0xf]
  %v52 = vld [vmem:[%s1 + $0x68] sm:$0xf]
  %v53 = vld [vmem:[%s1 + $0x6c] sm:$0xf]
  %v54 = vld [vmem:[%s1 + $0x70] sm:$0xf]
  %v55 = vld [vmem:[%s1 + $0x74] sm:$0xf]
  %v56 = vld [vmem:[%s1 + $0x78] sm:$0xf]
  %v57 = vld [vmem:[%s1 + $0x7c] sm:$0xf]
  %v58 = vld [vmem:[%s1 + $0x80] sm:$0xf]
  %v59 = vld [vmem:[%s1 + $0x84] sm:$0xf]
  %v60 = vld [vmem:[%s1 + $0x88] sm:$0xf]
  %v61 = vld [vmem:[%s1 + $0x8c] sm:$0xf]
  %v62 = vld [vmem:[%s1 + $0x90] sm:$0xf]
  %v63 = vld [vmem:[%s1 + $0x94] sm:$0xf]
  %v64 = vld [vmem:[%s1 + $0x98] sm:$0xf]
  %v65 = vld [vmem:[%s1 + $0x9c] sm:$0xf]
  %v66 = vld [vmem:[%s1 + $0xa0] sm:$0xf]
  %v67 = vld [vmem:[%s1 + $0xa4] sm:$0xf]
  %v68 = vld [vmem:[%s1 + $0xa8] sm:$0xf]
  %v69 = vld [vmem:[%s1 + $0xac] sm:$0xf]
  %v70 = vld [vmem:[%s1 + $0xb0] sm:$0xf]
  %v71 = vld [vmem:[%s1 + $0xb4] sm:$0xf]
  %v72 = vld [vmem:[%s1 + $0xb8] sm:$0xf]
  %v73 = vld [vmem:[%s1 + $0xbc] sm:$0xf]
  %v74 = vld [vmem:[%s1 + $0xc0] sm:$0xf]
  %v75 = vld [vmem:[%s1 + $0xc4] sm:$0xf]
  %v76 = vld [vmem:[%s1 + $0xc8] sm:$0xf]
  %v77 = vld [vmem:[%s1 + $0xcc] sm:$0xf]
  %v78 = vld [vmem:[%s1 + $0xd0] sm:$0xf]
  %v79 = vld [vmem:[%s1 + $0xd4] sm:$0xf]
  %v80 = vld [vmem:[%s1 + $0xd8] sm:$0xf]
  %v81 = vld [vmem:[%s1 + $0xdc] sm:$0xf]
  %v82 = vld [vmem:[%s1 + $0xe0] sm:$0xf]
  %v83 = vld [vmem:[%s1 + $0xe4] sm:$0xf]
  %v84 = vld [vmem:[%s1 + $0xe8] sm:$0xf]
  %v85 = vld [vmem:[%s1 + $0xec] sm:$0xf]
  %v86 = vld [vmem:[%s1 + $0xf0] sm:$0xf]
  %v87 = vld [vmem:[%s1 + $0xf4] sm:$0xf]
  %v88 = vld [vmem:[%s1 + $0xf8] sm:$0xf]
  %v89 = vld [vmem:[%s1 + $0xfc] sm:$0xf]
  %v90 = vld [vmem:[%s1 + $0x100] sm:$0xf]
  %v91 = vld [vmem:[%s1 + $0x104] sm:$0xf]
  %v92 = vld [vmem:[%s1 + $0x108] sm:$0xf]
  %v93 = vld [vmem:[%s1 + $0x10c] sm:$0xf]
  %v94 = vld [vmem:[%s1 + $0x110] sm:$0xf]
  %v95 = vld [vmem:[%s1 + $0x114] sm:$0xf]
  %v96 = vld [vmem:[%s1 + $0x118] sm:$0xf]
  %v97 = vld [vmem:[%s1 + $0x11c] sm:$0xf]
  %v98 = vld [vmem:[%s1 + $0x120] sm:$0xf]
  %v99 = vld [vmem:[%s1 + $0x124] sm:$0xf]
  %v100 = vld [vmem:[%s1 + $0x128] sm:$0xf]
  %v101 = vld [vmem:[%s1 + $0x12c] sm:$0xf]
  %v102 = vld [vmem:[%s1 + $0x130] sm:$0xf]
  %v103 = vld [vmem:[%s1 + $0x134] sm:$0xf]
  %v104 = vld [vmem:[%s1 + $0x138] sm:$0xf]
  %v105 = vld [vmem:[%s1 + $0x13c] sm:$0xf]
  %v106 = vld [vmem:[%s1 + $0x140] sm:$0xf]
  %v107 = vld [vmem:[%s1 + $0x144] sm:$0xf]
  %v108 = vld [vmem:[%s1 + $0x148] sm:$0xf]
  %v109 = vld [vmem:[%s1 + $0x14c] sm:$0xf]
  %v110 = vld [vmem:[%s1 + $0x150] sm:$0xf]
  %v111 = vld [vmem:[%s1 + $0x154] sm:$0xf]
  %v112 = vld [vmem:[%s1 + $0x158] sm:$0xf]
  %v113 = vld [vmem:[%s1 + $0x15c] sm:$0xf]
  %v114 = vld [vmem:[%s1 + $0x160] sm:$0xf]
  %v115 = vld [vmem:[%s1 + $0x164] sm:$0xf]
  %v116 = vld [vmem:[%s1 + $0x168] sm:$0xf]
  %v117 = vld [vmem:[%s1 + $0x16c] sm:$0xf]
  %v118 = vld [vmem:[%s1 + $0x170] sm:$0xf]
  %v119 = vld [vmem:[%s1 + $0x174] sm:$0xf]
  %v120 = vld [vmem:[%s1 + $0x178] sm:$0xf]
  %v121 = vld [vmem:[%s1 + $0x17c] sm:$0xf]
  %v122 = vld [vmem:[%s1 + $0x180] sm:$0xf]
  %v123 = vld [vmem:[%s1 + $0x184] sm:$0xf]
  %v124 = vld [vmem:[%s1 + $0x188] sm:$0xf]
  %v125 = vld [vmem:[%s1 + $0x18c] sm:$0xf]
  %v126 = vld [vmem:[%s1 + $0x190] sm:$0xf]
  %v127 = vld [vmem:[%s1 + $0x194] sm:$0xf]
  %v128 = vld [vmem:[%s1 + $0x198] sm:$0xf]
  %v129 = vld [vmem:[%s1 + $0x19c] sm:$0xf]
  %v130 = vld [vmem:[%s1 + $0x1a0] sm:$0xf]
  %v131 = vld [vmem:[%s1 + $0x1a4] sm:$0xf]
  %v132 = vld [vmem:[%s1 + $0x1a8] sm:$0xf]
  %v133 = vld [vmem:[%s1 + $0x1ac] sm:$0xf]
  %v134 = vld [vmem:[%s1 + $0x1b0] sm:$0xf]
  %v135 = vld [vmem:[%s1 + $0x1b4] sm:$0xf]
  %v136 = vld [vmem:[%s1 + $0x1b8] sm:$0xf]
  %v137 = vld [vmem:[%s1 + $0x1bc] sm:$0xf]
  %v138 = vld [vmem:[%s1 + $0x1c0] sm:$0xf]
  %v139 = vld [vmem:[%s1 + $0x1c4] sm:$0xf]
  %v140 = vld [vmem:[%s1 + $0x1c8] sm:$0xf]
  %v141 = vld [vmem:[%s1 + $0x1cc] sm:$0xf]
  %v142 = vld [vmem:[%s1 + $0x1d0] sm:$0xf]
  %v143 = vld [vmem:[%s1 + $0x1d4] sm:$0xf]
  %v144 = vld [vmem:[%s1 + $0x1d8] sm:$0xf]
  %v145 = vld [vmem:[%s1 + $0x1dc] sm:$0xf]
  %v146 = vld [vmem:[%s1 + $0x1e0] sm:$0xf]
  %v147 = vld [vmem:[%s1 + $0x1e4] sm:$0xf]
  %v148 = vld [vmem:[%s1 + $0x1e8] sm:$0xf]
  %v149 = vld [vmem:[%s1 + $0x1ec] sm:$0xf]
  %v150 = vld [vmem:[%s1 + $0x1f0] sm:$0xf]
  %v151 = vld [vmem:[%s1 + $0x1f4] sm:$0xf]
  %v152 = vld [vmem:[%s1 + $0x1f8] sm:$0xf]
  %v153 = vld [vmem:[%s1 + $0x1fc] sm:$0xf]
  %v154 = vld [vmem:[%s1 + $0x200] sm:$0xf]
  %v155 = vld [vmem:[%s1 + $0x204] sm:$0xf]
  %v156 = vld [vmem:[%s1 + $0x208] sm:$0xf]
  %v157 = vld [vmem:[%s1 + $0x20c] sm:$0xf]
  %v158 = vld [vmem:[%s1 + $0x210] sm:$0xf]
  %v159 = vld [vmem:[%s1 + $0x214] sm:$0xf]
  %v160 = vld [vmem:[%s1 + $0x218] sm:$0xf]
  %v161 = vld [vmem:[%s1 + $0x21c] sm:$0xf]
  %v162 = vld [vmem:[%s1 + $0x220] sm:$0xf]
  %v163 = vld [vmem:[%s1 + $0x224] sm:$0xf]
  %v164 = vld [vmem:[%s1 + $0x228] sm:$0xf]
  %v165 = vld [vmem:[%s1 + $0x22c] sm:$0xf]
  %v166 = vld [vmem:[%s1 + $0x230] sm:$0xf]
  %v167 = vld [vmem:[%s1 + $0x234] sm:$0xf]
  %v168 = vld [vmem:[%s1 + $0x238] sm:$0xf]
  %v169 = vld [vmem:[%s1 + $0x23c] sm:$0xf]
  %v170 = vld [vmem:[%s1 + $0x240] sm:$0xf]
  %v171 = vld [vmem:[%s1 + $0x244] sm:$0xf]
  %v172 = vld [vmem:[%s1 + $0x248] sm:$0xf]
  %v173 = vld [vmem:[%s1 + $0x24c] sm:$0xf]
  %v174 = vld [vmem:[%s1 + $0x250] sm:$0xf]
  %v175 = vld [vmem:[%s1 + $0x254] sm:$0xf]
  %v176 = vld [vmem:[%s1 + $0x258] sm:$0xf]
  %v177 = vld [vmem:[%s1 + $0x25c] sm:$0xf]
  %v178 = vld [vmem:[%s1 + $0x260] sm:$0xf]
  %v179 = vld [vmem:[%s1 + $0x264] sm:$0xf]
  %v180 = vld [vmem:[%s1 + $0x268] sm:$0xf]
  %v181 = vld [vmem:[%s1 + $0x26c] sm:$0xf]
  %v182 = vld [vmem:[%s1 + $0x270] sm:$0xf]
  %v183 = vld [vmem:[%s1 + $0x274] sm:$0xf]
  %v184 = vld [vmem:[%s1 + $0x278] sm:$0xf]
  %v185 = vld [vmem:[%s1 + $0x27c] sm:$0xf]
  %v186 = vld [vmem:[%s1 + $0x280] sm:$0xf]
  %v187 = vld [vmem:[%s1 + $0x284] sm:$0xf]
  %v188 = vld [vmem:[%s1 + $0x288] sm:$0xf]
  %v189 = vld [vmem:[%s1 + $0x28c] sm:$0xf]
  %v190 = vld [vmem:[%s1 + $0x290] sm:$0xf]
  %v191 = vld [vmem:[%s1 + $0x294] sm:$0xf]
  %v192 = vld [vmem:[%s1 + $0x298] sm:$0xf]
  %v193 = vld [vmem:[%s1 + $0x29c] sm:$0xf]
  %v194 = vld [vmem:[%s1 + $0x2a0] sm:$0xf]
  %v195 = vld [vmem:[%s1 + $0x2a4] sm:$0xf]
  %v196 = vld [vmem:[%s1 + $0x2a8] sm:$0xf]
  %v197 = vld [vmem:[%s1 + $0x2ac] sm:$0xf]
  %v198 = vld [vmem:[%s1 + $0x2b0] sm:$0xf]
  %v199 = vld [vmem:[%s1 + $0x2b4] sm:$0xf]
  %v200 = vld [vmem:[%s1 + $0x2b8] sm:$0xf]
  %v201 = vld [vmem:[%s1 + $0x2bc] sm:$0xf]
  %v202 = vld [vmem:[%s2] sm:$0x1]
  %v204 = vperm.slane %v202, 0
  %v218 = vunpack.c.l.b16 %v14
  %v219 = vunpack.c.h.b16 %v14
  %v220 = vunpack.c.l.b16 %v15
  %v221 = vunpack.c.h.b16 %v15
  %v222 = vunpack.c.l.b16 %v16
  %v223 = vunpack.c.h.b16 %v16
  %v224 = vunpack.c.l.b16 %v17
  %v225 = vunpack.c.h.b16 %v17
  %v226 = vunpack.c.l.b16 %v18
  %v227 = vunpack.c.h.b16 %v18
  %v228 = vunpack.c.l.b16 %v19
  %v229 = vunpack.c.l.b16 %v20
  %v230 = vunpack.c.h.b16 %v20
  %v231 = vunpack.c.l.b16 %v21
  %v232 = vunpack.c.h.b16 %v21
  %v233 = vunpack.c.l.b16 %v22
  %v234 = vunpack.c.h.b16 %v22
  %v235 = vunpack.c.l.b16 %v23
  %v236 = vunpack.c.h.b16 %v23
  %v237 = vunpack.c.l.b16 %v24
  %v238 = vunpack.c.h.b16 %v24
  %v239 = vunpack.c.l.b16 %v25
  %v240 = vpack.c.b16 %v229, %v218
  %v241 = vpack.c.b16 %v230, %v219
  %v242 = vpack.c.b16 %v231, %v220
  %v243 = vpack.c.b16 %v232, %v221
  %v244 = vpack.c.b16 %v233, %v222
  %v245 = vpack.c.b16 %v234, %v223
  %v246 = vpack.c.b16 %v235, %v224
  %v247 = vpack.c.b16 %v236, %v225
  %v248 = vpack.c.b16 %v237, %v226
  %v249 = vpack.c.b16 %v238, %v227
  %v250 = vpack.c.b16 %v239, %v228
  %v438 = vunpack.c.l.b16 %v26
  %v439 = vunpack.c.l.b16 %v27
  %v440 = vunpack.c.l.b16 %v28
  %v441 = vunpack.c.l.b16 %v29
  %v442 = vunpack.c.l.b16 %v30
  %v443 = vunpack.c.l.b16 %v31
  %v444 = vunpack.c.l.b16 %v32
  %v445 = vunpack.c.l.b16 %v33
  %v446 = vunpack.c.l.b16 %v34
  %v447 = vunpack.c.l.b16 %v35
  %v448 = vunpack.c.l.b16 %v36
  %v449 = vunpack.c.l.b16 %v37
  %v450 = vunpack.c.l.b16 %v38
  %v451 = vunpack.c.l.b16 %v39
  %v452 = vunpack.c.l.b16 %v40
  %v453 = vunpack.c.l.b16 %v41
  %v454 = vunpack.c.l.b16 %v42
  %v455 = vunpack.c.l.b16 %v43
  %v456 = vunpack.c.l.b16 %v44
  %v457 = vunpack.c.l.b16 %v45
  %v458 = vunpack.c.l.b16 %v46
  %v459 = vunpack.c.l.b16 %v47
  %v460 = vunpack.c.l.b16 %v48
  %v461 = vunpack.c.l.b16 %v49
  %v462 = vunpack.c.l.b16 %v50
  %v463 = vunpack.c.l.b16 %v51
  %v464 = vunpack.c.l.b16 %v52
  %v465 = vunpack.c.l.b16 %v53
  %v466 = vunpack.c.l.b16 %v54
  %v467 = vunpack.c.l.b16 %v55
  %v468 = vunpack.c.l.b16 %v56
  %v469 = vunpack.c.l.b16 %v57
  %v470 = vunpack.c.l.b16 %v58
  %v471 = vunpack.c.l.b16 %v59
  %v472 = vunpack.c.l.b16 %v60
  %v473 = vunpack.c.l.b16 %v61
  %v474 = vunpack.c.l.b16 %v62
  %v475 = vunpack.c.l.b16 %v63
  %v476 = vunpack.c.l.b16 %v64
  %v477 = vunpack.c.l.b16 %v65
  %v478 = vunpack.c.l.b16 %v66
  %v479 = vunpack.c.l.b16 %v67
  %v480 = vunpack.c.l.b16 %v68
  %v481 = vunpack.c.l.b16 %v69
  %v482 = vunpack.c.l.b16 %v70
  %v483 = vunpack.c.l.b16 %v71
  %v484 = vunpack.c.l.b16 %v72
  %v485 = vunpack.c.l.b16 %v73
  %v486 = vunpack.c.l.b16 %v74
  %v487 = vunpack.c.l.b16 %v75
  %v488 = vunpack.c.l.b16 %v76
  %v489 = vunpack.c.l.b16 %v77
  %v490 = vunpack.c.l.b16 %v78
  %v491 = vunpack.c.l.b16 %v79
  %v492 = vunpack.c.l.b16 %v80
  %v493 = vunpack.c.l.b16 %v81
  %v494 = vunpack.c.l.b16 %v82
  %v495 = vunpack.c.l.b16 %v83
  %v496 = vunpack.c.l.b16 %v84
  %v497 = vunpack.c.l.b16 %v85
  %v498 = vunpack.c.l.b16 %v86
  %v499 = vunpack.c.l.b16 %v87
  %v500 = vunpack.c.l.b16 %v88
  %v501 = vunpack.c.l.b16 %v89
  %v502 = vunpack.c.l.b16 %v90
  %v503 = vunpack.c.l.b16 %v91
  %v504 = vunpack.c.l.b16 %v92
  %v505 = vunpack.c.l.b16 %v93
  %v506 = vunpack.c.l.b16 %v94
  %v507 = vunpack.c.l.b16 %v95
  %v508 = vunpack.c.l.b16 %v96
  %v509 = vunpack.c.l.b16 %v97
  %v510 = vunpack.c.l.b16 %v98
  %v511 = vunpack.c.l.b16 %v99
  %v512 = vunpack.c.l.b16 %v100
  %v513 = vunpack.c.l.b16 %v101
  %v514 = vunpack.c.l.b16 %v102
  %v515 = vunpack.c.l.b16 %v103
  %v516 = vunpack.c.l.b16 %v104
  %v517 = vunpack.c.l.b16 %v105
  %v518 = vunpack.c.l.b16 %v106
  %v519 = vunpack.c.l.b16 %v107
  %v520 = vunpack.c.l.b16 %v108
  %v521 = vunpack.c.l.b16 %v109
  %v522 = vunpack.c.l.b16 %v110
  %v523 = vunpack.c.l.b16 %v111
  %v524 = vunpack.c.l.b16 %v112
  %v525 = vunpack.c.l.b16 %v113
  %v526 = vunpack.c.l.b16 %v114
  %v527 = vunpack.c.l.b16 %v115
  %v528 = vunpack.c.l.b16 %v116
  %v529 = vunpack.c.l.b16 %v117
  %v530 = vunpack.c.l.b16 %v118
  %v531 = vunpack.c.l.b16 %v119
  %v532 = vunpack.c.l.b16 %v120
  %v533 = vunpack.c.l.b16 %v121
  %v534 = vunpack.c.l.b16 %v122
  %v535 = vunpack.c.l.b16 %v123
  %v536 = vunpack.c.l.b16 %v124
  %v537 = vunpack.c.l.b16 %v125
  %v538 = vunpack.c.l.b16 %v126
  %v539 = vunpack.c.l.b16 %v127
  %v540 = vunpack.c.l.b16 %v128
  %v541 = vunpack.c.l.b16 %v129
  %v542 = vunpack.c.l.b16 %v130
  %v543 = vunpack.c.l.b16 %v131
  %v544 = vunpack.c.l.b16 %v132
  %v545 = vunpack.c.l.b16 %v133
  %v546 = vunpack.c.l.b16 %v134
  %v547 = vunpack.c.l.b16 %v135
  %v548 = vunpack.c.l.b16 %v136
  %v549 = vunpack.c.l.b16 %v137
  %v550 = vunpack.c.l.b16 %v138
  %v551 = vunpack.c.l.b16 %v139
  %v552 = vunpack.c.l.b16 %v140
  %v553 = vunpack.c.l.b16 %v141
  %v554 = vunpack.c.l.b16 %v142
  %v555 = vunpack.c.l.b16 %v143
  %v556 = vunpack.c.l.b16 %v144
  %v557 = vunpack.c.l.b16 %v145
  %v558 = vunpack.c.l.b16 %v146
  %v559 = vunpack.c.l.b16 %v147
  %v560 = vunpack.c.l.b16 %v148
  %v561 = vunpack.c.l.b16 %v149
  %v562 = vunpack.c.l.b16 %v150
  %v563 = vunpack.c.l.b16 %v151
  %v564 = vunpack.c.l.b16 %v152
  %v565 = vunpack.c.l.b16 %v153
  %v566 = vunpack.c.l.b16 %v154
  %v567 = vunpack.c.l.b16 %v155
  %v568 = vunpack.c.l.b16 %v156
  %v569 = vunpack.c.l.b16 %v157
  %v570 = vunpack.c.l.b16 %v158
  %v571 = vunpack.c.l.b16 %v159
  %v572 = vunpack.c.l.b16 %v160
  %v573 = vunpack.c.l.b16 %v161
  %v574 = vunpack.c.l.b16 %v162
  %v575 = vunpack.c.l.b16 %v163
  %v576 = vunpack.c.l.b16 %v164
  %v577 = vunpack.c.l.b16 %v165
  %v578 = vunpack.c.l.b16 %v166
  %v579 = vunpack.c.l.b16 %v167
  %v580 = vunpack.c.l.b16 %v168
  %v581 = vunpack.c.l.b16 %v169
  %v582 = vunpack.c.l.b16 %v170
  %v583 = vunpack.c.l.b16 %v171
  %v584 = vunpack.c.l.b16 %v172
  %v585 = vunpack.c.l.b16 %v173
  %v586 = vunpack.c.l.b16 %v174
  %v587 = vunpack.c.l.b16 %v175
  %v588 = vunpack.c.l.b16 %v176
  %v589 = vunpack.c.l.b16 %v177
  %v590 = vunpack.c.l.b16 %v178
  %v591 = vunpack.c.l.b16 %v179
  %v592 = vunpack.c.l.b16 %v180
  %v593 = vunpack.c.l.b16 %v181
  %v594 = vunpack.c.l.b16 %v182
  %v595 = vunpack.c.l.b16 %v183
  %v596 = vunpack.c.l.b16 %v184
  %v597 = vunpack.c.l.b16 %v185
  %v598 = vunpack.c.l.b16 %v186
  %v599 = vunpack.c.l.b16 %v187
  %v600 = vunpack.c.l.b16 %v188
  %v601 = vunpack.c.l.b16 %v189
  %v602 = vunpack.c.l.b16 %v190
  %v603 = vunpack.c.l.b16 %v191
  %v604 = vunpack.c.l.b16 %v192
  %v605 = vunpack.c.l.b16 %v193
  %v606 = vunpack.c.l.b16 %v194
  %v607 = vunpack.c.l.b16 %v195
  %v608 = vunpack.c.l.b16 %v196
  %v609 = vunpack.c.l.b16 %v197
  %v610 = vunpack.c.l.b16 %v198
  %v611 = vunpack.c.l.b16 %v199
  %v612 = vunpack.c.l.b16 %v200
  %v613 = vunpack.c.l.b16 %v201
  %v614 = vpack.c.b16 %v439, %v438
  %v615 = vpack.c.b16 %v441, %v440
  %v616 = vpack.c.b16 %v443, %v442
  %v617 = vpack.c.b16 %v445, %v444
  %v618 = vpack.c.b16 %v447, %v446
  %v619 = vpack.c.b16 %v449, %v448
  %v620 = vpack.c.b16 %v451, %v450
  %v621 = vpack.c.b16 %v453, %v452
  %v622 = vpack.c.b16 %v455, %v454
  %v623 = vpack.c.b16 %v457, %v456
  %v624 = vpack.c.b16 %v459, %v458
  %v625 = vpack.c.b16 %v461, %v460
  %v626 = vpack.c.b16 %v463, %v462
  %v627 = vpack.c.b16 %v465, %v464
  %v628 = vpack.c.b16 %v467, %v466
  %v629 = vpack.c.b16 %v469, %v468
  %v630 = vpack.c.b16 %v471, %v470
  %v631 = vpack.c.b16 %v473, %v472
  %v632 = vpack.c.b16 %v475, %v474
  %v633 = vpack.c.b16 %v477, %v476
  %v634 = vpack.c.b16 %v479, %v478
  %v635 = vpack.c.b16 %v481, %v480
  %v636 = vpack.c.b16 %v483, %v482
  %v637 = vpack.c.b16 %v485, %v484
  %v638 = vpack.c.b16 %v487, %v486
  %v639 = vpack.c.b16 %v489, %v488
  %v640 = vpack.c.b16 %v491, %v490
  %v641 = vpack.c.b16 %v493, %v492
  %v642 = vpack.c.b16 %v495, %v494
  %v643 = vpack.c.b16 %v497, %v496
  %v644 = vpack.c.b16 %v499, %v498
  %v645 = vpack.c.b16 %v501, %v500
  %v646 = vpack.c.b16 %v503, %v502
  %v647 = vpack.c.b16 %v505, %v504
  %v648 = vpack.c.b16 %v507, %v506
  %v649 = vpack.c.b16 %v509, %v508
  %v650 = vpack.c.b16 %v511, %v510
  %v651 = vpack.c.b16 %v513, %v512
  %v652 = vpack.c.b16 %v515, %v514
  %v653 = vpack.c.b16 %v517, %v516
  %v654 = vpack.c.b16 %v519, %v518
  %v655 = vpack.c.b16 %v521, %v520
  %v656 = vpack.c.b16 %v523, %v522
  %v657 = vpack.c.b16 %v525, %v524
  %v658 = vpack.c.b16 %v527, %v526
  %v659 = vpack.c.b16 %v529, %v528
  %v660 = vpack.c.b16 %v531, %v530
  %v661 = vpack.c.b16 %v533, %v532
  %v662 = vpack.c.b16 %v535, %v534
  %v663 = vpack.c.b16 %v537, %v536
  %v664 = vpack.c.b16 %v539, %v538
  %v665 = vpack.c.b16 %v541, %v540
  %v666 = vpack.c.b16 %v543, %v542
  %v667 = vpack.c.b16 %v545, %v544
  %v668 = vpack.c.b16 %v547, %v546
  %v669 = vpack.c.b16 %v549, %v548
  %v670 = vpack.c.b16 %v551, %v550
  %v671 = vpack.c.b16 %v553, %v552
  %v672 = vpack.c.b16 %v555, %v554
  %v673 = vpack.c.b16 %v557, %v556
  %v674 = vpack.c.b16 %v559, %v558
  %v675 = vpack.c.b16 %v561, %v560
  %v676 = vpack.c.b16 %v563, %v562
  %v677 = vpack.c.b16 %v565, %v564
  %v678 = vpack.c.b16 %v567, %v566
  %v679 = vpack.c.b16 %v569, %v568
  %v680 = vpack.c.b16 %v571, %v570
  %v681 = vpack.c.b16 %v573, %v572
  %v682 = vpack.c.b16 %v575, %v574
  %v683 = vpack.c.b16 %v577, %v576
  %v684 = vpack.c.b16 %v579, %v578
  %v685 = vpack.c.b16 %v581, %v580
  %v686 = vpack.c.b16 %v583, %v582
  %v687 = vpack.c.b16 %v585, %v584
  %v688 = vpack.c.b16 %v587, %v586
  %v689 = vpack.c.b16 %v589, %v588
  %v690 = vpack.c.b16 %v591, %v590
  %v691 = vpack.c.b16 %v593, %v592
  %v692 = vpack.c.b16 %v595, %v594
  %v693 = vpack.c.b16 %v597, %v596
  %v694 = vpack.c.b16 %v599, %v598
  %v695 = vpack.c.b16 %v601, %v600
  %v696 = vpack.c.b16 %v603, %v602
  %v697 = vpack.c.b16 %v605, %v604
  %v698 = vpack.c.b16 %v607, %v606
  %v699 = vpack.c.b16 %v609, %v608
  %v700 = vpack.c.b16 %v611, %v610
  %v701 = vpack.c.b16 %v613, %v612
  %790 = vmatpush.bf16.msra.mxu0 %v621
  %791 = vmatpush.bf16.msra.mxu0 %v620
  %792 = vmatpush.bf16.msra.mxu0 %v619
  %793 = vmatpush.bf16.msra.mxu0 %v618
  %794 = vmatpush.bf16.msra.mxu0 %v617
  %795 = vmatpush.bf16.msra.mxu0 %v616
  %796 = vmatpush.bf16.msra.mxu0 %v615
  %797 = vmatpush.bf16.msra.mxu0 %v614
  %798 = vmatmul.bf16.gmra.mxu0 %v240
  %v799 = vpop.f32.mrf.mxu0
  %v800 = vadd.f32 %v204, %v799
  %v801 = vpop.f32.mrf.mxu0
  %v802 = vadd.f32 %v204, %v801
  %803 = vdwg.mxu0
  %804 = vmatpush.bf16.msra.mxu0 %v629
  %805 = vmatpush.bf16.msra.mxu0 %v628
  %806 = vmatpush.bf16.msra.mxu0 %v627
  %807 = vmatpush.bf16.msra.mxu0 %v626
  %808 = vmatpush.bf16.msra.mxu0 %v625
  %809 = vmatpush.bf16.msra.mxu0 %v624
  %810 = vmatpush.bf16.msra.mxu0 %v623
  %811 = vmatpush.bf16.msra.mxu0 %v622
  %812 = vmatmul.bf16.gmra.mxu0 %v241
  %v813 = vpop.f32.mrf.mxu0
  %v814 = vadd.f32 %v800, %v813
  %v815 = vpop.f32.mrf.mxu0
  %v816 = vadd.f32 %v802, %v815
  %817 = vdwg.mxu0
  %818 = vmatpush.bf16.msra.mxu0 %v637
  %819 = vmatpush.bf16.msra.mxu0 %v636
  %820 = vmatpush.bf16.msra.mxu0 %v635
  %821 = vmatpush.bf16.msra.mxu0 %v634
  %822 = vmatpush.bf16.msra.mxu0 %v633
  %823 = vmatpush.bf16.msra.mxu0 %v632
  %824 = vmatpush.bf16.msra.mxu0 %v631
  %825 = vmatpush.bf16.msra.mxu0 %v630
  %826 = vmatmul.bf16.gmra.mxu0 %v242
  %v827 = vpop.f32.mrf.mxu0
  %v828 = vadd.f32 %v814, %v827
  %v829 = vpop.f32.mrf.mxu0
  %v830 = vadd.f32 %v816, %v829
  %831 = vdwg.mxu0
  %832 = vmatpush.bf16.msra.mxu0 %v645
  %833 = vmatpush.bf16.msra.mxu0 %v644
  %834 = vmatpush.bf16.msra.mxu0 %v643
  %835 = vmatpush.bf16.msra.mxu0 %v642
  %836 = vmatpush.bf16.msra.mxu0 %v641
  %837 = vmatpush.bf16.msra.mxu0 %v640
  %838 = vmatpush.bf16.msra.mxu0 %v639
  %839 = vmatpush.bf16.msra.mxu0 %v638
  %840 = vmatmul.bf16.gmra.mxu0 %v243
  %v841 = vpop.f32.mrf.mxu0
  %v842 = vadd.f32 %v828, %v841
  %v843 = vpop.f32.mrf.mxu0
  %v844 = vadd.f32 %v830, %v843
  %845 = vdwg.mxu0
  %846 = vmatpush.bf16.msra.mxu0 %v653
  %847 = vmatpush.bf16.msra.mxu0 %v652
  %848 = vmatpush.bf16.msra.mxu0 %v651
  %849 = vmatpush.bf16.msra.mxu0 %v650
  %850 = vmatpush.bf16.msra.mxu0 %v649
  %851 = vmatpush.bf16.msra.mxu0 %v648
  %852 = vmatpush.bf16.msra.mxu0 %v647
  %853 = vmatpush.bf16.msra.mxu0 %v646
  %854 = vmatmul.bf16.gmra.mxu0 %v244
  %v855 = vpop.f32.mrf.mxu0
  %v856 = vadd.f32 %v842, %v855
  %v857 = vpop.f32.mrf.mxu0
  %v858 = vadd.f32 %v844, %v857
  %859 = vdwg.mxu0
  %860 = vmatpush.bf16.msra.mxu0 %v661
  %861 = vmatpush.bf16.msra.mxu0 %v660
  %862 = vmatpush.bf16.msra.mxu0 %v659
  %863 = vmatpush.bf16.msra.mxu0 %v658
  %864 = vmatpush.bf16.msra.mxu0 %v657
  %865 = vmatpush.bf16.msra.mxu0 %v656
  %866 = vmatpush.bf16.msra.mxu0 %v655
  %867 = vmatpush.bf16.msra.mxu0 %v654
  %868 = vmatmul.bf16.gmra.mxu0 %v245
  %v869 = vpop.f32.mrf.mxu0
  %v870 = vadd.f32 %v856, %v869
  %v871 = vpop.f32.mrf.mxu0
  %v872 = vadd.f32 %v858, %v871
  %873 = vdwg.mxu0
  %874 = vmatpush.bf16.msra.mxu0 %v669
  %875 = vmatpush.bf16.msra.mxu0 %v668
  %876 = vmatpush.bf16.msra.mxu0 %v667
  %877 = vmatpush.bf16.msra.mxu0 %v666
  %878 = vmatpush.bf16.msra.mxu0 %v665
  %879 = vmatpush.bf16.msra.mxu0 %v664
  %880 = vmatpush.bf16.msra.mxu0 %v663
  %881 = vmatpush.bf16.msra.mxu0 %v662
  %882 = vmatmul.bf16.gmra.mxu0 %v246
  %v883 = vpop.f32.mrf.mxu0
  %v884 = vadd.f32 %v870, %v883
  %v885 = vpop.f32.mrf.mxu0
  %v886 = vadd.f32 %v872, %v885
  %887 = vdwg.mxu0
  %888 = vmatpush.bf16.msra.mxu0 %v677
  %889 = vmatpush.bf16.msra.mxu0 %v676
  %890 = vmatpush.bf16.msra.mxu0 %v675
  %891 = vmatpush.bf16.msra.mxu0 %v674
  %892 = vmatpush.bf16.msra.mxu0 %v673
  %893 = vmatpush.bf16.msra.mxu0 %v672
  %894 = vmatpush.bf16.msra.mxu0 %v671
  %895 = vmatpush.bf16.msra.mxu0 %v670
  %896 = vmatmul.bf16.gmra.mxu0 %v247
  %v897 = vpop.f32.mrf.mxu0
  %v898 = vadd.f32 %v884, %v897
  %v899 = vpop.f32.mrf.mxu0
  %v900 = vadd.f32 %v886, %v899
  %901 = vdwg.mxu0
  %902 = vmatpush.bf16.msra.mxu0 %v685
  %903 = vmatpush.bf16.msra.mxu0 %v684
  %904 = vmatpush.bf16.msra.mxu0 %v683
  %905 = vmatpush.bf16.msra.mxu0 %v682
  %906 = vmatpush.bf16.msra.mxu0 %v681
  %907 = vmatpush.bf16.msra.mxu0 %v680
  %908 = vmatpush.bf16.msra.mxu0 %v679
  %909 = vmatpush.bf16.msra.mxu0 %v678
  %910 = vmatmul.bf16.gmra.mxu0 %v248
  %v911 = vpop.f32.mrf.mxu0
  %v912 = vadd.f32 %v898, %v911
  %v913 = vpop.f32.mrf.mxu0
  %v914 = vadd.f32 %v900, %v913
  %915 = vdwg.mxu0
  %916 = vmatpush.bf16.msra.mxu0 %v693
  %917 = vmatpush.bf16.msra.mxu0 %v692
  %918 = vmatpush.bf16.msra.mxu0 %v691
  %919 = vmatpush.bf16.msra.mxu0 %v690
  %920 = vmatpush.bf16.msra.mxu0 %v689
  %921 = vmatpush.bf16.msra.mxu0 %v688
  %922 = vmatpush.bf16.msra.mxu0 %v687
  %923 = vmatpush.bf16.msra.mxu0 %v686
  %924 = vmatmul.bf16.gmra.mxu0 %v249
  %v925 = vpop.f32.mrf.mxu0
  %v926 = vadd.f32 %v912, %v925
  %v927 = vpop.f32.mrf.mxu0
  %v928 = vadd.f32 %v914, %v927
  %929 = vdwg.mxu0
  %930 = vmatpush.bf16.msra.mxu0 %v701
  %931 = vmatpush.bf16.msra.mxu0 %v700
  %932 = vmatpush.bf16.msra.mxu0 %v699
  %933 = vmatpush.bf16.msra.mxu0 %v698
  %934 = vmatpush.bf16.msra.mxu0 %v697
  %935 = vmatpush.bf16.msra.mxu0 %v696
  %936 = vmatpush.bf16.msra.mxu0 %v695
  %937 = vmatpush.bf16.msra.mxu0 %v694
  %938 = vmatmul.bf16.gmra.mxu0 %v250
  %v939 = vpop.f32.mrf.mxu0
  %v940 = vadd.f32 %v926, %v939
  %v941 = vpop.f32.mrf.mxu0
  %v942 = vadd.f32 %v928, %v941
  %943 = vdwg.mxu0
  %944 = vst [vmem:[%s3] sm:$0xff] %v940
  %945 = vst [vmem:[%s3 + $0x8] sm:$0xff] %v942
  // Predicated region
  $region14: #{net_forward.25} parent=0 // pred_check
    _
  $region15: #{net_forward.25} parent=0 // pred_check_branch
    %947 = sbr.rel (0) target = $region17
  $region16: #{net_forward.25} parent=0 // pred_region
    _
  $region17: #{net_forward.25} parent=0 // pred_fallthru
    _
  // Predicated region
  $region18: #{net_forward.25} parent=0 // pred_check
    _
  $region19: #{net_forward.25} parent=0 // pred_check_branch
    %949 = sbr.rel (0) target = $region21
  $region20: #{net_forward.25} parent=0 // pred_region
    _
  $region21: #{net_forward.25} parent=0 // pred_fallthru
    _

</llo_original>
